<compile_context>
chip_gen: v5e
topology: v5e:2x2
jax: 0.10.0
libtpu: 0.0.40
codegen_flags: <defaults>
</compile_context>

<pallas_src>
import functools

import jax
import jax.numpy as jnp
from jax.experimental import pallas as pl
from jax.experimental.pallas import tpu as pltpu


# ----------------------------------------------------------------------------
# helpers
# ----------------------------------------------------------------------------
def _round_up(x, m):
    return ((x + m - 1) // m) * m


def _pick_tile(padded_dim, candidates):
    for t in candidates:
        if padded_dim % t == 0:
            return t
    return padded_dim


# ----------------------------------------------------------------------------
# Pallas kernels
# ----------------------------------------------------------------------------
def _matmul_kernel(a_ref, b_ref, o_ref, acc_ref, *, activation):
    """Tiled matmul with K-axis accumulation; optional fused tanh epilogue."""
    @pl.when(pl.program_id(2) == 0)
    def _():
        acc_ref[...] = jnp.zeros_like(acc_ref)

    acc_ref[...] += jnp.dot(a_ref[...], b_ref[...],
                            preferred_element_type=jnp.float32)

    @pl.when(pl.program_id(2) == pl.num_programs(2) - 1)
    def _():
        acc = acc_ref[...]
        if activation == "tanh":
            acc = jnp.tanh(acc)
        o_ref[...] = acc.astype(o_ref.dtype)


def _inorm_kernel(x_ref, g_ref, b_ref, o_ref, *, relu, eps):
    """InstanceNorm (affine) + optional ReLU.  Block: (1, H*W, Cblk)."""
    x = x_ref[...]
    inv_hw = 1.0 / x.shape[1]
    mean = jnp.sum(x, axis=1, keepdims=True) * inv_hw
    ex2 = jnp.sum(x * x, axis=1, keepdims=True) * inv_hw
    inv_std = jax.lax.rsqrt(ex2 - mean * mean + eps)
    g = g_ref[...].reshape(1, 1, -1)
    b = b_ref[...].reshape(1, 1, -1)
    y = (x - mean) * inv_std * g + b
    if relu:
        y = jnp.maximum(y, 0.0)
    o_ref[...] = y


def _inorm_add_kernel(x_ref, r_ref, g_ref, b_ref, o_ref, *, eps):
    """InstanceNorm (affine, no ReLU) with the residual add fused in."""
    x = x_ref[...]
    inv_hw = 1.0 / x.shape[1]
    mean = jnp.sum(x, axis=1, keepdims=True) * inv_hw
    ex2 = jnp.sum(x * x, axis=1, keepdims=True) * inv_hw
    inv_std = jax.lax.rsqrt(ex2 - mean * mean + eps)
    g = g_ref[...].reshape(1, 1, -1)
    b = b_ref[...].reshape(1, 1, -1)
    o_ref[...] = r_ref[...] + (x - mean) * inv_std * g + b


# ----------------------------------------------------------------------------
# pallas_call wrappers
# ----------------------------------------------------------------------------
def pallas_matmul(a, b, *, activation=None):
    """C = A @ B (f32 out) with bf16 MXU inputs.

    A, B are zero-padded so M is a multiple of 16 and K, N are multiples of
    128 (lane-dense output stores, unmasked weight loads); the result is
    sliced back to (M, N).  Grid (M/tm, N/tn, K/tk) with a f32 VMEM
    accumulator; K is the innermost "arbitrary" axis, M/N are "parallel".
    """
    M, K = a.shape
    K2, N = b.shape
    assert K == K2

    Mp = _round_up(M, 16)
    Kp = _round_up(K, 128)
    Np = _round_up(N, 128)
    tm = _pick_tile(Mp, (512, 256, 128, 64, 32, 16))
    tk = _pick_tile(Kp, (512, 384, 256, 128))
    tn = _pick_tile(Np, (512, 384, 256, 128))

    a_p = jnp.pad(a.astype(jnp.bfloat16), ((0, Mp - M), (0, Kp - K)))
    b_p = jnp.pad(b.astype(jnp.bfloat16), ((0, Kp - K), (0, Np - N)))

    grid = (Mp // tm, Np // tn, Kp // tk)
    kern = functools.partial(_matmul_kernel, activation=activation)

    out = pl.pallas_call(
        kern,
        out_shape=jax.ShapeDtypeStruct((Mp, Np), jnp.float32),
        grid=grid,
        in_specs=[
            pl.BlockSpec((tm, tk), lambda i, j, k: (i, k)),
            pl.BlockSpec((tk, tn), lambda i, j, k: (k, j)),
        ],
        out_specs=pl.BlockSpec((tm, tn), lambda i, j, k: (i, j)),
        scratch_shapes=[pltpu.VMEM((tm, tn), jnp.float32)],
        compiler_params=pltpu.CompilerParams(
            dimension_semantics=("parallel", "parallel", "arbitrary"),
            vmem_limit_bytes=32 * 1024 * 1024),
        cost_estimate=pl.CostEstimate(
            flops=2 * Mp * Np * Kp,
            transcendentals=0,
            bytes_accessed=Mp * Kp * 2 + Kp * Np * 2 + Mp * Np * 4),
    )(a_p, b_p)
    return out[:M, :N]


def pallas_instance_norm(x, gamma, beta, *, relu, residual=None, eps=1e-5):
    """Per-(instance, channel) normalization + affine (+ReLU / +residual).

    Grid (N, C/Cblk); channel blocks are 128-wide when C is a multiple of 128
    (lane-dense), otherwise the full channel extent.  Both axes "parallel".
    """
    Nb, H, W, C = x.shape
    HW = H * W
    cblk = 128 if (C % 128 == 0) else C
    grid = (Nb, C // cblk)

    x3 = x.reshape(Nb, HW, C)
    xy_spec = pl.BlockSpec((1, HW, cblk), lambda n, c: (n, 0, c))
    gb_spec = pl.BlockSpec((1, cblk), lambda n, c: (0, c))

    if residual is None:
        kern = functools.partial(_inorm_kernel, relu=relu, eps=eps)
        in_specs = [xy_spec, gb_spec, gb_spec]
        args = (x3, gamma.reshape(1, C), beta.reshape(1, C))
    else:
        assert not relu
        kern = functools.partial(_inorm_add_kernel, eps=eps)
        in_specs = [xy_spec, xy_spec, gb_spec, gb_spec]
        args = (x3, residual.reshape(Nb, HW, C),
                gamma.reshape(1, C), beta.reshape(1, C))

    out = pl.pallas_call(
        kern,
        out_shape=jax.ShapeDtypeStruct((Nb, HW, C), jnp.float32),
        grid=grid,
        in_specs=in_specs,
        out_specs=xy_spec,
        compiler_params=pltpu.CompilerParams(
            dimension_semantics=("parallel", "parallel"),
            vmem_limit_bytes=32 * 1024 * 1024),
    )(*args)
    return out.reshape(Nb, H, W, C)


# ----------------------------------------------------------------------------
# Convolutions = im2col (glue) + Pallas matmul (hot path)
# ----------------------------------------------------------------------------
def conv2d(x, w_hwio, stride, pad, *, activation=None):
    """x: (N,H,W,Cin), w: (kH,kW,Cin,Cout), no bias."""
    Nb, H, W, Cin = x.shape
    kH, kW, _, Cout = w_hwio.shape
    xp = jnp.pad(x, ((0, 0), (pad, pad), (pad, pad), (0, 0))) if pad else x
    Ho = (H + 2 * pad - kH) // stride + 1
    Wo = (W + 2 * pad - kW) // stride + 1
    cols = []
    for i in range(kH):
        for j in range(kW):
            cols.append(xp[:, i:i + (Ho - 1) * stride + 1:stride,
                           j:j + (Wo - 1) * stride + 1:stride, :])
    patches = jnp.concatenate(cols, axis=-1)            # (N,Ho,Wo,kH*kW*Cin)
    a = patches.reshape(Nb * Ho * Wo, kH * kW * Cin)
    b = w_hwio.reshape(kH * kW * Cin, Cout)
    out = pallas_matmul(a, b, activation=activation)
    return out.reshape(Nb, Ho, Wo, Cout)


def conv_transpose2d(x, w_flip_hwio):
    """ConvTranspose2d(kernel=4, stride=2, pad=1) via the sub-pixel
    (output-parity) decomposition.

    The weight is stored as the equivalent forward-conv (spatially flipped)
    HWIO kernel.  Output pixel (2u+r, 2v+s) only sees the 2x2 sub-kernel
    w_flip[r::2, s::2], so all four parities are computed with a single 2x2
    stride-1 conv over the 1-padded input producing 4*Cout channels, then
    interleaved — no zero-dilation, ~4x fewer FLOPs and bytes.
    """
    Nb, H, W, Cin = x.shape
    kH, kW, _, Cout = w_flip_hwio.shape
    assert (kH, kW) == (4, 4)
    w_comb = jnp.concatenate(
        [w_flip_hwio[r::2, s::2] for r in (0, 1) for s in (0, 1)], axis=-1)
    xp = jnp.pad(x, ((0, 0), (1, 1), (1, 1), (0, 0)))
    y = conv2d(xp, w_comb, stride=1, pad=0)             # (Nb, H+1, W+1, 4*Cout)

    rows = []
    for r in (0, 1):
        cols = []
        for s in (0, 1):
            g = 2 * r + s
            cols.append(y[:, r:r + H, s:s + W, g * Cout:(g + 1) * Cout])
        rows.append(jnp.stack(cols, axis=3))            # (Nb, H, W, 2, Cout)
    out = jnp.stack(rows, axis=2)                       # (Nb, H, 2, W, 2, Cout)
    return out.reshape(Nb, 2 * H, 2 * W, Cout)


# ----------------------------------------------------------------------------
# Generator parameters + forward
# ----------------------------------------------------------------------------
def init_params(key, conv_dim, c_dim, repeat_num):
    keys = iter(jax.random.split(key, 128))

    def conv_w(kh, kw, cin, cout):
        scale = 1.0 / jnp.sqrt(float(kh * kw * cin))
        return scale * jax.random.normal(next(keys), (kh, kw, cin, cout),
                                         jnp.float32)

    def in_params(c):
        g = 1.0 + 0.1 * jax.random.normal(next(keys), (c,), jnp.float32)
        b = 0.1 * jax.random.normal(next(keys), (c,), jnp.float32)
        return g, b

    p = {}
    p['enc0_w'] = conv_w(7, 7, 3 + c_dim, conv_dim)
    p['enc0_g'], p['enc0_b'] = in_params(conv_dim)
    cur = conv_dim
    for i in range(2):
        p[f'down{i}_w'] = conv_w(4, 4, cur, cur * 2)
        p[f'down{i}_g'], p[f'down{i}_b'] = in_params(cur * 2)
        cur *= 2
    for r in range(repeat_num):
        p[f'res{r}_w1'] = conv_w(3, 3, cur, cur)
        p[f'res{r}_g1'], p[f'res{r}_b1'] = in_params(cur)
        p[f'res{r}_w2'] = conv_w(3, 3, cur, cur)
        p[f'res{r}_g2'], p[f'res{r}_b2'] = in_params(cur)
    for i in range(2):
        p[f'up{i}_w'] = conv_w(4, 4, cur, cur // 2)   # pre-flipped equiv conv
        p[f'up{i}_g'], p[f'up{i}_b'] = in_params(cur // 2)
        cur //= 2
    p['out_w'] = conv_w(7, 7, cur, 3)
    return p


def generator_forward(params, x, c, *, repeat_num):
    """x: (N,H,W,3) NHWC, c: (N, c_dim).  Returns (N,H,W,3)."""
    Nb, H, W, _ = x.shape
    c_map = jnp.broadcast_to(c[:, None, None, :], (Nb, H, W, c.shape[1]))
    h = jnp.concatenate([x, c_map], axis=-1)

    h = conv2d(h, params['enc0_w'], stride=1, pad=3)
    h = pallas_instance_norm(h, params['enc0_g'], params['enc0_b'], relu=True)

    for i in range(2):
        h = conv2d(h, params[f'down{i}_w'], stride=2, pad=1)
        h = pallas_instance_norm(h, params[f'down{i}_g'], params[f'down{i}_b'],
                                 relu=True)

    for r in range(repeat_num):
        y = conv2d(h, params[f'res{r}_w1'], stride=1, pad=1)
        y = pallas_instance_norm(y, params[f'res{r}_g1'], params[f'res{r}_b1'],
                                 relu=True)
        y = conv2d(y, params[f'res{r}_w2'], stride=1, pad=1)
        # second InstanceNorm of the block fused with the residual add
        h = pallas_instance_norm(y, params[f'res{r}_g2'], params[f'res{r}_b2'],
                                 relu=False, residual=h)

    for i in range(2):
        h = conv_transpose2d(h, params[f'up{i}_w'])
        h = pallas_instance_norm(h, params[f'up{i}_g'], params[f'up{i}_b'],
                                 relu=True)

    # final 7x7 conv with tanh fused into the matmul writeback
    return conv2d(h, params['out_w'], stride=1, pad=3, activation="tanh")


# ----------------------------------------------------------------------------
if __name__ == "__main__":
    conv_dim, c_dim, repeat_num = 16, 4, 2
    batch, height, width = 2, 16, 16

    key = jax.random.PRNGKey(0)
    kp, kx, kc = jax.random.split(key, 3)
    params = init_params(kp, conv_dim, c_dim, repeat_num)
    x = jax.random.normal(kx, (batch, height, width, 3), jnp.float32)
    c = jax.random.normal(kc, (batch, c_dim), jnp.float32)

    fwd = jax.jit(functools.partial(generator_forward, repeat_num=repeat_num))
    out = jax.block_until_ready(fwd(params, x, c))

    assert out.shape == (batch, height, width, 3), out.shape
    assert jnp.all(jnp.isfinite(out))
    print("KERNEL_OK")
</pallas_src>

<mosaic_0001>
module attributes {stable_mosaic.version = 11 : i64} {
  func.func @_matmul_kernel(%arg0: i32, %arg1: i32, %arg2: i32, %arg3: memref<512x384xbf16, #tpu.memory_space<vmem>>, %arg4: memref<384x128xbf16, #tpu.memory_space<vmem>>, %arg5: memref<512x128xf32, #tpu.memory_space<vmem>>, %arg6: memref<512x128xf32, #tpu.memory_space<vmem>>) attributes {dimension_semantics = [#tpu.dimension_semantics<parallel>, #tpu.dimension_semantics<parallel>, #tpu.dimension_semantics<arbitrary>], iteration_bounds = array<i64: 1, 1, 1>, scalar_prefetch = 0 : i64, scratch_operands = 1 : i64, tpu.core_type = #tpu.core_type<tc>, window_params = [{transform_indices = @transform_0, window_bounds = array<i64: 512, 384>}, {transform_indices = @transform_1, window_bounds = array<i64: 384, 128>}, {transform_indices = @transform_2, window_bounds = array<i64: 512, 128>}]} {
    %c0_i32 = arith.constant 0 : i32
    %0 = arith.cmpi eq, %arg2, %c0_i32 : i32
    %1 = arith.extui %0 : i1 to i32
    %c0_i32_0 = arith.constant 0 : i32
    %2 = arith.cmpi ne, %1, %c0_i32_0 : i32
    scf.if %2 {
      %cst_10 = arith.constant 0.000000e+00 : f32
      %12 = vector.broadcast %cst_10 : f32 to vector<512x128xf32>
      %c0_11 = arith.constant 0 : index
      %c0_12 = arith.constant 0 : index
      %13 = vector.load %arg6[%c0_11, %c0_12] : memref<512x128xf32, #tpu.memory_space<vmem>>, vector<512x128xf32>
      tpu.vector_store %arg6[%c0_11, %c0_12], %12 {strides = array<i32>} : memref<512x128xf32, #tpu.memory_space<vmem>>, vector<512x128xf32>,
    } else {
    }
    %c0 = arith.constant 0 : index
    %c0_1 = arith.constant 0 : index
    %3 = vector.load %arg6[%c0, %c0_1] : memref<512x128xf32, #tpu.memory_space<vmem>>, vector<512x128xf32>
    %c0_2 = arith.constant 0 : index
    %c0_3 = arith.constant 0 : index
    %4 = vector.load %arg3[%c0_2, %c0_3] : memref<512x384xbf16, #tpu.memory_space<vmem>>, vector<512x384xbf16>
    %c0_4 = arith.constant 0 : index
    %c0_5 = arith.constant 0 : index
    %5 = vector.load %arg4[%c0_4, %c0_5] : memref<384x128xbf16, #tpu.memory_space<vmem>>, vector<384x128xbf16>
    %cst = arith.constant dense<0.000000e+00> : vector<512x128xf32>
    %6 = tpu.matmul %4, %5, %cst {dimension_numbers = #tpu.dot_dimension_numbers<[1], [0], [0], [1], [0, 0, 1, 1], [], []>} : vector<512x384xbf16>, vector<384x128xbf16>, vector<512x128xf32> -> vector<512x128xf32>
    %7 = arith.addf %3, %6 : vector<512x128xf32>
    %c0_6 = arith.constant 0 : index
    %c0_7 = arith.constant 0 : index
    %8 = vector.load %arg6[%c0_6, %c0_7] : memref<512x128xf32, #tpu.memory_space<vmem>>, vector<512x128xf32>
    tpu.vector_store %arg6[%c0_6, %c0_7], %7 {strides = array<i32>} : memref<512x128xf32, #tpu.memory_space<vmem>>, vector<512x128xf32>,
    %c0_i32_8 = arith.constant 0 : i32
    %9 = arith.cmpi eq, %arg2, %c0_i32_8 : i32
    %10 = arith.extui %9 : i1 to i32
    %c0_i32_9 = arith.constant 0 : i32
    %11 = arith.cmpi ne, %10, %c0_i32_9 : i32
    scf.if %11 {
      %c0_10 = arith.constant 0 : index
      %c0_11 = arith.constant 0 : index
      %12 = vector.load %arg6[%c0_10, %c0_11] : memref<512x128xf32, #tpu.memory_space<vmem>>, vector<512x128xf32>
      %c0_12 = arith.constant 0 : index
      %c0_13 = arith.constant 0 : index
      %13 = vector.load %arg5[%c0_12, %c0_13] : memref<512x128xf32, #tpu.memory_space<vmem>>, vector<512x128xf32>
      tpu.vector_store %arg5[%c0_12, %c0_13], %12 {strides = array<i32>} : memref<512x128xf32, #tpu.memory_space<vmem>>, vector<512x128xf32>,
    } else {
    }
    return
  }
  func.func @transform_0(%arg0: i32, %arg1: i32, %arg2: i32) -> (i32, i32) {
    %c0_i32 = arith.constant 0 : i32
    return %arg0, %arg2 : i32, i32
  }
  func.func @transform_1(%arg0: i32, %arg1: i32, %arg2: i32) -> (i32, i32) {
    %c0_i32 = arith.constant 0 : i32
    return %arg2, %arg1 : i32, i32
  }
  func.func @transform_2(%arg0: i32, %arg1: i32, %arg2: i32) -> (i32, i32) {
    %c0_i32 = arith.constant 0 : i32
    return %arg0, %arg1 : i32, i32
  }
}

module attributes {stable_mosaic.version = 11 : i64} {
  func.func @_inorm_kernel(%arg0: i32, %arg1: i32, %arg2: memref<1x256x16xf32, #tpu.memory_space<vmem>>, %arg3: memref<1x16xf32, #tpu.memory_space<vmem>>, %arg4: memref<1x16xf32, #tpu.memory_space<vmem>>, %arg5: memref<1x256x16xf32, #tpu.memory_space<vmem>>) attributes {dimension_semantics = [#tpu.dimension_semantics<parallel>, #tpu.dimension_semantics<parallel>], iteration_bounds = array<i64: 2, 1>, scalar_prefetch = 0 : i64, scratch_operands = 0 : i64, tpu.core_type = #tpu.core_type<tc>, window_params = [{transform_indices = @transform_0, window_bounds = array<i64: 1, 256, 16>}, {transform_indices = @transform_1, window_bounds = array<i64: 1, 16>}, {transform_indices = @transform_2, window_bounds = array<i64: 1, 16>}, {transform_indices = @transform_3, window_bounds = array<i64: 1, 256, 16>}]} {
    %c0 = arith.constant 0 : index
    %c0_0 = arith.constant 0 : index
    %c0_1 = arith.constant 0 : index
    %0 = vector.load %arg2[%c0, %c0_0, %c0_1] : memref<1x256x16xf32, #tpu.memory_space<vmem>>, vector<1x256x16xf32>
    %cst = arith.constant dense<0.000000e+00> : vector<1x16xf32>
    %1 = vector.multi_reduction <add>, %0, %cst [1] : vector<1x256x16xf32> to vector<1x16xf32>
    %2 = vector.shape_cast %1 : vector<1x16xf32> to vector<1x1x16xf32>
    %cst_2 = arith.constant 3.906250e-03 : f32
    %3 = vector.broadcast %cst_2 : f32 to vector<1x1x16xf32>
    %4 = arith.mulf %2, %3 : vector<1x1x16xf32>
    %5 = arith.mulf %0, %0 : vector<1x256x16xf32>
    %cst_3 = arith.constant dense<0.000000e+00> : vector<1x16xf32>
    %6 = vector.multi_reduction <add>, %5, %cst_3 [1] : vector<1x256x16xf32> to vector<1x16xf32>
    %7 = vector.shape_cast %6 : vector<1x16xf32> to vector<1x1x16xf32>
    %cst_4 = arith.constant 3.906250e-03 : f32
    %8 = vector.broadcast %cst_4 : f32 to vector<1x1x16xf32>
    %9 = arith.mulf %7, %8 : vector<1x1x16xf32>
    %10 = arith.mulf %4, %4 : vector<1x1x16xf32>
    %11 = arith.subf %9, %10 : vector<1x1x16xf32>
    %cst_5 = arith.constant 9.99999974E-6 : f32
    %12 = vector.broadcast %cst_5 : f32 to vector<1x1x16xf32>
    %13 = arith.addf %11, %12 : vector<1x1x16xf32>
    %14 = math.rsqrt %13 : vector<1x1x16xf32>
    %c0_6 = arith.constant 0 : index
    %c0_7 = arith.constant 0 : index
    %15 = vector.load %arg3[%c0_6, %c0_7] : memref<1x16xf32, #tpu.memory_space<vmem>>, vector<1x16xf32>
    %16 = vector.shape_cast %15 : vector<1x16xf32> to vector<1x1x16xf32>
    %c0_8 = arith.constant 0 : index
    %c0_9 = arith.constant 0 : index
    %17 = vector.load %arg4[%c0_8, %c0_9] : memref<1x16xf32, #tpu.memory_space<vmem>>, vector<1x16xf32>
    %18 = vector.shape_cast %17 : vector<1x16xf32> to vector<1x1x16xf32>
    %19 = vector.broadcast %4 : vector<1x1x16xf32> to vector<1x256x16xf32>
    %20 = arith.subf %0, %19 : vector<1x256x16xf32>
    %21 = vector.broadcast %14 : vector<1x1x16xf32> to vector<1x256x16xf32>
    %22 = arith.mulf %20, %21 : vector<1x256x16xf32>
    %23 = vector.broadcast %16 : vector<1x1x16xf32> to vector<1x256x16xf32>
    %24 = arith.mulf %22, %23 : vector<1x256x16xf32>
    %25 = vector.broadcast %18 : vector<1x1x16xf32> to vector<1x256x16xf32>
    %26 = arith.addf %24, %25 : vector<1x256x16xf32>
    %cst_10 = arith.constant 0.000000e+00 : f32
    %27 = vector.broadcast %cst_10 : f32 to vector<1x256x16xf32>
    %28 = arith.maximumf %26, %27 : vector<1x256x16xf32>
    %c0_11 = arith.constant 0 : index
    %c0_12 = arith.constant 0 : index
    %c0_13 = arith.constant 0 : index
    %29 = vector.load %arg5[%c0_11, %c0_12, %c0_13] : memref<1x256x16xf32, #tpu.memory_space<vmem>>, vector<1x256x16xf32>
    tpu.vector_store %arg5[%c0_11, %c0_12, %c0_13], %28 {strides = array<i32>} : memref<1x256x16xf32, #tpu.memory_space<vmem>>, vector<1x256x16xf32>,
    return
  }
  func.func @transform_0(%arg0: i32, %arg1: i32) -> (i32, i32, i32) {
    %c0_i32 = arith.constant 0 : i32
    %c0_i32_0 = arith.constant 0 : i32
    return %arg0, %c0_i32, %arg1 : i32, i32, i32
  }
  func.func @transform_1(%arg0: i32, %arg1: i32) -> (i32, i32) {
    %c0_i32 = arith.constant 0 : i32
    %c0_i32_0 = arith.constant 0 : i32
    return %c0_i32, %arg1 : i32, i32
  }
  func.func @transform_2(%arg0: i32, %arg1: i32) -> (i32, i32) {
    %c0_i32 = arith.constant 0 : i32
    %c0_i32_0 = arith.constant 0 : i32
    return %c0_i32, %arg1 : i32, i32
  }
  func.func @transform_3(%arg0: i32, %arg1: i32) -> (i32, i32, i32) {
    %c0_i32 = arith.constant 0 : i32
    %c0_i32_0 = arith.constant 0 : i32
    return %arg0, %c0_i32, %arg1 : i32, i32, i32
  }
}

module attributes {stable_mosaic.version = 11 : i64} {
  func.func @_inorm_kernel(%arg0: i32, %arg1: i32, %arg2: memref<1x64x32xf32, #tpu.memory_space<vmem>>, %arg3: memref<1x32xf32, #tpu.memory_space<vmem>>, %arg4: memref<1x32xf32, #tpu.memory_space<vmem>>, %arg5: memref<1x64x32xf32, #tpu.memory_space<vmem>>) attributes {dimension_semantics = [#tpu.dimension_semantics<parallel>, #tpu.dimension_semantics<parallel>], iteration_bounds = array<i64: 2, 1>, scalar_prefetch = 0 : i64, scratch_operands = 0 : i64, tpu.core_type = #tpu.core_type<tc>, window_params = [{transform_indices = @transform_0, window_bounds = array<i64: 1, 64, 32>}, {transform_indices = @transform_1, window_bounds = array<i64: 1, 32>}, {transform_indices = @transform_2, window_bounds = array<i64: 1, 32>}, {transform_indices = @transform_3, window_bounds = array<i64: 1, 64, 32>}]} {
    %c0 = arith.constant 0 : index
    %c0_0 = arith.constant 0 : index
    %c0_1 = arith.constant 0 : index
    %0 = vector.load %arg2[%c0, %c0_0, %c0_1] : memref<1x64x32xf32, #tpu.memory_space<vmem>>, vector<1x64x32xf32>
    %cst = arith.constant dense<0.000000e+00> : vector<1x32xf32>
    %1 = vector.multi_reduction <add>, %0, %cst [1] : vector<1x64x32xf32> to vector<1x32xf32>
    %2 = vector.shape_cast %1 : vector<1x32xf32> to vector<1x1x32xf32>
    %cst_2 = arith.constant 1.562500e-02 : f32
    %3 = vector.broadcast %cst_2 : f32 to vector<1x1x32xf32>
    %4 = arith.mulf %2, %3 : vector<1x1x32xf32>
    %5 = arith.mulf %0, %0 : vector<1x64x32xf32>
    %cst_3 = arith.constant dense<0.000000e+00> : vector<1x32xf32>
    %6 = vector.multi_reduction <add>, %5, %cst_3 [1] : vector<1x64x32xf32> to vector<1x32xf32>
    %7 = vector.shape_cast %6 : vector<1x32xf32> to vector<1x1x32xf32>
    %cst_4 = arith.constant 1.562500e-02 : f32
    %8 = vector.broadcast %cst_4 : f32 to vector<1x1x32xf32>
    %9 = arith.mulf %7, %8 : vector<1x1x32xf32>
    %10 = arith.mulf %4, %4 : vector<1x1x32xf32>
    %11 = arith.subf %9, %10 : vector<1x1x32xf32>
    %cst_5 = arith.constant 9.99999974E-6 : f32
    %12 = vector.broadcast %cst_5 : f32 to vector<1x1x32xf32>
    %13 = arith.addf %11, %12 : vector<1x1x32xf32>
    %14 = math.rsqrt %13 : vector<1x1x32xf32>
    %c0_6 = arith.constant 0 : index
    %c0_7 = arith.constant 0 : index
    %15 = vector.load %arg3[%c0_6, %c0_7] : memref<1x32xf32, #tpu.memory_space<vmem>>, vector<1x32xf32>
    %16 = vector.shape_cast %15 : vector<1x32xf32> to vector<1x1x32xf32>
    %c0_8 = arith.constant 0 : index
    %c0_9 = arith.constant 0 : index
    %17 = vector.load %arg4[%c0_8, %c0_9] : memref<1x32xf32, #tpu.memory_space<vmem>>, vector<1x32xf32>
    %18 = vector.shape_cast %17 : vector<1x32xf32> to vector<1x1x32xf32>
    %19 = vector.broadcast %4 : vector<1x1x32xf32> to vector<1x64x32xf32>
    %20 = arith.subf %0, %19 : vector<1x64x32xf32>
    %21 = vector.broadcast %14 : vector<1x1x32xf32> to vector<1x64x32xf32>
    %22 = arith.mulf %20, %21 : vector<1x64x32xf32>
    %23 = vector.broadcast %16 : vector<1x1x32xf32> to vector<1x64x32xf32>
    %24 = arith.mulf %22, %23 : vector<1x64x32xf32>
    %25 = vector.broadcast %18 : vector<1x1x32xf32> to vector<1x64x32xf32>
    %26 = arith.addf %24, %25 : vector<1x64x32xf32>
    %cst_10 = arith.constant 0.000000e+00 : f32
    %27 = vector.broadcast %cst_10 : f32 to vector<1x64x32xf32>
    %28 = arith.maximumf %26, %27 : vector<1x64x32xf32>
    %c0_11 = arith.constant 0 : index
    %c0_12 = arith.constant 0 : index
    %c0_13 = arith.constant 0 : index
    %29 = vector.load %arg5[%c0_11, %c0_12, %c0_13] : memref<1x64x32xf32, #tpu.memory_space<vmem>>, vector<1x64x32xf32>
    tpu.vector_store %arg5[%c0_11, %c0_12, %c0_13], %28 {strides = array<i32>} : memref<1x64x32xf32, #tpu.memory_space<vmem>>, vector<1x64x32xf32>,
    return
  }
  func.func @transform_0(%arg0: i32, %arg1: i32) -> (i32, i32, i32) {
    %c0_i32 = arith.constant 0 : i32
    %c0_i32_0 = arith.constant 0 : i32
    return %arg0, %c0_i32, %arg1 : i32, i32, i32
  }
  func.func @transform_1(%arg0: i32, %arg1: i32) -> (i32, i32) {
    %c0_i32 = arith.constant 0 : i32
    %c0_i32_0 = arith.constant 0 : i32
    return %c0_i32, %arg1 : i32, i32
  }
  func.func @transform_2(%arg0: i32, %arg1: i32) -> (i32, i32) {
    %c0_i32 = arith.constant 0 : i32
    %c0_i32_0 = arith.constant 0 : i32
    return %c0_i32, %arg1 : i32, i32
  }
  func.func @transform_3(%arg0: i32, %arg1: i32) -> (i32, i32, i32) {
    %c0_i32 = arith.constant 0 : i32
    %c0_i32_0 = arith.constant 0 : i32
    return %arg0, %c0_i32, %arg1 : i32, i32, i32
  }
}

module attributes {stable_mosaic.version = 11 : i64} {
  func.func @_matmul_kernel(%arg0: i32, %arg1: i32, %arg2: i32, %arg3: memref<128x256xbf16, #tpu.memory_space<vmem>>, %arg4: memref<256x128xbf16, #tpu.memory_space<vmem>>, %arg5: memref<128x128xf32, #tpu.memory_space<vmem>>, %arg6: memref<128x128xf32, #tpu.memory_space<vmem>>) attributes {dimension_semantics = [#tpu.dimension_semantics<parallel>, #tpu.dimension_semantics<parallel>, #tpu.dimension_semantics<arbitrary>], iteration_bounds = array<i64: 1, 1, 1>, scalar_prefetch = 0 : i64, scratch_operands = 1 : i64, tpu.core_type = #tpu.core_type<tc>, window_params = [{transform_indices = @transform_0, window_bounds = array<i64: 128, 256>}, {transform_indices = @transform_1, window_bounds = array<i64: 256, 128>}, {transform_indices = @transform_2, window_bounds = array<i64: 128, 128>}]} {
    %c0_i32 = arith.constant 0 : i32
    %0 = arith.cmpi eq, %arg2, %c0_i32 : i32
    %1 = arith.extui %0 : i1 to i32
    %c0_i32_0 = arith.constant 0 : i32
    %2 = arith.cmpi ne, %1, %c0_i32_0 : i32
    scf.if %2 {
      %cst_10 = arith.constant 0.000000e+00 : f32
      %12 = vector.broadcast %cst_10 : f32 to vector<128x128xf32>
      %c0_11 = arith.constant 0 : index
      %c0_12 = arith.constant 0 : index
      %13 = vector.load %arg6[%c0_11, %c0_12] : memref<128x128xf32, #tpu.memory_space<vmem>>, vector<128x128xf32>
      tpu.vector_store %arg6[%c0_11, %c0_12], %12 {strides = array<i32>} : memref<128x128xf32, #tpu.memory_space<vmem>>, vector<128x128xf32>,
    } else {
    }
    %c0 = arith.constant 0 : index
    %c0_1 = arith.constant 0 : index
    %3 = vector.load %arg6[%c0, %c0_1] : memref<128x128xf32, #tpu.memory_space<vmem>>, vector<128x128xf32>
    %c0_2 = arith.constant 0 : index
    %c0_3 = arith.constant 0 : index
    %4 = vector.load %arg3[%c0_2, %c0_3] : memref<128x256xbf16, #tpu.memory_space<vmem>>, vector<128x256xbf16>
    %c0_4 = arith.constant 0 : index
    %c0_5 = arith.constant 0 : index
    %5 = vector.load %arg4[%c0_4, %c0_5] : memref<256x128xbf16, #tpu.memory_space<vmem>>, vector<256x128xbf16>
    %cst = arith.constant dense<0.000000e+00> : vector<128x128xf32>
    %6 = tpu.matmul %4, %5, %cst {dimension_numbers = #tpu.dot_dimension_numbers<[1], [0], [0], [1], [0, 0, 1, 1], [], []>} : vector<128x256xbf16>, vector<256x128xbf16>, vector<128x128xf32> -> vector<128x128xf32>
    %7 = arith.addf %3, %6 : vector<128x128xf32>
    %c0_6 = arith.constant 0 : index
    %c0_7 = arith.constant 0 : index
    %8 = vector.load %arg6[%c0_6, %c0_7] : memref<128x128xf32, #tpu.memory_space<vmem>>, vector<128x128xf32>
    tpu.vector_store %arg6[%c0_6, %c0_7], %7 {strides = array<i32>} : memref<128x128xf32, #tpu.memory_space<vmem>>, vector<128x128xf32>,
    %c0_i32_8 = arith.constant 0 : i32
    %9 = arith.cmpi eq, %arg2, %c0_i32_8 : i32
    %10 = arith.extui %9 : i1 to i32
    %c0_i32_9 = arith.constant 0 : i32
    %11 = arith.cmpi ne, %10, %c0_i32_9 : i32
    scf.if %11 {
      %c0_10 = arith.constant 0 : index
      %c0_11 = arith.constant 0 : index
      %12 = vector.load %arg6[%c0_10, %c0_11] : memref<128x128xf32, #tpu.memory_space<vmem>>, vector<128x128xf32>
      %c0_12 = arith.constant 0 : index
      %c0_13 = arith.constant 0 : index
      %13 = vector.load %arg5[%c0_12, %c0_13] : memref<128x128xf32, #tpu.memory_space<vmem>>, vector<128x128xf32>
      tpu.vector_store %arg5[%c0_12, %c0_13], %12 {strides = array<i32>} : memref<128x128xf32, #tpu.memory_space<vmem>>, vector<128x128xf32>,
    } else {
    }
    return
  }
  func.func @transform_0(%arg0: i32, %arg1: i32, %arg2: i32) -> (i32, i32) {
    %c0_i32 = arith.constant 0 : i32
    return %arg0, %arg2 : i32, i32
  }
  func.func @transform_1(%arg0: i32, %arg1: i32, %arg2: i32) -> (i32, i32) {
    %c0_i32 = arith.constant 0 : i32
    return %arg2, %arg1 : i32, i32
  }
  func.func @transform_2(%arg0: i32, %arg1: i32, %arg2: i32) -> (i32, i32) {
    %c0_i32 = arith.constant 0 : i32
    return %arg0, %arg1 : i32, i32
  }
}

module attributes {stable_mosaic.version = 11 : i64} {
  func.func @_inorm_kernel(%arg0: i32, %arg1: i32, %arg2: memref<1x16x64xf32, #tpu.memory_space<vmem>>, %arg3: memref<1x64xf32, #tpu.memory_space<vmem>>, %arg4: memref<1x64xf32, #tpu.memory_space<vmem>>, %arg5: memref<1x16x64xf32, #tpu.memory_space<vmem>>) attributes {dimension_semantics = [#tpu.dimension_semantics<parallel>, #tpu.dimension_semantics<parallel>], iteration_bounds = array<i64: 2, 1>, scalar_prefetch = 0 : i64, scratch_operands = 0 : i64, tpu.core_type = #tpu.core_type<tc>, window_params = [{transform_indices = @transform_0, window_bounds = array<i64: 1, 16, 64>}, {transform_indices = @transform_1, window_bounds = array<i64: 1, 64>}, {transform_indices = @transform_2, window_bounds = array<i64: 1, 64>}, {transform_indices = @transform_3, window_bounds = array<i64: 1, 16, 64>}]} {
    %c0 = arith.constant 0 : index
    %c0_0 = arith.constant 0 : index
    %c0_1 = arith.constant 0 : index
    %0 = vector.load %arg2[%c0, %c0_0, %c0_1] : memref<1x16x64xf32, #tpu.memory_space<vmem>>, vector<1x16x64xf32>
    %cst = arith.constant dense<0.000000e+00> : vector<1x64xf32>
    %1 = vector.multi_reduction <add>, %0, %cst [1] : vector<1x16x64xf32> to vector<1x64xf32>
    %2 = vector.shape_cast %1 : vector<1x64xf32> to vector<1x1x64xf32>
    %cst_2 = arith.constant 6.250000e-02 : f32
    %3 = vector.broadcast %cst_2 : f32 to vector<1x1x64xf32>
    %4 = arith.mulf %2, %3 : vector<1x1x64xf32>
    %5 = arith.mulf %0, %0 : vector<1x16x64xf32>
    %cst_3 = arith.constant dense<0.000000e+00> : vector<1x64xf32>
    %6 = vector.multi_reduction <add>, %5, %cst_3 [1] : vector<1x16x64xf32> to vector<1x64xf32>
    %7 = vector.shape_cast %6 : vector<1x64xf32> to vector<1x1x64xf32>
    %cst_4 = arith.constant 6.250000e-02 : f32
    %8 = vector.broadcast %cst_4 : f32 to vector<1x1x64xf32>
    %9 = arith.mulf %7, %8 : vector<1x1x64xf32>
    %10 = arith.mulf %4, %4 : vector<1x1x64xf32>
    %11 = arith.subf %9, %10 : vector<1x1x64xf32>
    %cst_5 = arith.constant 9.99999974E-6 : f32
    %12 = vector.broadcast %cst_5 : f32 to vector<1x1x64xf32>
    %13 = arith.addf %11, %12 : vector<1x1x64xf32>
    %14 = math.rsqrt %13 : vector<1x1x64xf32>
    %c0_6 = arith.constant 0 : index
    %c0_7 = arith.constant 0 : index
    %15 = vector.load %arg3[%c0_6, %c0_7] : memref<1x64xf32, #tpu.memory_space<vmem>>, vector<1x64xf32>
    %16 = vector.shape_cast %15 : vector<1x64xf32> to vector<1x1x64xf32>
    %c0_8 = arith.constant 0 : index
    %c0_9 = arith.constant 0 : index
    %17 = vector.load %arg4[%c0_8, %c0_9] : memref<1x64xf32, #tpu.memory_space<vmem>>, vector<1x64xf32>
    %18 = vector.shape_cast %17 : vector<1x64xf32> to vector<1x1x64xf32>
    %19 = vector.broadcast %4 : vector<1x1x64xf32> to vector<1x16x64xf32>
    %20 = arith.subf %0, %19 : vector<1x16x64xf32>
    %21 = vector.broadcast %14 : vector<1x1x64xf32> to vector<1x16x64xf32>
    %22 = arith.mulf %20, %21 : vector<1x16x64xf32>
    %23 = vector.broadcast %16 : vector<1x1x64xf32> to vector<1x16x64xf32>
    %24 = arith.mulf %22, %23 : vector<1x16x64xf32>
    %25 = vector.broadcast %18 : vector<1x1x64xf32> to vector<1x16x64xf32>
    %26 = arith.addf %24, %25 : vector<1x16x64xf32>
    %cst_10 = arith.constant 0.000000e+00 : f32
    %27 = vector.broadcast %cst_10 : f32 to vector<1x16x64xf32>
    %28 = arith.maximumf %26, %27 : vector<1x16x64xf32>
    %c0_11 = arith.constant 0 : index
    %c0_12 = arith.constant 0 : index
    %c0_13 = arith.constant 0 : index
    %29 = vector.load %arg5[%c0_11, %c0_12, %c0_13] : memref<1x16x64xf32, #tpu.memory_space<vmem>>, vector<1x16x64xf32>
    tpu.vector_store %arg5[%c0_11, %c0_12, %c0_13], %28 {strides = array<i32>} : memref<1x16x64xf32, #tpu.memory_space<vmem>>, vector<1x16x64xf32>,
    return
  }
  func.func @transform_0(%arg0: i32, %arg1: i32) -> (i32, i32, i32) {
    %c0_i32 = arith.constant 0 : i32
    %c0_i32_0 = arith.constant 0 : i32
    return %arg0, %c0_i32, %arg1 : i32, i32, i32
  }
  func.func @transform_1(%arg0: i32, %arg1: i32) -> (i32, i32) {
    %c0_i32 = arith.constant 0 : i32
    %c0_i32_0 = arith.constant 0 : i32
    return %c0_i32, %arg1 : i32, i32
  }
  func.func @transform_2(%arg0: i32, %arg1: i32) -> (i32, i32) {
    %c0_i32 = arith.constant 0 : i32
    %c0_i32_0 = arith.constant 0 : i32
    return %c0_i32, %arg1 : i32, i32
  }
  func.func @transform_3(%arg0: i32, %arg1: i32) -> (i32, i32, i32) {
    %c0_i32 = arith.constant 0 : i32
    %c0_i32_0 = arith.constant 0 : i32
    return %arg0, %c0_i32, %arg1 : i32, i32, i32
  }
}

module attributes {stable_mosaic.version = 11 : i64} {
  func.func @_matmul_kernel(%arg0: i32, %arg1: i32, %arg2: i32, %arg3: memref<32x512xbf16, #tpu.memory_space<vmem>>, %arg4: memref<512x128xbf16, #tpu.memory_space<vmem>>, %arg5: memref<32x128xf32, #tpu.memory_space<vmem>>, %arg6: memref<32x128xf32, #tpu.memory_space<vmem>>) attributes {dimension_semantics = [#tpu.dimension_semantics<parallel>, #tpu.dimension_semantics<parallel>, #tpu.dimension_semantics<arbitrary>], iteration_bounds = array<i64: 1, 1, 1>, scalar_prefetch = 0 : i64, scratch_operands = 1 : i64, tpu.core_type = #tpu.core_type<tc>, window_params = [{transform_indices = @transform_0, window_bounds = array<i64: 32, 512>}, {transform_indices = @transform_1, window_bounds = array<i64: 512, 128>}, {transform_indices = @transform_2, window_bounds = array<i64: 32, 128>}]} {
    %c0_i32 = arith.constant 0 : i32
    %0 = arith.cmpi eq, %arg2, %c0_i32 : i32
    %1 = arith.extui %0 : i1 to i32
    %c0_i32_0 = arith.constant 0 : i32
    %2 = arith.cmpi ne, %1, %c0_i32_0 : i32
    scf.if %2 {
      %cst_10 = arith.constant 0.000000e+00 : f32
      %12 = vector.broadcast %cst_10 : f32 to vector<32x128xf32>
      %c0_11 = arith.constant 0 : index
      %c0_12 = arith.constant 0 : index
      %13 = vector.load %arg6[%c0_11, %c0_12] : memref<32x128xf32, #tpu.memory_space<vmem>>, vector<32x128xf32>
      tpu.vector_store %arg6[%c0_11, %c0_12], %12 {strides = array<i32>} : memref<32x128xf32, #tpu.memory_space<vmem>>, vector<32x128xf32>,
    } else {
    }
    %c0 = arith.constant 0 : index
    %c0_1 = arith.constant 0 : index
    %3 = vector.load %arg6[%c0, %c0_1] : memref<32x128xf32, #tpu.memory_space<vmem>>, vector<32x128xf32>
    %c0_2 = arith.constant 0 : index
    %c0_3 = arith.constant 0 : index
    %4 = vector.load %arg3[%c0_2, %c0_3] : memref<32x512xbf16, #tpu.memory_space<vmem>>, vector<32x512xbf16>
    %c0_4 = arith.constant 0 : index
    %c0_5 = arith.constant 0 : index
    %5 = vector.load %arg4[%c0_4, %c0_5] : memref<512x128xbf16, #tpu.memory_space<vmem>>, vector<512x128xbf16>
    %cst = arith.constant dense<0.000000e+00> : vector<32x128xf32>
    %6 = tpu.matmul %4, %5, %cst {dimension_numbers = #tpu.dot_dimension_numbers<[1], [0], [0], [1], [0, 0, 1, 1], [], []>} : vector<32x512xbf16>, vector<512x128xbf16>, vector<32x128xf32> -> vector<32x128xf32>
    %7 = arith.addf %3, %6 : vector<32x128xf32>
    %c0_6 = arith.constant 0 : index
    %c0_7 = arith.constant 0 : index
    %8 = vector.load %arg6[%c0_6, %c0_7] : memref<32x128xf32, #tpu.memory_space<vmem>>, vector<32x128xf32>
    tpu.vector_store %arg6[%c0_6, %c0_7], %7 {strides = array<i32>} : memref<32x128xf32, #tpu.memory_space<vmem>>, vector<32x128xf32>,
    %c0_i32_8 = arith.constant 0 : i32
    %9 = arith.cmpi eq, %arg2, %c0_i32_8 : i32
    %10 = arith.extui %9 : i1 to i32
    %c0_i32_9 = arith.constant 0 : i32
    %11 = arith.cmpi ne, %10, %c0_i32_9 : i32
    scf.if %11 {
      %c0_10 = arith.constant 0 : index
      %c0_11 = arith.constant 0 : index
      %12 = vector.load %arg6[%c0_10, %c0_11] : memref<32x128xf32, #tpu.memory_space<vmem>>, vector<32x128xf32>
      %c0_12 = arith.constant 0 : index
      %c0_13 = arith.constant 0 : index
      %13 = vector.load %arg5[%c0_12, %c0_13] : memref<32x128xf32, #tpu.memory_space<vmem>>, vector<32x128xf32>
      tpu.vector_store %arg5[%c0_12, %c0_13], %12 {strides = array<i32>} : memref<32x128xf32, #tpu.memory_space<vmem>>, vector<32x128xf32>,
    } else {
    }
    return
  }
  func.func @transform_0(%arg0: i32, %arg1: i32, %arg2: i32) -> (i32, i32) {
    %c0_i32 = arith.constant 0 : i32
    return %arg0, %arg2 : i32, i32
  }
  func.func @transform_1(%arg0: i32, %arg1: i32, %arg2: i32) -> (i32, i32) {
    %c0_i32 = arith.constant 0 : i32
    return %arg2, %arg1 : i32, i32
  }
  func.func @transform_2(%arg0: i32, %arg1: i32, %arg2: i32) -> (i32, i32) {
    %c0_i32 = arith.constant 0 : i32
    return %arg0, %arg1 : i32, i32
  }
}

module attributes {stable_mosaic.version = 11 : i64} {
  func.func @_matmul_kernel(%arg0: i32, %arg1: i32, %arg2: i32, %arg3: memref<32x128xbf16, #tpu.memory_space<vmem>>, %arg4: memref<128x128xbf16, #tpu.memory_space<vmem>>, %arg5: memref<32x128xf32, #tpu.memory_space<vmem>>, %arg6: memref<32x128xf32, #tpu.memory_space<vmem>>) attributes {dimension_semantics = [#tpu.dimension_semantics<parallel>, #tpu.dimension_semantics<parallel>, #tpu.dimension_semantics<arbitrary>], iteration_bounds = array<i64: 1, 1, 5>, scalar_prefetch = 0 : i64, scratch_operands = 1 : i64, tpu.core_type = #tpu.core_type<tc>, window_params = [{transform_indices = @transform_0, window_bounds = array<i64: 32, 128>}, {transform_indices = @transform_1, window_bounds = array<i64: 128, 128>}, {transform_indices = @transform_2, window_bounds = array<i64: 32, 128>}]} {
    %c0_i32 = arith.constant 0 : i32
    %0 = arith.cmpi eq, %arg2, %c0_i32 : i32
    %1 = arith.extui %0 : i1 to i32
    %c0_i32_0 = arith.constant 0 : i32
    %2 = arith.cmpi ne, %1, %c0_i32_0 : i32
    scf.if %2 {
      %cst_9 = arith.constant 0.000000e+00 : f32
      %12 = vector.broadcast %cst_9 : f32 to vector<32x128xf32>
      %c0_10 = arith.constant 0 : index
      %c0_11 = arith.constant 0 : index
      %13 = vector.load %arg6[%c0_10, %c0_11] : memref<32x128xf32, #tpu.memory_space<vmem>>, vector<32x128xf32>
      tpu.vector_store %arg6[%c0_10, %c0_11], %12 {strides = array<i32>} : memref<32x128xf32, #tpu.memory_space<vmem>>, vector<32x128xf32>,
    } else {
    }
    %c0 = arith.constant 0 : index
    %c0_1 = arith.constant 0 : index
    %3 = vector.load %arg6[%c0, %c0_1] : memref<32x128xf32, #tpu.memory_space<vmem>>, vector<32x128xf32>
    %c0_2 = arith.constant 0 : index
    %c0_3 = arith.constant 0 : index
    %4 = vector.load %arg3[%c0_2, %c0_3] : memref<32x128xbf16, #tpu.memory_space<vmem>>, vector<32x128xbf16>
    %c0_4 = arith.constant 0 : index
    %c0_5 = arith.constant 0 : index
    %5 = vector.load %arg4[%c0_4, %c0_5] : memref<128x128xbf16, #tpu.memory_space<vmem>>, vector<128x128xbf16>
    %cst = arith.constant dense<0.000000e+00> : vector<32x128xf32>
    %6 = tpu.matmul %4, %5, %cst {dimension_numbers = #tpu.dot_dimension_numbers<[1], [0], [0], [1], [0, 0, 1, 1], [], []>} : vector<32x128xbf16>, vector<128x128xbf16>, vector<32x128xf32> -> vector<32x128xf32>
    %7 = arith.addf %3, %6 : vector<32x128xf32>
    %c0_6 = arith.constant 0 : index
    %c0_7 = arith.constant 0 : index
    %8 = vector.load %arg6[%c0_6, %c0_7] : memref<32x128xf32, #tpu.memory_space<vmem>>, vector<32x128xf32>
    tpu.vector_store %arg6[%c0_6, %c0_7], %7 {strides = array<i32>} : memref<32x128xf32, #tpu.memory_space<vmem>>, vector<32x128xf32>,
    %c4_i32 = arith.constant 4 : i32
    %9 = arith.cmpi eq, %arg2, %c4_i32 : i32
    %10 = arith.extui %9 : i1 to i32
    %c0_i32_8 = arith.constant 0 : i32
    %11 = arith.cmpi ne, %10, %c0_i32_8 : i32
    scf.if %11 {
      %c0_9 = arith.constant 0 : index
      %c0_10 = arith.constant 0 : index
      %12 = vector.load %arg6[%c0_9, %c0_10] : memref<32x128xf32, #tpu.memory_space<vmem>>, vector<32x128xf32>
      %c0_11 = arith.constant 0 : index
      %c0_12 = arith.constant 0 : index
      %13 = vector.load %arg5[%c0_11, %c0_12] : memref<32x128xf32, #tpu.memory_space<vmem>>, vector<32x128xf32>
      tpu.vector_store %arg5[%c0_11, %c0_12], %12 {strides = array<i32>} : memref<32x128xf32, #tpu.memory_space<vmem>>, vector<32x128xf32>,
    } else {
    }
    return
  }
  func.func @transform_0(%arg0: i32, %arg1: i32, %arg2: i32) -> (i32, i32) {
    %c0_i32 = arith.constant 0 : i32
    return %arg0, %arg2 : i32, i32
  }
  func.func @transform_1(%arg0: i32, %arg1: i32, %arg2: i32) -> (i32, i32) {
    %c0_i32 = arith.constant 0 : i32
    return %arg2, %arg1 : i32, i32
  }
  func.func @transform_2(%arg0: i32, %arg1: i32, %arg2: i32) -> (i32, i32) {
    %c0_i32 = arith.constant 0 : i32
    return %arg0, %arg1 : i32, i32
  }
}

module attributes {stable_mosaic.version = 11 : i64} {
  func.func @_inorm_add_kernel(%arg0: i32, %arg1: i32, %arg2: memref<1x16x64xf32, #tpu.memory_space<vmem>>, %arg3: memref<1x16x64xf32, #tpu.memory_space<vmem>>, %arg4: memref<1x64xf32, #tpu.memory_space<vmem>>, %arg5: memref<1x64xf32, #tpu.memory_space<vmem>>, %arg6: memref<1x16x64xf32, #tpu.memory_space<vmem>>) attributes {dimension_semantics = [#tpu.dimension_semantics<parallel>, #tpu.dimension_semantics<parallel>], iteration_bounds = array<i64: 2, 1>, scalar_prefetch = 0 : i64, scratch_operands = 0 : i64, tpu.core_type = #tpu.core_type<tc>, window_params = [{transform_indices = @transform_0, window_bounds = array<i64: 1, 16, 64>}, {transform_indices = @transform_1, window_bounds = array<i64: 1, 16, 64>}, {transform_indices = @transform_2, window_bounds = array<i64: 1, 64>}, {transform_indices = @transform_3, window_bounds = array<i64: 1, 64>}, {transform_indices = @transform_4, window_bounds = array<i64: 1, 16, 64>}]} {
    %c0 = arith.constant 0 : index
    %c0_0 = arith.constant 0 : index
    %c0_1 = arith.constant 0 : index
    %0 = vector.load %arg2[%c0, %c0_0, %c0_1] : memref<1x16x64xf32, #tpu.memory_space<vmem>>, vector<1x16x64xf32>
    %cst = arith.constant dense<0.000000e+00> : vector<1x64xf32>
    %1 = vector.multi_reduction <add>, %0, %cst [1] : vector<1x16x64xf32> to vector<1x64xf32>
    %2 = vector.shape_cast %1 : vector<1x64xf32> to vector<1x1x64xf32>
    %cst_2 = arith.constant 6.250000e-02 : f32
    %3 = vector.broadcast %cst_2 : f32 to vector<1x1x64xf32>
    %4 = arith.mulf %2, %3 : vector<1x1x64xf32>
    %5 = arith.mulf %0, %0 : vector<1x16x64xf32>
    %cst_3 = arith.constant dense<0.000000e+00> : vector<1x64xf32>
    %6 = vector.multi_reduction <add>, %5, %cst_3 [1] : vector<1x16x64xf32> to vector<1x64xf32>
    %7 = vector.shape_cast %6 : vector<1x64xf32> to vector<1x1x64xf32>
    %cst_4 = arith.constant 6.250000e-02 : f32
    %8 = vector.broadcast %cst_4 : f32 to vector<1x1x64xf32>
    %9 = arith.mulf %7, %8 : vector<1x1x64xf32>
    %10 = arith.mulf %4, %4 : vector<1x1x64xf32>
    %11 = arith.subf %9, %10 : vector<1x1x64xf32>
    %cst_5 = arith.constant 9.99999974E-6 : f32
    %12 = vector.broadcast %cst_5 : f32 to vector<1x1x64xf32>
    %13 = arith.addf %11, %12 : vector<1x1x64xf32>
    %14 = math.rsqrt %13 : vector<1x1x64xf32>
    %c0_6 = arith.constant 0 : index
    %c0_7 = arith.constant 0 : index
    %15 = vector.load %arg4[%c0_6, %c0_7] : memref<1x64xf32, #tpu.memory_space<vmem>>, vector<1x64xf32>
    %16 = vector.shape_cast %15 : vector<1x64xf32> to vector<1x1x64xf32>
    %c0_8 = arith.constant 0 : index
    %c0_9 = arith.constant 0 : index
    %17 = vector.load %arg5[%c0_8, %c0_9] : memref<1x64xf32, #tpu.memory_space<vmem>>, vector<1x64xf32>
    %18 = vector.shape_cast %17 : vector<1x64xf32> to vector<1x1x64xf32>
    %c0_10 = arith.constant 0 : index
    %c0_11 = arith.constant 0 : index
    %c0_12 = arith.constant 0 : index
    %19 = vector.load %arg3[%c0_10, %c0_11, %c0_12] : memref<1x16x64xf32, #tpu.memory_space<vmem>>, vector<1x16x64xf32>
    %20 = vector.broadcast %4 : vector<1x1x64xf32> to vector<1x16x64xf32>
    %21 = arith.subf %0, %20 : vector<1x16x64xf32>
    %22 = vector.broadcast %14 : vector<1x1x64xf32> to vector<1x16x64xf32>
    %23 = arith.mulf %21, %22 : vector<1x16x64xf32>
    %24 = vector.broadcast %16 : vector<1x1x64xf32> to vector<1x16x64xf32>
    %25 = arith.mulf %23, %24 : vector<1x16x64xf32>
    %26 = arith.addf %19, %25 : vector<1x16x64xf32>
    %27 = vector.broadcast %18 : vector<1x1x64xf32> to vector<1x16x64xf32>
    %28 = arith.addf %26, %27 : vector<1x16x64xf32>
    %c0_13 = arith.constant 0 : index
    %c0_14 = arith.constant 0 : index
    %c0_15 = arith.constant 0 : index
    %29 = vector.load %arg6[%c0_13, %c0_14, %c0_15] : memref<1x16x64xf32, #tpu.memory_space<vmem>>, vector<1x16x64xf32>
    tpu.vector_store %arg6[%c0_13, %c0_14, %c0_15], %28 {strides = array<i32>} : memref<1x16x64xf32, #tpu.memory_space<vmem>>, vector<1x16x64xf32>,
    return
  }
  func.func @transform_0(%arg0: i32, %arg1: i32) -> (i32, i32, i32) {
    %c0_i32 = arith.constant 0 : i32
    %c0_i32_0 = arith.constant 0 : i32
    return %arg0, %c0_i32, %arg1 : i32, i32, i32
  }
  func.func @transform_1(%arg0: i32, %arg1: i32) -> (i32, i32, i32) {
    %c0_i32 = arith.constant 0 : i32
    %c0_i32_0 = arith.constant 0 : i32
    return %arg0, %c0_i32, %arg1 : i32, i32, i32
  }
  func.func @transform_2(%arg0: i32, %arg1: i32) -> (i32, i32) {
    %c0_i32 = arith.constant 0 : i32
    %c0_i32_0 = arith.constant 0 : i32
    return %c0_i32, %arg1 : i32, i32
  }
  func.func @transform_3(%arg0: i32, %arg1: i32) -> (i32, i32) {
    %c0_i32 = arith.constant 0 : i32
    %c0_i32_0 = arith.constant 0 : i32
    return %c0_i32, %arg1 : i32, i32
  }
  func.func @transform_4(%arg0: i32, %arg1: i32) -> (i32, i32, i32) {
    %c0_i32 = arith.constant 0 : i32
    %c0_i32_0 = arith.constant 0 : i32
    return %arg0, %c0_i32, %arg1 : i32, i32, i32
  }
}

module attributes {stable_mosaic.version = 11 : i64} {
  func.func @_matmul_kernel(%arg0: i32, %arg1: i32, %arg2: i32, %arg3: memref<64x256xbf16, #tpu.memory_space<vmem>>, %arg4: memref<256x128xbf16, #tpu.memory_space<vmem>>, %arg5: memref<64x128xf32, #tpu.memory_space<vmem>>, %arg6: memref<64x128xf32, #tpu.memory_space<vmem>>) attributes {dimension_semantics = [#tpu.dimension_semantics<parallel>, #tpu.dimension_semantics<parallel>, #tpu.dimension_semantics<arbitrary>], iteration_bounds = array<i64: 1, 1, 1>, scalar_prefetch = 0 : i64, scratch_operands = 1 : i64, tpu.core_type = #tpu.core_type<tc>, window_params = [{transform_indices = @transform_0, window_bounds = array<i64: 64, 256>}, {transform_indices = @transform_1, window_bounds = array<i64: 256, 128>}, {transform_indices = @transform_2, window_bounds = array<i64: 64, 128>}]} {
    %c0_i32 = arith.constant 0 : i32
    %0 = arith.cmpi eq, %arg2, %c0_i32 : i32
    %1 = arith.extui %0 : i1 to i32
    %c0_i32_0 = arith.constant 0 : i32
    %2 = arith.cmpi ne, %1, %c0_i32_0 : i32
    scf.if %2 {
      %cst_10 = arith.constant 0.000000e+00 : f32
      %12 = vector.broadcast %cst_10 : f32 to vector<64x128xf32>
      %c0_11 = arith.constant 0 : index
      %c0_12 = arith.constant 0 : index
      %13 = vector.load %arg6[%c0_11, %c0_12] : memref<64x128xf32, #tpu.memory_space<vmem>>, vector<64x128xf32>
      tpu.vector_store %arg6[%c0_11, %c0_12], %12 {strides = array<i32>} : memref<64x128xf32, #tpu.memory_space<vmem>>, vector<64x128xf32>,
    } else {
    }
    %c0 = arith.constant 0 : index
    %c0_1 = arith.constant 0 : index
    %3 = vector.load %arg6[%c0, %c0_1] : memref<64x128xf32, #tpu.memory_space<vmem>>, vector<64x128xf32>
    %c0_2 = arith.constant 0 : index
    %c0_3 = arith.constant 0 : index
    %4 = vector.load %arg3[%c0_2, %c0_3] : memref<64x256xbf16, #tpu.memory_space<vmem>>, vector<64x256xbf16>
    %c0_4 = arith.constant 0 : index
    %c0_5 = arith.constant 0 : index
    %5 = vector.load %arg4[%c0_4, %c0_5] : memref<256x128xbf16, #tpu.memory_space<vmem>>, vector<256x128xbf16>
    %cst = arith.constant dense<0.000000e+00> : vector<64x128xf32>
    %6 = tpu.matmul %4, %5, %cst {dimension_numbers = #tpu.dot_dimension_numbers<[1], [0], [0], [1], [0, 0, 1, 1], [], []>} : vector<64x256xbf16>, vector<256x128xbf16>, vector<64x128xf32> -> vector<64x128xf32>
    %7 = arith.addf %3, %6 : vector<64x128xf32>
    %c0_6 = arith.constant 0 : index
    %c0_7 = arith.constant 0 : index
    %8 = vector.load %arg6[%c0_6, %c0_7] : memref<64x128xf32, #tpu.memory_space<vmem>>, vector<64x128xf32>
    tpu.vector_store %arg6[%c0_6, %c0_7], %7 {strides = array<i32>} : memref<64x128xf32, #tpu.memory_space<vmem>>, vector<64x128xf32>,
    %c0_i32_8 = arith.constant 0 : i32
    %9 = arith.cmpi eq, %arg2, %c0_i32_8 : i32
    %10 = arith.extui %9 : i1 to i32
    %c0_i32_9 = arith.constant 0 : i32
    %11 = arith.cmpi ne, %10, %c0_i32_9 : i32
    scf.if %11 {
      %c0_10 = arith.constant 0 : index
      %c0_11 = arith.constant 0 : index
      %12 = vector.load %arg6[%c0_10, %c0_11] : memref<64x128xf32, #tpu.memory_space<vmem>>, vector<64x128xf32>
      %c0_12 = arith.constant 0 : index
      %c0_13 = arith.constant 0 : index
      %13 = vector.load %arg5[%c0_12, %c0_13] : memref<64x128xf32, #tpu.memory_space<vmem>>, vector<64x128xf32>
      tpu.vector_store %arg5[%c0_12, %c0_13], %12 {strides = array<i32>} : memref<64x128xf32, #tpu.memory_space<vmem>>, vector<64x128xf32>,
    } else {
    }
    return
  }
  func.func @transform_0(%arg0: i32, %arg1: i32, %arg2: i32) -> (i32, i32) {
    %c0_i32 = arith.constant 0 : i32
    return %arg0, %arg2 : i32, i32
  }
  func.func @transform_1(%arg0: i32, %arg1: i32, %arg2: i32) -> (i32, i32) {
    %c0_i32 = arith.constant 0 : i32
    return %arg2, %arg1 : i32, i32
  }
  func.func @transform_2(%arg0: i32, %arg1: i32, %arg2: i32) -> (i32, i32) {
    %c0_i32 = arith.constant 0 : i32
    return %arg0, %arg1 : i32, i32
  }
}

module attributes {stable_mosaic.version = 11 : i64} {
  func.func @_matmul_kernel(%arg0: i32, %arg1: i32, %arg2: i32, %arg3: memref<16x128xbf16, #tpu.memory_space<vmem>>, %arg4: memref<128x128xbf16, #tpu.memory_space<vmem>>, %arg5: memref<16x128xf32, #tpu.memory_space<vmem>>, %arg6: memref<16x128xf32, #tpu.memory_space<vmem>>) attributes {dimension_semantics = [#tpu.dimension_semantics<parallel>, #tpu.dimension_semantics<parallel>, #tpu.dimension_semantics<arbitrary>], iteration_bounds = array<i64: 11, 1, 1>, scalar_prefetch = 0 : i64, scratch_operands = 1 : i64, tpu.core_type = #tpu.core_type<tc>, window_params = [{transform_indices = @transform_0, window_bounds = array<i64: 16, 128>}, {transform_indices = @transform_1, window_bounds = array<i64: 128, 128>}, {transform_indices = @transform_2, window_bounds = array<i64: 16, 128>}]} {
    %c0_i32 = arith.constant 0 : i32
    %0 = arith.cmpi eq, %arg2, %c0_i32 : i32
    %1 = arith.extui %0 : i1 to i32
    %c0_i32_0 = arith.constant 0 : i32
    %2 = arith.cmpi ne, %1, %c0_i32_0 : i32
    scf.if %2 {
      %cst_10 = arith.constant 0.000000e+00 : f32
      %12 = vector.broadcast %cst_10 : f32 to vector<16x128xf32>
      %c0_11 = arith.constant 0 : index
      %c0_12 = arith.constant 0 : index
      %13 = vector.load %arg6[%c0_11, %c0_12] : memref<16x128xf32, #tpu.memory_space<vmem>>, vector<16x128xf32>
      tpu.vector_store %arg6[%c0_11, %c0_12], %12 {strides = array<i32>} : memref<16x128xf32, #tpu.memory_space<vmem>>, vector<16x128xf32>,
    } else {
    }
    %c0 = arith.constant 0 : index
    %c0_1 = arith.constant 0 : index
    %3 = vector.load %arg6[%c0, %c0_1] : memref<16x128xf32, #tpu.memory_space<vmem>>, vector<16x128xf32>
    %c0_2 = arith.constant 0 : index
    %c0_3 = arith.constant 0 : index
    %4 = vector.load %arg3[%c0_2, %c0_3] : memref<16x128xbf16, #tpu.memory_space<vmem>>, vector<16x128xbf16>
    %c0_4 = arith.constant 0 : index
    %c0_5 = arith.constant 0 : index
    %5 = vector.load %arg4[%c0_4, %c0_5] : memref<128x128xbf16, #tpu.memory_space<vmem>>, vector<128x128xbf16>
    %cst = arith.constant dense<0.000000e+00> : vector<16x128xf32>
    %6 = tpu.matmul %4, %5, %cst {dimension_numbers = #tpu.dot_dimension_numbers<[1], [0], [0], [1], [0, 0, 1, 1], [], []>} : vector<16x128xbf16>, vector<128x128xbf16>, vector<16x128xf32> -> vector<16x128xf32>
    %7 = arith.addf %3, %6 : vector<16x128xf32>
    %c0_6 = arith.constant 0 : index
    %c0_7 = arith.constant 0 : index
    %8 = vector.load %arg6[%c0_6, %c0_7] : memref<16x128xf32, #tpu.memory_space<vmem>>, vector<16x128xf32>
    tpu.vector_store %arg6[%c0_6, %c0_7], %7 {strides = array<i32>} : memref<16x128xf32, #tpu.memory_space<vmem>>, vector<16x128xf32>,
    %c0_i32_8 = arith.constant 0 : i32
    %9 = arith.cmpi eq, %arg2, %c0_i32_8 : i32
    %10 = arith.extui %9 : i1 to i32
    %c0_i32_9 = arith.constant 0 : i32
    %11 = arith.cmpi ne, %10, %c0_i32_9 : i32
    scf.if %11 {
      %c0_10 = arith.constant 0 : index
      %c0_11 = arith.constant 0 : index
      %12 = vector.load %arg6[%c0_10, %c0_11] : memref<16x128xf32, #tpu.memory_space<vmem>>, vector<16x128xf32>
      %c0_12 = arith.constant 0 : index
      %c0_13 = arith.constant 0 : index
      %13 = vector.load %arg5[%c0_12, %c0_13] : memref<16x128xf32, #tpu.memory_space<vmem>>, vector<16x128xf32>
      tpu.vector_store %arg5[%c0_12, %c0_13], %12 {strides = array<i32>} : memref<16x128xf32, #tpu.memory_space<vmem>>, vector<16x128xf32>,
    } else {
    }
    return
  }
  func.func @transform_0(%arg0: i32, %arg1: i32, %arg2: i32) -> (i32, i32) {
    %c0_i32 = arith.constant 0 : i32
    return %arg0, %arg2 : i32, i32
  }
  func.func @transform_1(%arg0: i32, %arg1: i32, %arg2: i32) -> (i32, i32) {
    %c0_i32 = arith.constant 0 : i32
    return %arg2, %arg1 : i32, i32
  }
  func.func @transform_2(%arg0: i32, %arg1: i32, %arg2: i32) -> (i32, i32) {
    %c0_i32 = arith.constant 0 : i32
    return %arg0, %arg1 : i32, i32
  }
}

module attributes {stable_mosaic.version = 11 : i64} {
  func.func @_matmul_kernel(%arg0: i32, %arg1: i32, %arg2: i32, %arg3: memref<512x128xbf16, #tpu.memory_space<vmem>>, %arg4: memref<128x128xbf16, #tpu.memory_space<vmem>>, %arg5: memref<512x128xf32, #tpu.memory_space<vmem>>, %arg6: memref<512x128xf32, #tpu.memory_space<vmem>>) attributes {dimension_semantics = [#tpu.dimension_semantics<parallel>, #tpu.dimension_semantics<parallel>, #tpu.dimension_semantics<arbitrary>], iteration_bounds = array<i64: 1, 1, 7>, scalar_prefetch = 0 : i64, scratch_operands = 1 : i64, tpu.core_type = #tpu.core_type<tc>, window_params = [{transform_indices = @transform_0, window_bounds = array<i64: 512, 128>}, {transform_indices = @transform_1, window_bounds = array<i64: 128, 128>}, {transform_indices = @transform_2, window_bounds = array<i64: 512, 128>}]} {
    %c0_i32 = arith.constant 0 : i32
    %0 = arith.cmpi eq, %arg2, %c0_i32 : i32
    %1 = arith.extui %0 : i1 to i32
    %c0_i32_0 = arith.constant 0 : i32
    %2 = arith.cmpi ne, %1, %c0_i32_0 : i32
    scf.if %2 {
      %cst_9 = arith.constant 0.000000e+00 : f32
      %12 = vector.broadcast %cst_9 : f32 to vector<512x128xf32>
      %c0_10 = arith.constant 0 : index
      %c0_11 = arith.constant 0 : index
      %13 = vector.load %arg6[%c0_10, %c0_11] : memref<512x128xf32, #tpu.memory_space<vmem>>, vector<512x128xf32>
      tpu.vector_store %arg6[%c0_10, %c0_11], %12 {strides = array<i32>} : memref<512x128xf32, #tpu.memory_space<vmem>>, vector<512x128xf32>,
    } else {
    }
    %c0 = arith.constant 0 : index
    %c0_1 = arith.constant 0 : index
    %3 = vector.load %arg6[%c0, %c0_1] : memref<512x128xf32, #tpu.memory_space<vmem>>, vector<512x128xf32>
    %c0_2 = arith.constant 0 : index
    %c0_3 = arith.constant 0 : index
    %4 = vector.load %arg3[%c0_2, %c0_3] : memref<512x128xbf16, #tpu.memory_space<vmem>>, vector<512x128xbf16>
    %c0_4 = arith.constant 0 : index
    %c0_5 = arith.constant 0 : index
    %5 = vector.load %arg4[%c0_4, %c0_5] : memref<128x128xbf16, #tpu.memory_space<vmem>>, vector<128x128xbf16>
    %cst = arith.constant dense<0.000000e+00> : vector<512x128xf32>
    %6 = tpu.matmul %4, %5, %cst {dimension_numbers = #tpu.dot_dimension_numbers<[1], [0], [0], [1], [0, 0, 1, 1], [], []>} : vector<512x128xbf16>, vector<128x128xbf16>, vector<512x128xf32> -> vector<512x128xf32>
    %7 = arith.addf %3, %6 : vector<512x128xf32>
    %c0_6 = arith.constant 0 : index
    %c0_7 = arith.constant 0 : index
    %8 = vector.load %arg6[%c0_6, %c0_7] : memref<512x128xf32, #tpu.memory_space<vmem>>, vector<512x128xf32>
    tpu.vector_store %arg6[%c0_6, %c0_7], %7 {strides = array<i32>} : memref<512x128xf32, #tpu.memory_space<vmem>>, vector<512x128xf32>,
    %c6_i32 = arith.constant 6 : i32
    %9 = arith.cmpi eq, %arg2, %c6_i32 : i32
    %10 = arith.extui %9 : i1 to i32
    %c0_i32_8 = arith.constant 0 : i32
    %11 = arith.cmpi ne, %10, %c0_i32_8 : i32
    scf.if %11 {
      %c0_9 = arith.constant 0 : index
      %c0_10 = arith.constant 0 : index
      %12 = vector.load %arg6[%c0_9, %c0_10] : memref<512x128xf32, #tpu.memory_space<vmem>>, vector<512x128xf32>
      %13 = math.tanh %12 : vector<512x128xf32>
      %c0_11 = arith.constant 0 : index
      %c0_12 = arith.constant 0 : index
      %14 = vector.load %arg5[%c0_11, %c0_12] : memref<512x128xf32, #tpu.memory_space<vmem>>, vector<512x128xf32>
      tpu.vector_store %arg5[%c0_11, %c0_12], %13 {strides = array<i32>} : memref<512x128xf32, #tpu.memory_space<vmem>>, vector<512x128xf32>,
    } else {
    }
    return
  }
  func.func @transform_0(%arg0: i32, %arg1: i32, %arg2: i32) -> (i32, i32) {
    %c0_i32 = arith.constant 0 : i32
    return %arg0, %arg2 : i32, i32
  }
  func.func @transform_1(%arg0: i32, %arg1: i32, %arg2: i32) -> (i32, i32) {
    %c0_i32 = arith.constant 0 : i32
    return %arg2, %arg1 : i32, i32
  }
  func.func @transform_2(%arg0: i32, %arg1: i32, %arg2: i32) -> (i32, i32) {
    %c0_i32 = arith.constant 0 : i32
    return %arg0, %arg1 : i32, i32
  }
}

</mosaic_0001>

<llo_original>
// kernel: generator_forward.20
$region0: #{generator_forward.20}
  #allocation0 [shape = 'u32[]', space=smem, size = 0x4, offset = 0x4, fixed_abs, tag = 'smem constant byte address 0x4 - core index']
  #allocation1 [shape = 'u32[72,128]{1,0:T(1,128)}', space=vmem, size = 0x9000, scoped, tag = 'internal scratch']
  %s0 = inlined_call_operand.vmem [shape: f32[2,256,16], index: 0, kind: input, shape index: {}]
  %s1 = inlined_call_operand.vmem [shape: f32[1,16], index: 1, kind: input, shape index: {}]
  %s2 = inlined_call_operand.vmem [shape: f32[1,16], index: 2, kind: input, shape index: {}]
  %s3 = inlined_call_operand.vmem [shape: f32[2,256,16], index: 3, kind: output, shape index: {}]
  %s4 = sld [smem:[#allocation0]]
  $region45: #{generator_forward.20} parent=0
    _
  %s6 = ssub.s32 1, %s4
  %s7 = scalar_select 0, %s6, %s4
  loop: start=0, step=1, limit=4
  $region2: #{generator_forward.20} parent=0 // loop_pre_header
    _
  $region3: #{generator_forward.20} parent=0 // loop_header
    %s9 = sphi 0, %s13
    %p10 = scmp.ge.s32.totalorder %s9, 4
    %s16 = sphi 0, %s28
    %s17 = sphi 0, %s24
    %s18 = sphi 0, %s16
    %s19 = sphi 0, %s17
    %s20 = sphi 0, %s18
    %s21 = sphi 0, %s19
    %s33 = sphi 0, %s35
    %s36 = sphi 0, %s33
    %s37 = sphi 0, %s36
    %s53 = sphi 0, %s37
    %s59 = sphi 0, %s61
    %s62 = sphi 0, %s59
    %s63 = sphi 0, %s62
    %s79 = sphi 0, %s63
    %s85 = sphi 0, %s87
    %s88 = sphi 0, %s85
    %s89 = sphi 0, %s88
    %s105 = sphi 0, %s89
    %s113 = sphi 0, %s115
    %s116 = sphi 0, %s113
    %s117 = sphi 0, %s116
    %s133 = sphi 0, %s117
  $region4: #{generator_forward.20} parent=0 // loop_header_branch
    %12 = sbr.rel (%p10) target = $region8
  $region5: #{generator_forward.20} parent=0 // loop_body
    %s14 = ssub.s32 %s9, 1
    %s15 = ssub.s32 %s9, 2
    %s22 = sadd.s32 1, %s17
    %p23 = scmp.ge.s32.totalorder %s22, 1
    %s24 = scalar_select %p23, 0, %s22
    %s25 = sadd.s32 1, %s16
    %s26 = scalar_select %p23, %s25, %s16
    %p27 = scmp.ge.s32.totalorder %s26, 2
    %s28 = scalar_select %p27, 0, %s26
    %s29 = ssub.s32 %s16, %s28
    %s30 = ssub.s32 %s17, %s24
    %s31 = sor.u32 %s29, %s30
    %p32 = scmp.eq.s32.totalorder %s31, 0
    %s34 = sadd.s32 %s33, 1
    %s35 = scalar_select %p32, %s33, %s34
    %p38 = pneg %p32
    %p39 = scmp.eq.s32.totalorder %s9, 1
    %p40 = por %p38, %p39
    %p41 = scmp.ne.s32.totalorder %s33, %s36
    %p42 = scmp.eq.s32.totalorder %s9, 0
    %p43 = por %p41, %p42
    %p44 = scmp.ne.s32.totalorder %s33, %s36
    %p45 = scmp.eq.s32.totalorder %s14, 1
    %p46 = por %p44, %p45
    %p47 = scmp.ne.s32.totalorder %s36, %s37
    %p48 = scmp.eq.s32.totalorder %s14, 0
    %p49 = por %p47, %p48
    %p50 = scmp.ne.s32.totalorder %s36, %s37
    %p51 = scmp.eq.s32.totalorder %s15, 1
    %p52 = por %p50, %p51
    %p54 = scmp.ne.s32.totalorder %s37, %s53
    %p55 = scmp.eq.s32.totalorder %s15, 0
    %p56 = por %p54, %p55
    %s57 = ssub.s32 %s17, %s24
    %p58 = scmp.eq.s32.totalorder %s57, 0
    %s60 = sadd.s32 %s59, 1
    %s61 = scalar_select %p58, %s59, %s60
    %p64 = pneg %p58
    %p65 = scmp.eq.s32.totalorder %s9, 1
    %p66 = por %p64, %p65
    %p67 = scmp.ne.s32.totalorder %s59, %s62
    %p68 = scmp.eq.s32.totalorder %s9, 0
    %p69 = por %p67, %p68
    %p70 = scmp.ne.s32.totalorder %s59, %s62
    %p71 = scmp.eq.s32.totalorder %s14, 1
    %p72 = por %p70, %p71
    %p73 = scmp.ne.s32.totalorder %s62, %s63
    %p74 = scmp.eq.s32.totalorder %s14, 0
    %p75 = por %p73, %p74
    %p76 = scmp.ne.s32.totalorder %s62, %s63
    %p77 = scmp.eq.s32.totalorder %s15, 1
    %p78 = por %p76, %p77
    %p80 = scmp.ne.s32.totalorder %s63, %s79
    %p81 = scmp.eq.s32.totalorder %s15, 0
    %p82 = por %p80, %p81
    %s83 = ssub.s32 %s17, %s24
    %p84 = scmp.eq.s32.totalorder %s83, 0
    %s86 = sadd.s32 %s85, 1
    %s87 = scalar_select %p84, %s85, %s86
    %p90 = pneg %p84
    %p91 = scmp.eq.s32.totalorder %s9, 1
    %p92 = por %p90, %p91
    %p93 = scmp.ne.s32.totalorder %s85, %s88
    %p94 = scmp.eq.s32.totalorder %s9, 0
    %p95 = por %p93, %p94
    %p96 = scmp.ne.s32.totalorder %s85, %s88
    %p97 = scmp.eq.s32.totalorder %s14, 1
    %p98 = por %p96, %p97
    %p99 = scmp.ne.s32.totalorder %s88, %s89
    %p100 = scmp.eq.s32.totalorder %s14, 0
    %p101 = por %p99, %p100
    %p102 = scmp.ne.s32.totalorder %s88, %s89
    %p103 = scmp.eq.s32.totalorder %s15, 1
    %p104 = por %p102, %p103
    %p106 = scmp.ne.s32.totalorder %s89, %s105
    %p107 = scmp.eq.s32.totalorder %s15, 0
    %p108 = por %p106, %p107
    %s109 = ssub.s32 %s16, %s28
    %s110 = ssub.s32 %s17, %s24
    %s111 = sor.u32 %s109, %s110
    %p112 = scmp.eq.s32.totalorder %s111, 0
    %s114 = sadd.s32 %s113, 1
    %s115 = scalar_select %p112, %s113, %s114
    %p118 = pneg %p112
    %p119 = scmp.eq.s32.totalorder %s9, 1
    %p120 = por %p118, %p119
    %p121 = scmp.ne.s32.totalorder %s113, %s116
    %p122 = scmp.eq.s32.totalorder %s9, 0
    %p123 = por %p121, %p122
    %p124 = scmp.ne.s32.totalorder %s113, %s116
    %p125 = scmp.eq.s32.totalorder %s14, 1
    %p126 = por %p124, %p125
    %p127 = scmp.ne.s32.totalorder %s116, %s117
    %p128 = scmp.eq.s32.totalorder %s14, 0
    %p129 = por %p127, %p128
    %p130 = scmp.ne.s32.totalorder %s116, %s117
    %p131 = scmp.eq.s32.totalorder %s15, 1
    %p132 = por %p130, %p131
    %p134 = scmp.ne.s32.totalorder %s117, %s133
    %p135 = scmp.eq.s32.totalorder %s15, 0
    %p136 = por %p134, %p135
    %p137 = scmp.le.s32.totalorder 1, %s9
    %p138 = scmp.lt.s32.totalorder %s9, 3
    %p139 = pnand %p137, %p138
    %p140 = pneg %p139
    // Predicated region
    $region9: #{generator_forward.20} parent=5 // pred_check
      _
    $region10: #{generator_forward.20} parent=5 // pred_check_branch
      %142 = sbr.rel (%p139) target = $region12
    $region11: #{generator_forward.20} parent=5 // pred_region
      %s143 = ssub.s32 %s9, 1
      // Predicated region
      $region13: #{generator_forward.20} parent=11 // pred_check
        %p144 = pneg %p75
      $region14: #{generator_forward.20} parent=11 // pred_check_branch
        %146 = sbr.rel (%p144) target = $region16
      $region15: #{generator_forward.20} parent=11 // pred_region
        %p147 = scmp.lt.s32.totalorder %s19, 0
        %s148 = scalar_select %p147, %s19, 0
        %s149 = scalar_lea.vmem %s1, %s148
      $region16: #{generator_forward.20} parent=11 // pred_fallthru
        _
      // Predicated region
      $region17: #{generator_forward.20} parent=11 // pred_check
        %p150 = pneg %p101
      $region18: #{generator_forward.20} parent=11 // pred_check_branch
        %152 = sbr.rel (%p150) target = $region20
      $region19: #{generator_forward.20} parent=11 // pred_region
        %p153 = scmp.lt.s32.totalorder %s19, 0
        %s154 = scalar_select %p153, %s19, 0
        %s155 = scalar_lea.vmem %s2, %s154
      $region20: #{generator_forward.20} parent=11 // pred_fallthru
        _
    $region12: #{generator_forward.20} parent=5 // pred_fallthru
      _
    %p156 = scmp.lt.s32.totalorder %s9, 2
    // Predicated region
    $region21: #{generator_forward.20} parent=5 // pred_check
      %p157 = pneg %p156
    $region22: #{generator_forward.20} parent=5 // pred_check_branch
      %159 = sbr.rel (%p157) target = $region24
    $region23: #{generator_forward.20} parent=5 // pred_region
      // Predicated region
      $region25: #{generator_forward.20} parent=23 // pred_check
        %p160 = pneg %p43
      $region26: #{generator_forward.20} parent=23 // pred_check_branch
        %162 = sbr.rel (%p160) target = $region28
      $region27: #{generator_forward.20} parent=23 // pred_region
        %p163 = scmp.lt.s32.totalorder %s16, 1
        %s164 = scalar_select %p163, %s16, 1
        %p165 = scmp.lt.s32.totalorder %s17, 0
        %s166 = scalar_select %p165, %s17, 0
        %s167 = smul.addr %s164, 32
        %s168 = sadd.s32 %s166, %s167
        %s169 = smul.addr %s168, 8
        %s170 = scalar_lea.vmem %s0, %s169
      $region28: #{generator_forward.20} parent=23 // pred_fallthru
        _
    $region24: #{generator_forward.20} parent=5 // pred_fallthru
      _
    %p171 = scmp.le.s32.totalorder 1, %s9
    %p172 = scmp.lt.s32.totalorder %s9, 3
    %p173 = pnand %p171, %p172
    %p174 = pneg %p173
    // Predicated region
    $region29: #{generator_forward.20} parent=5 // pred_check
      _
    $region30: #{generator_forward.20} parent=5 // pred_check_branch
      %176 = sbr.rel (%p173) target = $region32
    $region31: #{generator_forward.20} parent=5 // pred_region
      %s177 = ssub.s32 %s9, 1
      %p178 = scmp.lt.s32.totalorder %s18, 1
      %s179 = scalar_select %p178, %s18, 1
      %p180 = scmp.lt.s32.totalorder %s19, 0
      %s181 = scalar_select %p180, %s19, 0
      %s182 = smul.addr %s179, 32
      %s183 = sadd.s32 %s181, %s182
      %s184 = smul.addr %s183, 8
      %s185 = scalar_lea.vmem %s0, %s184
      %p186 = pneg %p49
      %p187 = pneg %p46
      %p188 = scmp.lt.s32.totalorder %s19, 0
      %s189 = scalar_select %p188, %s19, 0
      %s190 = scalar_lea.vmem %s1, %s189
      %p191 = pneg %p75
      %p192 = pneg %p72
      %p193 = scmp.lt.s32.totalorder %s19, 0
      %s194 = scalar_select %p193, %s19, 0
      %s195 = scalar_lea.vmem %s2, %s194
      %p196 = pneg %p101
      %p197 = pneg %p98
      %p198 = pneg %p129
      %p199 = pneg %p126
      %p200 = scmp.lt.s32.totalorder %s18, 1
      %s201 = scalar_select %p200, %s18, 1
      %p202 = scmp.lt.s32.totalorder %s19, 0
      %s203 = scalar_select %p202, %s19, 0
      %s204 = smul.addr %s201, 32
      %s205 = sadd.s32 %s203, %s204
      %s206 = smul.addr %s205, 8
      %s207 = scalar_lea.vmem %s3, %s206
      %p208 = scmp.lt.s32.totalorder %s18, 1
      %s209 = scalar_select %p208, %s18, 1
      %p210 = scmp.lt.s32.totalorder %s19, 0
      %s211 = scalar_select %p210, %s19, 0
      %s212 = smul.addr %s209, 32
      %s213 = sadd.s32 %s211, %s212
      %s214 = smul.addr %s213, 8
      %s215 = scalar_lea.vmem %s0, %s214
      %p216 = scmp.lt.s32.totalorder %s19, 0
      %s217 = scalar_select %p216, %s19, 0
      %s218 = scalar_lea.vmem %s1, %s217
      %p219 = scmp.lt.s32.totalorder %s19, 0
      %s220 = scalar_select %p219, %s19, 0
      %s221 = scalar_lea.vmem %s2, %s220
      %p222 = scmp.lt.s32.totalorder %s18, 1
      %s223 = scalar_select %p222, %s18, 1
      %p224 = scmp.lt.s32.totalorder %s19, 0
      %s225 = scalar_select %p224, %s19, 0
      %s226 = smul.addr %s223, 32
      %s227 = sadd.s32 %s225, %s226
      %s228 = smul.addr %s227, 8
      %s229 = scalar_lea.vmem %s3, %s228
      %v230 = vld [vmem:[%s215] sm:$0xff]
      %v231 = vld [vmem:[%s215 + $0x8] sm:$0xff]
      %v232 = vld [vmem:[%s215 + $0x10] sm:$0xff]
      %v233 = vld [vmem:[%s215 + $0x18] sm:$0xff]
      %v234 = vld [vmem:[%s215 + $0x20] sm:$0xff]
      %v235 = vld [vmem:[%s215 + $0x28] sm:$0xff]
      %v236 = vld [vmem:[%s215 + $0x30] sm:$0xff]
      %v237 = vld [vmem:[%s215 + $0x38] sm:$0xff]
      %v238 = vld [vmem:[%s215 + $0x40] sm:$0xff]
      %v239 = vld [vmem:[%s215 + $0x48] sm:$0xff]
      %v240 = vld [vmem:[%s215 + $0x50] sm:$0xff]
      %v241 = vld [vmem:[%s215 + $0x58] sm:$0xff]
      %v242 = vld [vmem:[%s215 + $0x60] sm:$0xff]
      %v243 = vld [vmem:[%s215 + $0x68] sm:$0xff]
      %v244 = vld [vmem:[%s215 + $0x70] sm:$0xff]
      %v245 = vld [vmem:[%s215 + $0x78] sm:$0xff]
      %v246 = vld [vmem:[%s215 + $0x80] sm:$0xff]
      %v247 = vld [vmem:[%s215 + $0x88] sm:$0xff]
      %v248 = vld [vmem:[%s215 + $0x90] sm:$0xff]
      %v249 = vld [vmem:[%s215 + $0x98] sm:$0xff]
      %v250 = vld [vmem:[%s215 + $0xa0] sm:$0xff]
      %v251 = vld [vmem:[%s215 + $0xa8] sm:$0xff]
      %v252 = vld [vmem:[%s215 + $0xb0] sm:$0xff]
      %v253 = vld [vmem:[%s215 + $0xb8] sm:$0xff]
      %v254 = vld [vmem:[%s215 + $0xc0] sm:$0xff]
      %v255 = vld [vmem:[%s215 + $0xc8] sm:$0xff]
      %v256 = vld [vmem:[%s215 + $0xd0] sm:$0xff]
      %v257 = vld [vmem:[%s215 + $0xd8] sm:$0xff]
      %v258 = vld [vmem:[%s215 + $0xe0] sm:$0xff]
      %v259 = vld [vmem:[%s215 + $0xe8] sm:$0xff]
      %v260 = vld [vmem:[%s215 + $0xf0] sm:$0xff]
      %v261 = vld [vmem:[%s215 + $0xf8] sm:$0xff]
      %vm262 = vcmask 130048
      %v263 = vsel %vm262, %v230, 0.0
      %v264 = vsel %vm262, %v231, 0.0
      %v265 = vadd.f32 %v263, %v264
      %v266 = vsel %vm262, %v232, 0.0
      %v267 = vadd.f32 %v265, %v266
      %v268 = vsel %vm262, %v233, 0.0
      %v269 = vadd.f32 %v267, %v268
      %v270 = vsel %vm262, %v234, 0.0
      %v271 = vadd.f32 %v269, %v270
      %v272 = vsel %vm262, %v235, 0.0
      %v273 = vadd.f32 %v271, %v272
      %v274 = vsel %vm262, %v236, 0.0
      %v275 = vadd.f32 %v273, %v274
      %v276 = vsel %vm262, %v237, 0.0
      %v277 = vadd.f32 %v275, %v276
      %v278 = vsel %vm262, %v238, 0.0
      %v279 = vadd.f32 %v277, %v278
      %v280 = vsel %vm262, %v239, 0.0
      %v281 = vadd.f32 %v279, %v280
      %v282 = vsel %vm262, %v240, 0.0
      %v283 = vadd.f32 %v281, %v282
      %v284 = vsel %vm262, %v241, 0.0
      %v285 = vadd.f32 %v283, %v284
      %v286 = vsel %vm262, %v242, 0.0
      %v287 = vadd.f32 %v285, %v286
      %v288 = vsel %vm262, %v243, 0.0
      %v289 = vadd.f32 %v287, %v288
      %v290 = vsel %vm262, %v244, 0.0
      %v291 = vadd.f32 %v289, %v290
      %v292 = vsel %vm262, %v245, 0.0
      %v293 = vadd.f32 %v291, %v292
      %v294 = vsel %vm262, %v246, 0.0
      %v295 = vadd.f32 %v293, %v294
      %v296 = vsel %vm262, %v247, 0.0
      %v297 = vadd.f32 %v295, %v296
      %v298 = vsel %vm262, %v248, 0.0
      %v299 = vadd.f32 %v297, %v298
      %v300 = vsel %vm262, %v249, 0.0
      %v301 = vadd.f32 %v299, %v300
      %v302 = vsel %vm262, %v250, 0.0
      %v303 = vadd.f32 %v301, %v302
      %v304 = vsel %vm262, %v251, 0.0
      %v305 = vadd.f32 %v303, %v304
      %v306 = vsel %vm262, %v252, 0.0
      %v307 = vadd.f32 %v305, %v306
      %v308 = vsel %vm262, %v253, 0.0
      %v309 = vadd.f32 %v307, %v308
      %v310 = vsel %vm262, %v254, 0.0
      %v311 = vadd.f32 %v309, %v310
      %v312 = vsel %vm262, %v255, 0.0
      %v313 = vadd.f32 %v311, %v312
      %v314 = vsel %vm262, %v256, 0.0
      %v315 = vadd.f32 %v313, %v314
      %v316 = vsel %vm262, %v257, 0.0
      %v317 = vadd.f32 %v315, %v316
      %v318 = vsel %vm262, %v258, 0.0
      %v319 = vadd.f32 %v317, %v318
      %v320 = vsel %vm262, %v259, 0.0
      %v321 = vadd.f32 %v319, %v320
      %v322 = vsel %vm262, %v260, 0.0
      %v323 = vadd.f32 %v321, %v322
      %v324 = vsel %vm262, %v261, 0.0
      %v325 = vadd.f32 %v323, %v324
      %v326 = vrot.slane %v325, 4
      %v327 = vadd.f32 %v325, %v326
      %v328 = vrot.slane %v327, 2
      %v329 = vadd.f32 %v327, %v328
      %v330 = vrot.slane %v329, 1
      %v331 = vadd.f32 %v329, %v330
      %v332 = vmul.f32 %v331, 0.00390625
      %v333 = vmul.f32 %v230, %v230
      %v334 = vmul.f32 %v231, %v231
      %v335 = vmul.f32 %v232, %v232
      %v336 = vmul.f32 %v233, %v233
      %v337 = vmul.f32 %v234, %v234
      %v338 = vmul.f32 %v235, %v235
      %v339 = vmul.f32 %v236, %v236
      %v340 = vmul.f32 %v237, %v237
      %v341 = vmul.f32 %v238, %v238
      %v342 = vmul.f32 %v239, %v239
      %v343 = vmul.f32 %v240, %v240
      %v344 = vmul.f32 %v241, %v241
      %v345 = vmul.f32 %v242, %v242
      %v346 = vmul.f32 %v243, %v243
      %v347 = vmul.f32 %v244, %v244
      %v348 = vmul.f32 %v245, %v245
      %v349 = vmul.f32 %v246, %v246
      %v350 = vmul.f32 %v247, %v247
      %v351 = vmul.f32 %v248, %v248
      %v352 = vmul.f32 %v249, %v249
      %v353 = vmul.f32 %v250, %v250
      %v354 = vmul.f32 %v251, %v251
      %v355 = vmul.f32 %v252, %v252
      %v356 = vmul.f32 %v253, %v253
      %v357 = vmul.f32 %v254, %v254
      %v358 = vmul.f32 %v255, %v255
      %v359 = vmul.f32 %v256, %v256
      %v360 = vmul.f32 %v257, %v257
      %v361 = vmul.f32 %v258, %v258
      %v362 = vmul.f32 %v259, %v259
      %v363 = vmul.f32 %v260, %v260
      %v364 = vmul.f32 %v261, %v261
      %v365 = vsel %vm262, %v333, 0.0
      %v366 = vsel %vm262, %v334, 0.0
      %v367 = vadd.f32 %v365, %v366
      %v368 = vsel %vm262, %v335, 0.0
      %v369 = vadd.f32 %v367, %v368
      %v370 = vsel %vm262, %v336, 0.0
      %v371 = vadd.f32 %v369, %v370
      %v372 = vsel %vm262, %v337, 0.0
      %v373 = vadd.f32 %v371, %v372
      %v374 = vsel %vm262, %v338, 0.0
      %v375 = vadd.f32 %v373, %v374
      %v376 = vsel %vm262, %v339, 0.0
      %v377 = vadd.f32 %v375, %v376
      %v378 = vsel %vm262, %v340, 0.0
      %v379 = vadd.f32 %v377, %v378
      %v380 = vsel %vm262, %v341, 0.0
      %v381 = vadd.f32 %v379, %v380
      %v382 = vsel %vm262, %v342, 0.0
      %v383 = vadd.f32 %v381, %v382
      %v384 = vsel %vm262, %v343, 0.0
      %v385 = vadd.f32 %v383, %v384
      %v386 = vsel %vm262, %v344, 0.0
      %v387 = vadd.f32 %v385, %v386
      %v388 = vsel %vm262, %v345, 0.0
      %v389 = vadd.f32 %v387, %v388
      %v390 = vsel %vm262, %v346, 0.0
      %v391 = vadd.f32 %v389, %v390
      %v392 = vsel %vm262, %v347, 0.0
      %v393 = vadd.f32 %v391, %v392
      %v394 = vsel %vm262, %v348, 0.0
      %v395 = vadd.f32 %v393, %v394
      %v396 = vsel %vm262, %v349, 0.0
      %v397 = vadd.f32 %v395, %v396
      %v398 = vsel %vm262, %v350, 0.0
      %v399 = vadd.f32 %v397, %v398
      %v400 = vsel %vm262, %v351, 0.0
      %v401 = vadd.f32 %v399, %v400
      %v402 = vsel %vm262, %v352, 0.0
      %v403 = vadd.f32 %v401, %v402
      %v404 = vsel %vm262, %v353, 0.0
      %v405 = vadd.f32 %v403, %v404
      %v406 = vsel %vm262, %v354, 0.0
      %v407 = vadd.f32 %v405, %v406
      %v408 = vsel %vm262, %v355, 0.0
      %v409 = vadd.f32 %v407, %v408
      %v410 = vsel %vm262, %v356, 0.0
      %v411 = vadd.f32 %v409, %v410
      %v412 = vsel %vm262, %v357, 0.0
      %v413 = vadd.f32 %v411, %v412
      %v414 = vsel %vm262, %v358, 0.0
      %v415 = vadd.f32 %v413, %v414
      %v416 = vsel %vm262, %v359, 0.0
      %v417 = vadd.f32 %v415, %v416
      %v418 = vsel %vm262, %v360, 0.0
      %v419 = vadd.f32 %v417, %v418
      %v420 = vsel %vm262, %v361, 0.0
      %v421 = vadd.f32 %v419, %v420
      %v422 = vsel %vm262, %v362, 0.0
      %v423 = vadd.f32 %v421, %v422
      %v424 = vsel %vm262, %v363, 0.0
      %v425 = vadd.f32 %v423, %v424
      %v426 = vsel %vm262, %v364, 0.0
      %v427 = vadd.f32 %v425, %v426
      %v428 = vrot.slane %v427, 4
      %v429 = vadd.f32 %v427, %v428
      %v430 = vrot.slane %v429, 2
      %v431 = vadd.f32 %v429, %v430
      %v432 = vrot.slane %v431, 1
      %v433 = vadd.f32 %v431, %v432
      %v434 = vmul.f32 %v433, 0.00390625
      %v435 = vmul.f32 %v332, %v332
      %v436 = vsub.f32 %v434, %v435
      %v437 = vadd.f32 %v436, 1e-05
      %v438 = vrsqrt.pop %v437
      %v439 = vmul.f32 %v438, %v437
      %v440 = vmul.f32 %v439, %v438
      %v441 = vmul.f32 0.5, %v440
      %v442 = vsub.f32 1.5, %v441
      %v443 = vmul.f32 %v438, %v442
      %vm444 = vweird.f32 %v437
      %vm445 = vweird.f32 %v438
      %vm446 = vmor %vm444, %vm445
      %v447 = vsel %vm446, %v438, %v443
      %v448 = vld [vmem:[%s218] sm:$0x1]
      %v449 = vld [vmem:[%s221] sm:$0x1]
      %v450 = vsub.f32 %v230, %v332
      %v451 = vsub.f32 %v231, %v332
      %v452 = vsub.f32 %v232, %v332
      %v453 = vsub.f32 %v233, %v332
      %v454 = vsub.f32 %v234, %v332
      %v455 = vsub.f32 %v235, %v332
      %v456 = vsub.f32 %v236, %v332
      %v457 = vsub.f32 %v237, %v332
      %v458 = vsub.f32 %v238, %v332
      %v459 = vsub.f32 %v239, %v332
      %v460 = vsub.f32 %v240, %v332
      %v461 = vsub.f32 %v241, %v332
      %v462 = vsub.f32 %v242, %v332
      %v463 = vsub.f32 %v243, %v332
      %v464 = vsub.f32 %v244, %v332
      %v465 = vsub.f32 %v245, %v332
      %v466 = vsub.f32 %v246, %v332
      %v467 = vsub.f32 %v247, %v332
      %v468 = vsub.f32 %v248, %v332
      %v469 = vsub.f32 %v249, %v332
      %v470 = vsub.f32 %v250, %v332
      %v471 = vsub.f32 %v251, %v332
      %v472 = vsub.f32 %v252, %v332
      %v473 = vsub.f32 %v253, %v332
      %v474 = vsub.f32 %v254, %v332
      %v475 = vsub.f32 %v255, %v332
      %v476 = vsub.f32 %v256, %v332
      %v477 = vsub.f32 %v257, %v332
      %v478 = vsub.f32 %v258, %v332
      %v479 = vsub.f32 %v259, %v332
      %v480 = vsub.f32 %v260, %v332
      %v481 = vsub.f32 %v261, %v332
      %v482 = vmul.f32 %v450, %v447
      %v483 = vmul.f32 %v451, %v447
      %v484 = vmul.f32 %v452, %v447
      %v485 = vmul.f32 %v453, %v447
      %v486 = vmul.f32 %v454, %v447
      %v487 = vmul.f32 %v455, %v447
      %v488 = vmul.f32 %v456, %v447
      %v489 = vmul.f32 %v457, %v447
      %v490 = vmul.f32 %v458, %v447
      %v491 = vmul.f32 %v459, %v447
      %v492 = vmul.f32 %v460, %v447
      %v493 = vmul.f32 %v461, %v447
      %v494 = vmul.f32 %v462, %v447
      %v495 = vmul.f32 %v463, %v447
      %v496 = vmul.f32 %v464, %v447
      %v497 = vmul.f32 %v465, %v447
      %v498 = vmul.f32 %v466, %v447
      %v499 = vmul.f32 %v467, %v447
      %v500 = vmul.f32 %v468, %v447
      %v501 = vmul.f32 %v469, %v447
      %v502 = vmul.f32 %v470, %v447
      %v503 = vmul.f32 %v471, %v447
      %v504 = vmul.f32 %v472, %v447
      %v505 = vmul.f32 %v473, %v447
      %v506 = vmul.f32 %v474, %v447
      %v507 = vmul.f32 %v475, %v447
      %v508 = vmul.f32 %v476, %v447
      %v509 = vmul.f32 %v477, %v447
      %v510 = vmul.f32 %v478, %v447
      %v511 = vmul.f32 %v479, %v447
      %v512 = vmul.f32 %v480, %v447
      %v513 = vmul.f32 %v481, %v447
      %v515 = vperm.slane %v448, 0
      %v517 = vmul.f32 %v482, %v515
      %v518 = vmul.f32 %v483, %v515
      %v519 = vmul.f32 %v484, %v515
      %v520 = vmul.f32 %v485, %v515
      %v521 = vmul.f32 %v486, %v515
      %v522 = vmul.f32 %v487, %v515
      %v523 = vmul.f32 %v488, %v515
      %v524 = vmul.f32 %v489, %v515
      %v525 = vmul.f32 %v490, %v515
      %v526 = vmul.f32 %v491, %v515
      %v527 = vmul.f32 %v492, %v515
      %v528 = vmul.f32 %v493, %v515
      %v529 = vmul.f32 %v494, %v515
      %v530 = vmul.f32 %v495, %v515
      %v531 = vmul.f32 %v496, %v515
      %v532 = vmul.f32 %v497, %v515
      %v533 = vmul.f32 %v498, %v515
      %v534 = vmul.f32 %v499, %v515
      %v535 = vmul.f32 %v500, %v515
      %v536 = vmul.f32 %v501, %v515
      %v537 = vmul.f32 %v502, %v515
      %v538 = vmul.f32 %v503, %v515
      %v539 = vmul.f32 %v504, %v515
      %v540 = vmul.f32 %v505, %v515
      %v541 = vmul.f32 %v506, %v515
      %v542 = vmul.f32 %v507, %v515
      %v543 = vmul.f32 %v508, %v515
      %v544 = vmul.f32 %v509, %v515
      %v545 = vmul.f32 %v510, %v515
      %v546 = vmul.f32 %v511, %v515
      %v547 = vmul.f32 %v512, %v515
      %v548 = vmul.f32 %v513, %v515
      %v550 = vperm.slane %v449, 0
      %v552 = vadd.f32 %v517, %v550
      %v553 = vadd.f32 %v518, %v550
      %v554 = vadd.f32 %v519, %v550
      %v555 = vadd.f32 %v520, %v550
      %v556 = vadd.f32 %v521, %v550
      %v557 = vadd.f32 %v522, %v550
      %v558 = vadd.f32 %v523, %v550
      %v559 = vadd.f32 %v524, %v550
      %v560 = vadd.f32 %v525, %v550
      %v561 = vadd.f32 %v526, %v550
      %v562 = vadd.f32 %v527, %v550
      %v563 = vadd.f32 %v528, %v550
      %v564 = vadd.f32 %v529, %v550
      %v565 = vadd.f32 %v530, %v550
      %v566 = vadd.f32 %v531, %v550
      %v567 = vadd.f32 %v532, %v550
      %v568 = vadd.f32 %v533, %v550
      %v569 = vadd.f32 %v534, %v550
      %v570 = vadd.f32 %v535, %v550
      %v571 = vadd.f32 %v536, %v550
      %v572 = vadd.f32 %v537, %v550
      %v573 = vadd.f32 %v538, %v550
      %v574 = vadd.f32 %v539, %v550
      %v575 = vadd.f32 %v540, %v550
      %v576 = vadd.f32 %v541, %v550
      %v577 = vadd.f32 %v542, %v550
      %v578 = vadd.f32 %v543, %v550
      %v579 = vadd.f32 %v544, %v550
      %v580 = vadd.f32 %v545, %v550
      %v581 = vadd.f32 %v546, %v550
      %v582 = vadd.f32 %v547, %v550
      %v583 = vadd.f32 %v548, %v550
      %v584 = vmax.f32 %v552, 0.0
      %v585 = vmax.f32 %v553, 0.0
      %v586 = vmax.f32 %v554, 0.0
      %v587 = vmax.f32 %v555, 0.0
      %v588 = vmax.f32 %v556, 0.0
      %v589 = vmax.f32 %v557, 0.0
      %v590 = vmax.f32 %v558, 0.0
      %v591 = vmax.f32 %v559, 0.0
      %v592 = vmax.f32 %v560, 0.0
      %v593 = vmax.f32 %v561, 0.0
      %v594 = vmax.f32 %v562, 0.0
      %v595 = vmax.f32 %v563, 0.0
      %v596 = vmax.f32 %v564, 0.0
      %v597 = vmax.f32 %v565, 0.0
      %v598 = vmax.f32 %v566, 0.0
      %v599 = vmax.f32 %v567, 0.0
      %v600 = vmax.f32 %v568, 0.0
      %v601 = vmax.f32 %v569, 0.0
      %v602 = vmax.f32 %v570, 0.0
      %v603 = vmax.f32 %v571, 0.0
      %v604 = vmax.f32 %v572, 0.0
      %v605 = vmax.f32 %v573, 0.0
      %v606 = vmax.f32 %v574, 0.0
      %v607 = vmax.f32 %v575, 0.0
      %v608 = vmax.f32 %v576, 0.0
      %v609 = vmax.f32 %v577, 0.0
      %v610 = vmax.f32 %v578, 0.0
      %v611 = vmax.f32 %v579, 0.0
      %v612 = vmax.f32 %v580, 0.0
      %v613 = vmax.f32 %v581, 0.0
      %v614 = vmax.f32 %v582, 0.0
      %v615 = vmax.f32 %v583, 0.0
      %616 = vst.msk [vmem:[%s229] sm:$0xff] %vm262, %v584
      %617 = vst.msk [vmem:[%s229 + $0x8] sm:$0xff] %vm262, %v585
      %618 = vst.msk [vmem:[%s229 + $0x10] sm:$0xff] %vm262, %v586
      %619 = vst.msk [vmem:[%s229 + $0x18] sm:$0xff] %vm262, %v587
      %620 = vst.msk [vmem:[%s229 + $0x20] sm:$0xff] %vm262, %v588
      %621 = vst.msk [vmem:[%s229 + $0x28] sm:$0xff] %vm262, %v589
      %622 = vst.msk [vmem:[%s229 + $0x30] sm:$0xff] %vm262, %v590
      %623 = vst.msk [vmem:[%s229 + $0x38] sm:$0xff] %vm262, %v591
      %624 = vst.msk [vmem:[%s229 + $0x40] sm:$0xff] %vm262, %v592
      %625 = vst.msk [vmem:[%s229 + $0x48] sm:$0xff] %vm262, %v593
      %626 = vst.msk [vmem:[%s229 + $0x50] sm:$0xff] %vm262, %v594
      %627 = vst.msk [vmem:[%s229 + $0x58] sm:$0xff] %vm262, %v595
      %628 = vst.msk [vmem:[%s229 + $0x60] sm:$0xff] %vm262, %v596
      %629 = vst.msk [vmem:[%s229 + $0x68] sm:$0xff] %vm262, %v597
      %630 = vst.msk [vmem:[%s229 + $0x70] sm:$0xff] %vm262, %v598
      %631 = vst.msk [vmem:[%s229 + $0x78] sm:$0xff] %vm262, %v599
      %632 = vst.msk [vmem:[%s229 + $0x80] sm:$0xff] %vm262, %v600
      %633 = vst.msk [vmem:[%s229 + $0x88] sm:$0xff] %vm262, %v601
      %634 = vst.msk [vmem:[%s229 + $0x90] sm:$0xff] %vm262, %v602
      %635 = vst.msk [vmem:[%s229 + $0x98] sm:$0xff] %vm262, %v603
      %636 = vst.msk [vmem:[%s229 + $0xa0] sm:$0xff] %vm262, %v604
      %637 = vst.msk [vmem:[%s229 + $0xa8] sm:$0xff] %vm262, %v605
      %638 = vst.msk [vmem:[%s229 + $0xb0] sm:$0xff] %vm262, %v606
      %639 = vst.msk [vmem:[%s229 + $0xb8] sm:$0xff] %vm262, %v607
      %640 = vst.msk [vmem:[%s229 + $0xc0] sm:$0xff] %vm262, %v608
      %641 = vst.msk [vmem:[%s229 + $0xc8] sm:$0xff] %vm262, %v609
      %642 = vst.msk [vmem:[%s229 + $0xd0] sm:$0xff] %vm262, %v610
      %643 = vst.msk [vmem:[%s229 + $0xd8] sm:$0xff] %vm262, %v611
      %644 = vst.msk [vmem:[%s229 + $0xe0] sm:$0xff] %vm262, %v612
      %645 = vst.msk [vmem:[%s229 + $0xe8] sm:$0xff] %vm262, %v613
      %646 = vst.msk [vmem:[%s229 + $0xf0] sm:$0xff] %vm262, %v614
      %647 = vst.msk [vmem:[%s229 + $0xf8] sm:$0xff] %vm262, %v615
      %p648 = scmp.lt.s32.totalorder %s18, 1
      %s649 = scalar_select %p648, %s18, 1
      %p650 = scmp.lt.s32.totalorder %s19, 0
      %s651 = scalar_select %p650, %s19, 0
      %s652 = smul.addr %s649, 32
      %s653 = sadd.s32 %s651, %s652
      %s654 = smul.addr %s653, 8
      %s655 = scalar_lea.vmem %s3, %s654
      // Predicated region
      $region33: #{generator_forward.20} parent=31 // pred_check
        %p656 = pneg %p126
      $region34: #{generator_forward.20} parent=31 // pred_check_branch
        %658 = sbr.rel (%p656) target = $region36
      $region35: #{generator_forward.20} parent=31 // pred_region
        _
      $region36: #{generator_forward.20} parent=31 // pred_fallthru
        _
    $region32: #{generator_forward.20} parent=5 // pred_fallthru
      _
    %p659 = scmp.le.s32.totalorder 2, %s9
    // Predicated region
    $region37: #{generator_forward.20} parent=5 // pred_check
      %p660 = pneg %p659
    $region38: #{generator_forward.20} parent=5 // pred_check_branch
      %662 = sbr.rel (%p660) target = $region40
    $region39: #{generator_forward.20} parent=5 // pred_region
      %s663 = ssub.s32 %s9, 2
      // Predicated region
      $region41: #{generator_forward.20} parent=39 // pred_check
        %p664 = pneg %p132
      $region42: #{generator_forward.20} parent=39 // pred_check_branch
        %666 = sbr.rel (%p664) target = $region44
      $region43: #{generator_forward.20} parent=39 // pred_region
        %p667 = scmp.lt.s32.totalorder %s20, 1
        %s668 = scalar_select %p667, %s20, 1
        %p669 = scmp.lt.s32.totalorder %s21, 0
        %s670 = scalar_select %p669, %s21, 0
        %s671 = smul.addr %s668, 32
        %s672 = sadd.s32 %s670, %s671
        %s673 = smul.addr %s672, 8
        %s674 = scalar_lea.vmem %s3, %s673
      $region44: #{generator_forward.20} parent=39 // pred_fallthru
        _
    $region40: #{generator_forward.20} parent=5 // pred_fallthru
      _
  $region6: #{generator_forward.20} parent=0 // loop_footer
    %s13 = sadd.s32 1, %s9
  $region7: #{generator_forward.20} parent=0 // loop_footer_branch
    %8 = sbr.rel target = $region3
  $region8: #{generator_forward.20} parent=0 // loop_exit
    _

// kernel: generator_forward.19
$region0: #{generator_forward.19}
  #allocation0 [shape = 'u32[]', space=smem, size = 0x4, offset = 0x4, fixed_abs, tag = 'smem constant byte address 0x4 - core index']
  #allocation1 [shape = 'u32[72,128]{1,0:T(1,128)}', space=vmem, size = 0x9000, scoped, tag = 'internal scratch']
  #allocation2 [shape = 'f32[512,128]{1,0:T(8,128)}', space=vmem, size = 0x40000, scoped, tag = 'scratch operand']
  %s0 = inlined_call_operand.vmem [shape: bf16[512,384], index: 0, kind: input, shape index: {}]
  %s1 = inlined_call_operand.vmem [shape: bf16[384,128], index: 1, kind: input, shape index: {}]
  %s2 = inlined_call_operand.vmem [shape: f32[512,128], index: 2, kind: output, shape index: {}]
  %s3 = sld [smem:[#allocation0]]
  $region26: #{generator_forward.19} parent=0
    _
  %s5 = ssub.s32 1, %s3
  %s6 = scalar_select 0, %s5, %s3
  // Predicated region
  $region2: #{generator_forward.19} parent=0 // pred_check
    _
  $region3: #{generator_forward.19} parent=0 // pred_check_branch
    %8 = sbr.rel (0) target = $region5
  $region4: #{generator_forward.19} parent=0 // pred_region
    _
  $region5: #{generator_forward.19} parent=0 // pred_fallthru
    _
  // Predicated region
  $region6: #{generator_forward.19} parent=0 // pred_check
    _
  $region7: #{generator_forward.19} parent=0 // pred_check_branch
    %10 = sbr.rel (0) target = $region9
  $region8: #{generator_forward.19} parent=0 // pred_region
    _
  $region9: #{generator_forward.19} parent=0 // pred_fallthru
    _
  %p11 = scmp.eq.s32.totalorder 0, 0
  // Predicated region
  $region10: #{generator_forward.19} parent=0 // pred_check
    %p12 = pneg %p11
  $region11: #{generator_forward.19} parent=0 // pred_check_branch
    %14 = sbr.rel (%p12) target = $region13
  $region12: #{generator_forward.19} parent=0 // pred_region
    %15 = vst [vmem:[#allocation2] sm:$0xff] 0.0
    %16 = vst [vmem:[#allocation2 + $0x8] sm:$0xff] 0.0
    %17 = vst [vmem:[#allocation2 + $0x10] sm:$0xff] 0.0
    %18 = vst [vmem:[#allocation2 + $0x18] sm:$0xff] 0.0
    %19 = vst [vmem:[#allocation2 + $0x20] sm:$0xff] 0.0
    %20 = vst [vmem:[#allocation2 + $0x28] sm:$0xff] 0.0
    %21 = vst [vmem:[#allocation2 + $0x30] sm:$0xff] 0.0
    %22 = vst [vmem:[#allocation2 + $0x38] sm:$0xff] 0.0
    %23 = vst [vmem:[#allocation2 + $0x40] sm:$0xff] 0.0
    %24 = vst [vmem:[#allocation2 + $0x48] sm:$0xff] 0.0
    %25 = vst [vmem:[#allocation2 + $0x50] sm:$0xff] 0.0
    %26 = vst [vmem:[#allocation2 + $0x58] sm:$0xff] 0.0
    %27 = vst [vmem:[#allocation2 + $0x60] sm:$0xff] 0.0
    %28 = vst [vmem:[#allocation2 + $0x68] sm:$0xff] 0.0
    %29 = vst [vmem:[#allocation2 + $0x70] sm:$0xff] 0.0
    %30 = vst [vmem:[#allocation2 + $0x78] sm:$0xff] 0.0
    %31 = vst [vmem:[#allocation2 + $0x80] sm:$0xff] 0.0
    %32 = vst [vmem:[#allocation2 + $0x88] sm:$0xff] 0.0
    %33 = vst [vmem:[#allocation2 + $0x90] sm:$0xff] 0.0
    %34 = vst [vmem:[#allocation2 + $0x98] sm:$0xff] 0.0
    %35 = vst [vmem:[#allocation2 + $0xa0] sm:$0xff] 0.0
    %36 = vst [vmem:[#allocation2 + $0xa8] sm:$0xff] 0.0
    %37 = vst [vmem:[#allocation2 + $0xb0] sm:$0xff] 0.0
    %38 = vst [vmem:[#allocation2 + $0xb8] sm:$0xff] 0.0
    %39 = vst [vmem:[#allocation2 + $0xc0] sm:$0xff] 0.0
    %40 = vst [vmem:[#allocation2 + $0xc8] sm:$0xff] 0.0
    %41 = vst [vmem:[#allocation2 + $0xd0] sm:$0xff] 0.0
    %42 = vst [vmem:[#allocation2 + $0xd8] sm:$0xff] 0.0
    %43 = vst [vmem:[#allocation2 + $0xe0] sm:$0xff] 0.0
    %44 = vst [vmem:[#allocation2 + $0xe8] sm:$0xff] 0.0
    %45 = vst [vmem:[#allocation2 + $0xf0] sm:$0xff] 0.0
    %46 = vst [vmem:[#allocation2 + $0xf8] sm:$0xff] 0.0
    %47 = vst [vmem:[#allocation2 + $0x100] sm:$0xff] 0.0
    %48 = vst [vmem:[#allocation2 + $0x108] sm:$0xff] 0.0
    %49 = vst [vmem:[#allocation2 + $0x110] sm:$0xff] 0.0
    %50 = vst [vmem:[#allocation2 + $0x118] sm:$0xff] 0.0
    %51 = vst [vmem:[#allocation2 + $0x120] sm:$0xff] 0.0
    %52 = vst [vmem:[#allocation2 + $0x128] sm:$0xff] 0.0
    %53 = vst [vmem:[#allocation2 + $0x130] sm:$0xff] 0.0
    %54 = vst [vmem:[#allocation2 + $0x138] sm:$0xff] 0.0
    %55 = vst [vmem:[#allocation2 + $0x140] sm:$0xff] 0.0
    %56 = vst [vmem:[#allocation2 + $0x148] sm:$0xff] 0.0
    %57 = vst [vmem:[#allocation2 + $0x150] sm:$0xff] 0.0
    %58 = vst [vmem:[#allocation2 + $0x158] sm:$0xff] 0.0
    %59 = vst [vmem:[#allocation2 + $0x160] sm:$0xff] 0.0
    %60 = vst [vmem:[#allocation2 + $0x168] sm:$0xff] 0.0
    %61 = vst [vmem:[#allocation2 + $0x170] sm:$0xff] 0.0
    %62 = vst [vmem:[#allocation2 + $0x178] sm:$0xff] 0.0
    %63 = vst [vmem:[#allocation2 + $0x180] sm:$0xff] 0.0
    %64 = vst [vmem:[#allocation2 + $0x188] sm:$0xff] 0.0
    %65 = vst [vmem:[#allocation2 + $0x190] sm:$0xff] 0.0
    %66 = vst [vmem:[#allocation2 + $0x198] sm:$0xff] 0.0
    %67 = vst [vmem:[#allocation2 + $0x1a0] sm:$0xff] 0.0
    %68 = vst [vmem:[#allocation2 + $0x1a8] sm:$0xff] 0.0
    %69 = vst [vmem:[#allocation2 + $0x1b0] sm:$0xff] 0.0
    %70 = vst [vmem:[#allocation2 + $0x1b8] sm:$0xff] 0.0
    %71 = vst [vmem:[#allocation2 + $0x1c0] sm:$0xff] 0.0
    %72 = vst [vmem:[#allocation2 + $0x1c8] sm:$0xff] 0.0
    %73 = vst [vmem:[#allocation2 + $0x1d0] sm:$0xff] 0.0
    %74 = vst [vmem:[#allocation2 + $0x1d8] sm:$0xff] 0.0
    %75 = vst [vmem:[#allocation2 + $0x1e0] sm:$0xff] 0.0
    %76 = vst [vmem:[#allocation2 + $0x1e8] sm:$0xff] 0.0
    %77 = vst [vmem:[#allocation2 + $0x1f0] sm:$0xff] 0.0
    %78 = vst [vmem:[#allocation2 + $0x1f8] sm:$0xff] 0.0
  $region13: #{generator_forward.19} parent=0 // pred_fallthru
    _
  %v79 = vld [vmem:[#allocation2] sm:$0xff]
  %v80 = vld [vmem:[#allocation2 + $0x8] sm:$0xff]
  %v81 = vld [vmem:[#allocation2 + $0x10] sm:$0xff]
  %v82 = vld [vmem:[#allocation2 + $0x18] sm:$0xff]
  %v83 = vld [vmem:[#allocation2 + $0x20] sm:$0xff]
  %v84 = vld [vmem:[#allocation2 + $0x28] sm:$0xff]
  %v85 = vld [vmem:[#allocation2 + $0x30] sm:$0xff]
  %v86 = vld [vmem:[#allocation2 + $0x38] sm:$0xff]
  %v87 = vld [vmem:[#allocation2 + $0x40] sm:$0xff]
  %v88 = vld [vmem:[#allocation2 + $0x48] sm:$0xff]
  %v89 = vld [vmem:[#allocation2 + $0x50] sm:$0xff]
  %v90 = vld [vmem:[#allocation2 + $0x58] sm:$0xff]
  %v91 = vld [vmem:[#allocation2 + $0x60] sm:$0xff]
  %v92 = vld [vmem:[#allocation2 + $0x68] sm:$0xff]
  %v93 = vld [vmem:[#allocation2 + $0x70] sm:$0xff]
  %v94 = vld [vmem:[#allocation2 + $0x78] sm:$0xff]
  %v95 = vld [vmem:[#allocation2 + $0x80] sm:$0xff]
  %v96 = vld [vmem:[#allocation2 + $0x88] sm:$0xff]
  %v97 = vld [vmem:[#allocation2 + $0x90] sm:$0xff]
  %v98 = vld [vmem:[#allocation2 + $0x98] sm:$0xff]
  %v99 = vld [vmem:[#allocation2 + $0xa0] sm:$0xff]
  %v100 = vld [vmem:[#allocation2 + $0xa8] sm:$0xff]
  %v101 = vld [vmem:[#allocation2 + $0xb0] sm:$0xff]
  %v102 = vld [vmem:[#allocation2 + $0xb8] sm:$0xff]
  %v103 = vld [vmem:[#allocation2 + $0xc0] sm:$0xff]
  %v104 = vld [vmem:[#allocation2 + $0xc8] sm:$0xff]
  %v105 = vld [vmem:[#allocation2 + $0xd0] sm:$0xff]
  %v106 = vld [vmem:[#allocation2 + $0xd8] sm:$0xff]
  %v107 = vld [vmem:[#allocation2 + $0xe0] sm:$0xff]
  %v108 = vld [vmem:[#allocation2 + $0xe8] sm:$0xff]
  %v109 = vld [vmem:[#allocation2 + $0xf0] sm:$0xff]
  %v110 = vld [vmem:[#allocation2 + $0xf8] sm:$0xff]
  %v111 = vld [vmem:[#allocation2 + $0x100] sm:$0xff]
  %v112 = vld [vmem:[#allocation2 + $0x108] sm:$0xff]
  %v113 = vld [vmem:[#allocation2 + $0x110] sm:$0xff]
  %v114 = vld [vmem:[#allocation2 + $0x118] sm:$0xff]
  %v115 = vld [vmem:[#allocation2 + $0x120] sm:$0xff]
  %v116 = vld [vmem:[#allocation2 + $0x128] sm:$0xff]
  %v117 = vld [vmem:[#allocation2 + $0x130] sm:$0xff]
  %v118 = vld [vmem:[#allocation2 + $0x138] sm:$0xff]
  %v119 = vld [vmem:[#allocation2 + $0x140] sm:$0xff]
  %v120 = vld [vmem:[#allocation2 + $0x148] sm:$0xff]
  %v121 = vld [vmem:[#allocation2 + $0x150] sm:$0xff]
  %v122 = vld [vmem:[#allocation2 + $0x158] sm:$0xff]
  %v123 = vld [vmem:[#allocation2 + $0x160] sm:$0xff]
  %v124 = vld [vmem:[#allocation2 + $0x168] sm:$0xff]
  %v125 = vld [vmem:[#allocation2 + $0x170] sm:$0xff]
  %v126 = vld [vmem:[#allocation2 + $0x178] sm:$0xff]
  %v127 = vld [vmem:[#allocation2 + $0x180] sm:$0xff]
  %v128 = vld [vmem:[#allocation2 + $0x188] sm:$0xff]
  %v129 = vld [vmem:[#allocation2 + $0x190] sm:$0xff]
  %v130 = vld [vmem:[#allocation2 + $0x198] sm:$0xff]
  %v131 = vld [vmem:[#allocation2 + $0x1a0] sm:$0xff]
  %v132 = vld [vmem:[#allocation2 + $0x1a8] sm:$0xff]
  %v133 = vld [vmem:[#allocation2 + $0x1b0] sm:$0xff]
  %v134 = vld [vmem:[#allocation2 + $0x1b8] sm:$0xff]
  %v135 = vld [vmem:[#allocation2 + $0x1c0] sm:$0xff]
  %v136 = vld [vmem:[#allocation2 + $0x1c8] sm:$0xff]
  %v137 = vld [vmem:[#allocation2 + $0x1d0] sm:$0xff]
  %v138 = vld [vmem:[#allocation2 + $0x1d8] sm:$0xff]
  %v139 = vld [vmem:[#allocation2 + $0x1e0] sm:$0xff]
  %v140 = vld [vmem:[#allocation2 + $0x1e8] sm:$0xff]
  %v141 = vld [vmem:[#allocation2 + $0x1f0] sm:$0xff]
  %v142 = vld [vmem:[#allocation2 + $0x1f8] sm:$0xff]
  %v143 = vld [vmem:[%s0] sm:$0xff]
  %v144 = vld [vmem:[%s0 + $0x8] sm:$0xf]
  %v145 = vld [vmem:[%s0 + $0xc] sm:$0xff]
  %v146 = vld [vmem:[%s0 + $0x14] sm:$0xf]
  %v147 = vld [vmem:[%s0 + $0x18] sm:$0xff]
  %v148 = vld [vmem:[%s0 + $0x20] sm:$0xf]
  %v149 = vld [vmem:[%s0 + $0x24] sm:$0xff]
  %v150 = vld [vmem:[%s0 + $0x2c] sm:$0xf]
  %v151 = vld [vmem:[%s0 + $0x30] sm:$0xff]
  %v152 = vld [vmem:[%s0 + $0x38] sm:$0xf]
  %v153 = vld [vmem:[%s0 + $0x3c] sm:$0xff]
  %v154 = vld [vmem:[%s0 + $0x44] sm:$0xf]
  %v155 = vld [vmem:[%s0 + $0x48] sm:$0xff]
  %v156 = vld [vmem:[%s0 + $0x50] sm:$0xf]
  %v157 = vld [vmem:[%s0 + $0x54] sm:$0xff]
  %v158 = vld [vmem:[%s0 + $0x5c] sm:$0xf]
  %v159 = vld [vmem:[%s0 + $0x60] sm:$0xff]
  %v160 = vld [vmem:[%s0 + $0x68] sm:$0xf]
  %v161 = vld [vmem:[%s0 + $0x6c] sm:$0xff]
  %v162 = vld [vmem:[%s0 + $0x74] sm:$0xf]
  %v163 = vld [vmem:[%s0 + $0x78] sm:$0xff]
  %v164 = vld [vmem:[%s0 + $0x80] sm:$0xf]
  %v165 = vld [vmem:[%s0 + $0x84] sm:$0xff]
  %v166 = vld [vmem:[%s0 + $0x8c] sm:$0xf]
  %v167 = vld [vmem:[%s0 + $0x90] sm:$0xff]
  %v168 = vld [vmem:[%s0 + $0x98] sm:$0xf]
  %v169 = vld [vmem:[%s0 + $0x9c] sm:$0xff]
  %v170 = vld [vmem:[%s0 + $0xa4] sm:$0xf]
  %v171 = vld [vmem:[%s0 + $0xa8] sm:$0xff]
  %v172 = vld [vmem:[%s0 + $0xb0] sm:$0xf]
  %v173 = vld [vmem:[%s0 + $0xb4] sm:$0xff]
  %v174 = vld [vmem:[%s0 + $0xbc] sm:$0xf]
  %v175 = vld [vmem:[%s0 + $0xc0] sm:$0xff]
  %v176 = vld [vmem:[%s0 + $0xc8] sm:$0xf]
  %v177 = vld [vmem:[%s0 + $0xcc] sm:$0xff]
  %v178 = vld [vmem:[%s0 + $0xd4] sm:$0xf]
  %v179 = vld [vmem:[%s0 + $0xd8] sm:$0xff]
  %v180 = vld [vmem:[%s0 + $0xe0] sm:$0xf]
  %v181 = vld [vmem:[%s0 + $0xe4] sm:$0xff]
  %v182 = vld [vmem:[%s0 + $0xec] sm:$0xf]
  %v183 = vld [vmem:[%s0 + $0xf0] sm:$0xff]
  %v184 = vld [vmem:[%s0 + $0xf8] sm:$0xf]
  %v185 = vld [vmem:[%s0 + $0xfc] sm:$0xff]
  %v186 = vld [vmem:[%s0 + $0x104] sm:$0xf]
  %v187 = vld [vmem:[%s0 + $0x108] sm:$0xff]
  %v188 = vld [vmem:[%s0 + $0x110] sm:$0xf]
  %v189 = vld [vmem:[%s0 + $0x114] sm:$0xff]
  %v190 = vld [vmem:[%s0 + $0x11c] sm:$0xf]
  %v191 = vld [vmem:[%s0 + $0x120] sm:$0xff]
  %v192 = vld [vmem:[%s0 + $0x128] sm:$0xf]
  %v193 = vld [vmem:[%s0 + $0x12c] sm:$0xff]
  %v194 = vld [vmem:[%s0 + $0x134] sm:$0xf]
  %v195 = vld [vmem:[%s0 + $0x138] sm:$0xff]
  %v196 = vld [vmem:[%s0 + $0x140] sm:$0xf]
  %v197 = vld [vmem:[%s0 + $0x144] sm:$0xff]
  %v198 = vld [vmem:[%s0 + $0x14c] sm:$0xf]
  %v199 = vld [vmem:[%s0 + $0x150] sm:$0xff]
  %v200 = vld [vmem:[%s0 + $0x158] sm:$0xf]
  %v201 = vld [vmem:[%s0 + $0x15c] sm:$0xff]
  %v202 = vld [vmem:[%s0 + $0x164] sm:$0xf]
  %v203 = vld [vmem:[%s0 + $0x168] sm:$0xff]
  %v204 = vld [vmem:[%s0 + $0x170] sm:$0xf]
  %v205 = vld [vmem:[%s0 + $0x174] sm:$0xff]
  %v206 = vld [vmem:[%s0 + $0x17c] sm:$0xf]
  %v207 = vld [vmem:[%s0 + $0x180] sm:$0xff]
  %v208 = vld [vmem:[%s0 + $0x188] sm:$0xf]
  %v209 = vld [vmem:[%s0 + $0x18c] sm:$0xff]
  %v210 = vld [vmem:[%s0 + $0x194] sm:$0xf]
  %v211 = vld [vmem:[%s0 + $0x198] sm:$0xff]
  %v212 = vld [vmem:[%s0 + $0x1a0] sm:$0xf]
  %v213 = vld [vmem:[%s0 + $0x1a4] sm:$0xff]
  %v214 = vld [vmem:[%s0 + $0x1ac] sm:$0xf]
  %v215 = vld [vmem:[%s0 + $0x1b0] sm:$0xff]
  %v216 = vld [vmem:[%s0 + $0x1b8] sm:$0xf]
  %v217 = vld [vmem:[%s0 + $0x1bc] sm:$0xff]
  %v218 = vld [vmem:[%s0 + $0x1c4] sm:$0xf]
  %v219 = vld [vmem:[%s0 + $0x1c8] sm:$0xff]
  %v220 = vld [vmem:[%s0 + $0x1d0] sm:$0xf]
  %v221 = vld [vmem:[%s0 + $0x1d4] sm:$0xff]
  %v222 = vld [vmem:[%s0 + $0x1dc] sm:$0xf]
  %v223 = vld [vmem:[%s0 + $0x1e0] sm:$0xff]
  %v224 = vld [vmem:[%s0 + $0x1e8] sm:$0xf]
  %v225 = vld [vmem:[%s0 + $0x1ec] sm:$0xff]
  %v226 = vld [vmem:[%s0 + $0x1f4] sm:$0xf]
  %v227 = vld [vmem:[%s0 + $0x1f8] sm:$0xff]
  %v228 = vld [vmem:[%s0 + $0x200] sm:$0xf]
  %v229 = vld [vmem:[%s0 + $0x204] sm:$0xff]
  %v230 = vld [vmem:[%s0 + $0x20c] sm:$0xf]
  %v231 = vld [vmem:[%s0 + $0x210] sm:$0xff]
  %v232 = vld [vmem:[%s0 + $0x218] sm:$0xf]
  %v233 = vld [vmem:[%s0 + $0x21c] sm:$0xff]
  %v234 = vld [vmem:[%s0 + $0x224] sm:$0xf]
  %v235 = vld [vmem:[%s0 + $0x228] sm:$0xff]
  %v236 = vld [vmem:[%s0 + $0x230] sm:$0xf]
  %v237 = vld [vmem:[%s0 + $0x234] sm:$0xff]
  %v238 = vld [vmem:[%s0 + $0x23c] sm:$0xf]
  %v239 = vld [vmem:[%s0 + $0x240] sm:$0xff]
  %v240 = vld [vmem:[%s0 + $0x248] sm:$0xf]
  %v241 = vld [vmem:[%s0 + $0x24c] sm:$0xff]
  %v242 = vld [vmem:[%s0 + $0x254] sm:$0xf]
  %v243 = vld [vmem:[%s0 + $0x258] sm:$0xff]
  %v244 = vld [vmem:[%s0 + $0x260] sm:$0xf]
  %v245 = vld [vmem:[%s0 + $0x264] sm:$0xff]
  %v246 = vld [vmem:[%s0 + $0x26c] sm:$0xf]
  %v247 = vld [vmem:[%s0 + $0x270] sm:$0xff]
  %v248 = vld [vmem:[%s0 + $0x278] sm:$0xf]
  %v249 = vld [vmem:[%s0 + $0x27c] sm:$0xff]
  %v250 = vld [vmem:[%s0 + $0x284] sm:$0xf]
  %v251 = vld [vmem:[%s0 + $0x288] sm:$0xff]
  %v252 = vld [vmem:[%s0 + $0x290] sm:$0xf]
  %v253 = vld [vmem:[%s0 + $0x294] sm:$0xff]
  %v254 = vld [vmem:[%s0 + $0x29c] sm:$0xf]
  %v255 = vld [vmem:[%s0 + $0x2a0] sm:$0xff]
  %v256 = vld [vmem:[%s0 + $0x2a8] sm:$0xf]
  %v257 = vld [vmem:[%s0 + $0x2ac] sm:$0xff]
  %v258 = vld [vmem:[%s0 + $0x2b4] sm:$0xf]
  %v259 = vld [vmem:[%s0 + $0x2b8] sm:$0xff]
  %v260 = vld [vmem:[%s0 + $0x2c0] sm:$0xf]
  %v261 = vld [vmem:[%s0 + $0x2c4] sm:$0xff]
  %v262 = vld [vmem:[%s0 + $0x2cc] sm:$0xf]
  %v263 = vld [vmem:[%s0 + $0x2d0] sm:$0xff]
  %v264 = vld [vmem:[%s0 + $0x2d8] sm:$0xf]
  %v265 = vld [vmem:[%s0 + $0x2dc] sm:$0xff]
  %v266 = vld [vmem:[%s0 + $0x2e4] sm:$0xf]
  %v267 = vld [vmem:[%s0 + $0x2e8] sm:$0xff]
  %v268 = vld [vmem:[%s0 + $0x2f0] sm:$0xf]
  %v269 = vld [vmem:[%s0 + $0x2f4] sm:$0xff]
  %v270 = vld [vmem:[%s0 + $0x2fc] sm:$0xf]
  %v271 = vld [vmem:[%s1] sm:$0xf]
  %v272 = vld [vmem:[%s1 + $0x4] sm:$0xf]
  %v273 = vld [vmem:[%s1 + $0x8] sm:$0xf]
  %v274 = vld [vmem:[%s1 + $0xc] sm:$0xf]
  %v275 = vld [vmem:[%s1 + $0x10] sm:$0xf]
  %v276 = vld [vmem:[%s1 + $0x14] sm:$0xf]
  %v277 = vld [vmem:[%s1 + $0x18] sm:$0xf]
  %v278 = vld [vmem:[%s1 + $0x1c] sm:$0xf]
  %v279 = vld [vmem:[%s1 + $0x20] sm:$0xf]
  %v280 = vld [vmem:[%s1 + $0x24] sm:$0xf]
  %v281 = vld [vmem:[%s1 + $0x28] sm:$0xf]
  %v282 = vld [vmem:[%s1 + $0x2c] sm:$0xf]
  %v283 = vld [vmem:[%s1 + $0x30] sm:$0xf]
  %v284 = vld [vmem:[%s1 + $0x34] sm:$0xf]
  %v285 = vld [vmem:[%s1 + $0x38] sm:$0xf]
  %v286 = vld [vmem:[%s1 + $0x3c] sm:$0xf]
  %v287 = vld [vmem:[%s1 + $0x40] sm:$0xf]
  %v288 = vld [vmem:[%s1 + $0x44] sm:$0xf]
  %v289 = vld [vmem:[%s1 + $0x48] sm:$0xf]
  %v290 = vld [vmem:[%s1 + $0x4c] sm:$0xf]
  %v291 = vld [vmem:[%s1 + $0x50] sm:$0xf]
  %v292 = vld [vmem:[%s1 + $0x54] sm:$0xf]
  %v293 = vld [vmem:[%s1 + $0x58] sm:$0xf]
  %v294 = vld [vmem:[%s1 + $0x5c] sm:$0xf]
  %v295 = vld [vmem:[%s1 + $0x60] sm:$0xf]
  %v296 = vld [vmem:[%s1 + $0x64] sm:$0xf]
  %v297 = vld [vmem:[%s1 + $0x68] sm:$0xf]
  %v298 = vld [vmem:[%s1 + $0x6c] sm:$0xf]
  %v299 = vld [vmem:[%s1 + $0x70] sm:$0xf]
  %v300 = vld [vmem:[%s1 + $0x74] sm:$0xf]
  %v301 = vld [vmem:[%s1 + $0x78] sm:$0xf]
  %v302 = vld [vmem:[%s1 + $0x7c] sm:$0xf]
  %v303 = vld [vmem:[%s1 + $0x80] sm:$0xf]
  %v304 = vld [vmem:[%s1 + $0x84] sm:$0xf]
  %v305 = vld [vmem:[%s1 + $0x88] sm:$0xf]
  %v306 = vld [vmem:[%s1 + $0x8c] sm:$0xf]
  %v307 = vld [vmem:[%s1 + $0x90] sm:$0xf]
  %v308 = vld [vmem:[%s1 + $0x94] sm:$0xf]
  %v309 = vld [vmem:[%s1 + $0x98] sm:$0xf]
  %v310 = vld [vmem:[%s1 + $0x9c] sm:$0xf]
  %v311 = vld [vmem:[%s1 + $0xa0] sm:$0xf]
  %v312 = vld [vmem:[%s1 + $0xa4] sm:$0xf]
  %v313 = vld [vmem:[%s1 + $0xa8] sm:$0xf]
  %v314 = vld [vmem:[%s1 + $0xac] sm:$0xf]
  %v315 = vld [vmem:[%s1 + $0xb0] sm:$0xf]
  %v316 = vld [vmem:[%s1 + $0xb4] sm:$0xf]
  %v317 = vld [vmem:[%s1 + $0xb8] sm:$0xf]
  %v318 = vld [vmem:[%s1 + $0xbc] sm:$0xf]
  %v447 = vunpack.c.l.b16 %v143
  %v448 = vunpack.c.h.b16 %v143
  %v449 = vunpack.c.l.b16 %v144
  %v450 = vunpack.c.l.b16 %v145
  %v451 = vunpack.c.h.b16 %v145
  %v452 = vunpack.c.l.b16 %v146
  %v453 = vunpack.c.l.b16 %v147
  %v454 = vunpack.c.h.b16 %v147
  %v455 = vunpack.c.l.b16 %v148
  %v456 = vunpack.c.l.b16 %v149
  %v457 = vunpack.c.h.b16 %v149
  %v458 = vunpack.c.l.b16 %v150
  %v459 = vunpack.c.l.b16 %v151
  %v460 = vunpack.c.h.b16 %v151
  %v461 = vunpack.c.l.b16 %v152
  %v462 = vunpack.c.l.b16 %v153
  %v463 = vunpack.c.h.b16 %v153
  %v464 = vunpack.c.l.b16 %v154
  %v465 = vunpack.c.l.b16 %v155
  %v466 = vunpack.c.h.b16 %v155
  %v467 = vunpack.c.l.b16 %v156
  %v468 = vunpack.c.l.b16 %v157
  %v469 = vunpack.c.h.b16 %v157
  %v470 = vunpack.c.l.b16 %v158
  %v471 = vunpack.c.l.b16 %v159
  %v472 = vunpack.c.h.b16 %v159
  %v473 = vunpack.c.l.b16 %v160
  %v474 = vunpack.c.l.b16 %v161
  %v475 = vunpack.c.h.b16 %v161
  %v476 = vunpack.c.l.b16 %v162
  %v477 = vunpack.c.l.b16 %v163
  %v478 = vunpack.c.h.b16 %v163
  %v479 = vunpack.c.l.b16 %v164
  %v480 = vunpack.c.l.b16 %v165
  %v481 = vunpack.c.h.b16 %v165
  %v482 = vunpack.c.l.b16 %v166
  %v483 = vunpack.c.l.b16 %v167
  %v484 = vunpack.c.h.b16 %v167
  %v485 = vunpack.c.l.b16 %v168
  %v486 = vunpack.c.l.b16 %v169
  %v487 = vunpack.c.h.b16 %v169
  %v488 = vunpack.c.l.b16 %v170
  %v489 = vunpack.c.l.b16 %v171
  %v490 = vunpack.c.h.b16 %v171
  %v491 = vunpack.c.l.b16 %v172
  %v492 = vunpack.c.l.b16 %v173
  %v493 = vunpack.c.h.b16 %v173
  %v494 = vunpack.c.l.b16 %v174
  %v495 = vunpack.c.l.b16 %v175
  %v496 = vunpack.c.h.b16 %v175
  %v497 = vunpack.c.l.b16 %v176
  %v498 = vunpack.c.l.b16 %v177
  %v499 = vunpack.c.h.b16 %v177
  %v500 = vunpack.c.l.b16 %v178
  %v501 = vunpack.c.l.b16 %v179
  %v502 = vunpack.c.h.b16 %v179
  %v503 = vunpack.c.l.b16 %v180
  %v504 = vunpack.c.l.b16 %v181
  %v505 = vunpack.c.h.b16 %v181
  %v506 = vunpack.c.l.b16 %v182
  %v507 = vunpack.c.l.b16 %v183
  %v508 = vunpack.c.h.b16 %v183
  %v509 = vunpack.c.l.b16 %v184
  %v510 = vunpack.c.l.b16 %v185
  %v511 = vunpack.c.h.b16 %v185
  %v512 = vunpack.c.l.b16 %v186
  %v513 = vunpack.c.l.b16 %v187
  %v514 = vunpack.c.h.b16 %v187
  %v515 = vunpack.c.l.b16 %v188
  %v516 = vunpack.c.l.b16 %v189
  %v517 = vunpack.c.h.b16 %v189
  %v518 = vunpack.c.l.b16 %v190
  %v519 = vunpack.c.l.b16 %v191
  %v520 = vunpack.c.h.b16 %v191
  %v521 = vunpack.c.l.b16 %v192
  %v522 = vunpack.c.l.b16 %v193
  %v523 = vunpack.c.h.b16 %v193
  %v524 = vunpack.c.l.b16 %v194
  %v525 = vunpack.c.l.b16 %v195
  %v526 = vunpack.c.h.b16 %v195
  %v527 = vunpack.c.l.b16 %v196
  %v528 = vunpack.c.l.b16 %v197
  %v529 = vunpack.c.h.b16 %v197
  %v530 = vunpack.c.l.b16 %v198
  %v531 = vunpack.c.l.b16 %v199
  %v532 = vunpack.c.h.b16 %v199
  %v533 = vunpack.c.l.b16 %v200
  %v534 = vunpack.c.l.b16 %v201
  %v535 = vunpack.c.h.b16 %v201
  %v536 = vunpack.c.l.b16 %v202
  %v537 = vunpack.c.l.b16 %v203
  %v538 = vunpack.c.h.b16 %v203
  %v539 = vunpack.c.l.b16 %v204
  %v540 = vunpack.c.l.b16 %v205
  %v541 = vunpack.c.h.b16 %v205
  %v542 = vunpack.c.l.b16 %v206
  %v543 = vunpack.c.l.b16 %v207
  %v544 = vunpack.c.h.b16 %v207
  %v545 = vunpack.c.l.b16 %v208
  %v546 = vunpack.c.l.b16 %v209
  %v547 = vunpack.c.h.b16 %v209
  %v548 = vunpack.c.l.b16 %v210
  %v549 = vunpack.c.l.b16 %v211
  %v550 = vunpack.c.h.b16 %v211
  %v551 = vunpack.c.l.b16 %v212
  %v552 = vunpack.c.l.b16 %v213
  %v553 = vunpack.c.h.b16 %v213
  %v554 = vunpack.c.l.b16 %v214
  %v555 = vunpack.c.l.b16 %v215
  %v556 = vunpack.c.h.b16 %v215
  %v557 = vunpack.c.l.b16 %v216
  %v558 = vunpack.c.l.b16 %v217
  %v559 = vunpack.c.h.b16 %v217
  %v560 = vunpack.c.l.b16 %v218
  %v561 = vunpack.c.l.b16 %v219
  %v562 = vunpack.c.h.b16 %v219
  %v563 = vunpack.c.l.b16 %v220
  %v564 = vunpack.c.l.b16 %v221
  %v565 = vunpack.c.h.b16 %v221
  %v566 = vunpack.c.l.b16 %v222
  %v567 = vunpack.c.l.b16 %v223
  %v568 = vunpack.c.h.b16 %v223
  %v569 = vunpack.c.l.b16 %v224
  %v570 = vunpack.c.l.b16 %v225
  %v571 = vunpack.c.h.b16 %v225
  %v572 = vunpack.c.l.b16 %v226
  %v573 = vunpack.c.l.b16 %v227
  %v574 = vunpack.c.h.b16 %v227
  %v575 = vunpack.c.l.b16 %v228
  %v576 = vunpack.c.l.b16 %v229
  %v577 = vunpack.c.h.b16 %v229
  %v578 = vunpack.c.l.b16 %v230
  %v579 = vunpack.c.l.b16 %v231
  %v580 = vunpack.c.h.b16 %v231
  %v581 = vunpack.c.l.b16 %v232
  %v582 = vunpack.c.l.b16 %v233
  %v583 = vunpack.c.h.b16 %v233
  %v584 = vunpack.c.l.b16 %v234
  %v585 = vunpack.c.l.b16 %v235
  %v586 = vunpack.c.h.b16 %v235
  %v587 = vunpack.c.l.b16 %v236
  %v588 = vunpack.c.l.b16 %v237
  %v589 = vunpack.c.h.b16 %v237
  %v590 = vunpack.c.l.b16 %v238
  %v591 = vunpack.c.l.b16 %v239
  %v592 = vunpack.c.h.b16 %v239
  %v593 = vunpack.c.l.b16 %v240
  %v594 = vunpack.c.l.b16 %v241
  %v595 = vunpack.c.h.b16 %v241
  %v596 = vunpack.c.l.b16 %v242
  %v597 = vunpack.c.l.b16 %v243
  %v598 = vunpack.c.h.b16 %v243
  %v599 = vunpack.c.l.b16 %v244
  %v600 = vunpack.c.l.b16 %v245
  %v601 = vunpack.c.h.b16 %v245
  %v602 = vunpack.c.l.b16 %v246
  %v603 = vunpack.c.l.b16 %v247
  %v604 = vunpack.c.h.b16 %v247
  %v605 = vunpack.c.l.b16 %v248
  %v606 = vunpack.c.l.b16 %v249
  %v607 = vunpack.c.h.b16 %v249
  %v608 = vunpack.c.l.b16 %v250
  %v609 = vunpack.c.l.b16 %v251
  %v610 = vunpack.c.h.b16 %v251
  %v611 = vunpack.c.l.b16 %v252
  %v612 = vunpack.c.l.b16 %v253
  %v613 = vunpack.c.h.b16 %v253
  %v614 = vunpack.c.l.b16 %v254
  %v615 = vunpack.c.l.b16 %v255
  %v616 = vunpack.c.h.b16 %v255
  %v617 = vunpack.c.l.b16 %v256
  %v618 = vunpack.c.l.b16 %v257
  %v619 = vunpack.c.h.b16 %v257
  %v620 = vunpack.c.l.b16 %v258
  %v621 = vunpack.c.l.b16 %v259
  %v622 = vunpack.c.h.b16 %v259
  %v623 = vunpack.c.l.b16 %v260
  %v624 = vunpack.c.l.b16 %v261
  %v625 = vunpack.c.h.b16 %v261
  %v626 = vunpack.c.l.b16 %v262
  %v627 = vunpack.c.l.b16 %v263
  %v628 = vunpack.c.h.b16 %v263
  %v629 = vunpack.c.l.b16 %v264
  %v630 = vunpack.c.l.b16 %v265
  %v631 = vunpack.c.h.b16 %v265
  %v632 = vunpack.c.l.b16 %v266
  %v633 = vunpack.c.l.b16 %v267
  %v634 = vunpack.c.h.b16 %v267
  %v635 = vunpack.c.l.b16 %v268
  %v636 = vunpack.c.l.b16 %v269
  %v637 = vunpack.c.h.b16 %v269
  %v638 = vunpack.c.l.b16 %v270
  %v639 = vpack.c.b16 %v450, %v447
  %v640 = vpack.c.b16 %v451, %v448
  %v641 = vpack.c.b16 %v452, %v449
  %v642 = vpack.c.b16 %v456, %v453
  %v643 = vpack.c.b16 %v457, %v454
  %v644 = vpack.c.b16 %v458, %v455
  %v645 = vpack.c.b16 %v462, %v459
  %v646 = vpack.c.b16 %v463, %v460
  %v647 = vpack.c.b16 %v464, %v461
  %v648 = vpack.c.b16 %v468, %v465
  %v649 = vpack.c.b16 %v469, %v466
  %v650 = vpack.c.b16 %v470, %v467
  %v651 = vpack.c.b16 %v474, %v471
  %v652 = vpack.c.b16 %v475, %v472
  %v653 = vpack.c.b16 %v476, %v473
  %v654 = vpack.c.b16 %v480, %v477
  %v655 = vpack.c.b16 %v481, %v478
  %v656 = vpack.c.b16 %v482, %v479
  %v657 = vpack.c.b16 %v486, %v483
  %v658 = vpack.c.b16 %v487, %v484
  %v659 = vpack.c.b16 %v488, %v485
  %v660 = vpack.c.b16 %v492, %v489
  %v661 = vpack.c.b16 %v493, %v490
  %v662 = vpack.c.b16 %v494, %v491
  %v663 = vpack.c.b16 %v498, %v495
  %v664 = vpack.c.b16 %v499, %v496
  %v665 = vpack.c.b16 %v500, %v497
  %v666 = vpack.c.b16 %v504, %v501
  %v667 = vpack.c.b16 %v505, %v502
  %v668 = vpack.c.b16 %v506, %v503
  %v669 = vpack.c.b16 %v510, %v507
  %v670 = vpack.c.b16 %v511, %v508
  %v671 = vpack.c.b16 %v512, %v509
  %v672 = vpack.c.b16 %v516, %v513
  %v673 = vpack.c.b16 %v517, %v514
  %v674 = vpack.c.b16 %v518, %v515
  %v675 = vpack.c.b16 %v522, %v519
  %v676 = vpack.c.b16 %v523, %v520
  %v677 = vpack.c.b16 %v524, %v521
  %v678 = vpack.c.b16 %v528, %v525
  %v679 = vpack.c.b16 %v529, %v526
  %v680 = vpack.c.b16 %v530, %v527
  %v681 = vpack.c.b16 %v534, %v531
  %v682 = vpack.c.b16 %v535, %v532
  %v683 = vpack.c.b16 %v536, %v533
  %v684 = vpack.c.b16 %v540, %v537
  %v685 = vpack.c.b16 %v541, %v538
  %v686 = vpack.c.b16 %v542, %v539
  %v687 = vpack.c.b16 %v546, %v543
  %v688 = vpack.c.b16 %v547, %v544
  %v689 = vpack.c.b16 %v548, %v545
  %v690 = vpack.c.b16 %v552, %v549
  %v691 = vpack.c.b16 %v553, %v550
  %v692 = vpack.c.b16 %v554, %v551
  %v693 = vpack.c.b16 %v558, %v555
  %v694 = vpack.c.b16 %v559, %v556
  %v695 = vpack.c.b16 %v560, %v557
  %v696 = vpack.c.b16 %v564, %v561
  %v697 = vpack.c.b16 %v565, %v562
  %v698 = vpack.c.b16 %v566, %v563
  %v699 = vpack.c.b16 %v570, %v567
  %v700 = vpack.c.b16 %v571, %v568
  %v701 = vpack.c.b16 %v572, %v569
  %v702 = vpack.c.b16 %v576, %v573
  %v703 = vpack.c.b16 %v577, %v574
  %v704 = vpack.c.b16 %v578, %v575
  %v705 = vpack.c.b16 %v582, %v579
  %v706 = vpack.c.b16 %v583, %v580
  %v707 = vpack.c.b16 %v584, %v581
  %v708 = vpack.c.b16 %v588, %v585
  %v709 = vpack.c.b16 %v589, %v586
  %v710 = vpack.c.b16 %v590, %v587
  %v711 = vpack.c.b16 %v594, %v591
  %v712 = vpack.c.b16 %v595, %v592
  %v713 = vpack.c.b16 %v596, %v593
  %v714 = vpack.c.b16 %v600, %v597
  %v715 = vpack.c.b16 %v601, %v598
  %v716 = vpack.c.b16 %v602, %v599
  %v717 = vpack.c.b16 %v606, %v603
  %v718 = vpack.c.b16 %v607, %v604
  %v719 = vpack.c.b16 %v608, %v605
  %v720 = vpack.c.b16 %v612, %v609
  %v721 = vpack.c.b16 %v613, %v610
  %v722 = vpack.c.b16 %v614, %v611
  %v723 = vpack.c.b16 %v618, %v615
  %v724 = vpack.c.b16 %v619, %v616
  %v725 = vpack.c.b16 %v620, %v617
  %v726 = vpack.c.b16 %v624, %v621
  %v727 = vpack.c.b16 %v625, %v622
  %v728 = vpack.c.b16 %v626, %v623
  %v729 = vpack.c.b16 %v630, %v627
  %v730 = vpack.c.b16 %v631, %v628
  %v731 = vpack.c.b16 %v632, %v629
  %v732 = vpack.c.b16 %v636, %v633
  %v733 = vpack.c.b16 %v637, %v634
  %v734 = vpack.c.b16 %v638, %v635
  %v879 = vunpack.c.l.b16 %v271
  %v880 = vunpack.c.l.b16 %v272
  %v881 = vunpack.c.l.b16 %v273
  %v882 = vunpack.c.l.b16 %v274
  %v883 = vunpack.c.l.b16 %v275
  %v884 = vunpack.c.l.b16 %v276
  %v885 = vunpack.c.l.b16 %v277
  %v886 = vunpack.c.l.b16 %v278
  %v887 = vunpack.c.l.b16 %v279
  %v888 = vunpack.c.l.b16 %v280
  %v889 = vunpack.c.l.b16 %v281
  %v890 = vunpack.c.l.b16 %v282
  %v891 = vunpack.c.l.b16 %v283
  %v892 = vunpack.c.l.b16 %v284
  %v893 = vunpack.c.l.b16 %v285
  %v894 = vunpack.c.l.b16 %v286
  %v895 = vunpack.c.l.b16 %v287
  %v896 = vunpack.c.l.b16 %v288
  %v897 = vunpack.c.l.b16 %v289
  %v898 = vunpack.c.l.b16 %v290
  %v899 = vunpack.c.l.b16 %v291
  %v900 = vunpack.c.l.b16 %v292
  %v901 = vunpack.c.l.b16 %v293
  %v902 = vunpack.c.l.b16 %v294
  %v903 = vunpack.c.l.b16 %v295
  %v904 = vunpack.c.l.b16 %v296
  %v905 = vunpack.c.l.b16 %v297
  %v906 = vunpack.c.l.b16 %v298
  %v907 = vunpack.c.l.b16 %v299
  %v908 = vunpack.c.l.b16 %v300
  %v909 = vunpack.c.l.b16 %v301
  %v910 = vunpack.c.l.b16 %v302
  %v911 = vunpack.c.l.b16 %v303
  %v912 = vunpack.c.l.b16 %v304
  %v913 = vunpack.c.l.b16 %v305
  %v914 = vunpack.c.l.b16 %v306
  %v915 = vunpack.c.l.b16 %v307
  %v916 = vunpack.c.l.b16 %v308
  %v917 = vunpack.c.l.b16 %v309
  %v918 = vunpack.c.l.b16 %v310
  %v919 = vunpack.c.l.b16 %v311
  %v920 = vunpack.c.l.b16 %v312
  %v921 = vunpack.c.l.b16 %v313
  %v922 = vunpack.c.l.b16 %v314
  %v923 = vunpack.c.l.b16 %v315
  %v924 = vunpack.c.l.b16 %v316
  %v925 = vunpack.c.l.b16 %v317
  %v926 = vunpack.c.l.b16 %v318
  %v927 = vpack.c.b16 %v880, %v879
  %v928 = vpack.c.b16 %v882, %v881
  %v929 = vpack.c.b16 %v884, %v883
  %v930 = vpack.c.b16 %v886, %v885
  %v931 = vpack.c.b16 %v888, %v887
  %v932 = vpack.c.b16 %v890, %v889
  %v933 = vpack.c.b16 %v892, %v891
  %v934 = vpack.c.b16 %v894, %v893
  %v935 = vpack.c.b16 %v896, %v895
  %v936 = vpack.c.b16 %v898, %v897
  %v937 = vpack.c.b16 %v900, %v899
  %v938 = vpack.c.b16 %v902, %v901
  %v939 = vpack.c.b16 %v904, %v903
  %v940 = vpack.c.b16 %v906, %v905
  %v941 = vpack.c.b16 %v908, %v907
  %v942 = vpack.c.b16 %v910, %v909
  %v943 = vpack.c.b16 %v912, %v911
  %v944 = vpack.c.b16 %v914, %v913
  %v945 = vpack.c.b16 %v916, %v915
  %v946 = vpack.c.b16 %v918, %v917
  %v947 = vpack.c.b16 %v920, %v919
  %v948 = vpack.c.b16 %v922, %v921
  %v949 = vpack.c.b16 %v924, %v923
  %v950 = vpack.c.b16 %v926, %v925
  %975 = vmatpush.bf16.msra.mxu0 %v934
  %976 = vmatpush.bf16.msra.mxu0 %v933
  %977 = vmatpush.bf16.msra.mxu0 %v932
  %978 = vmatpush.bf16.msra.mxu0 %v931
  %979 = vmatpush.bf16.msra.mxu0 %v930
  %980 = vmatpush.bf16.msra.mxu0 %v929
  %981 = vmatpush.bf16.msra.mxu0 %v928
  %982 = vmatpush.bf16.msra.mxu0 %v927
  %983 = vmatmul.bf16.gmra.mxu0 %v639
  %v984 = vpop.f32.mrf.mxu0
  %v985 = vadd.f32 0.0, %v984
  %v986 = vpop.f32.mrf.mxu0
  %v987 = vadd.f32 0.0, %v986
  %988 = vmatmul.bf16.gmra.mxu0 %v642
  %v989 = vpop.f32.mrf.mxu0
  %v990 = vadd.f32 0.0, %v989
  %v991 = vpop.f32.mrf.mxu0
  %v992 = vadd.f32 0.0, %v991
  %993 = vmatmul.bf16.gmra.mxu0 %v645
  %v994 = vpop.f32.mrf.mxu0
  %v995 = vadd.f32 0.0, %v994
  %v996 = vpop.f32.mrf.mxu0
  %v997 = vadd.f32 0.0, %v996
  %998 = vmatmul.bf16.gmra.mxu0 %v648
  %v999 = vpop.f32.mrf.mxu0
  %v1000 = vadd.f32 0.0, %v999
  %v1001 = vpop.f32.mrf.mxu0
  %v1002 = vadd.f32 0.0, %v1001
  %1003 = vmatmul.bf16.gmra.mxu0 %v651
  %v1004 = vpop.f32.mrf.mxu0
  %v1005 = vadd.f32 0.0, %v1004
  %v1006 = vpop.f32.mrf.mxu0
  %v1007 = vadd.f32 0.0, %v1006
  %1008 = vmatmul.bf16.gmra.mxu0 %v654
  %v1009 = vpop.f32.mrf.mxu0
  %v1010 = vadd.f32 0.0, %v1009
  %v1011 = vpop.f32.mrf.mxu0
  %v1012 = vadd.f32 0.0, %v1011
  %1013 = vmatmul.bf16.gmra.mxu0 %v657
  %v1014 = vpop.f32.mrf.mxu0
  %v1015 = vadd.f32 0.0, %v1014
  %v1016 = vpop.f32.mrf.mxu0
  %v1017 = vadd.f32 0.0, %v1016
  %1018 = vmatmul.bf16.gmra.mxu0 %v660
  %v1019 = vpop.f32.mrf.mxu0
  %v1020 = vadd.f32 0.0, %v1019
  %v1021 = vpop.f32.mrf.mxu0
  %v1022 = vadd.f32 0.0, %v1021
  %1023 = vmatmul.bf16.gmra.mxu0 %v663
  %v1024 = vpop.f32.mrf.mxu0
  %v1025 = vadd.f32 0.0, %v1024
  %v1026 = vpop.f32.mrf.mxu0
  %v1027 = vadd.f32 0.0, %v1026
  %1028 = vmatmul.bf16.gmra.mxu0 %v666
  %v1029 = vpop.f32.mrf.mxu0
  %v1030 = vadd.f32 0.0, %v1029
  %v1031 = vpop.f32.mrf.mxu0
  %v1032 = vadd.f32 0.0, %v1031
  %1033 = vmatmul.bf16.gmra.mxu0 %v669
  %v1034 = vpop.f32.mrf.mxu0
  %v1035 = vadd.f32 0.0, %v1034
  %v1036 = vpop.f32.mrf.mxu0
  %v1037 = vadd.f32 0.0, %v1036
  %1038 = vmatmul.bf16.gmra.mxu0 %v672
  %v1039 = vpop.f32.mrf.mxu0
  %v1040 = vadd.f32 0.0, %v1039
  %v1041 = vpop.f32.mrf.mxu0
  %v1042 = vadd.f32 0.0, %v1041
  %1043 = vmatmul.bf16.gmra.mxu0 %v675
  %v1044 = vpop.f32.mrf.mxu0
  %v1045 = vadd.f32 0.0, %v1044
  %v1046 = vpop.f32.mrf.mxu0
  %v1047 = vadd.f32 0.0, %v1046
  %1048 = vmatmul.bf16.gmra.mxu0 %v678
  %v1049 = vpop.f32.mrf.mxu0
  %v1050 = vadd.f32 0.0, %v1049
  %v1051 = vpop.f32.mrf.mxu0
  %v1052 = vadd.f32 0.0, %v1051
  %1053 = vmatmul.bf16.gmra.mxu0 %v681
  %v1054 = vpop.f32.mrf.mxu0
  %v1055 = vadd.f32 0.0, %v1054
  %v1056 = vpop.f32.mrf.mxu0
  %v1057 = vadd.f32 0.0, %v1056
  %1058 = vmatmul.bf16.gmra.mxu0 %v684
  %v1059 = vpop.f32.mrf.mxu0
  %v1060 = vadd.f32 0.0, %v1059
  %v1061 = vpop.f32.mrf.mxu0
  %v1062 = vadd.f32 0.0, %v1061
  %1063 = vmatmul.bf16.gmra.mxu0 %v687
  %v1064 = vpop.f32.mrf.mxu0
  %v1065 = vadd.f32 0.0, %v1064
  %v1066 = vpop.f32.mrf.mxu0
  %v1067 = vadd.f32 0.0, %v1066
  %1068 = vmatmul.bf16.gmra.mxu0 %v690
  %v1069 = vpop.f32.mrf.mxu0
  %v1070 = vadd.f32 0.0, %v1069
  %v1071 = vpop.f32.mrf.mxu0
  %v1072 = vadd.f32 0.0, %v1071
  %1073 = vmatmul.bf16.gmra.mxu0 %v693
  %v1074 = vpop.f32.mrf.mxu0
  %v1075 = vadd.f32 0.0, %v1074
  %v1076 = vpop.f32.mrf.mxu0
  %v1077 = vadd.f32 0.0, %v1076
  %1078 = vmatmul.bf16.gmra.mxu0 %v696
  %v1079 = vpop.f32.mrf.mxu0
  %v1080 = vadd.f32 0.0, %v1079
  %v1081 = vpop.f32.mrf.mxu0
  %v1082 = vadd.f32 0.0, %v1081
  %1083 = vmatmul.bf16.gmra.mxu0 %v699
  %v1084 = vpop.f32.mrf.mxu0
  %v1085 = vadd.f32 0.0, %v1084
  %v1086 = vpop.f32.mrf.mxu0
  %v1087 = vadd.f32 0.0, %v1086
  %1088 = vmatmul.bf16.gmra.mxu0 %v702
  %v1089 = vpop.f32.mrf.mxu0
  %v1090 = vadd.f32 0.0, %v1089
  %v1091 = vpop.f32.mrf.mxu0
  %v1092 = vadd.f32 0.0, %v1091
  %1093 = vmatmul.bf16.gmra.mxu0 %v705
  %v1094 = vpop.f32.mrf.mxu0
  %v1095 = vadd.f32 0.0, %v1094
  %v1096 = vpop.f32.mrf.mxu0
  %v1097 = vadd.f32 0.0, %v1096
  %1098 = vmatmul.bf16.gmra.mxu0 %v708
  %v1099 = vpop.f32.mrf.mxu0
  %v1100 = vadd.f32 0.0, %v1099
  %v1101 = vpop.f32.mrf.mxu0
  %v1102 = vadd.f32 0.0, %v1101
  %1103 = vmatmul.bf16.gmra.mxu0 %v711
  %v1104 = vpop.f32.mrf.mxu0
  %v1105 = vadd.f32 0.0, %v1104
  %v1106 = vpop.f32.mrf.mxu0
  %v1107 = vadd.f32 0.0, %v1106
  %1108 = vmatmul.bf16.gmra.mxu0 %v714
  %v1109 = vpop.f32.mrf.mxu0
  %v1110 = vadd.f32 0.0, %v1109
  %v1111 = vpop.f32.mrf.mxu0
  %v1112 = vadd.f32 0.0, %v1111
  %1113 = vmatmul.bf16.gmra.mxu0 %v717
  %v1114 = vpop.f32.mrf.mxu0
  %v1115 = vadd.f32 0.0, %v1114
  %v1116 = vpop.f32.mrf.mxu0
  %v1117 = vadd.f32 0.0, %v1116
  %1118 = vmatmul.bf16.gmra.mxu0 %v720
  %v1119 = vpop.f32.mrf.mxu0
  %v1120 = vadd.f32 0.0, %v1119
  %v1121 = vpop.f32.mrf.mxu0
  %v1122 = vadd.f32 0.0, %v1121
  %1123 = vmatmul.bf16.gmra.mxu0 %v723
  %v1124 = vpop.f32.mrf.mxu0
  %v1125 = vadd.f32 0.0, %v1124
  %v1126 = vpop.f32.mrf.mxu0
  %v1127 = vadd.f32 0.0, %v1126
  %1128 = vmatmul.bf16.gmra.mxu0 %v726
  %v1129 = vpop.f32.mrf.mxu0
  %v1130 = vadd.f32 0.0, %v1129
  %v1131 = vpop.f32.mrf.mxu0
  %v1132 = vadd.f32 0.0, %v1131
  %1133 = vmatmul.bf16.gmra.mxu0 %v729
  %v1134 = vpop.f32.mrf.mxu0
  %v1135 = vadd.f32 0.0, %v1134
  %v1136 = vpop.f32.mrf.mxu0
  %v1137 = vadd.f32 0.0, %v1136
  %1138 = vmatmul.bf16.gmra.mxu0 %v732
  %v1139 = vpop.f32.mrf.mxu0
  %v1140 = vadd.f32 0.0, %v1139
  %v1141 = vpop.f32.mrf.mxu0
  %v1142 = vadd.f32 0.0, %v1141
  %1143 = vdwg.mxu0
  %1144 = vmatpush.bf16.msra.mxu0 %v942
  %1145 = vmatpush.bf16.msra.mxu0 %v941
  %1146 = vmatpush.bf16.msra.mxu0 %v940
  %1147 = vmatpush.bf16.msra.mxu0 %v939
  %1148 = vmatpush.bf16.msra.mxu0 %v938
  %1149 = vmatpush.bf16.msra.mxu0 %v937
  %1150 = vmatpush.bf16.msra.mxu0 %v936
  %1151 = vmatpush.bf16.msra.mxu0 %v935
  %1152 = vmatmul.bf16.gmra.mxu0 %v640
  %v1153 = vpop.f32.mrf.mxu0
  %v1154 = vadd.f32 %v985, %v1153
  %v1155 = vpop.f32.mrf.mxu0
  %v1156 = vadd.f32 %v987, %v1155
  %1157 = vmatmul.bf16.gmra.mxu0 %v643
  %v1158 = vpop.f32.mrf.mxu0
  %v1159 = vadd.f32 %v990, %v1158
  %v1160 = vpop.f32.mrf.mxu0
  %v1161 = vadd.f32 %v992, %v1160
  %1162 = vmatmul.bf16.gmra.mxu0 %v646
  %v1163 = vpop.f32.mrf.mxu0
  %v1164 = vadd.f32 %v995, %v1163
  %v1165 = vpop.f32.mrf.mxu0
  %v1166 = vadd.f32 %v997, %v1165
  %1167 = vmatmul.bf16.gmra.mxu0 %v649
  %v1168 = vpop.f32.mrf.mxu0
  %v1169 = vadd.f32 %v1000, %v1168
  %v1170 = vpop.f32.mrf.mxu0
  %v1171 = vadd.f32 %v1002, %v1170
  %1172 = vmatmul.bf16.gmra.mxu0 %v652
  %v1173 = vpop.f32.mrf.mxu0
  %v1174 = vadd.f32 %v1005, %v1173
  %v1175 = vpop.f32.mrf.mxu0
  %v1176 = vadd.f32 %v1007, %v1175
  %1177 = vmatmul.bf16.gmra.mxu0 %v655
  %v1178 = vpop.f32.mrf.mxu0
  %v1179 = vadd.f32 %v1010, %v1178
  %v1180 = vpop.f32.mrf.mxu0
  %v1181 = vadd.f32 %v1012, %v1180
  %1182 = vmatmul.bf16.gmra.mxu0 %v658
  %v1183 = vpop.f32.mrf.mxu0
  %v1184 = vadd.f32 %v1015, %v1183
  %v1185 = vpop.f32.mrf.mxu0
  %v1186 = vadd.f32 %v1017, %v1185
  %1187 = vmatmul.bf16.gmra.mxu0 %v661
  %v1188 = vpop.f32.mrf.mxu0
  %v1189 = vadd.f32 %v1020, %v1188
  %v1190 = vpop.f32.mrf.mxu0
  %v1191 = vadd.f32 %v1022, %v1190
  %1192 = vmatmul.bf16.gmra.mxu0 %v664
  %v1193 = vpop.f32.mrf.mxu0
  %v1194 = vadd.f32 %v1025, %v1193
  %v1195 = vpop.f32.mrf.mxu0
  %v1196 = vadd.f32 %v1027, %v1195
  %1197 = vmatmul.bf16.gmra.mxu0 %v667
  %v1198 = vpop.f32.mrf.mxu0
  %v1199 = vadd.f32 %v1030, %v1198
  %v1200 = vpop.f32.mrf.mxu0
  %v1201 = vadd.f32 %v1032, %v1200
  %1202 = vmatmul.bf16.gmra.mxu0 %v670
  %v1203 = vpop.f32.mrf.mxu0
  %v1204 = vadd.f32 %v1035, %v1203
  %v1205 = vpop.f32.mrf.mxu0
  %v1206 = vadd.f32 %v1037, %v1205
  %1207 = vmatmul.bf16.gmra.mxu0 %v673
  %v1208 = vpop.f32.mrf.mxu0
  %v1209 = vadd.f32 %v1040, %v1208
  %v1210 = vpop.f32.mrf.mxu0
  %v1211 = vadd.f32 %v1042, %v1210
  %1212 = vmatmul.bf16.gmra.mxu0 %v676
  %v1213 = vpop.f32.mrf.mxu0
  %v1214 = vadd.f32 %v1045, %v1213
  %v1215 = vpop.f32.mrf.mxu0
  %v1216 = vadd.f32 %v1047, %v1215
  %1217 = vmatmul.bf16.gmra.mxu0 %v679
  %v1218 = vpop.f32.mrf.mxu0
  %v1219 = vadd.f32 %v1050, %v1218
  %v1220 = vpop.f32.mrf.mxu0
  %v1221 = vadd.f32 %v1052, %v1220
  %1222 = vmatmul.bf16.gmra.mxu0 %v682
  %v1223 = vpop.f32.mrf.mxu0
  %v1224 = vadd.f32 %v1055, %v1223
  %v1225 = vpop.f32.mrf.mxu0
  %v1226 = vadd.f32 %v1057, %v1225
  %1227 = vmatmul.bf16.gmra.mxu0 %v685
  %v1228 = vpop.f32.mrf.mxu0
  %v1229 = vadd.f32 %v1060, %v1228
  %v1230 = vpop.f32.mrf.mxu0
  %v1231 = vadd.f32 %v1062, %v1230
  %1232 = vmatmul.bf16.gmra.mxu0 %v688
  %v1233 = vpop.f32.mrf.mxu0
  %v1234 = vadd.f32 %v1065, %v1233
  %v1235 = vpop.f32.mrf.mxu0
  %v1236 = vadd.f32 %v1067, %v1235
  %1237 = vmatmul.bf16.gmra.mxu0 %v691
  %v1238 = vpop.f32.mrf.mxu0
  %v1239 = vadd.f32 %v1070, %v1238
  %v1240 = vpop.f32.mrf.mxu0
  %v1241 = vadd.f32 %v1072, %v1240
  %1242 = vmatmul.bf16.gmra.mxu0 %v694
  %v1243 = vpop.f32.mrf.mxu0
  %v1244 = vadd.f32 %v1075, %v1243
  %v1245 = vpop.f32.mrf.mxu0
  %v1246 = vadd.f32 %v1077, %v1245
  %1247 = vmatmul.bf16.gmra.mxu0 %v697
  %v1248 = vpop.f32.mrf.mxu0
  %v1249 = vadd.f32 %v1080, %v1248
  %v1250 = vpop.f32.mrf.mxu0
  %v1251 = vadd.f32 %v1082, %v1250
  %1252 = vmatmul.bf16.gmra.mxu0 %v700
  %v1253 = vpop.f32.mrf.mxu0
  %v1254 = vadd.f32 %v1085, %v1253
  %v1255 = vpop.f32.mrf.mxu0
  %v1256 = vadd.f32 %v1087, %v1255
  %1257 = vmatmul.bf16.gmra.mxu0 %v703
  %v1258 = vpop.f32.mrf.mxu0
  %v1259 = vadd.f32 %v1090, %v1258
  %v1260 = vpop.f32.mrf.mxu0
  %v1261 = vadd.f32 %v1092, %v1260
  %1262 = vmatmul.bf16.gmra.mxu0 %v706
  %v1263 = vpop.f32.mrf.mxu0
  %v1264 = vadd.f32 %v1095, %v1263
  %v1265 = vpop.f32.mrf.mxu0
  %v1266 = vadd.f32 %v1097, %v1265
  %1267 = vmatmul.bf16.gmra.mxu0 %v709
  %v1268 = vpop.f32.mrf.mxu0
  %v1269 = vadd.f32 %v1100, %v1268
  %v1270 = vpop.f32.mrf.mxu0
  %v1271 = vadd.f32 %v1102, %v1270
  %1272 = vmatmul.bf16.gmra.mxu0 %v712
  %v1273 = vpop.f32.mrf.mxu0
  %v1274 = vadd.f32 %v1105, %v1273
  %v1275 = vpop.f32.mrf.mxu0
  %v1276 = vadd.f32 %v1107, %v1275
  %1277 = vmatmul.bf16.gmra.mxu0 %v715
  %v1278 = vpop.f32.mrf.mxu0
  %v1279 = vadd.f32 %v1110, %v1278
  %v1280 = vpop.f32.mrf.mxu0
  %v1281 = vadd.f32 %v1112, %v1280
  %1282 = vmatmul.bf16.gmra.mxu0 %v718
  %v1283 = vpop.f32.mrf.mxu0
  %v1284 = vadd.f32 %v1115, %v1283
  %v1285 = vpop.f32.mrf.mxu0
  %v1286 = vadd.f32 %v1117, %v1285
  %1287 = vmatmul.bf16.gmra.mxu0 %v721
  %v1288 = vpop.f32.mrf.mxu0
  %v1289 = vadd.f32 %v1120, %v1288
  %v1290 = vpop.f32.mrf.mxu0
  %v1291 = vadd.f32 %v1122, %v1290
  %1292 = vmatmul.bf16.gmra.mxu0 %v724
  %v1293 = vpop.f32.mrf.mxu0
  %v1294 = vadd.f32 %v1125, %v1293
  %v1295 = vpop.f32.mrf.mxu0
  %v1296 = vadd.f32 %v1127, %v1295
  %1297 = vmatmul.bf16.gmra.mxu0 %v727
  %v1298 = vpop.f32.mrf.mxu0
  %v1299 = vadd.f32 %v1130, %v1298
  %v1300 = vpop.f32.mrf.mxu0
  %v1301 = vadd.f32 %v1132, %v1300
  %1302 = vmatmul.bf16.gmra.mxu0 %v730
  %v1303 = vpop.f32.mrf.mxu0
  %v1304 = vadd.f32 %v1135, %v1303
  %v1305 = vpop.f32.mrf.mxu0
  %v1306 = vadd.f32 %v1137, %v1305
  %1307 = vmatmul.bf16.gmra.mxu0 %v733
  %v1308 = vpop.f32.mrf.mxu0
  %v1309 = vadd.f32 %v1140, %v1308
  %v1310 = vpop.f32.mrf.mxu0
  %v1311 = vadd.f32 %v1142, %v1310
  %1312 = vdwg.mxu0
  %1313 = vmatpush.bf16.msra.mxu0 %v950
  %1314 = vmatpush.bf16.msra.mxu0 %v949
  %1315 = vmatpush.bf16.msra.mxu0 %v948
  %1316 = vmatpush.bf16.msra.mxu0 %v947
  %1317 = vmatpush.bf16.msra.mxu0 %v946
  %1318 = vmatpush.bf16.msra.mxu0 %v945
  %1319 = vmatpush.bf16.msra.mxu0 %v944
  %1320 = vmatpush.bf16.msra.mxu0 %v943
  %1321 = vmatmul.bf16.gmra.mxu0 %v641
  %v1322 = vpop.f32.mrf.mxu0
  %v1323 = vadd.f32 %v1154, %v1322
  %v1324 = vpop.f32.mrf.mxu0
  %v1325 = vadd.f32 %v1156, %v1324
  %1326 = vmatmul.bf16.gmra.mxu0 %v644
  %v1327 = vpop.f32.mrf.mxu0
  %v1328 = vadd.f32 %v1159, %v1327
  %v1329 = vpop.f32.mrf.mxu0
  %v1330 = vadd.f32 %v1161, %v1329
  %1331 = vmatmul.bf16.gmra.mxu0 %v647
  %v1332 = vpop.f32.mrf.mxu0
  %v1333 = vadd.f32 %v1164, %v1332
  %v1334 = vpop.f32.mrf.mxu0
  %v1335 = vadd.f32 %v1166, %v1334
  %1336 = vmatmul.bf16.gmra.mxu0 %v650
  %v1337 = vpop.f32.mrf.mxu0
  %v1338 = vadd.f32 %v1169, %v1337
  %v1339 = vpop.f32.mrf.mxu0
  %v1340 = vadd.f32 %v1171, %v1339
  %1341 = vmatmul.bf16.gmra.mxu0 %v653
  %v1342 = vpop.f32.mrf.mxu0
  %v1343 = vadd.f32 %v1174, %v1342
  %v1344 = vpop.f32.mrf.mxu0
  %v1345 = vadd.f32 %v1176, %v1344
  %1346 = vmatmul.bf16.gmra.mxu0 %v656
  %v1347 = vpop.f32.mrf.mxu0
  %v1348 = vadd.f32 %v1179, %v1347
  %v1349 = vpop.f32.mrf.mxu0
  %v1350 = vadd.f32 %v1181, %v1349
  %1351 = vmatmul.bf16.gmra.mxu0 %v659
  %v1352 = vpop.f32.mrf.mxu0
  %v1353 = vadd.f32 %v1184, %v1352
  %v1354 = vpop.f32.mrf.mxu0
  %v1355 = vadd.f32 %v1186, %v1354
  %1356 = vmatmul.bf16.gmra.mxu0 %v662
  %v1357 = vpop.f32.mrf.mxu0
  %v1358 = vadd.f32 %v1189, %v1357
  %v1359 = vpop.f32.mrf.mxu0
  %v1360 = vadd.f32 %v1191, %v1359
  %1361 = vmatmul.bf16.gmra.mxu0 %v665
  %v1362 = vpop.f32.mrf.mxu0
  %v1363 = vadd.f32 %v1194, %v1362
  %v1364 = vpop.f32.mrf.mxu0
  %v1365 = vadd.f32 %v1196, %v1364
  %1366 = vmatmul.bf16.gmra.mxu0 %v668
  %v1367 = vpop.f32.mrf.mxu0
  %v1368 = vadd.f32 %v1199, %v1367
  %v1369 = vpop.f32.mrf.mxu0
  %v1370 = vadd.f32 %v1201, %v1369
  %1371 = vmatmul.bf16.gmra.mxu0 %v671
  %v1372 = vpop.f32.mrf.mxu0
  %v1373 = vadd.f32 %v1204, %v1372
  %v1374 = vpop.f32.mrf.mxu0
  %v1375 = vadd.f32 %v1206, %v1374
  %1376 = vmatmul.bf16.gmra.mxu0 %v674
  %v1377 = vpop.f32.mrf.mxu0
  %v1378 = vadd.f32 %v1209, %v1377
  %v1379 = vpop.f32.mrf.mxu0
  %v1380 = vadd.f32 %v1211, %v1379
  %1381 = vmatmul.bf16.gmra.mxu0 %v677
  %v1382 = vpop.f32.mrf.mxu0
  %v1383 = vadd.f32 %v1214, %v1382
  %v1384 = vpop.f32.mrf.mxu0
  %v1385 = vadd.f32 %v1216, %v1384
  %1386 = vmatmul.bf16.gmra.mxu0 %v680
  %v1387 = vpop.f32.mrf.mxu0
  %v1388 = vadd.f32 %v1219, %v1387
  %v1389 = vpop.f32.mrf.mxu0
  %v1390 = vadd.f32 %v1221, %v1389
  %1391 = vmatmul.bf16.gmra.mxu0 %v683
  %v1392 = vpop.f32.mrf.mxu0
  %v1393 = vadd.f32 %v1224, %v1392
  %v1394 = vpop.f32.mrf.mxu0
  %v1395 = vadd.f32 %v1226, %v1394
  %1396 = vmatmul.bf16.gmra.mxu0 %v686
  %v1397 = vpop.f32.mrf.mxu0
  %v1398 = vadd.f32 %v1229, %v1397
  %v1399 = vpop.f32.mrf.mxu0
  %v1400 = vadd.f32 %v1231, %v1399
  %1401 = vmatmul.bf16.gmra.mxu0 %v689
  %v1402 = vpop.f32.mrf.mxu0
  %v1403 = vadd.f32 %v1234, %v1402
  %v1404 = vpop.f32.mrf.mxu0
  %v1405 = vadd.f32 %v1236, %v1404
  %1406 = vmatmul.bf16.gmra.mxu0 %v692
  %v1407 = vpop.f32.mrf.mxu0
  %v1408 = vadd.f32 %v1239, %v1407
  %v1409 = vpop.f32.mrf.mxu0
  %v1410 = vadd.f32 %v1241, %v1409
  %1411 = vmatmul.bf16.gmra.mxu0 %v695
  %v1412 = vpop.f32.mrf.mxu0
  %v1413 = vadd.f32 %v1244, %v1412
  %v1414 = vpop.f32.mrf.mxu0
  %v1415 = vadd.f32 %v1246, %v1414
  %1416 = vmatmul.bf16.gmra.mxu0 %v698
  %v1417 = vpop.f32.mrf.mxu0
  %v1418 = vadd.f32 %v1249, %v1417
  %v1419 = vpop.f32.mrf.mxu0
  %v1420 = vadd.f32 %v1251, %v1419
  %1421 = vmatmul.bf16.gmra.mxu0 %v701
  %v1422 = vpop.f32.mrf.mxu0
  %v1423 = vadd.f32 %v1254, %v1422
  %v1424 = vpop.f32.mrf.mxu0
  %v1425 = vadd.f32 %v1256, %v1424
  %1426 = vmatmul.bf16.gmra.mxu0 %v704
  %v1427 = vpop.f32.mrf.mxu0
  %v1428 = vadd.f32 %v1259, %v1427
  %v1429 = vpop.f32.mrf.mxu0
  %v1430 = vadd.f32 %v1261, %v1429
  %1431 = vmatmul.bf16.gmra.mxu0 %v707
  %v1432 = vpop.f32.mrf.mxu0
  %v1433 = vadd.f32 %v1264, %v1432
  %v1434 = vpop.f32.mrf.mxu0
  %v1435 = vadd.f32 %v1266, %v1434
  %1436 = vmatmul.bf16.gmra.mxu0 %v710
  %v1437 = vpop.f32.mrf.mxu0
  %v1438 = vadd.f32 %v1269, %v1437
  %v1439 = vpop.f32.mrf.mxu0
  %v1440 = vadd.f32 %v1271, %v1439
  %1441 = vmatmul.bf16.gmra.mxu0 %v713
  %v1442 = vpop.f32.mrf.mxu0
  %v1443 = vadd.f32 %v1274, %v1442
  %v1444 = vpop.f32.mrf.mxu0
  %v1445 = vadd.f32 %v1276, %v1444
  %1446 = vmatmul.bf16.gmra.mxu0 %v716
  %v1447 = vpop.f32.mrf.mxu0
  %v1448 = vadd.f32 %v1279, %v1447
  %v1449 = vpop.f32.mrf.mxu0
  %v1450 = vadd.f32 %v1281, %v1449
  %1451 = vmatmul.bf16.gmra.mxu0 %v719
  %v1452 = vpop.f32.mrf.mxu0
  %v1453 = vadd.f32 %v1284, %v1452
  %v1454 = vpop.f32.mrf.mxu0
  %v1455 = vadd.f32 %v1286, %v1454
  %1456 = vmatmul.bf16.gmra.mxu0 %v722
  %v1457 = vpop.f32.mrf.mxu0
  %v1458 = vadd.f32 %v1289, %v1457
  %v1459 = vpop.f32.mrf.mxu0
  %v1460 = vadd.f32 %v1291, %v1459
  %1461 = vmatmul.bf16.gmra.mxu0 %v725
  %v1462 = vpop.f32.mrf.mxu0
  %v1463 = vadd.f32 %v1294, %v1462
  %v1464 = vpop.f32.mrf.mxu0
  %v1465 = vadd.f32 %v1296, %v1464
  %1466 = vmatmul.bf16.gmra.mxu0 %v728
  %v1467 = vpop.f32.mrf.mxu0
  %v1468 = vadd.f32 %v1299, %v1467
  %v1469 = vpop.f32.mrf.mxu0
  %v1470 = vadd.f32 %v1301, %v1469
  %1471 = vmatmul.bf16.gmra.mxu0 %v731
  %v1472 = vpop.f32.mrf.mxu0
  %v1473 = vadd.f32 %v1304, %v1472
  %v1474 = vpop.f32.mrf.mxu0
  %v1475 = vadd.f32 %v1306, %v1474
  %1476 = vmatmul.bf16.gmra.mxu0 %v734
  %v1477 = vpop.f32.mrf.mxu0
  %v1478 = vadd.f32 %v1309, %v1477
  %v1479 = vpop.f32.mrf.mxu0
  %v1480 = vadd.f32 %v1311, %v1479
  %1481 = vdwg.mxu0
  %v1482 = vadd.f32 %v79, %v1323
  %v1483 = vadd.f32 %v80, %v1325
  %v1484 = vadd.f32 %v81, %v1328
  %v1485 = vadd.f32 %v82, %v1330
  %v1486 = vadd.f32 %v83, %v1333
  %v1487 = vadd.f32 %v84, %v1335
  %v1488 = vadd.f32 %v85, %v1338
  %v1489 = vadd.f32 %v86, %v1340
  %v1490 = vadd.f32 %v87, %v1343
  %v1491 = vadd.f32 %v88, %v1345
  %v1492 = vadd.f32 %v89, %v1348
  %v1493 = vadd.f32 %v90, %v1350
  %v1494 = vadd.f32 %v91, %v1353
  %v1495 = vadd.f32 %v92, %v1355
  %v1496 = vadd.f32 %v93, %v1358
  %v1497 = vadd.f32 %v94, %v1360
  %v1498 = vadd.f32 %v95, %v1363
  %v1499 = vadd.f32 %v96, %v1365
  %v1500 = vadd.f32 %v97, %v1368
  %v1501 = vadd.f32 %v98, %v1370
  %v1502 = vadd.f32 %v99, %v1373
  %v1503 = vadd.f32 %v100, %v1375
  %v1504 = vadd.f32 %v101, %v1378
  %v1505 = vadd.f32 %v102, %v1380
  %v1506 = vadd.f32 %v103, %v1383
  %v1507 = vadd.f32 %v104, %v1385
  %v1508 = vadd.f32 %v105, %v1388
  %v1509 = vadd.f32 %v106, %v1390
  %v1510 = vadd.f32 %v107, %v1393
  %v1511 = vadd.f32 %v108, %v1395
  %v1512 = vadd.f32 %v109, %v1398
  %v1513 = vadd.f32 %v110, %v1400
  %v1514 = vadd.f32 %v111, %v1403
  %v1515 = vadd.f32 %v112, %v1405
  %v1516 = vadd.f32 %v113, %v1408
  %v1517 = vadd.f32 %v114, %v1410
  %v1518 = vadd.f32 %v115, %v1413
  %v1519 = vadd.f32 %v116, %v1415
  %v1520 = vadd.f32 %v117, %v1418
  %v1521 = vadd.f32 %v118, %v1420
  %v1522 = vadd.f32 %v119, %v1423
  %v1523 = vadd.f32 %v120, %v1425
  %v1524 = vadd.f32 %v121, %v1428
  %v1525 = vadd.f32 %v122, %v1430
  %v1526 = vadd.f32 %v123, %v1433
  %v1527 = vadd.f32 %v124, %v1435
  %v1528 = vadd.f32 %v125, %v1438
  %v1529 = vadd.f32 %v126, %v1440
  %v1530 = vadd.f32 %v127, %v1443
  %v1531 = vadd.f32 %v128, %v1445
  %v1532 = vadd.f32 %v129, %v1448
  %v1533 = vadd.f32 %v130, %v1450
  %v1534 = vadd.f32 %v131, %v1453
  %v1535 = vadd.f32 %v132, %v1455
  %v1536 = vadd.f32 %v133, %v1458
  %v1537 = vadd.f32 %v134, %v1460
  %v1538 = vadd.f32 %v135, %v1463
  %v1539 = vadd.f32 %v136, %v1465
  %v1540 = vadd.f32 %v137, %v1468
  %v1541 = vadd.f32 %v138, %v1470
  %v1542 = vadd.f32 %v139, %v1473
  %v1543 = vadd.f32 %v140, %v1475
  %v1544 = vadd.f32 %v141, %v1478
  %v1545 = vadd.f32 %v142, %v1480
  %1546 = vst [vmem:[#allocation2] sm:$0xff] %v1482
  %1547 = vst [vmem:[#allocation2 + $0x8] sm:$0xff] %v1483
  %1548 = vst [vmem:[#allocation2 + $0x10] sm:$0xff] %v1484
  %1549 = vst [vmem:[#allocation2 + $0x18] sm:$0xff] %v1485
  %1550 = vst [vmem:[#allocation2 + $0x20] sm:$0xff] %v1486
  %1551 = vst [vmem:[#allocation2 + $0x28] sm:$0xff] %v1487
  %1552 = vst [vmem:[#allocation2 + $0x30] sm:$0xff] %v1488
  %1553 = vst [vmem:[#allocation2 + $0x38] sm:$0xff] %v1489
  %1554 = vst [vmem:[#allocation2 + $0x40] sm:$0xff] %v1490
  %1555 = vst [vmem:[#allocation2 + $0x48] sm:$0xff] %v1491
  %1556 = vst [vmem:[#allocation2 + $0x50] sm:$0xff] %v1492
  %1557 = vst [vmem:[#allocation2 + $0x58] sm:$0xff] %v1493
  %1558 = vst [vmem:[#allocation2 + $0x60] sm:$0xff] %v1494
  %1559 = vst [vmem:[#allocation2 + $0x68] sm:$0xff] %v1495
  %1560 = vst [vmem:[#allocation2 + $0x70] sm:$0xff] %v1496
  %1561 = vst [vmem:[#allocation2 + $0x78] sm:$0xff] %v1497
  %1562 = vst [vmem:[#allocation2 + $0x80] sm:$0xff] %v1498
  %1563 = vst [vmem:[#allocation2 + $0x88] sm:$0xff] %v1499
  %1564 = vst [vmem:[#allocation2 + $0x90] sm:$0xff] %v1500
  %1565 = vst [vmem:[#allocation2 + $0x98] sm:$0xff] %v1501
  %1566 = vst [vmem:[#allocation2 + $0xa0] sm:$0xff] %v1502
  %1567 = vst [vmem:[#allocation2 + $0xa8] sm:$0xff] %v1503
  %1568 = vst [vmem:[#allocation2 + $0xb0] sm:$0xff] %v1504
  %1569 = vst [vmem:[#allocation2 + $0xb8] sm:$0xff] %v1505
  %1570 = vst [vmem:[#allocation2 + $0xc0] sm:$0xff] %v1506
  %1571 = vst [vmem:[#allocation2 + $0xc8] sm:$0xff] %v1507
  %1572 = vst [vmem:[#allocation2 + $0xd0] sm:$0xff] %v1508
  %1573 = vst [vmem:[#allocation2 + $0xd8] sm:$0xff] %v1509
  %1574 = vst [vmem:[#allocation2 + $0xe0] sm:$0xff] %v1510
  %1575 = vst [vmem:[#allocation2 + $0xe8] sm:$0xff] %v1511
  %1576 = vst [vmem:[#allocation2 + $0xf0] sm:$0xff] %v1512
  %1577 = vst [vmem:[#allocation2 + $0xf8] sm:$0xff] %v1513
  %1578 = vst [vmem:[#allocation2 + $0x100] sm:$0xff] %v1514
  %1579 = vst [vmem:[#allocation2 + $0x108] sm:$0xff] %v1515
  %1580 = vst [vmem:[#allocation2 + $0x110] sm:$0xff] %v1516
  %1581 = vst [vmem:[#allocation2 + $0x118] sm:$0xff] %v1517
  %1582 = vst [vmem:[#allocation2 + $0x120] sm:$0xff] %v1518
  %1583 = vst [vmem:[#allocation2 + $0x128] sm:$0xff] %v1519
  %1584 = vst [vmem:[#allocation2 + $0x130] sm:$0xff] %v1520
  %1585 = vst [vmem:[#allocation2 + $0x138] sm:$0xff] %v1521
  %1586 = vst [vmem:[#allocation2 + $0x140] sm:$0xff] %v1522
  %1587 = vst [vmem:[#allocation2 + $0x148] sm:$0xff] %v1523
  %1588 = vst [vmem:[#allocation2 + $0x150] sm:$0xff] %v1524
  %1589 = vst [vmem:[#allocation2 + $0x158] sm:$0xff] %v1525
  %1590 = vst [vmem:[#allocation2 + $0x160] sm:$0xff] %v1526
  %1591 = vst [vmem:[#allocation2 + $0x168] sm:$0xff] %v1527
  %1592 = vst [vmem:[#allocation2 + $0x170] sm:$0xff] %v1528
  %1593 = vst [vmem:[#allocation2 + $0x178] sm:$0xff] %v1529
  %1594 = vst [vmem:[#allocation2 + $0x180] sm:$0xff] %v1530
  %1595 = vst [vmem:[#allocation2 + $0x188] sm:$0xff] %v1531
  %1596 = vst [vmem:[#allocation2 + $0x190] sm:$0xff] %v1532
  %1597 = vst [vmem:[#allocation2 + $0x198] sm:$0xff] %v1533
  %1598 = vst [vmem:[#allocation2 + $0x1a0] sm:$0xff] %v1534
  %1599 = vst [vmem:[#allocation2 + $0x1a8] sm:$0xff] %v1535
  %1600 = vst [vmem:[#allocation2 + $0x1b0] sm:$0xff] %v1536
  %1601 = vst [vmem:[#allocation2 + $0x1b8] sm:$0xff] %v1537
  %1602 = vst [vmem:[#allocation2 + $0x1c0] sm:$0xff] %v1538
  %1603 = vst [vmem:[#allocation2 + $0x1c8] sm:$0xff] %v1539
  %1604 = vst [vmem:[#allocation2 + $0x1d0] sm:$0xff] %v1540
  %1605 = vst [vmem:[#allocation2 + $0x1d8] sm:$0xff] %v1541
  %1606 = vst [vmem:[#allocation2 + $0x1e0] sm:$0xff] %v1542
  %1607 = vst [vmem:[#allocation2 + $0x1e8] sm:$0xff] %v1543
  %1608 = vst [vmem:[#allocation2 + $0x1f0] sm:$0xff] %v1544
  %1609 = vst [vmem:[#allocation2 + $0x1f8] sm:$0xff] %v1545
  // Predicated region
  $region14: #{generator_forward.19} parent=0 // pred_check
    %p1610 = pneg %p11
  $region15: #{generator_forward.19} parent=0 // pred_check_branch
    %1612 = sbr.rel (%p1610) target = $region17
  $region16: #{generator_forward.19} parent=0 // pred_region
    %v1613 = vld [vmem:[#allocation2] sm:$0xff]
    %v1614 = vld [vmem:[#allocation2 + $0x8] sm:$0xff]
    %v1615 = vld [vmem:[#allocation2 + $0x10] sm:$0xff]
    %v1616 = vld [vmem:[#allocation2 + $0x18] sm:$0xff]
    %v1617 = vld [vmem:[#allocation2 + $0x20] sm:$0xff]
    %v1618 = vld [vmem:[#allocation2 + $0x28] sm:$0xff]
    %v1619 = vld [vmem:[#allocation2 + $0x30] sm:$0xff]
    %v1620 = vld [vmem:[#allocation2 + $0x38] sm:$0xff]
    %v1621 = vld [vmem:[#allocation2 + $0x40] sm:$0xff]
    %v1622 = vld [vmem:[#allocation2 + $0x48] sm:$0xff]
    %v1623 = vld [vmem:[#allocation2 + $0x50] sm:$0xff]
    %v1624 = vld [vmem:[#allocation2 + $0x58] sm:$0xff]
    %v1625 = vld [vmem:[#allocation2 + $0x60] sm:$0xff]
    %v1626 = vld [vmem:[#allocation2 + $0x68] sm:$0xff]
    %v1627 = vld [vmem:[#allocation2 + $0x70] sm:$0xff]
    %v1628 = vld [vmem:[#allocation2 + $0x78] sm:$0xff]
    %v1629 = vld [vmem:[#allocation2 + $0x80] sm:$0xff]
    %v1630 = vld [vmem:[#allocation2 + $0x88] sm:$0xff]
    %v1631 = vld [vmem:[#allocation2 + $0x90] sm:$0xff]
    %v1632 = vld [vmem:[#allocation2 + $0x98] sm:$0xff]
    %v1633 = vld [vmem:[#allocation2 + $0xa0] sm:$0xff]
    %v1634 = vld [vmem:[#allocation2 + $0xa8] sm:$0xff]
    %v1635 = vld [vmem:[#allocation2 + $0xb0] sm:$0xff]
    %v1636 = vld [vmem:[#allocation2 + $0xb8] sm:$0xff]
    %v1637 = vld [vmem:[#allocation2 + $0xc0] sm:$0xff]
    %v1638 = vld [vmem:[#allocation2 + $0xc8] sm:$0xff]
    %v1639 = vld [vmem:[#allocation2 + $0xd0] sm:$0xff]
    %v1640 = vld [vmem:[#allocation2 + $0xd8] sm:$0xff]
    %v1641 = vld [vmem:[#allocation2 + $0xe0] sm:$0xff]
    %v1642 = vld [vmem:[#allocation2 + $0xe8] sm:$0xff]
    %v1643 = vld [vmem:[#allocation2 + $0xf0] sm:$0xff]
    %v1644 = vld [vmem:[#allocation2 + $0xf8] sm:$0xff]
    %v1645 = vld [vmem:[#allocation2 + $0x100] sm:$0xff]
    %v1646 = vld [vmem:[#allocation2 + $0x108] sm:$0xff]
    %v1647 = vld [vmem:[#allocation2 + $0x110] sm:$0xff]
    %v1648 = vld [vmem:[#allocation2 + $0x118] sm:$0xff]
    %v1649 = vld [vmem:[#allocation2 + $0x120] sm:$0xff]
    %v1650 = vld [vmem:[#allocation2 + $0x128] sm:$0xff]
    %v1651 = vld [vmem:[#allocation2 + $0x130] sm:$0xff]
    %v1652 = vld [vmem:[#allocation2 + $0x138] sm:$0xff]
    %v1653 = vld [vmem:[#allocation2 + $0x140] sm:$0xff]
    %v1654 = vld [vmem:[#allocation2 + $0x148] sm:$0xff]
    %v1655 = vld [vmem:[#allocation2 + $0x150] sm:$0xff]
    %v1656 = vld [vmem:[#allocation2 + $0x158] sm:$0xff]
    %v1657 = vld [vmem:[#allocation2 + $0x160] sm:$0xff]
    %v1658 = vld [vmem:[#allocation2 + $0x168] sm:$0xff]
    %v1659 = vld [vmem:[#allocation2 + $0x170] sm:$0xff]
    %v1660 = vld [vmem:[#allocation2 + $0x178] sm:$0xff]
    %v1661 = vld [vmem:[#allocation2 + $0x180] sm:$0xff]
    %v1662 = vld [vmem:[#allocation2 + $0x188] sm:$0xff]
    %v1663 = vld [vmem:[#allocation2 + $0x190] sm:$0xff]
    %v1664 = vld [vmem:[#allocation2 + $0x198] sm:$0xff]
    %v1665 = vld [vmem:[#allocation2 + $0x1a0] sm:$0xff]
    %v1666 = vld [vmem:[#allocation2 + $0x1a8] sm:$0xff]
    %v1667 = vld [vmem:[#allocation2 + $0x1b0] sm:$0xff]
    %v1668 = vld [vmem:[#allocation2 + $0x1b8] sm:$0xff]
    %v1669 = vld [vmem:[#allocation2 + $0x1c0] sm:$0xff]
    %v1670 = vld [vmem:[#allocation2 + $0x1c8] sm:$0xff]
    %v1671 = vld [vmem:[#allocation2 + $0x1d0] sm:$0xff]
    %v1672 = vld [vmem:[#allocation2 + $0x1d8] sm:$0xff]
    %v1673 = vld [vmem:[#allocation2 + $0x1e0] sm:$0xff]
    %v1674 = vld [vmem:[#allocation2 + $0x1e8] sm:$0xff]
    %v1675 = vld [vmem:[#allocation2 + $0x1f0] sm:$0xff]
    %v1676 = vld [vmem:[#allocation2 + $0x1f8] sm:$0xff]
    %1677 = vst [vmem:[%s2] sm:$0xff] %v1613
    %1678 = vst [vmem:[%s2 + $0x8] sm:$0xff] %v1614
    %1679 = vst [vmem:[%s2 + $0x10] sm:$0xff] %v1615
    %1680 = vst [vmem:[%s2 + $0x18] sm:$0xff] %v1616
    %1681 = vst [vmem:[%s2 + $0x20] sm:$0xff] %v1617
    %1682 = vst [vmem:[%s2 + $0x28] sm:$0xff] %v1618
    %1683 = vst [vmem:[%s2 + $0x30] sm:$0xff] %v1619
    %1684 = vst [vmem:[%s2 + $0x38] sm:$0xff] %v1620
    %1685 = vst [vmem:[%s2 + $0x40] sm:$0xff] %v1621
    %1686 = vst [vmem:[%s2 + $0x48] sm:$0xff] %v1622
    %1687 = vst [vmem:[%s2 + $0x50] sm:$0xff] %v1623
    %1688 = vst [vmem:[%s2 + $0x58] sm:$0xff] %v1624
    %1689 = vst [vmem:[%s2 + $0x60] sm:$0xff] %v1625
    %1690 = vst [vmem:[%s2 + $0x68] sm:$0xff] %v1626
    %1691 = vst [vmem:[%s2 + $0x70] sm:$0xff] %v1627
    %1692 = vst [vmem:[%s2 + $0x78] sm:$0xff] %v1628
    %1693 = vst [vmem:[%s2 + $0x80] sm:$0xff] %v1629
    %1694 = vst [vmem:[%s2 + $0x88] sm:$0xff] %v1630
    %1695 = vst [vmem:[%s2 + $0x90] sm:$0xff] %v1631
    %1696 = vst [vmem:[%s2 + $0x98] sm:$0xff] %v1632
    %1697 = vst [vmem:[%s2 + $0xa0] sm:$0xff] %v1633
    %1698 = vst [vmem:[%s2 + $0xa8] sm:$0xff] %v1634
    %1699 = vst [vmem:[%s2 + $0xb0] sm:$0xff] %v1635
    %1700 = vst [vmem:[%s2 + $0xb8] sm:$0xff] %v1636
    %1701 = vst [vmem:[%s2 + $0xc0] sm:$0xff] %v1637
    %1702 = vst [vmem:[%s2 + $0xc8] sm:$0xff] %v1638
    %1703 = vst [vmem:[%s2 + $0xd0] sm:$0xff] %v1639
    %1704 = vst [vmem:[%s2 + $0xd8] sm:$0xff] %v1640
    %1705 = vst [vmem:[%s2 + $0xe0] sm:$0xff] %v1641
    %1706 = vst [vmem:[%s2 + $0xe8] sm:$0xff] %v1642
    %1707 = vst [vmem:[%s2 + $0xf0] sm:$0xff] %v1643
    %1708 = vst [vmem:[%s2 + $0xf8] sm:$0xff] %v1644
    %1709 = vst [vmem:[%s2 + $0x100] sm:$0xff] %v1645
    %1710 = vst [vmem:[%s2 + $0x108] sm:$0xff] %v1646
    %1711 = vst [vmem:[%s2 + $0x110] sm:$0xff] %v1647
    %1712 = vst [vmem:[%s2 + $0x118] sm:$0xff] %v1648
    %1713 = vst [vmem:[%s2 + $0x120] sm:$0xff] %v1649
    %1714 = vst [vmem:[%s2 + $0x128] sm:$0xff] %v1650
    %1715 = vst [vmem:[%s2 + $0x130] sm:$0xff] %v1651
    %1716 = vst [vmem:[%s2 + $0x138] sm:$0xff] %v1652
    %1717 = vst [vmem:[%s2 + $0x140] sm:$0xff] %v1653
    %1718 = vst [vmem:[%s2 + $0x148] sm:$0xff] %v1654
    %1719 = vst [vmem:[%s2 + $0x150] sm:$0xff] %v1655
    %1720 = vst [vmem:[%s2 + $0x158] sm:$0xff] %v1656
    %1721 = vst [vmem:[%s2 + $0x160] sm:$0xff] %v1657
    %1722 = vst [vmem:[%s2 + $0x168] sm:$0xff] %v1658
    %1723 = vst [vmem:[%s2 + $0x170] sm:$0xff] %v1659
    %1724 = vst [vmem:[%s2 + $0x178] sm:$0xff] %v1660
    %1725 = vst [vmem:[%s2 + $0x180] sm:$0xff] %v1661
    %1726 = vst [vmem:[%s2 + $0x188] sm:$0xff] %v1662
    %1727 = vst [vmem:[%s2 + $0x190] sm:$0xff] %v1663
    %1728 = vst [vmem:[%s2 + $0x198] sm:$0xff] %v1664
    %1729 = vst [vmem:[%s2 + $0x1a0] sm:$0xff] %v1665
    %1730 = vst [vmem:[%s2 + $0x1a8] sm:$0xff] %v1666
    %1731 = vst [vmem:[%s2 + $0x1b0] sm:$0xff] %v1667
    %1732 = vst [vmem:[%s2 + $0x1b8] sm:$0xff] %v1668
    %1733 = vst [vmem:[%s2 + $0x1c0] sm:$0xff] %v1669
    %1734 = vst [vmem:[%s2 + $0x1c8] sm:$0xff] %v1670
    %1735 = vst [vmem:[%s2 + $0x1d0] sm:$0xff] %v1671
    %1736 = vst [vmem:[%s2 + $0x1d8] sm:$0xff] %v1672
    %1737 = vst [vmem:[%s2 + $0x1e0] sm:$0xff] %v1673
    %1738 = vst [vmem:[%s2 + $0x1e8] sm:$0xff] %v1674
    %1739 = vst [vmem:[%s2 + $0x1f0] sm:$0xff] %v1675
    %1740 = vst [vmem:[%s2 + $0x1f8] sm:$0xff] %v1676
  $region17: #{generator_forward.19} parent=0 // pred_fallthru
    _
  // Predicated region
  $region18: #{generator_forward.19} parent=0 // pred_check
    _
  $region19: #{generator_forward.19} parent=0 // pred_check_branch
    %1742 = sbr.rel (0) target = $region21
  $region20: #{generator_forward.19} parent=0 // pred_region
    _
  $region21: #{generator_forward.19} parent=0 // pred_fallthru
    _
  // Predicated region
  $region22: #{generator_forward.19} parent=0 // pred_check
    _
  $region23: #{generator_forward.19} parent=0 // pred_check_branch
    %1744 = sbr.rel (0) target = $region25
  $region24: #{generator_forward.19} parent=0 // pred_region
    _
  $region25: #{generator_forward.19} parent=0 // pred_fallthru
    _

// kernel: generator_forward.22
$region0: #{generator_forward.22}
  #allocation0 [shape = 'u32[]', space=smem, size = 0x4, offset = 0x4, fixed_abs, tag = 'smem constant byte address 0x4 - core index']
  #allocation1 [shape = 'u32[72,128]{1,0:T(1,128)}', space=vmem, size = 0x9000, scoped, tag = 'internal scratch']
  %s0 = inlined_call_operand.vmem [shape: f32[2,64,32], index: 0, kind: input, shape index: {}]
  %s1 = inlined_call_operand.vmem [shape: f32[1,32], index: 1, kind: input, shape index: {}]
  %s2 = inlined_call_operand.vmem [shape: f32[1,32], index: 2, kind: input, shape index: {}]
  %s3 = inlined_call_operand.vmem [shape: f32[2,64,32], index: 3, kind: output, shape index: {}]
  %s4 = sld [smem:[#allocation0]]
  $region45: #{generator_forward.22} parent=0
    _
  %s6 = ssub.s32 1, %s4
  %s7 = scalar_select 0, %s6, %s4
  loop: start=0, step=1, limit=4
  $region2: #{generator_forward.22} parent=0 // loop_pre_header
    _
  $region3: #{generator_forward.22} parent=0 // loop_header
    %s9 = sphi 0, %s13
    %p10 = scmp.ge.s32.totalorder %s9, 4
    %s16 = sphi 0, %s28
    %s17 = sphi 0, %s24
    %s18 = sphi 0, %s16
    %s19 = sphi 0, %s17
    %s20 = sphi 0, %s18
    %s21 = sphi 0, %s19
    %s33 = sphi 0, %s35
    %s36 = sphi 0, %s33
    %s37 = sphi 0, %s36
    %s53 = sphi 0, %s37
    %s59 = sphi 0, %s61
    %s62 = sphi 0, %s59
    %s63 = sphi 0, %s62
    %s79 = sphi 0, %s63
    %s85 = sphi 0, %s87
    %s88 = sphi 0, %s85
    %s89 = sphi 0, %s88
    %s105 = sphi 0, %s89
    %s113 = sphi 0, %s115
    %s116 = sphi 0, %s113
    %s117 = sphi 0, %s116
    %s133 = sphi 0, %s117
  $region4: #{generator_forward.22} parent=0 // loop_header_branch
    %12 = sbr.rel (%p10) target = $region8
  $region5: #{generator_forward.22} parent=0 // loop_body
    %s14 = ssub.s32 %s9, 1
    %s15 = ssub.s32 %s9, 2
    %s22 = sadd.s32 1, %s17
    %p23 = scmp.ge.s32.totalorder %s22, 1
    %s24 = scalar_select %p23, 0, %s22
    %s25 = sadd.s32 1, %s16
    %s26 = scalar_select %p23, %s25, %s16
    %p27 = scmp.ge.s32.totalorder %s26, 2
    %s28 = scalar_select %p27, 0, %s26
    %s29 = ssub.s32 %s16, %s28
    %s30 = ssub.s32 %s17, %s24
    %s31 = sor.u32 %s29, %s30
    %p32 = scmp.eq.s32.totalorder %s31, 0
    %s34 = sadd.s32 %s33, 1
    %s35 = scalar_select %p32, %s33, %s34
    %p38 = pneg %p32
    %p39 = scmp.eq.s32.totalorder %s9, 1
    %p40 = por %p38, %p39
    %p41 = scmp.ne.s32.totalorder %s33, %s36
    %p42 = scmp.eq.s32.totalorder %s9, 0
    %p43 = por %p41, %p42
    %p44 = scmp.ne.s32.totalorder %s33, %s36
    %p45 = scmp.eq.s32.totalorder %s14, 1
    %p46 = por %p44, %p45
    %p47 = scmp.ne.s32.totalorder %s36, %s37
    %p48 = scmp.eq.s32.totalorder %s14, 0
    %p49 = por %p47, %p48
    %p50 = scmp.ne.s32.totalorder %s36, %s37
    %p51 = scmp.eq.s32.totalorder %s15, 1
    %p52 = por %p50, %p51
    %p54 = scmp.ne.s32.totalorder %s37, %s53
    %p55 = scmp.eq.s32.totalorder %s15, 0
    %p56 = por %p54, %p55
    %s57 = ssub.s32 %s17, %s24
    %p58 = scmp.eq.s32.totalorder %s57, 0
    %s60 = sadd.s32 %s59, 1
    %s61 = scalar_select %p58, %s59, %s60
    %p64 = pneg %p58
    %p65 = scmp.eq.s32.totalorder %s9, 1
    %p66 = por %p64, %p65
    %p67 = scmp.ne.s32.totalorder %s59, %s62
    %p68 = scmp.eq.s32.totalorder %s9, 0
    %p69 = por %p67, %p68
    %p70 = scmp.ne.s32.totalorder %s59, %s62
    %p71 = scmp.eq.s32.totalorder %s14, 1
    %p72 = por %p70, %p71
    %p73 = scmp.ne.s32.totalorder %s62, %s63
    %p74 = scmp.eq.s32.totalorder %s14, 0
    %p75 = por %p73, %p74
    %p76 = scmp.ne.s32.totalorder %s62, %s63
    %p77 = scmp.eq.s32.totalorder %s15, 1
    %p78 = por %p76, %p77
    %p80 = scmp.ne.s32.totalorder %s63, %s79
    %p81 = scmp.eq.s32.totalorder %s15, 0
    %p82 = por %p80, %p81
    %s83 = ssub.s32 %s17, %s24
    %p84 = scmp.eq.s32.totalorder %s83, 0
    %s86 = sadd.s32 %s85, 1
    %s87 = scalar_select %p84, %s85, %s86
    %p90 = pneg %p84
    %p91 = scmp.eq.s32.totalorder %s9, 1
    %p92 = por %p90, %p91
    %p93 = scmp.ne.s32.totalorder %s85, %s88
    %p94 = scmp.eq.s32.totalorder %s9, 0
    %p95 = por %p93, %p94
    %p96 = scmp.ne.s32.totalorder %s85, %s88
    %p97 = scmp.eq.s32.totalorder %s14, 1
    %p98 = por %p96, %p97
    %p99 = scmp.ne.s32.totalorder %s88, %s89
    %p100 = scmp.eq.s32.totalorder %s14, 0
    %p101 = por %p99, %p100
    %p102 = scmp.ne.s32.totalorder %s88, %s89
    %p103 = scmp.eq.s32.totalorder %s15, 1
    %p104 = por %p102, %p103
    %p106 = scmp.ne.s32.totalorder %s89, %s105
    %p107 = scmp.eq.s32.totalorder %s15, 0
    %p108 = por %p106, %p107
    %s109 = ssub.s32 %s16, %s28
    %s110 = ssub.s32 %s17, %s24
    %s111 = sor.u32 %s109, %s110
    %p112 = scmp.eq.s32.totalorder %s111, 0
    %s114 = sadd.s32 %s113, 1
    %s115 = scalar_select %p112, %s113, %s114
    %p118 = pneg %p112
    %p119 = scmp.eq.s32.totalorder %s9, 1
    %p120 = por %p118, %p119
    %p121 = scmp.ne.s32.totalorder %s113, %s116
    %p122 = scmp.eq.s32.totalorder %s9, 0
    %p123 = por %p121, %p122
    %p124 = scmp.ne.s32.totalorder %s113, %s116
    %p125 = scmp.eq.s32.totalorder %s14, 1
    %p126 = por %p124, %p125
    %p127 = scmp.ne.s32.totalorder %s116, %s117
    %p128 = scmp.eq.s32.totalorder %s14, 0
    %p129 = por %p127, %p128
    %p130 = scmp.ne.s32.totalorder %s116, %s117
    %p131 = scmp.eq.s32.totalorder %s15, 1
    %p132 = por %p130, %p131
    %p134 = scmp.ne.s32.totalorder %s117, %s133
    %p135 = scmp.eq.s32.totalorder %s15, 0
    %p136 = por %p134, %p135
    %p137 = scmp.le.s32.totalorder 1, %s9
    %p138 = scmp.lt.s32.totalorder %s9, 3
    %p139 = pnand %p137, %p138
    %p140 = pneg %p139
    // Predicated region
    $region9: #{generator_forward.22} parent=5 // pred_check
      _
    $region10: #{generator_forward.22} parent=5 // pred_check_branch
      %142 = sbr.rel (%p139) target = $region12
    $region11: #{generator_forward.22} parent=5 // pred_region
      %s143 = ssub.s32 %s9, 1
      // Predicated region
      $region13: #{generator_forward.22} parent=11 // pred_check
        %p144 = pneg %p75
      $region14: #{generator_forward.22} parent=11 // pred_check_branch
        %146 = sbr.rel (%p144) target = $region16
      $region15: #{generator_forward.22} parent=11 // pred_region
        %p147 = scmp.lt.s32.totalorder %s19, 0
        %s148 = scalar_select %p147, %s19, 0
        %s149 = scalar_lea.vmem %s1, %s148
      $region16: #{generator_forward.22} parent=11 // pred_fallthru
        _
      // Predicated region
      $region17: #{generator_forward.22} parent=11 // pred_check
        %p150 = pneg %p101
      $region18: #{generator_forward.22} parent=11 // pred_check_branch
        %152 = sbr.rel (%p150) target = $region20
      $region19: #{generator_forward.22} parent=11 // pred_region
        %p153 = scmp.lt.s32.totalorder %s19, 0
        %s154 = scalar_select %p153, %s19, 0
        %s155 = scalar_lea.vmem %s2, %s154
      $region20: #{generator_forward.22} parent=11 // pred_fallthru
        _
    $region12: #{generator_forward.22} parent=5 // pred_fallthru
      _
    %p156 = scmp.lt.s32.totalorder %s9, 2
    // Predicated region
    $region21: #{generator_forward.22} parent=5 // pred_check
      %p157 = pneg %p156
    $region22: #{generator_forward.22} parent=5 // pred_check_branch
      %159 = sbr.rel (%p157) target = $region24
    $region23: #{generator_forward.22} parent=5 // pred_region
      // Predicated region
      $region25: #{generator_forward.22} parent=23 // pred_check
        %p160 = pneg %p43
      $region26: #{generator_forward.22} parent=23 // pred_check_branch
        %162 = sbr.rel (%p160) target = $region28
      $region27: #{generator_forward.22} parent=23 // pred_region
        %p163 = scmp.lt.s32.totalorder %s16, 1
        %s164 = scalar_select %p163, %s16, 1
        %p165 = scmp.lt.s32.totalorder %s17, 0
        %s166 = scalar_select %p165, %s17, 0
        %s167 = smul.addr %s164, 8
        %s168 = sadd.s32 %s166, %s167
        %s169 = smul.addr %s168, 8
        %s170 = scalar_lea.vmem %s0, %s169
      $region28: #{generator_forward.22} parent=23 // pred_fallthru
        _
    $region24: #{generator_forward.22} parent=5 // pred_fallthru
      _
    %p171 = scmp.le.s32.totalorder 1, %s9
    %p172 = scmp.lt.s32.totalorder %s9, 3
    %p173 = pnand %p171, %p172
    %p174 = pneg %p173
    // Predicated region
    $region29: #{generator_forward.22} parent=5 // pred_check
      _
    $region30: #{generator_forward.22} parent=5 // pred_check_branch
      %176 = sbr.rel (%p173) target = $region32
    $region31: #{generator_forward.22} parent=5 // pred_region
      %s177 = ssub.s32 %s9, 1
      %p178 = scmp.lt.s32.totalorder %s18, 1
      %s179 = scalar_select %p178, %s18, 1
      %p180 = scmp.lt.s32.totalorder %s19, 0
      %s181 = scalar_select %p180, %s19, 0
      %s182 = smul.addr %s179, 8
      %s183 = sadd.s32 %s181, %s182
      %s184 = smul.addr %s183, 8
      %s185 = scalar_lea.vmem %s0, %s184
      %p186 = pneg %p49
      %p187 = pneg %p46
      %p188 = scmp.lt.s32.totalorder %s19, 0
      %s189 = scalar_select %p188, %s19, 0
      %s190 = scalar_lea.vmem %s1, %s189
      %p191 = pneg %p75
      %p192 = pneg %p72
      %p193 = scmp.lt.s32.totalorder %s19, 0
      %s194 = scalar_select %p193, %s19, 0
      %s195 = scalar_lea.vmem %s2, %s194
      %p196 = pneg %p101
      %p197 = pneg %p98
      %p198 = pneg %p129
      %p199 = pneg %p126
      %p200 = scmp.lt.s32.totalorder %s18, 1
      %s201 = scalar_select %p200, %s18, 1
      %p202 = scmp.lt.s32.totalorder %s19, 0
      %s203 = scalar_select %p202, %s19, 0
      %s204 = smul.addr %s201, 8
      %s205 = sadd.s32 %s203, %s204
      %s206 = smul.addr %s205, 8
      %s207 = scalar_lea.vmem %s3, %s206
      %p208 = scmp.lt.s32.totalorder %s18, 1
      %s209 = scalar_select %p208, %s18, 1
      %p210 = scmp.lt.s32.totalorder %s19, 0
      %s211 = scalar_select %p210, %s19, 0
      %s212 = smul.addr %s209, 8
      %s213 = sadd.s32 %s211, %s212
      %s214 = smul.addr %s213, 8
      %s215 = scalar_lea.vmem %s0, %s214
      %p216 = scmp.lt.s32.totalorder %s19, 0
      %s217 = scalar_select %p216, %s19, 0
      %s218 = scalar_lea.vmem %s1, %s217
      %p219 = scmp.lt.s32.totalorder %s19, 0
      %s220 = scalar_select %p219, %s19, 0
      %s221 = scalar_lea.vmem %s2, %s220
      %p222 = scmp.lt.s32.totalorder %s18, 1
      %s223 = scalar_select %p222, %s18, 1
      %p224 = scmp.lt.s32.totalorder %s19, 0
      %s225 = scalar_select %p224, %s19, 0
      %s226 = smul.addr %s223, 8
      %s227 = sadd.s32 %s225, %s226
      %s228 = smul.addr %s227, 8
      %s229 = scalar_lea.vmem %s3, %s228
      %v230 = vld [vmem:[%s215] sm:$0xff]
      %v231 = vld [vmem:[%s215 + $0x8] sm:$0xff]
      %v232 = vld [vmem:[%s215 + $0x10] sm:$0xff]
      %v233 = vld [vmem:[%s215 + $0x18] sm:$0xff]
      %v234 = vld [vmem:[%s215 + $0x20] sm:$0xff]
      %v235 = vld [vmem:[%s215 + $0x28] sm:$0xff]
      %v236 = vld [vmem:[%s215 + $0x30] sm:$0xff]
      %v237 = vld [vmem:[%s215 + $0x38] sm:$0xff]
      %vm238 = vcmask 261120
      %v239 = vsel %vm238, %v230, 0.0
      %v240 = vsel %vm238, %v231, 0.0
      %v241 = vadd.f32 %v239, %v240
      %v242 = vsel %vm238, %v232, 0.0
      %v243 = vadd.f32 %v241, %v242
      %v244 = vsel %vm238, %v233, 0.0
      %v245 = vadd.f32 %v243, %v244
      %v246 = vsel %vm238, %v234, 0.0
      %v247 = vadd.f32 %v245, %v246
      %v248 = vsel %vm238, %v235, 0.0
      %v249 = vadd.f32 %v247, %v248
      %v250 = vsel %vm238, %v236, 0.0
      %v251 = vadd.f32 %v249, %v250
      %v252 = vsel %vm238, %v237, 0.0
      %v253 = vadd.f32 %v251, %v252
      %v254 = vrot.slane %v253, 4
      %v255 = vadd.f32 %v253, %v254
      %v256 = vrot.slane %v255, 2
      %v257 = vadd.f32 %v255, %v256
      %v258 = vrot.slane %v257, 1
      %v259 = vadd.f32 %v257, %v258
      %v260 = vmul.f32 %v259, 0.015625
      %v261 = vmul.f32 %v230, %v230
      %v262 = vmul.f32 %v231, %v231
      %v263 = vmul.f32 %v232, %v232
      %v264 = vmul.f32 %v233, %v233
      %v265 = vmul.f32 %v234, %v234
      %v266 = vmul.f32 %v235, %v235
      %v267 = vmul.f32 %v236, %v236
      %v268 = vmul.f32 %v237, %v237
      %v269 = vsel %vm238, %v261, 0.0
      %v270 = vsel %vm238, %v262, 0.0
      %v271 = vadd.f32 %v269, %v270
      %v272 = vsel %vm238, %v263, 0.0
      %v273 = vadd.f32 %v271, %v272
      %v274 = vsel %vm238, %v264, 0.0
      %v275 = vadd.f32 %v273, %v274
      %v276 = vsel %vm238, %v265, 0.0
      %v277 = vadd.f32 %v275, %v276
      %v278 = vsel %vm238, %v266, 0.0
      %v279 = vadd.f32 %v277, %v278
      %v280 = vsel %vm238, %v267, 0.0
      %v281 = vadd.f32 %v279, %v280
      %v282 = vsel %vm238, %v268, 0.0
      %v283 = vadd.f32 %v281, %v282
      %v284 = vrot.slane %v283, 4
      %v285 = vadd.f32 %v283, %v284
      %v286 = vrot.slane %v285, 2
      %v287 = vadd.f32 %v285, %v286
      %v288 = vrot.slane %v287, 1
      %v289 = vadd.f32 %v287, %v288
      %v290 = vmul.f32 %v289, 0.015625
      %v291 = vmul.f32 %v260, %v260
      %v292 = vsub.f32 %v290, %v291
      %v293 = vadd.f32 %v292, 1e-05
      %v294 = vrsqrt.pop %v293
      %v295 = vmul.f32 %v294, %v293
      %v296 = vmul.f32 %v295, %v294
      %v297 = vmul.f32 0.5, %v296
      %v298 = vsub.f32 1.5, %v297
      %v299 = vmul.f32 %v294, %v298
      %vm300 = vweird.f32 %v293
      %vm301 = vweird.f32 %v294
      %vm302 = vmor %vm300, %vm301
      %v303 = vsel %vm302, %v294, %v299
      %v304 = vld [vmem:[%s218] sm:$0x1]
      %v305 = vld [vmem:[%s221] sm:$0x1]
      %v306 = vsub.f32 %v230, %v260
      %v307 = vsub.f32 %v231, %v260
      %v308 = vsub.f32 %v232, %v260
      %v309 = vsub.f32 %v233, %v260
      %v310 = vsub.f32 %v234, %v260
      %v311 = vsub.f32 %v235, %v260
      %v312 = vsub.f32 %v236, %v260
      %v313 = vsub.f32 %v237, %v260
      %v314 = vmul.f32 %v306, %v303
      %v315 = vmul.f32 %v307, %v303
      %v316 = vmul.f32 %v308, %v303
      %v317 = vmul.f32 %v309, %v303
      %v318 = vmul.f32 %v310, %v303
      %v319 = vmul.f32 %v311, %v303
      %v320 = vmul.f32 %v312, %v303
      %v321 = vmul.f32 %v313, %v303
      %v323 = vperm.slane %v304, 0
      %v325 = vmul.f32 %v314, %v323
      %v326 = vmul.f32 %v315, %v323
      %v327 = vmul.f32 %v316, %v323
      %v328 = vmul.f32 %v317, %v323
      %v329 = vmul.f32 %v318, %v323
      %v330 = vmul.f32 %v319, %v323
      %v331 = vmul.f32 %v320, %v323
      %v332 = vmul.f32 %v321, %v323
      %v334 = vperm.slane %v305, 0
      %v336 = vadd.f32 %v325, %v334
      %v337 = vadd.f32 %v326, %v334
      %v338 = vadd.f32 %v327, %v334
      %v339 = vadd.f32 %v328, %v334
      %v340 = vadd.f32 %v329, %v334
      %v341 = vadd.f32 %v330, %v334
      %v342 = vadd.f32 %v331, %v334
      %v343 = vadd.f32 %v332, %v334
      %v344 = vmax.f32 %v336, 0.0
      %v345 = vmax.f32 %v337, 0.0
      %v346 = vmax.f32 %v338, 0.0
      %v347 = vmax.f32 %v339, 0.0
      %v348 = vmax.f32 %v340, 0.0
      %v349 = vmax.f32 %v341, 0.0
      %v350 = vmax.f32 %v342, 0.0
      %v351 = vmax.f32 %v343, 0.0
      %352 = vst.msk [vmem:[%s229] sm:$0xff] %vm238, %v344
      %353 = vst.msk [vmem:[%s229 + $0x8] sm:$0xff] %vm238, %v345
      %354 = vst.msk [vmem:[%s229 + $0x10] sm:$0xff] %vm238, %v346
      %355 = vst.msk [vmem:[%s229 + $0x18] sm:$0xff] %vm238, %v347
      %356 = vst.msk [vmem:[%s229 + $0x20] sm:$0xff] %vm238, %v348
      %357 = vst.msk [vmem:[%s229 + $0x28] sm:$0xff] %vm238, %v349
      %358 = vst.msk [vmem:[%s229 + $0x30] sm:$0xff] %vm238, %v350
      %359 = vst.msk [vmem:[%s229 + $0x38] sm:$0xff] %vm238, %v351
      %p360 = scmp.lt.s32.totalorder %s18, 1
      %s361 = scalar_select %p360, %s18, 1
      %p362 = scmp.lt.s32.totalorder %s19, 0
      %s363 = scalar_select %p362, %s19, 0
      %s364 = smul.addr %s361, 8
      %s365 = sadd.s32 %s363, %s364
      %s366 = smul.addr %s365, 8
      %s367 = scalar_lea.vmem %s3, %s366
      // Predicated region
      $region33: #{generator_forward.22} parent=31 // pred_check
        %p368 = pneg %p126
      $region34: #{generator_forward.22} parent=31 // pred_check_branch
        %370 = sbr.rel (%p368) target = $region36
      $region35: #{generator_forward.22} parent=31 // pred_region
        _
      $region36: #{generator_forward.22} parent=31 // pred_fallthru
        _
    $region32: #{generator_forward.22} parent=5 // pred_fallthru
      _
    %p371 = scmp.le.s32.totalorder 2, %s9
    // Predicated region
    $region37: #{generator_forward.22} parent=5 // pred_check
      %p372 = pneg %p371
    $region38: #{generator_forward.22} parent=5 // pred_check_branch
      %374 = sbr.rel (%p372) target = $region40
    $region39: #{generator_forward.22} parent=5 // pred_region
      %s375 = ssub.s32 %s9, 2
      // Predicated region
      $region41: #{generator_forward.22} parent=39 // pred_check
        %p376 = pneg %p132
      $region42: #{generator_forward.22} parent=39 // pred_check_branch
        %378 = sbr.rel (%p376) target = $region44
      $region43: #{generator_forward.22} parent=39 // pred_region
        %p379 = scmp.lt.s32.totalorder %s20, 1
        %s380 = scalar_select %p379, %s20, 1
        %p381 = scmp.lt.s32.totalorder %s21, 0
        %s382 = scalar_select %p381, %s21, 0
        %s383 = smul.addr %s380, 8
        %s384 = sadd.s32 %s382, %s383
        %s385 = smul.addr %s384, 8
        %s386 = scalar_lea.vmem %s3, %s385
      $region44: #{generator_forward.22} parent=39 // pred_fallthru
        _
    $region40: #{generator_forward.22} parent=5 // pred_fallthru
      _
  $region6: #{generator_forward.22} parent=0 // loop_footer
    %s13 = sadd.s32 1, %s9
  $region7: #{generator_forward.22} parent=0 // loop_footer_branch
    %8 = sbr.rel target = $region3
  $region8: #{generator_forward.22} parent=0 // loop_exit
    _

// kernel: generator_forward.21
$region0: #{generator_forward.21}
  #allocation0 [shape = 'u32[]', space=smem, size = 0x4, offset = 0x4, fixed_abs, tag = 'smem constant byte address 0x4 - core index']
  #allocation1 [shape = 'u32[72,128]{1,0:T(1,128)}', space=vmem, size = 0x9000, scoped, tag = 'internal scratch']
  #allocation2 [shape = 'f32[128,128]{1,0:T(8,128)}', space=vmem, size = 0x10000, scoped, tag = 'scratch operand']
  %s0 = inlined_call_operand.vmem [shape: bf16[128,256], index: 0, kind: input, shape index: {}]
  %s1 = inlined_call_operand.vmem [shape: bf16[256,128], index: 1, kind: input, shape index: {}]
  %s2 = inlined_call_operand.vmem [shape: f32[128,128], index: 2, kind: output, shape index: {}]
  %s3 = sld [smem:[#allocation0]]
  $region26: #{generator_forward.21} parent=0
    _
  %s5 = ssub.s32 1, %s3
  %s6 = scalar_select 0, %s5, %s3
  // Predicated region
  $region2: #{generator_forward.21} parent=0 // pred_check
    _
  $region3: #{generator_forward.21} parent=0 // pred_check_branch
    %8 = sbr.rel (0) target = $region5
  $region4: #{generator_forward.21} parent=0 // pred_region
    _
  $region5: #{generator_forward.21} parent=0 // pred_fallthru
    _
  // Predicated region
  $region6: #{generator_forward.21} parent=0 // pred_check
    _
  $region7: #{generator_forward.21} parent=0 // pred_check_branch
    %10 = sbr.rel (0) target = $region9
  $region8: #{generator_forward.21} parent=0 // pred_region
    _
  $region9: #{generator_forward.21} parent=0 // pred_fallthru
    _
  %p11 = scmp.eq.s32.totalorder 0, 0
  // Predicated region
  $region10: #{generator_forward.21} parent=0 // pred_check
    %p12 = pneg %p11
  $region11: #{generator_forward.21} parent=0 // pred_check_branch
    %14 = sbr.rel (%p12) target = $region13
  $region12: #{generator_forward.21} parent=0 // pred_region
    %15 = vst [vmem:[#allocation2] sm:$0xff] 0.0
    %16 = vst [vmem:[#allocation2 + $0x8] sm:$0xff] 0.0
    %17 = vst [vmem:[#allocation2 + $0x10] sm:$0xff] 0.0
    %18 = vst [vmem:[#allocation2 + $0x18] sm:$0xff] 0.0
    %19 = vst [vmem:[#allocation2 + $0x20] sm:$0xff] 0.0
    %20 = vst [vmem:[#allocation2 + $0x28] sm:$0xff] 0.0
    %21 = vst [vmem:[#allocation2 + $0x30] sm:$0xff] 0.0
    %22 = vst [vmem:[#allocation2 + $0x38] sm:$0xff] 0.0
    %23 = vst [vmem:[#allocation2 + $0x40] sm:$0xff] 0.0
    %24 = vst [vmem:[#allocation2 + $0x48] sm:$0xff] 0.0
    %25 = vst [vmem:[#allocation2 + $0x50] sm:$0xff] 0.0
    %26 = vst [vmem:[#allocation2 + $0x58] sm:$0xff] 0.0
    %27 = vst [vmem:[#allocation2 + $0x60] sm:$0xff] 0.0
    %28 = vst [vmem:[#allocation2 + $0x68] sm:$0xff] 0.0
    %29 = vst [vmem:[#allocation2 + $0x70] sm:$0xff] 0.0
    %30 = vst [vmem:[#allocation2 + $0x78] sm:$0xff] 0.0
  $region13: #{generator_forward.21} parent=0 // pred_fallthru
    _
  %v31 = vld [vmem:[#allocation2] sm:$0xff]
  %v32 = vld [vmem:[#allocation2 + $0x8] sm:$0xff]
  %v33 = vld [vmem:[#allocation2 + $0x10] sm:$0xff]
  %v34 = vld [vmem:[#allocation2 + $0x18] sm:$0xff]
  %v35 = vld [vmem:[#allocation2 + $0x20] sm:$0xff]
  %v36 = vld [vmem:[#allocation2 + $0x28] sm:$0xff]
  %v37 = vld [vmem:[#allocation2 + $0x30] sm:$0xff]
  %v38 = vld [vmem:[#allocation2 + $0x38] sm:$0xff]
  %v39 = vld [vmem:[#allocation2 + $0x40] sm:$0xff]
  %v40 = vld [vmem:[#allocation2 + $0x48] sm:$0xff]
  %v41 = vld [vmem:[#allocation2 + $0x50] sm:$0xff]
  %v42 = vld [vmem:[#allocation2 + $0x58] sm:$0xff]
  %v43 = vld [vmem:[#allocation2 + $0x60] sm:$0xff]
  %v44 = vld [vmem:[#allocation2 + $0x68] sm:$0xff]
  %v45 = vld [vmem:[#allocation2 + $0x70] sm:$0xff]
  %v46 = vld [vmem:[#allocation2 + $0x78] sm:$0xff]
  %v47 = vld [vmem:[%s0] sm:$0xff]
  %v48 = vld [vmem:[%s0 + $0x8] sm:$0xff]
  %v49 = vld [vmem:[%s0 + $0x10] sm:$0xff]
  %v50 = vld [vmem:[%s0 + $0x18] sm:$0xff]
  %v51 = vld [vmem:[%s0 + $0x20] sm:$0xff]
  %v52 = vld [vmem:[%s0 + $0x28] sm:$0xff]
  %v53 = vld [vmem:[%s0 + $0x30] sm:$0xff]
  %v54 = vld [vmem:[%s0 + $0x38] sm:$0xff]
  %v55 = vld [vmem:[%s0 + $0x40] sm:$0xff]
  %v56 = vld [vmem:[%s0 + $0x48] sm:$0xff]
  %v57 = vld [vmem:[%s0 + $0x50] sm:$0xff]
  %v58 = vld [vmem:[%s0 + $0x58] sm:$0xff]
  %v59 = vld [vmem:[%s0 + $0x60] sm:$0xff]
  %v60 = vld [vmem:[%s0 + $0x68] sm:$0xff]
  %v61 = vld [vmem:[%s0 + $0x70] sm:$0xff]
  %v62 = vld [vmem:[%s0 + $0x78] sm:$0xff]
  %v63 = vld [vmem:[%s1] sm:$0xf]
  %v64 = vld [vmem:[%s1 + $0x4] sm:$0xf]
  %v65 = vld [vmem:[%s1 + $0x8] sm:$0xf]
  %v66 = vld [vmem:[%s1 + $0xc] sm:$0xf]
  %v67 = vld [vmem:[%s1 + $0x10] sm:$0xf]
  %v68 = vld [vmem:[%s1 + $0x14] sm:$0xf]
  %v69 = vld [vmem:[%s1 + $0x18] sm:$0xf]
  %v70 = vld [vmem:[%s1 + $0x1c] sm:$0xf]
  %v71 = vld [vmem:[%s1 + $0x20] sm:$0xf]
  %v72 = vld [vmem:[%s1 + $0x24] sm:$0xf]
  %v73 = vld [vmem:[%s1 + $0x28] sm:$0xf]
  %v74 = vld [vmem:[%s1 + $0x2c] sm:$0xf]
  %v75 = vld [vmem:[%s1 + $0x30] sm:$0xf]
  %v76 = vld [vmem:[%s1 + $0x34] sm:$0xf]
  %v77 = vld [vmem:[%s1 + $0x38] sm:$0xf]
  %v78 = vld [vmem:[%s1 + $0x3c] sm:$0xf]
  %v79 = vld [vmem:[%s1 + $0x40] sm:$0xf]
  %v80 = vld [vmem:[%s1 + $0x44] sm:$0xf]
  %v81 = vld [vmem:[%s1 + $0x48] sm:$0xf]
  %v82 = vld [vmem:[%s1 + $0x4c] sm:$0xf]
  %v83 = vld [vmem:[%s1 + $0x50] sm:$0xf]
  %v84 = vld [vmem:[%s1 + $0x54] sm:$0xf]
  %v85 = vld [vmem:[%s1 + $0x58] sm:$0xf]
  %v86 = vld [vmem:[%s1 + $0x5c] sm:$0xf]
  %v87 = vld [vmem:[%s1 + $0x60] sm:$0xf]
  %v88 = vld [vmem:[%s1 + $0x64] sm:$0xf]
  %v89 = vld [vmem:[%s1 + $0x68] sm:$0xf]
  %v90 = vld [vmem:[%s1 + $0x6c] sm:$0xf]
  %v91 = vld [vmem:[%s1 + $0x70] sm:$0xf]
  %v92 = vld [vmem:[%s1 + $0x74] sm:$0xf]
  %v93 = vld [vmem:[%s1 + $0x78] sm:$0xf]
  %v94 = vld [vmem:[%s1 + $0x7c] sm:$0xf]
  %v111 = vunpack.c.l.b16 %v47
  %v112 = vunpack.c.h.b16 %v47
  %v113 = vunpack.c.l.b16 %v48
  %v114 = vunpack.c.h.b16 %v48
  %v115 = vunpack.c.l.b16 %v49
  %v116 = vunpack.c.h.b16 %v49
  %v117 = vunpack.c.l.b16 %v50
  %v118 = vunpack.c.h.b16 %v50
  %v119 = vunpack.c.l.b16 %v51
  %v120 = vunpack.c.h.b16 %v51
  %v121 = vunpack.c.l.b16 %v52
  %v122 = vunpack.c.h.b16 %v52
  %v123 = vunpack.c.l.b16 %v53
  %v124 = vunpack.c.h.b16 %v53
  %v125 = vunpack.c.l.b16 %v54
  %v126 = vunpack.c.h.b16 %v54
  %v127 = vunpack.c.l.b16 %v55
  %v128 = vunpack.c.h.b16 %v55
  %v129 = vunpack.c.l.b16 %v56
  %v130 = vunpack.c.h.b16 %v56
  %v131 = vunpack.c.l.b16 %v57
  %v132 = vunpack.c.h.b16 %v57
  %v133 = vunpack.c.l.b16 %v58
  %v134 = vunpack.c.h.b16 %v58
  %v135 = vunpack.c.l.b16 %v59
  %v136 = vunpack.c.h.b16 %v59
  %v137 = vunpack.c.l.b16 %v60
  %v138 = vunpack.c.h.b16 %v60
  %v139 = vunpack.c.l.b16 %v61
  %v140 = vunpack.c.h.b16 %v61
  %v141 = vunpack.c.l.b16 %v62
  %v142 = vunpack.c.h.b16 %v62
  %v143 = vpack.c.b16 %v113, %v111
  %v144 = vpack.c.b16 %v114, %v112
  %v145 = vpack.c.b16 %v117, %v115
  %v146 = vpack.c.b16 %v118, %v116
  %v147 = vpack.c.b16 %v121, %v119
  %v148 = vpack.c.b16 %v122, %v120
  %v149 = vpack.c.b16 %v125, %v123
  %v150 = vpack.c.b16 %v126, %v124
  %v151 = vpack.c.b16 %v129, %v127
  %v152 = vpack.c.b16 %v130, %v128
  %v153 = vpack.c.b16 %v133, %v131
  %v154 = vpack.c.b16 %v134, %v132
  %v155 = vpack.c.b16 %v137, %v135
  %v156 = vpack.c.b16 %v138, %v136
  %v157 = vpack.c.b16 %v141, %v139
  %v158 = vpack.c.b16 %v142, %v140
  %v207 = vunpack.c.l.b16 %v63
  %v208 = vunpack.c.l.b16 %v64
  %v209 = vunpack.c.l.b16 %v65
  %v210 = vunpack.c.l.b16 %v66
  %v211 = vunpack.c.l.b16 %v67
  %v212 = vunpack.c.l.b16 %v68
  %v213 = vunpack.c.l.b16 %v69
  %v214 = vunpack.c.l.b16 %v70
  %v215 = vunpack.c.l.b16 %v71
  %v216 = vunpack.c.l.b16 %v72
  %v217 = vunpack.c.l.b16 %v73
  %v218 = vunpack.c.l.b16 %v74
  %v219 = vunpack.c.l.b16 %v75
  %v220 = vunpack.c.l.b16 %v76
  %v221 = vunpack.c.l.b16 %v77
  %v222 = vunpack.c.l.b16 %v78
  %v223 = vunpack.c.l.b16 %v79
  %v224 = vunpack.c.l.b16 %v80
  %v225 = vunpack.c.l.b16 %v81
  %v226 = vunpack.c.l.b16 %v82
  %v227 = vunpack.c.l.b16 %v83
  %v228 = vunpack.c.l.b16 %v84
  %v229 = vunpack.c.l.b16 %v85
  %v230 = vunpack.c.l.b16 %v86
  %v231 = vunpack.c.l.b16 %v87
  %v232 = vunpack.c.l.b16 %v88
  %v233 = vunpack.c.l.b16 %v89
  %v234 = vunpack.c.l.b16 %v90
  %v235 = vunpack.c.l.b16 %v91
  %v236 = vunpack.c.l.b16 %v92
  %v237 = vunpack.c.l.b16 %v93
  %v238 = vunpack.c.l.b16 %v94
  %v239 = vpack.c.b16 %v208, %v207
  %v240 = vpack.c.b16 %v210, %v209
  %v241 = vpack.c.b16 %v212, %v211
  %v242 = vpack.c.b16 %v214, %v213
  %v243 = vpack.c.b16 %v216, %v215
  %v244 = vpack.c.b16 %v218, %v217
  %v245 = vpack.c.b16 %v220, %v219
  %v246 = vpack.c.b16 %v222, %v221
  %v247 = vpack.c.b16 %v224, %v223
  %v248 = vpack.c.b16 %v226, %v225
  %v249 = vpack.c.b16 %v228, %v227
  %v250 = vpack.c.b16 %v230, %v229
  %v251 = vpack.c.b16 %v232, %v231
  %v252 = vpack.c.b16 %v234, %v233
  %v253 = vpack.c.b16 %v236, %v235
  %v254 = vpack.c.b16 %v238, %v237
  %271 = vmatpush.bf16.msra.mxu0 %v246
  %272 = vmatpush.bf16.msra.mxu0 %v245
  %273 = vmatpush.bf16.msra.mxu0 %v244
  %274 = vmatpush.bf16.msra.mxu0 %v243
  %275 = vmatpush.bf16.msra.mxu0 %v242
  %276 = vmatpush.bf16.msra.mxu0 %v241
  %277 = vmatpush.bf16.msra.mxu0 %v240
  %278 = vmatpush.bf16.msra.mxu0 %v239
  %279 = vmatmul.bf16.gmra.mxu0 %v143
  %v280 = vpop.f32.mrf.mxu0
  %v281 = vadd.f32 0.0, %v280
  %v282 = vpop.f32.mrf.mxu0
  %v283 = vadd.f32 0.0, %v282
  %284 = vmatmul.bf16.gmra.mxu0 %v145
  %v285 = vpop.f32.mrf.mxu0
  %v286 = vadd.f32 0.0, %v285
  %v287 = vpop.f32.mrf.mxu0
  %v288 = vadd.f32 0.0, %v287
  %289 = vmatmul.bf16.gmra.mxu0 %v147
  %v290 = vpop.f32.mrf.mxu0
  %v291 = vadd.f32 0.0, %v290
  %v292 = vpop.f32.mrf.mxu0
  %v293 = vadd.f32 0.0, %v292
  %294 = vmatmul.bf16.gmra.mxu0 %v149
  %v295 = vpop.f32.mrf.mxu0
  %v296 = vadd.f32 0.0, %v295
  %v297 = vpop.f32.mrf.mxu0
  %v298 = vadd.f32 0.0, %v297
  %299 = vmatmul.bf16.gmra.mxu0 %v151
  %v300 = vpop.f32.mrf.mxu0
  %v301 = vadd.f32 0.0, %v300
  %v302 = vpop.f32.mrf.mxu0
  %v303 = vadd.f32 0.0, %v302
  %304 = vmatmul.bf16.gmra.mxu0 %v153
  %v305 = vpop.f32.mrf.mxu0
  %v306 = vadd.f32 0.0, %v305
  %v307 = vpop.f32.mrf.mxu0
  %v308 = vadd.f32 0.0, %v307
  %309 = vmatmul.bf16.gmra.mxu0 %v155
  %v310 = vpop.f32.mrf.mxu0
  %v311 = vadd.f32 0.0, %v310
  %v312 = vpop.f32.mrf.mxu0
  %v313 = vadd.f32 0.0, %v312
  %314 = vmatmul.bf16.gmra.mxu0 %v157
  %v315 = vpop.f32.mrf.mxu0
  %v316 = vadd.f32 0.0, %v315
  %v317 = vpop.f32.mrf.mxu0
  %v318 = vadd.f32 0.0, %v317
  %319 = vdwg.mxu0
  %320 = vmatpush.bf16.msra.mxu0 %v254
  %321 = vmatpush.bf16.msra.mxu0 %v253
  %322 = vmatpush.bf16.msra.mxu0 %v252
  %323 = vmatpush.bf16.msra.mxu0 %v251
  %324 = vmatpush.bf16.msra.mxu0 %v250
  %325 = vmatpush.bf16.msra.mxu0 %v249
  %326 = vmatpush.bf16.msra.mxu0 %v248
  %327 = vmatpush.bf16.msra.mxu0 %v247
  %328 = vmatmul.bf16.gmra.mxu0 %v144
  %v329 = vpop.f32.mrf.mxu0
  %v330 = vadd.f32 %v281, %v329
  %v331 = vpop.f32.mrf.mxu0
  %v332 = vadd.f32 %v283, %v331
  %333 = vmatmul.bf16.gmra.mxu0 %v146
  %v334 = vpop.f32.mrf.mxu0
  %v335 = vadd.f32 %v286, %v334
  %v336 = vpop.f32.mrf.mxu0
  %v337 = vadd.f32 %v288, %v336
  %338 = vmatmul.bf16.gmra.mxu0 %v148
  %v339 = vpop.f32.mrf.mxu0
  %v340 = vadd.f32 %v291, %v339
  %v341 = vpop.f32.mrf.mxu0
  %v342 = vadd.f32 %v293, %v341
  %343 = vmatmul.bf16.gmra.mxu0 %v150
  %v344 = vpop.f32.mrf.mxu0
  %v345 = vadd.f32 %v296, %v344
  %v346 = vpop.f32.mrf.mxu0
  %v347 = vadd.f32 %v298, %v346
  %348 = vmatmul.bf16.gmra.mxu0 %v152
  %v349 = vpop.f32.mrf.mxu0
  %v350 = vadd.f32 %v301, %v349
  %v351 = vpop.f32.mrf.mxu0
  %v352 = vadd.f32 %v303, %v351
  %353 = vmatmul.bf16.gmra.mxu0 %v154
  %v354 = vpop.f32.mrf.mxu0
  %v355 = vadd.f32 %v306, %v354
  %v356 = vpop.f32.mrf.mxu0
  %v357 = vadd.f32 %v308, %v356
  %358 = vmatmul.bf16.gmra.mxu0 %v156
  %v359 = vpop.f32.mrf.mxu0
  %v360 = vadd.f32 %v311, %v359
  %v361 = vpop.f32.mrf.mxu0
  %v362 = vadd.f32 %v313, %v361
  %363 = vmatmul.bf16.gmra.mxu0 %v158
  %v364 = vpop.f32.mrf.mxu0
  %v365 = vadd.f32 %v316, %v364
  %v366 = vpop.f32.mrf.mxu0
  %v367 = vadd.f32 %v318, %v366
  %368 = vdwg.mxu0
  %v369 = vadd.f32 %v31, %v330
  %v370 = vadd.f32 %v32, %v332
  %v371 = vadd.f32 %v33, %v335
  %v372 = vadd.f32 %v34, %v337
  %v373 = vadd.f32 %v35, %v340
  %v374 = vadd.f32 %v36, %v342
  %v375 = vadd.f32 %v37, %v345
  %v376 = vadd.f32 %v38, %v347
  %v377 = vadd.f32 %v39, %v350
  %v378 = vadd.f32 %v40, %v352
  %v379 = vadd.f32 %v41, %v355
  %v380 = vadd.f32 %v42, %v357
  %v381 = vadd.f32 %v43, %v360
  %v382 = vadd.f32 %v44, %v362
  %v383 = vadd.f32 %v45, %v365
  %v384 = vadd.f32 %v46, %v367
  %385 = vst [vmem:[#allocation2] sm:$0xff] %v369
  %386 = vst [vmem:[#allocation2 + $0x8] sm:$0xff] %v370
  %387 = vst [vmem:[#allocation2 + $0x10] sm:$0xff] %v371
  %388 = vst [vmem:[#allocation2 + $0x18] sm:$0xff] %v372
  %389 = vst [vmem:[#allocation2 + $0x20] sm:$0xff] %v373
  %390 = vst [vmem:[#allocation2 + $0x28] sm:$0xff] %v374
  %391 = vst [vmem:[#allocation2 + $0x30] sm:$0xff] %v375
  %392 = vst [vmem:[#allocation2 + $0x38] sm:$0xff] %v376
  %393 = vst [vmem:[#allocation2 + $0x40] sm:$0xff] %v377
  %394 = vst [vmem:[#allocation2 + $0x48] sm:$0xff] %v378
  %395 = vst [vmem:[#allocation2 + $0x50] sm:$0xff] %v379
  %396 = vst [vmem:[#allocation2 + $0x58] sm:$0xff] %v380
  %397 = vst [vmem:[#allocation2 + $0x60] sm:$0xff] %v381
  %398 = vst [vmem:[#allocation2 + $0x68] sm:$0xff] %v382
  %399 = vst [vmem:[#allocation2 + $0x70] sm:$0xff] %v383
  %400 = vst [vmem:[#allocation2 + $0x78] sm:$0xff] %v384
  // Predicated region
  $region14: #{generator_forward.21} parent=0 // pred_check
    %p401 = pneg %p11
  $region15: #{generator_forward.21} parent=0 // pred_check_branch
    %403 = sbr.rel (%p401) target = $region17
  $region16: #{generator_forward.21} parent=0 // pred_region
    %v404 = vld [vmem:[#allocation2] sm:$0xff]
    %v405 = vld [vmem:[#allocation2 + $0x8] sm:$0xff]
    %v406 = vld [vmem:[#allocation2 + $0x10] sm:$0xff]
    %v407 = vld [vmem:[#allocation2 + $0x18] sm:$0xff]
    %v408 = vld [vmem:[#allocation2 + $0x20] sm:$0xff]
    %v409 = vld [vmem:[#allocation2 + $0x28] sm:$0xff]
    %v410 = vld [vmem:[#allocation2 + $0x30] sm:$0xff]
    %v411 = vld [vmem:[#allocation2 + $0x38] sm:$0xff]
    %v412 = vld [vmem:[#allocation2 + $0x40] sm:$0xff]
    %v413 = vld [vmem:[#allocation2 + $0x48] sm:$0xff]
    %v414 = vld [vmem:[#allocation2 + $0x50] sm:$0xff]
    %v415 = vld [vmem:[#allocation2 + $0x58] sm:$0xff]
    %v416 = vld [vmem:[#allocation2 + $0x60] sm:$0xff]
    %v417 = vld [vmem:[#allocation2 + $0x68] sm:$0xff]
    %v418 = vld [vmem:[#allocation2 + $0x70] sm:$0xff]
    %v419 = vld [vmem:[#allocation2 + $0x78] sm:$0xff]
    %420 = vst [vmem:[%s2] sm:$0xff] %v404
    %421 = vst [vmem:[%s2 + $0x8] sm:$0xff] %v405
    %422 = vst [vmem:[%s2 + $0x10] sm:$0xff] %v406
    %423 = vst [vmem:[%s2 + $0x18] sm:$0xff] %v407
    %424 = vst [vmem:[%s2 + $0x20] sm:$0xff] %v408
    %425 = vst [vmem:[%s2 + $0x28] sm:$0xff] %v409
    %426 = vst [vmem:[%s2 + $0x30] sm:$0xff] %v410
    %427 = vst [vmem:[%s2 + $0x38] sm:$0xff] %v411
    %428 = vst [vmem:[%s2 + $0x40] sm:$0xff] %v412
    %429 = vst [vmem:[%s2 + $0x48] sm:$0xff] %v413
    %430 = vst [vmem:[%s2 + $0x50] sm:$0xff] %v414
    %431 = vst [vmem:[%s2 + $0x58] sm:$0xff] %v415
    %432 = vst [vmem:[%s2 + $0x60] sm:$0xff] %v416
    %433 = vst [vmem:[%s2 + $0x68] sm:$0xff] %v417
    %434 = vst [vmem:[%s2 + $0x70] sm:$0xff] %v418
    %435 = vst [vmem:[%s2 + $0x78] sm:$0xff] %v419
  $region17: #{generator_forward.21} parent=0 // pred_fallthru
    _
  // Predicated region
  $region18: #{generator_forward.21} parent=0 // pred_check
    _
  $region19: #{generator_forward.21} parent=0 // pred_check_branch
    %437 = sbr.rel (0) target = $region21
  $region20: #{generator_forward.21} parent=0 // pred_region
    _
  $region21: #{generator_forward.21} parent=0 // pred_fallthru
    _
  // Predicated region
  $region22: #{generator_forward.21} parent=0 // pred_check
    _
  $region23: #{generator_forward.21} parent=0 // pred_check_branch
    %439 = sbr.rel (0) target = $region25
  $region24: #{generator_forward.21} parent=0 // pred_region
    _
  $region25: #{generator_forward.21} parent=0 // pred_fallthru
    _

// kernel: generator_forward.24
$region0: #{generator_forward.24}
  #allocation0 [shape = 'u32[]', space=smem, size = 0x4, offset = 0x4, fixed_abs, tag = 'smem constant byte address 0x4 - core index']
  #allocation1 [shape = 'u32[72,128]{1,0:T(1,128)}', space=vmem, size = 0x9000, scoped, tag = 'internal scratch']
  %s0 = inlined_call_operand.vmem [shape: f32[2,16,64], index: 0, kind: input, shape index: {}]
  %s1 = inlined_call_operand.vmem [shape: f32[1,64], index: 1, kind: input, shape index: {}]
  %s2 = inlined_call_operand.vmem [shape: f32[1,64], index: 2, kind: input, shape index: {}]
  %s3 = inlined_call_operand.vmem [shape: f32[2,16,64], index: 3, kind: output, shape index: {}]
  %s4 = sld [smem:[#allocation0]]
  $region45: #{generator_forward.24} parent=0
    _
  %s6 = ssub.s32 1, %s4
  %s7 = scalar_select 0, %s6, %s4
  loop: start=0, step=1, limit=4
  $region2: #{generator_forward.24} parent=0 // loop_pre_header
    _
  $region3: #{generator_forward.24} parent=0 // loop_header
    %s9 = sphi 0, %s13
    %p10 = scmp.ge.s32.totalorder %s9, 4
    %s16 = sphi 0, %s28
    %s17 = sphi 0, %s24
    %s18 = sphi 0, %s16
    %s19 = sphi 0, %s17
    %s20 = sphi 0, %s18
    %s21 = sphi 0, %s19
    %s33 = sphi 0, %s35
    %s36 = sphi 0, %s33
    %s37 = sphi 0, %s36
    %s53 = sphi 0, %s37
    %s59 = sphi 0, %s61
    %s62 = sphi 0, %s59
    %s63 = sphi 0, %s62
    %s79 = sphi 0, %s63
    %s85 = sphi 0, %s87
    %s88 = sphi 0, %s85
    %s89 = sphi 0, %s88
    %s105 = sphi 0, %s89
    %s113 = sphi 0, %s115
    %s116 = sphi 0, %s113
    %s117 = sphi 0, %s116
    %s133 = sphi 0, %s117
  $region4: #{generator_forward.24} parent=0 // loop_header_branch
    %12 = sbr.rel (%p10) target = $region8
  $region5: #{generator_forward.24} parent=0 // loop_body
    %s14 = ssub.s32 %s9, 1
    %s15 = ssub.s32 %s9, 2
    %s22 = sadd.s32 1, %s17
    %p23 = scmp.ge.s32.totalorder %s22, 1
    %s24 = scalar_select %p23, 0, %s22
    %s25 = sadd.s32 1, %s16
    %s26 = scalar_select %p23, %s25, %s16
    %p27 = scmp.ge.s32.totalorder %s26, 2
    %s28 = scalar_select %p27, 0, %s26
    %s29 = ssub.s32 %s16, %s28
    %s30 = ssub.s32 %s17, %s24
    %s31 = sor.u32 %s29, %s30
    %p32 = scmp.eq.s32.totalorder %s31, 0
    %s34 = sadd.s32 %s33, 1
    %s35 = scalar_select %p32, %s33, %s34
    %p38 = pneg %p32
    %p39 = scmp.eq.s32.totalorder %s9, 1
    %p40 = por %p38, %p39
    %p41 = scmp.ne.s32.totalorder %s33, %s36
    %p42 = scmp.eq.s32.totalorder %s9, 0
    %p43 = por %p41, %p42
    %p44 = scmp.ne.s32.totalorder %s33, %s36
    %p45 = scmp.eq.s32.totalorder %s14, 1
    %p46 = por %p44, %p45
    %p47 = scmp.ne.s32.totalorder %s36, %s37
    %p48 = scmp.eq.s32.totalorder %s14, 0
    %p49 = por %p47, %p48
    %p50 = scmp.ne.s32.totalorder %s36, %s37
    %p51 = scmp.eq.s32.totalorder %s15, 1
    %p52 = por %p50, %p51
    %p54 = scmp.ne.s32.totalorder %s37, %s53
    %p55 = scmp.eq.s32.totalorder %s15, 0
    %p56 = por %p54, %p55
    %s57 = ssub.s32 %s17, %s24
    %p58 = scmp.eq.s32.totalorder %s57, 0
    %s60 = sadd.s32 %s59, 1
    %s61 = scalar_select %p58, %s59, %s60
    %p64 = pneg %p58
    %p65 = scmp.eq.s32.totalorder %s9, 1
    %p66 = por %p64, %p65
    %p67 = scmp.ne.s32.totalorder %s59, %s62
    %p68 = scmp.eq.s32.totalorder %s9, 0
    %p69 = por %p67, %p68
    %p70 = scmp.ne.s32.totalorder %s59, %s62
    %p71 = scmp.eq.s32.totalorder %s14, 1
    %p72 = por %p70, %p71
    %p73 = scmp.ne.s32.totalorder %s62, %s63
    %p74 = scmp.eq.s32.totalorder %s14, 0
    %p75 = por %p73, %p74
    %p76 = scmp.ne.s32.totalorder %s62, %s63
    %p77 = scmp.eq.s32.totalorder %s15, 1
    %p78 = por %p76, %p77
    %p80 = scmp.ne.s32.totalorder %s63, %s79
    %p81 = scmp.eq.s32.totalorder %s15, 0
    %p82 = por %p80, %p81
    %s83 = ssub.s32 %s17, %s24
    %p84 = scmp.eq.s32.totalorder %s83, 0
    %s86 = sadd.s32 %s85, 1
    %s87 = scalar_select %p84, %s85, %s86
    %p90 = pneg %p84
    %p91 = scmp.eq.s32.totalorder %s9, 1
    %p92 = por %p90, %p91
    %p93 = scmp.ne.s32.totalorder %s85, %s88
    %p94 = scmp.eq.s32.totalorder %s9, 0
    %p95 = por %p93, %p94
    %p96 = scmp.ne.s32.totalorder %s85, %s88
    %p97 = scmp.eq.s32.totalorder %s14, 1
    %p98 = por %p96, %p97
    %p99 = scmp.ne.s32.totalorder %s88, %s89
    %p100 = scmp.eq.s32.totalorder %s14, 0
    %p101 = por %p99, %p100
    %p102 = scmp.ne.s32.totalorder %s88, %s89
    %p103 = scmp.eq.s32.totalorder %s15, 1
    %p104 = por %p102, %p103
    %p106 = scmp.ne.s32.totalorder %s89, %s105
    %p107 = scmp.eq.s32.totalorder %s15, 0
    %p108 = por %p106, %p107
    %s109 = ssub.s32 %s16, %s28
    %s110 = ssub.s32 %s17, %s24
    %s111 = sor.u32 %s109, %s110
    %p112 = scmp.eq.s32.totalorder %s111, 0
    %s114 = sadd.s32 %s113, 1
    %s115 = scalar_select %p112, %s113, %s114
    %p118 = pneg %p112
    %p119 = scmp.eq.s32.totalorder %s9, 1
    %p120 = por %p118, %p119
    %p121 = scmp.ne.s32.totalorder %s113, %s116
    %p122 = scmp.eq.s32.totalorder %s9, 0
    %p123 = por %p121, %p122
    %p124 = scmp.ne.s32.totalorder %s113, %s116
    %p125 = scmp.eq.s32.totalorder %s14, 1
    %p126 = por %p124, %p125
    %p127 = scmp.ne.s32.totalorder %s116, %s117
    %p128 = scmp.eq.s32.totalorder %s14, 0
    %p129 = por %p127, %p128
    %p130 = scmp.ne.s32.totalorder %s116, %s117
    %p131 = scmp.eq.s32.totalorder %s15, 1
    %p132 = por %p130, %p131
    %p134 = scmp.ne.s32.totalorder %s117, %s133
    %p135 = scmp.eq.s32.totalorder %s15, 0
    %p136 = por %p134, %p135
    %p137 = scmp.le.s32.totalorder 1, %s9
    %p138 = scmp.lt.s32.totalorder %s9, 3
    %p139 = pnand %p137, %p138
    %p140 = pneg %p139
    // Predicated region
    $region9: #{generator_forward.24} parent=5 // pred_check
      _
    $region10: #{generator_forward.24} parent=5 // pred_check_branch
      %142 = sbr.rel (%p139) target = $region12
    $region11: #{generator_forward.24} parent=5 // pred_region
      %s143 = ssub.s32 %s9, 1
      // Predicated region
      $region13: #{generator_forward.24} parent=11 // pred_check
        %p144 = pneg %p75
      $region14: #{generator_forward.24} parent=11 // pred_check_branch
        %146 = sbr.rel (%p144) target = $region16
      $region15: #{generator_forward.24} parent=11 // pred_region
        %p147 = scmp.lt.s32.totalorder %s19, 0
        %s148 = scalar_select %p147, %s19, 0
        %s149 = scalar_lea.vmem %s1, %s148
      $region16: #{generator_forward.24} parent=11 // pred_fallthru
        _
      // Predicated region
      $region17: #{generator_forward.24} parent=11 // pred_check
        %p150 = pneg %p101
      $region18: #{generator_forward.24} parent=11 // pred_check_branch
        %152 = sbr.rel (%p150) target = $region20
      $region19: #{generator_forward.24} parent=11 // pred_region
        %p153 = scmp.lt.s32.totalorder %s19, 0
        %s154 = scalar_select %p153, %s19, 0
        %s155 = scalar_lea.vmem %s2, %s154
      $region20: #{generator_forward.24} parent=11 // pred_fallthru
        _
    $region12: #{generator_forward.24} parent=5 // pred_fallthru
      _
    %p156 = scmp.lt.s32.totalorder %s9, 2
    // Predicated region
    $region21: #{generator_forward.24} parent=5 // pred_check
      %p157 = pneg %p156
    $region22: #{generator_forward.24} parent=5 // pred_check_branch
      %159 = sbr.rel (%p157) target = $region24
    $region23: #{generator_forward.24} parent=5 // pred_region
      // Predicated region
      $region25: #{generator_forward.24} parent=23 // pred_check
        %p160 = pneg %p43
      $region26: #{generator_forward.24} parent=23 // pred_check_branch
        %162 = sbr.rel (%p160) target = $region28
      $region27: #{generator_forward.24} parent=23 // pred_region
        %p163 = scmp.lt.s32.totalorder %s16, 1
        %s164 = scalar_select %p163, %s16, 1
        %p165 = scmp.lt.s32.totalorder %s17, 0
        %s166 = scalar_select %p165, %s17, 0
        %s167 = smul.addr %s164, 2
        %s168 = sadd.s32 %s166, %s167
        %s169 = smul.addr %s168, 8
        %s170 = scalar_lea.vmem %s0, %s169
      $region28: #{generator_forward.24} parent=23 // pred_fallthru
        _
    $region24: #{generator_forward.24} parent=5 // pred_fallthru
      _
    %p171 = scmp.le.s32.totalorder 1, %s9
    %p172 = scmp.lt.s32.totalorder %s9, 3
    %p173 = pnand %p171, %p172
    %p174 = pneg %p173
    // Predicated region
    $region29: #{generator_forward.24} parent=5 // pred_check
      _
    $region30: #{generator_forward.24} parent=5 // pred_check_branch
      %176 = sbr.rel (%p173) target = $region32
    $region31: #{generator_forward.24} parent=5 // pred_region
      %s177 = ssub.s32 %s9, 1
      %p178 = scmp.lt.s32.totalorder %s18, 1
      %s179 = scalar_select %p178, %s18, 1
      %p180 = scmp.lt.s32.totalorder %s19, 0
      %s181 = scalar_select %p180, %s19, 0
      %s182 = smul.addr %s179, 2
      %s183 = sadd.s32 %s181, %s182
      %s184 = smul.addr %s183, 8
      %s185 = scalar_lea.vmem %s0, %s184
      %p186 = pneg %p49
      %p187 = pneg %p46
      %p188 = scmp.lt.s32.totalorder %s19, 0
      %s189 = scalar_select %p188, %s19, 0
      %s190 = scalar_lea.vmem %s1, %s189
      %p191 = pneg %p75
      %p192 = pneg %p72
      %p193 = scmp.lt.s32.totalorder %s19, 0
      %s194 = scalar_select %p193, %s19, 0
      %s195 = scalar_lea.vmem %s2, %s194
      %p196 = pneg %p101
      %p197 = pneg %p98
      %p198 = pneg %p129
      %p199 = pneg %p126
      %p200 = scmp.lt.s32.totalorder %s18, 1
      %s201 = scalar_select %p200, %s18, 1
      %p202 = scmp.lt.s32.totalorder %s19, 0
      %s203 = scalar_select %p202, %s19, 0
      %s204 = smul.addr %s201, 2
      %s205 = sadd.s32 %s203, %s204
      %s206 = smul.addr %s205, 8
      %s207 = scalar_lea.vmem %s3, %s206
      %p208 = scmp.lt.s32.totalorder %s18, 1
      %s209 = scalar_select %p208, %s18, 1
      %p210 = scmp.lt.s32.totalorder %s19, 0
      %s211 = scalar_select %p210, %s19, 0
      %s212 = smul.addr %s209, 2
      %s213 = sadd.s32 %s211, %s212
      %s214 = smul.addr %s213, 8
      %s215 = scalar_lea.vmem %s0, %s214
      %p216 = scmp.lt.s32.totalorder %s19, 0
      %s217 = scalar_select %p216, %s19, 0
      %s218 = scalar_lea.vmem %s1, %s217
      %p219 = scmp.lt.s32.totalorder %s19, 0
      %s220 = scalar_select %p219, %s19, 0
      %s221 = scalar_lea.vmem %s2, %s220
      %p222 = scmp.lt.s32.totalorder %s18, 1
      %s223 = scalar_select %p222, %s18, 1
      %p224 = scmp.lt.s32.totalorder %s19, 0
      %s225 = scalar_select %p224, %s19, 0
      %s226 = smul.addr %s223, 2
      %s227 = sadd.s32 %s225, %s226
      %s228 = smul.addr %s227, 8
      %s229 = scalar_lea.vmem %s3, %s228
      %v230 = vld [vmem:[%s215] sm:$0xff]
      %v231 = vld [vmem:[%s215 + $0x8] sm:$0xff]
      %vm232 = vcmask 523264
      %v233 = vsel %vm232, %v230, 0.0
      %v234 = vsel %vm232, %v231, 0.0
      %v235 = vadd.f32 %v233, %v234
      %v236 = vrot.slane %v235, 4
      %v237 = vadd.f32 %v235, %v236
      %v238 = vrot.slane %v237, 2
      %v239 = vadd.f32 %v237, %v238
      %v240 = vrot.slane %v239, 1
      %v241 = vadd.f32 %v239, %v240
      %v242 = vmul.f32 %v241, 0.0625
      %v243 = vmul.f32 %v230, %v230
      %v244 = vmul.f32 %v231, %v231
      %v245 = vsel %vm232, %v243, 0.0
      %v246 = vsel %vm232, %v244, 0.0
      %v247 = vadd.f32 %v245, %v246
      %v248 = vrot.slane %v247, 4
      %v249 = vadd.f32 %v247, %v248
      %v250 = vrot.slane %v249, 2
      %v251 = vadd.f32 %v249, %v250
      %v252 = vrot.slane %v251, 1
      %v253 = vadd.f32 %v251, %v252
      %v254 = vmul.f32 %v253, 0.0625
      %v255 = vmul.f32 %v242, %v242
      %v256 = vsub.f32 %v254, %v255
      %v257 = vadd.f32 %v256, 1e-05
      %v258 = vrsqrt.pop %v257
      %v259 = vmul.f32 %v258, %v257
      %v260 = vmul.f32 %v259, %v258
      %v261 = vmul.f32 0.5, %v260
      %v262 = vsub.f32 1.5, %v261
      %v263 = vmul.f32 %v258, %v262
      %vm264 = vweird.f32 %v257
      %vm265 = vweird.f32 %v258
      %vm266 = vmor %vm264, %vm265
      %v267 = vsel %vm266, %v258, %v263
      %v268 = vld [vmem:[%s218] sm:$0x1]
      %v269 = vld [vmem:[%s221] sm:$0x1]
      %v270 = vsub.f32 %v230, %v242
      %v271 = vsub.f32 %v231, %v242
      %v272 = vmul.f32 %v270, %v267
      %v273 = vmul.f32 %v271, %v267
      %v275 = vperm.slane %v268, 0
      %v277 = vmul.f32 %v272, %v275
      %v278 = vmul.f32 %v273, %v275
      %v280 = vperm.slane %v269, 0
      %v282 = vadd.f32 %v277, %v280
      %v283 = vadd.f32 %v278, %v280
      %v284 = vmax.f32 %v282, 0.0
      %v285 = vmax.f32 %v283, 0.0
      %286 = vst.msk [vmem:[%s229] sm:$0xff] %vm232, %v284
      %287 = vst.msk [vmem:[%s229 + $0x8] sm:$0xff] %vm232, %v285
      %p288 = scmp.lt.s32.totalorder %s18, 1
      %s289 = scalar_select %p288, %s18, 1
      %p290 = scmp.lt.s32.totalorder %s19, 0
      %s291 = scalar_select %p290, %s19, 0
      %s292 = smul.addr %s289, 2
      %s293 = sadd.s32 %s291, %s292
      %s294 = smul.addr %s293, 8
      %s295 = scalar_lea.vmem %s3, %s294
      // Predicated region
      $region33: #{generator_forward.24} parent=31 // pred_check
        %p296 = pneg %p126
      $region34: #{generator_forward.24} parent=31 // pred_check_branch
        %298 = sbr.rel (%p296) target = $region36
      $region35: #{generator_forward.24} parent=31 // pred_region
        _
      $region36: #{generator_forward.24} parent=31 // pred_fallthru
        _
    $region32: #{generator_forward.24} parent=5 // pred_fallthru
      _
    %p299 = scmp.le.s32.totalorder 2, %s9
    // Predicated region
    $region37: #{generator_forward.24} parent=5 // pred_check
      %p300 = pneg %p299
    $region38: #{generator_forward.24} parent=5 // pred_check_branch
      %302 = sbr.rel (%p300) target = $region40
    $region39: #{generator_forward.24} parent=5 // pred_region
      %s303 = ssub.s32 %s9, 2
      // Predicated region
      $region41: #{generator_forward.24} parent=39 // pred_check
        %p304 = pneg %p132
      $region42: #{generator_forward.24} parent=39 // pred_check_branch
        %306 = sbr.rel (%p304) target = $region44
      $region43: #{generator_forward.24} parent=39 // pred_region
        %p307 = scmp.lt.s32.totalorder %s20, 1
        %s308 = scalar_select %p307, %s20, 1
        %p309 = scmp.lt.s32.totalorder %s21, 0
        %s310 = scalar_select %p309, %s21, 0
        %s311 = smul.addr %s308, 2
        %s312 = sadd.s32 %s310, %s311
        %s313 = smul.addr %s312, 8
        %s314 = scalar_lea.vmem %s3, %s313
      $region44: #{generator_forward.24} parent=39 // pred_fallthru
        _
    $region40: #{generator_forward.24} parent=5 // pred_fallthru
      _
  $region6: #{generator_forward.24} parent=0 // loop_footer
    %s13 = sadd.s32 1, %s9
  $region7: #{generator_forward.24} parent=0 // loop_footer_branch
    %8 = sbr.rel target = $region3
  $region8: #{generator_forward.24} parent=0 // loop_exit
    _

// kernel: generator_forward.23
$region0: #{generator_forward.23}
  #allocation0 [shape = 'u32[]', space=smem, size = 0x4, offset = 0x4, fixed_abs, tag = 'smem constant byte address 0x4 - core index']
  #allocation1 [shape = 'u32[72,128]{1,0:T(1,128)}', space=vmem, size = 0x9000, scoped, tag = 'internal scratch']
  #allocation2 [shape = 'f32[32,128]{1,0:T(8,128)}', space=vmem, size = 0x4000, scoped, tag = 'scratch operand']
  %s0 = inlined_call_operand.vmem [shape: bf16[32,512], index: 0, kind: input, shape index: {}]
  %s1 = inlined_call_operand.vmem [shape: bf16[512,128], index: 1, kind: input, shape index: {}]
  %s2 = inlined_call_operand.vmem [shape: f32[32,128], index: 2, kind: output, shape index: {}]
  %s3 = sld [smem:[#allocation0]]
  $region26: #{generator_forward.23} parent=0
    _
  %s5 = ssub.s32 1, %s3
  %s6 = scalar_select 0, %s5, %s3
  // Predicated region
  $region2: #{generator_forward.23} parent=0 // pred_check
    _
  $region3: #{generator_forward.23} parent=0 // pred_check_branch
    %8 = sbr.rel (0) target = $region5
  $region4: #{generator_forward.23} parent=0 // pred_region
    _
  $region5: #{generator_forward.23} parent=0 // pred_fallthru
    _
  // Predicated region
  $region6: #{generator_forward.23} parent=0 // pred_check
    _
  $region7: #{generator_forward.23} parent=0 // pred_check_branch
    %10 = sbr.rel (0) target = $region9
  $region8: #{generator_forward.23} parent=0 // pred_region
    _
  $region9: #{generator_forward.23} parent=0 // pred_fallthru
    _
  %p11 = scmp.eq.s32.totalorder 0, 0
  // Predicated region
  $region10: #{generator_forward.23} parent=0 // pred_check
    %p12 = pneg %p11
  $region11: #{generator_forward.23} parent=0 // pred_check_branch
    %14 = sbr.rel (%p12) target = $region13
  $region12: #{generator_forward.23} parent=0 // pred_region
    %15 = vst [vmem:[#allocation2] sm:$0xff] 0.0
    %16 = vst [vmem:[#allocation2 + $0x8] sm:$0xff] 0.0
    %17 = vst [vmem:[#allocation2 + $0x10] sm:$0xff] 0.0
    %18 = vst [vmem:[#allocation2 + $0x18] sm:$0xff] 0.0
  $region13: #{generator_forward.23} parent=0 // pred_fallthru
    _
  %v19 = vld [vmem:[#allocation2] sm:$0xff]
  %v20 = vld [vmem:[#allocation2 + $0x8] sm:$0xff]
  %v21 = vld [vmem:[#allocation2 + $0x10] sm:$0xff]
  %v22 = vld [vmem:[#allocation2 + $0x18] sm:$0xff]
  %v23 = vld [vmem:[%s0] sm:$0xff]
  %v24 = vld [vmem:[%s0 + $0x8] sm:$0xff]
  %v25 = vld [vmem:[%s0 + $0x10] sm:$0xff]
  %v26 = vld [vmem:[%s0 + $0x18] sm:$0xff]
  %v27 = vld [vmem:[%s0 + $0x20] sm:$0xff]
  %v28 = vld [vmem:[%s0 + $0x28] sm:$0xff]
  %v29 = vld [vmem:[%s0 + $0x30] sm:$0xff]
  %v30 = vld [vmem:[%s0 + $0x38] sm:$0xff]
  %v31 = vld [vmem:[%s1] sm:$0xf]
  %v32 = vld [vmem:[%s1 + $0x4] sm:$0xf]
  %v33 = vld [vmem:[%s1 + $0x8] sm:$0xf]
  %v34 = vld [vmem:[%s1 + $0xc] sm:$0xf]
  %v35 = vld [vmem:[%s1 + $0x10] sm:$0xf]
  %v36 = vld [vmem:[%s1 + $0x14] sm:$0xf]
  %v37 = vld [vmem:[%s1 + $0x18] sm:$0xf]
  %v38 = vld [vmem:[%s1 + $0x1c] sm:$0xf]
  %v39 = vld [vmem:[%s1 + $0x20] sm:$0xf]
  %v40 = vld [vmem:[%s1 + $0x24] sm:$0xf]
  %v41 = vld [vmem:[%s1 + $0x28] sm:$0xf]
  %v42 = vld [vmem:[%s1 + $0x2c] sm:$0xf]
  %v43 = vld [vmem:[%s1 + $0x30] sm:$0xf]
  %v44 = vld [vmem:[%s1 + $0x34] sm:$0xf]
  %v45 = vld [vmem:[%s1 + $0x38] sm:$0xf]
  %v46 = vld [vmem:[%s1 + $0x3c] sm:$0xf]
  %v47 = vld [vmem:[%s1 + $0x40] sm:$0xf]
  %v48 = vld [vmem:[%s1 + $0x44] sm:$0xf]
  %v49 = vld [vmem:[%s1 + $0x48] sm:$0xf]
  %v50 = vld [vmem:[%s1 + $0x4c] sm:$0xf]
  %v51 = vld [vmem:[%s1 + $0x50] sm:$0xf]
  %v52 = vld [vmem:[%s1 + $0x54] sm:$0xf]
  %v53 = vld [vmem:[%s1 + $0x58] sm:$0xf]
  %v54 = vld [vmem:[%s1 + $0x5c] sm:$0xf]
  %v55 = vld [vmem:[%s1 + $0x60] sm:$0xf]
  %v56 = vld [vmem:[%s1 + $0x64] sm:$0xf]
  %v57 = vld [vmem:[%s1 + $0x68] sm:$0xf]
  %v58 = vld [vmem:[%s1 + $0x6c] sm:$0xf]
  %v59 = vld [vmem:[%s1 + $0x70] sm:$0xf]
  %v60 = vld [vmem:[%s1 + $0x74] sm:$0xf]
  %v61 = vld [vmem:[%s1 + $0x78] sm:$0xf]
  %v62 = vld [vmem:[%s1 + $0x7c] sm:$0xf]
  %v63 = vld [vmem:[%s1 + $0x80] sm:$0xf]
  %v64 = vld [vmem:[%s1 + $0x84] sm:$0xf]
  %v65 = vld [vmem:[%s1 + $0x88] sm:$0xf]
  %v66 = vld [vmem:[%s1 + $0x8c] sm:$0xf]
  %v67 = vld [vmem:[%s1 + $0x90] sm:$0xf]
  %v68 = vld [vmem:[%s1 + $0x94] sm:$0xf]
  %v69 = vld [vmem:[%s1 + $0x98] sm:$0xf]
  %v70 = vld [vmem:[%s1 + $0x9c] sm:$0xf]
  %v71 = vld [vmem:[%s1 + $0xa0] sm:$0xf]
  %v72 = vld [vmem:[%s1 + $0xa4] sm:$0xf]
  %v73 = vld [vmem:[%s1 + $0xa8] sm:$0xf]
  %v74 = vld [vmem:[%s1 + $0xac] sm:$0xf]
  %v75 = vld [vmem:[%s1 + $0xb0] sm:$0xf]
  %v76 = vld [vmem:[%s1 + $0xb4] sm:$0xf]
  %v77 = vld [vmem:[%s1 + $0xb8] sm:$0xf]
  %v78 = vld [vmem:[%s1 + $0xbc] sm:$0xf]
  %v79 = vld [vmem:[%s1 + $0xc0] sm:$0xf]
  %v80 = vld [vmem:[%s1 + $0xc4] sm:$0xf]
  %v81 = vld [vmem:[%s1 + $0xc8] sm:$0xf]
  %v82 = vld [vmem:[%s1 + $0xcc] sm:$0xf]
  %v83 = vld [vmem:[%s1 + $0xd0] sm:$0xf]
  %v84 = vld [vmem:[%s1 + $0xd4] sm:$0xf]
  %v85 = vld [vmem:[%s1 + $0xd8] sm:$0xf]
  %v86 = vld [vmem:[%s1 + $0xdc] sm:$0xf]
  %v87 = vld [vmem:[%s1 + $0xe0] sm:$0xf]
  %v88 = vld [vmem:[%s1 + $0xe4] sm:$0xf]
  %v89 = vld [vmem:[%s1 + $0xe8] sm:$0xf]
  %v90 = vld [vmem:[%s1 + $0xec] sm:$0xf]
  %v91 = vld [vmem:[%s1 + $0xf0] sm:$0xf]
  %v92 = vld [vmem:[%s1 + $0xf4] sm:$0xf]
  %v93 = vld [vmem:[%s1 + $0xf8] sm:$0xf]
  %v94 = vld [vmem:[%s1 + $0xfc] sm:$0xf]
  %v103 = vunpack.c.l.b16 %v23
  %v104 = vunpack.c.h.b16 %v23
  %v105 = vunpack.c.l.b16 %v24
  %v106 = vunpack.c.h.b16 %v24
  %v107 = vunpack.c.l.b16 %v25
  %v108 = vunpack.c.h.b16 %v25
  %v109 = vunpack.c.l.b16 %v26
  %v110 = vunpack.c.h.b16 %v26
  %v111 = vunpack.c.l.b16 %v27
  %v112 = vunpack.c.h.b16 %v27
  %v113 = vunpack.c.l.b16 %v28
  %v114 = vunpack.c.h.b16 %v28
  %v115 = vunpack.c.l.b16 %v29
  %v116 = vunpack.c.h.b16 %v29
  %v117 = vunpack.c.l.b16 %v30
  %v118 = vunpack.c.h.b16 %v30
  %v119 = vpack.c.b16 %v107, %v103
  %v120 = vpack.c.b16 %v108, %v104
  %v121 = vpack.c.b16 %v109, %v105
  %v122 = vpack.c.b16 %v110, %v106
  %v123 = vpack.c.b16 %v115, %v111
  %v124 = vpack.c.b16 %v116, %v112
  %v125 = vpack.c.b16 %v117, %v113
  %v126 = vpack.c.b16 %v118, %v114
  %v199 = vunpack.c.l.b16 %v31
  %v200 = vunpack.c.l.b16 %v32
  %v201 = vunpack.c.l.b16 %v33
  %v202 = vunpack.c.l.b16 %v34
  %v203 = vunpack.c.l.b16 %v35
  %v204 = vunpack.c.l.b16 %v36
  %v205 = vunpack.c.l.b16 %v37
  %v206 = vunpack.c.l.b16 %v38
  %v207 = vunpack.c.l.b16 %v39
  %v208 = vunpack.c.l.b16 %v40
  %v209 = vunpack.c.l.b16 %v41
  %v210 = vunpack.c.l.b16 %v42
  %v211 = vunpack.c.l.b16 %v43
  %v212 = vunpack.c.l.b16 %v44
  %v213 = vunpack.c.l.b16 %v45
  %v214 = vunpack.c.l.b16 %v46
  %v215 = vunpack.c.l.b16 %v47
  %v216 = vunpack.c.l.b16 %v48
  %v217 = vunpack.c.l.b16 %v49
  %v218 = vunpack.c.l.b16 %v50
  %v219 = vunpack.c.l.b16 %v51
  %v220 = vunpack.c.l.b16 %v52
  %v221 = vunpack.c.l.b16 %v53
  %v222 = vunpack.c.l.b16 %v54
  %v223 = vunpack.c.l.b16 %v55
  %v224 = vunpack.c.l.b16 %v56
  %v225 = vunpack.c.l.b16 %v57
  %v226 = vunpack.c.l.b16 %v58
  %v227 = vunpack.c.l.b16 %v59
  %v228 = vunpack.c.l.b16 %v60
  %v229 = vunpack.c.l.b16 %v61
  %v230 = vunpack.c.l.b16 %v62
  %v231 = vunpack.c.l.b16 %v63
  %v232 = vunpack.c.l.b16 %v64
  %v233 = vunpack.c.l.b16 %v65
  %v234 = vunpack.c.l.b16 %v66
  %v235 = vunpack.c.l.b16 %v67
  %v236 = vunpack.c.l.b16 %v68
  %v237 = vunpack.c.l.b16 %v69
  %v238 = vunpack.c.l.b16 %v70
  %v239 = vunpack.c.l.b16 %v71
  %v240 = vunpack.c.l.b16 %v72
  %v241 = vunpack.c.l.b16 %v73
  %v242 = vunpack.c.l.b16 %v74
  %v243 = vunpack.c.l.b16 %v75
  %v244 = vunpack.c.l.b16 %v76
  %v245 = vunpack.c.l.b16 %v77
  %v246 = vunpack.c.l.b16 %v78
  %v247 = vunpack.c.l.b16 %v79
  %v248 = vunpack.c.l.b16 %v80
  %v249 = vunpack.c.l.b16 %v81
  %v250 = vunpack.c.l.b16 %v82
  %v251 = vunpack.c.l.b16 %v83
  %v252 = vunpack.c.l.b16 %v84
  %v253 = vunpack.c.l.b16 %v85
  %v254 = vunpack.c.l.b16 %v86
  %v255 = vunpack.c.l.b16 %v87
  %v256 = vunpack.c.l.b16 %v88
  %v257 = vunpack.c.l.b16 %v89
  %v258 = vunpack.c.l.b16 %v90
  %v259 = vunpack.c.l.b16 %v91
  %v260 = vunpack.c.l.b16 %v92
  %v261 = vunpack.c.l.b16 %v93
  %v262 = vunpack.c.l.b16 %v94
  %v263 = vpack.c.b16 %v200, %v199
  %v264 = vpack.c.b16 %v202, %v201
  %v265 = vpack.c.b16 %v204, %v203
  %v266 = vpack.c.b16 %v206, %v205
  %v267 = vpack.c.b16 %v208, %v207
  %v268 = vpack.c.b16 %v210, %v209
  %v269 = vpack.c.b16 %v212, %v211
  %v270 = vpack.c.b16 %v214, %v213
  %v271 = vpack.c.b16 %v216, %v215
  %v272 = vpack.c.b16 %v218, %v217
  %v273 = vpack.c.b16 %v220, %v219
  %v274 = vpack.c.b16 %v222, %v221
  %v275 = vpack.c.b16 %v224, %v223
  %v276 = vpack.c.b16 %v226, %v225
  %v277 = vpack.c.b16 %v228, %v227
  %v278 = vpack.c.b16 %v230, %v229
  %v279 = vpack.c.b16 %v232, %v231
  %v280 = vpack.c.b16 %v234, %v233
  %v281 = vpack.c.b16 %v236, %v235
  %v282 = vpack.c.b16 %v238, %v237
  %v283 = vpack.c.b16 %v240, %v239
  %v284 = vpack.c.b16 %v242, %v241
  %v285 = vpack.c.b16 %v244, %v243
  %v286 = vpack.c.b16 %v246, %v245
  %v287 = vpack.c.b16 %v248, %v247
  %v288 = vpack.c.b16 %v250, %v249
  %v289 = vpack.c.b16 %v252, %v251
  %v290 = vpack.c.b16 %v254, %v253
  %v291 = vpack.c.b16 %v256, %v255
  %v292 = vpack.c.b16 %v258, %v257
  %v293 = vpack.c.b16 %v260, %v259
  %v294 = vpack.c.b16 %v262, %v261
  %327 = vmatpush.bf16.msra.mxu0 %v270
  %328 = vmatpush.bf16.msra.mxu0 %v269
  %329 = vmatpush.bf16.msra.mxu0 %v268
  %330 = vmatpush.bf16.msra.mxu0 %v267
  %331 = vmatpush.bf16.msra.mxu0 %v266
  %332 = vmatpush.bf16.msra.mxu0 %v265
  %333 = vmatpush.bf16.msra.mxu0 %v264
  %334 = vmatpush.bf16.msra.mxu0 %v263
  %335 = vmatmul.bf16.gmra.mxu0 %v119
  %v336 = vpop.f32.mrf.mxu0
  %v337 = vadd.f32 0.0, %v336
  %v338 = vpop.f32.mrf.mxu0
  %v339 = vadd.f32 0.0, %v338
  %340 = vmatmul.bf16.gmra.mxu0 %v123
  %v341 = vpop.f32.mrf.mxu0
  %v342 = vadd.f32 0.0, %v341
  %v343 = vpop.f32.mrf.mxu0
  %v344 = vadd.f32 0.0, %v343
  %345 = vdwg.mxu0
  %346 = vmatpush.bf16.msra.mxu0 %v278
  %347 = vmatpush.bf16.msra.mxu0 %v277
  %348 = vmatpush.bf16.msra.mxu0 %v276
  %349 = vmatpush.bf16.msra.mxu0 %v275
  %350 = vmatpush.bf16.msra.mxu0 %v274
  %351 = vmatpush.bf16.msra.mxu0 %v273
  %352 = vmatpush.bf16.msra.mxu0 %v272
  %353 = vmatpush.bf16.msra.mxu0 %v271
  %354 = vmatmul.bf16.gmra.mxu0 %v120
  %v355 = vpop.f32.mrf.mxu0
  %v356 = vadd.f32 %v337, %v355
  %v357 = vpop.f32.mrf.mxu0
  %v358 = vadd.f32 %v339, %v357
  %359 = vmatmul.bf16.gmra.mxu0 %v124
  %v360 = vpop.f32.mrf.mxu0
  %v361 = vadd.f32 %v342, %v360
  %v362 = vpop.f32.mrf.mxu0
  %v363 = vadd.f32 %v344, %v362
  %364 = vdwg.mxu0
  %365 = vmatpush.bf16.msra.mxu0 %v286
  %366 = vmatpush.bf16.msra.mxu0 %v285
  %367 = vmatpush.bf16.msra.mxu0 %v284
  %368 = vmatpush.bf16.msra.mxu0 %v283
  %369 = vmatpush.bf16.msra.mxu0 %v282
  %370 = vmatpush.bf16.msra.mxu0 %v281
  %371 = vmatpush.bf16.msra.mxu0 %v280
  %372 = vmatpush.bf16.msra.mxu0 %v279
  %373 = vmatmul.bf16.gmra.mxu0 %v121
  %v374 = vpop.f32.mrf.mxu0
  %v375 = vadd.f32 %v356, %v374
  %v376 = vpop.f32.mrf.mxu0
  %v377 = vadd.f32 %v358, %v376
  %378 = vmatmul.bf16.gmra.mxu0 %v125
  %v379 = vpop.f32.mrf.mxu0
  %v380 = vadd.f32 %v361, %v379
  %v381 = vpop.f32.mrf.mxu0
  %v382 = vadd.f32 %v363, %v381
  %383 = vdwg.mxu0
  %384 = vmatpush.bf16.msra.mxu0 %v294
  %385 = vmatpush.bf16.msra.mxu0 %v293
  %386 = vmatpush.bf16.msra.mxu0 %v292
  %387 = vmatpush.bf16.msra.mxu0 %v291
  %388 = vmatpush.bf16.msra.mxu0 %v290
  %389 = vmatpush.bf16.msra.mxu0 %v289
  %390 = vmatpush.bf16.msra.mxu0 %v288
  %391 = vmatpush.bf16.msra.mxu0 %v287
  %392 = vmatmul.bf16.gmra.mxu0 %v122
  %v393 = vpop.f32.mrf.mxu0
  %v394 = vadd.f32 %v375, %v393
  %v395 = vpop.f32.mrf.mxu0
  %v396 = vadd.f32 %v377, %v395
  %397 = vmatmul.bf16.gmra.mxu0 %v126
  %v398 = vpop.f32.mrf.mxu0
  %v399 = vadd.f32 %v380, %v398
  %v400 = vpop.f32.mrf.mxu0
  %v401 = vadd.f32 %v382, %v400
  %402 = vdwg.mxu0
  %v403 = vadd.f32 %v19, %v394
  %v404 = vadd.f32 %v20, %v396
  %v405 = vadd.f32 %v21, %v399
  %v406 = vadd.f32 %v22, %v401
  %407 = vst [vmem:[#allocation2] sm:$0xff] %v403
  %408 = vst [vmem:[#allocation2 + $0x8] sm:$0xff] %v404
  %409 = vst [vmem:[#allocation2 + $0x10] sm:$0xff] %v405
  %410 = vst [vmem:[#allocation2 + $0x18] sm:$0xff] %v406
  // Predicated region
  $region14: #{generator_forward.23} parent=0 // pred_check
    %p411 = pneg %p11
  $region15: #{generator_forward.23} parent=0 // pred_check_branch
    %413 = sbr.rel (%p411) target = $region17
  $region16: #{generator_forward.23} parent=0 // pred_region
    %v414 = vld [vmem:[#allocation2] sm:$0xff]
    %v415 = vld [vmem:[#allocation2 + $0x8] sm:$0xff]
    %v416 = vld [vmem:[#allocation2 + $0x10] sm:$0xff]
    %v417 = vld [vmem:[#allocation2 + $0x18] sm:$0xff]
    %418 = vst [vmem:[%s2] sm:$0xff] %v414
    %419 = vst [vmem:[%s2 + $0x8] sm:$0xff] %v415
    %420 = vst [vmem:[%s2 + $0x10] sm:$0xff] %v416
    %421 = vst [vmem:[%s2 + $0x18] sm:$0xff] %v417
  $region17: #{generator_forward.23} parent=0 // pred_fallthru
    _
  // Predicated region
  $region18: #{generator_forward.23} parent=0 // pred_check
    _
  $region19: #{generator_forward.23} parent=0 // pred_check_branch
    %423 = sbr.rel (0) target = $region21
  $region20: #{generator_forward.23} parent=0 // pred_region
    _
  $region21: #{generator_forward.23} parent=0 // pred_fallthru
    _
  // Predicated region
  $region22: #{generator_forward.23} parent=0 // pred_check
    _
  $region23: #{generator_forward.23} parent=0 // pred_check_branch
    %425 = sbr.rel (0) target = $region25
  $region24: #{generator_forward.23} parent=0 // pred_region
    _
  $region25: #{generator_forward.23} parent=0 // pred_fallthru
    _

// kernel: generator_forward.25
$region0: #{generator_forward.25}
  #allocation0 [shape = 'u32[]', space=smem, size = 0x4, offset = 0x4, fixed_abs, tag = 'smem constant byte address 0x4 - core index']
  #allocation1 [shape = 'u32[72,128]{1,0:T(1,128)}', space=vmem, size = 0x9000, scoped, tag = 'internal scratch']
  #allocation2 [shape = 'f32[32,128]{1,0:T(8,128)}', space=vmem, size = 0x4000, scoped, tag = 'scratch operand']
  %s0 = inlined_call_operand.vmem [shape: bf16[32,640], index: 0, kind: input, shape index: {}]
  %s1 = inlined_call_operand.vmem [shape: bf16[640,128], index: 1, kind: input, shape index: {}]
  %s2 = inlined_call_operand.vmem [shape: f32[32,128], index: 2, kind: output, shape index: {}]
  %s3 = sld [smem:[#allocation0]]
  $region90: #{generator_forward.25} parent=0
    _
  %s5 = ssub.s32 1, %s3
  %s6 = scalar_select 0, %s5, %s3
  $region1: #{generator_forward.25} parent=0
    #allocation3 [shape = 'u8[16384]{0}', space=vmem, size = 0x4000, scoped, tag = 'input window, operand 0']
    loop: start=0, step=1, limit=7
    $region2: #{generator_forward.25} parent=1 // loop_pre_header
      _
    $region3: #{generator_forward.25} parent=1 // loop_header
      %s8 = sphi 0, %s12
      %p9 = scmp.ge.s32.totalorder %s8, 7
      %s15 = sphi 0, %s34
      %s16 = sphi 0, %s30
      %s17 = sphi 0, %s26
      %s18 = sphi 0, %s15
      %s19 = sphi 0, %s16
      %s20 = sphi 0, %s17
      %s21 = sphi 0, %s18
      %s22 = sphi 0, %s19
      %s23 = sphi 0, %s20
      %s39 = sphi 0, %s41
      %s42 = sphi 0, %s39
      %s43 = sphi 0, %s42
      %s59 = sphi 0, %s43
      %s67 = sphi 0, %s69
      %s70 = sphi 0, %s67
      %s71 = sphi 0, %s70
      %s87 = sphi 0, %s71
      %s95 = sphi 0, %s97
      %s98 = sphi 0, %s95
      %s99 = sphi 0, %s98
      %s115 = sphi 0, %s99
    $region4: #{generator_forward.25} parent=1 // loop_header_branch
      %11 = sbr.rel (%p9) target = $region8
    $region5: #{generator_forward.25} parent=1 // loop_body
      %s13 = ssub.s32 %s8, 1
      %s14 = ssub.s32 %s8, 2
      %s24 = sadd.s32 1, %s17
      %p25 = scmp.ge.s32.totalorder %s24, 5
      %s26 = scalar_select %p25, 0, %s24
      %s27 = sadd.s32 1, %s16
      %s28 = scalar_select %p25, %s27, %s16
      %p29 = scmp.ge.s32.totalorder %s28, 1
      %s30 = scalar_select %p29, 0, %s28
      %s31 = sadd.s32 1, %s15
      %s32 = scalar_select %p29, %s31, %s15
      %p33 = scmp.ge.s32.totalorder %s32, 1
      %s34 = scalar_select %p33, 0, %s32
      %s35 = ssub.s32 %s15, %s34
      %s36 = ssub.s32 %s17, %s26
      %s37 = sor.u32 %s35, %s36
      %p38 = scmp.eq.s32.totalorder %s37, 0
      %s40 = sadd.s32 %s39, 1
      %s41 = scalar_select %p38, %s39, %s40
      %p44 = pneg %p38
      %p45 = scmp.eq.s32.totalorder %s8, 4
      %p46 = por %p44, %p45
      %p47 = scmp.ne.s32.totalorder %s39, %s42
      %p48 = scmp.eq.s32.totalorder %s8, 0
      %p49 = por %p47, %p48
      %p50 = scmp.ne.s32.totalorder %s39, %s42
      %p51 = scmp.eq.s32.totalorder %s13, 4
      %p52 = por %p50, %p51
      %p53 = scmp.ne.s32.totalorder %s42, %s43
      %p54 = scmp.eq.s32.totalorder %s13, 0
      %p55 = por %p53, %p54
      %p56 = scmp.ne.s32.totalorder %s42, %s43
      %p57 = scmp.eq.s32.totalorder %s14, 4
      %p58 = por %p56, %p57
      %p60 = scmp.ne.s32.totalorder %s43, %s59
      %p61 = scmp.eq.s32.totalorder %s14, 0
      %p62 = por %p60, %p61
      %s63 = ssub.s32 %s17, %s26
      %s64 = ssub.s32 %s16, %s30
      %s65 = sor.u32 %s63, %s64
      %p66 = scmp.eq.s32.totalorder %s65, 0
      %s68 = sadd.s32 %s67, 1
      %s69 = scalar_select %p66, %s67, %s68
      %p72 = pneg %p66
      %p73 = scmp.eq.s32.totalorder %s8, 4
      %p74 = por %p72, %p73
      %p75 = scmp.ne.s32.totalorder %s67, %s70
      %p76 = scmp.eq.s32.totalorder %s8, 0
      %p77 = por %p75, %p76
      %p78 = scmp.ne.s32.totalorder %s67, %s70
      %p79 = scmp.eq.s32.totalorder %s13, 4
      %p80 = por %p78, %p79
      %p81 = scmp.ne.s32.totalorder %s70, %s71
      %p82 = scmp.eq.s32.totalorder %s13, 0
      %p83 = por %p81, %p82
      %p84 = scmp.ne.s32.totalorder %s70, %s71
      %p85 = scmp.eq.s32.totalorder %s14, 4
      %p86 = por %p84, %p85
      %p88 = scmp.ne.s32.totalorder %s71, %s87
      %p89 = scmp.eq.s32.totalorder %s14, 0
      %p90 = por %p88, %p89
      %s91 = ssub.s32 %s15, %s34
      %s92 = ssub.s32 %s16, %s30
      %s93 = sor.u32 %s91, %s92
      %p94 = scmp.eq.s32.totalorder %s93, 0
      %s96 = sadd.s32 %s95, 1
      %s97 = scalar_select %p94, %s95, %s96
      %p100 = pneg %p94
      %p101 = scmp.eq.s32.totalorder %s8, 4
      %p102 = por %p100, %p101
      %p103 = scmp.ne.s32.totalorder %s95, %s98
      %p104 = scmp.eq.s32.totalorder %s8, 0
      %p105 = por %p103, %p104
      %p106 = scmp.ne.s32.totalorder %s95, %s98
      %p107 = scmp.eq.s32.totalorder %s13, 4
      %p108 = por %p106, %p107
      %p109 = scmp.ne.s32.totalorder %s98, %s99
      %p110 = scmp.eq.s32.totalorder %s13, 0
      %p111 = por %p109, %p110
      %p112 = scmp.ne.s32.totalorder %s98, %s99
      %p113 = scmp.eq.s32.totalorder %s14, 4
      %p114 = por %p112, %p113
      %p116 = scmp.ne.s32.totalorder %s99, %s115
      %p117 = scmp.eq.s32.totalorder %s14, 0
      %p118 = por %p116, %p117
      %p119 = scmp.le.s32.totalorder 1, %s8
      %p120 = scmp.lt.s32.totalorder %s8, 6
      %p121 = pnand %p119, %p120
      %p122 = pneg %p121
      // Predicated region
      $region9: #{generator_forward.25} parent=5 // pred_check
        _
      $region10: #{generator_forward.25} parent=5 // pred_check_branch
        %124 = sbr.rel (%p121) target = $region12
      $region11: #{generator_forward.25} parent=5 // pred_region
        %s125 = ssub.s32 %s8, 1
      $region12: #{generator_forward.25} parent=5 // pred_fallthru
        _
      %p126 = scmp.lt.s32.totalorder %s8, 5
      // Predicated region
      $region13: #{generator_forward.25} parent=5 // pred_check
        %p127 = pneg %p126
      $region14: #{generator_forward.25} parent=5 // pred_check_branch
        %129 = sbr.rel (%p127) target = $region16
      $region15: #{generator_forward.25} parent=5 // pred_region
        // Predicated region
        $region17: #{generator_forward.25} parent=15 // pred_check
          %p130 = pneg %p49
        $region18: #{generator_forward.25} parent=15 // pred_check_branch
          %132 = sbr.rel (%p130) target = $region20
        $region19: #{generator_forward.25} parent=15 // pred_region
          %s133 = sand.u32 %s39, 1
          %s134 = sand.u32 %s39, 1
          %s135 = smul.addr %s134, 16
          %s136 = scalar_lea.vmem [#allocation3], %s135
          %s137 = smul.u32 4, %s15
          %s138 = smul.addr %s137, 5
          %s139 = sadd.s32 %s17, %s138
          %s140 = smul.addr %s139, 4
          %s141 = scalar_lea.vmem %s0, %s140
          // Predicated region
          $region21: #{generator_forward.25} parent=19 // pred_check
            _
          $region22: #{generator_forward.25} parent=19 // pred_check_branch
            %143 = sbr.rel (0) target = $region24
          $region23: #{generator_forward.25} parent=19 // pred_region
            // Predicated region
            $region25: #{generator_forward.25} parent=23 // pred_check
              _
            $region26: #{generator_forward.25} parent=23 // pred_check_branch
              %145 = sbr.rel target = $region28
            $region27: #{generator_forward.25} parent=23 // pred_region
              // Predicated region
              $region40: #{generator_forward.25} parent=27 // pred_check
                _
              $region41: #{generator_forward.25} parent=27 // pred_check_branch
                %167 = sbr.rel (0) target = $region43
              $region42: #{generator_forward.25} parent=27 // pred_region
                loop: start=0, step=1, limit=1
                $region44: #{generator_forward.25} parent=42 // loop_pre_header
                  _
                $region45: #{generator_forward.25} parent=42 // loop_header
                  %s169 = sphi 0, %s173
                  %p170 = scmp.ge.s32.totalorder %s169, 1
                  %s174 = sphi %s141, %s141
                  %s175 = sphi %s136, %s136
                $region46: #{generator_forward.25} parent=42 // loop_header_branch
                  %172 = sbr.rel (%p170) target = $region50
                $region47: #{generator_forward.25} parent=42 // loop_body
                  _
                $region48: #{generator_forward.25} parent=42 // loop_footer
                  %s173 = sadd.s32 1, %s169
                $region49: #{generator_forward.25} parent=42 // loop_footer_branch
                  %168 = sbr.rel target = $region45
                $region50: #{generator_forward.25} parent=42 // loop_exit
                  _
                %s177 = ssub.s32 16, 1
                loop: start=0, step=1, limit=1
                $region51: #{generator_forward.25} parent=42 // loop_pre_header
                  _
                $region52: #{generator_forward.25} parent=42 // loop_header
                  %s179 = sphi 0, %s183
                  %p180 = scmp.ge.s32.totalorder %s179, 1
                  %s184 = sphi %s141, %s141
                  %s185 = sphi %s136, %s136
                $region53: #{generator_forward.25} parent=42 // loop_header_branch
                  %182 = sbr.rel (%p180) target = $region57
                $region54: #{generator_forward.25} parent=42 // loop_body
                  %v186 = vld [vmem:[%s184] sm:%s177]
                  %187 = vst [vmem:[%s185] sm:%s177] %v186
                  %v188 = vld [vmem:[%s184 + $0x14] sm:%s177]
                  %189 = vst [vmem:[%s185 + $0x4] sm:%s177] %v188
                  %v190 = vld [vmem:[%s184 + $0x28] sm:%s177]
                  %191 = vst [vmem:[%s185 + $0x8] sm:%s177] %v190
                  %v192 = vld [vmem:[%s184 + $0x3c] sm:%s177]
                  %193 = vst [vmem:[%s185 + $0xc] sm:%s177] %v192
                $region55: #{generator_forward.25} parent=42 // loop_footer
                  %s183 = sadd.s32 1, %s179
                $region56: #{generator_forward.25} parent=42 // loop_footer_branch
                  %178 = sbr.rel target = $region52
                $region57: #{generator_forward.25} parent=42 // loop_exit
                  _
              $region43: #{generator_forward.25} parent=27 // pred_fallthru
                _
            $region28: #{generator_forward.25} parent=23 // pred_fallthru
              _
            // Predicated region
            $region29: #{generator_forward.25} parent=23 // pred_check
              _
            $region30: #{generator_forward.25} parent=23 // pred_check_branch
              %147 = sbr.rel (0) target = $region32
            $region31: #{generator_forward.25} parent=23 // pred_region
              %s149 = ssub.s32 16, 1
              loop: start=0, step=1, limit=1
              $region33: #{generator_forward.25} parent=31 // loop_pre_header
                _
              $region34: #{generator_forward.25} parent=31 // loop_header
                %s151 = sphi 0, %s155
                %p152 = scmp.ge.s32.totalorder %s151, 1
                %s156 = sphi %s141, %s141
                %s157 = sphi %s136, %s136
              $region35: #{generator_forward.25} parent=31 // loop_header_branch
                %154 = sbr.rel (%p152) target = $region39
              $region36: #{generator_forward.25} parent=31 // loop_body
                %v158 = vld [vmem:[%s156] sm:%s149]
                %159 = vst [vmem:[%s157] sm:%s149] %v158
                %v160 = vld [vmem:[%s156 + $0x14] sm:%s149]
                %161 = vst [vmem:[%s157 + $0x4] sm:%s149] %v160
                %v162 = vld [vmem:[%s156 + $0x28] sm:%s149]
                %163 = vst [vmem:[%s157 + $0x8] sm:%s149] %v162
                %v164 = vld [vmem:[%s156 + $0x3c] sm:%s149]
                %165 = vst [vmem:[%s157 + $0xc] sm:%s149] %v164
              $region37: #{generator_forward.25} parent=31 // loop_footer
                %s155 = sadd.s32 1, %s151
              $region38: #{generator_forward.25} parent=31 // loop_footer_branch
                %150 = sbr.rel target = $region34
              $region39: #{generator_forward.25} parent=31 // loop_exit
                _
            $region32: #{generator_forward.25} parent=23 // pred_fallthru
              _
          $region24: #{generator_forward.25} parent=19 // pred_fallthru
            _
          %194 = vnop
        $region20: #{generator_forward.25} parent=15 // pred_fallthru
          _
        // Predicated region
        $region58: #{generator_forward.25} parent=15 // pred_check
          %p195 = pneg %p77
        $region59: #{generator_forward.25} parent=15 // pred_check_branch
          %197 = sbr.rel (%p195) target = $region61
        $region60: #{generator_forward.25} parent=15 // pred_region
          %s198 = smul.u32 16, %s17
          %p199 = scmp.lt.s32.totalorder %s198, 79
          %s200 = scalar_select %p199, %s198, 79
          %p201 = scmp.lt.s32.totalorder %s16, 0
          %s202 = scalar_select %p201, %s16, 0
          %s203 = sadd.s32 %s202, %s200
          %s204 = smul.addr %s203, 4
          %s205 = scalar_lea.vmem %s1, %s204
          %s206 = smul.u32 16, %s17
        $region61: #{generator_forward.25} parent=15 // pred_fallthru
          _
      $region16: #{generator_forward.25} parent=5 // pred_fallthru
        _
      %p207 = scmp.le.s32.totalorder 1, %s8
      %p208 = scmp.lt.s32.totalorder %s8, 6
      %p209 = pnand %p207, %p208
      %p210 = pneg %p209
      // Predicated region
      $region62: #{generator_forward.25} parent=5 // pred_check
        _
      $region63: #{generator_forward.25} parent=5 // pred_check_branch
        %212 = sbr.rel (%p209) target = $region65
      $region64: #{generator_forward.25} parent=5 // pred_region
        %s213 = ssub.s32 %s8, 1
        %s214 = sand.u32 %s42, 1
        %s215 = sand.u32 %s42, 1
        %s216 = smul.addr %s215, 16
        %s217 = scalar_lea.vmem [#allocation3], %s216
        // Predicated region
        $region66: #{generator_forward.25} parent=64 // pred_check
          %p218 = pneg %p55
        $region67: #{generator_forward.25} parent=64 // pred_check_branch
          %220 = sbr.rel (%p218) target = $region69
        $region68: #{generator_forward.25} parent=64 // pred_region
          _
        $region69: #{generator_forward.25} parent=64 // pred_fallthru
          _
        %s221 = sand.u32 %s42, 1
        %s222 = sand.u32 %s42, 1
        %s223 = smul.addr %s222, 16
        %s224 = scalar_lea.vmem [#allocation3], %s223
        %p225 = pneg %p55
        %p226 = pneg %p52
        %s227 = smul.u32 16, %s20
        %p228 = scmp.lt.s32.totalorder %s227, 79
        %s229 = scalar_select %p228, %s227, 79
        %p230 = scmp.lt.s32.totalorder %s19, 0
        %s231 = scalar_select %p230, %s19, 0
        %s232 = sadd.s32 %s231, %s229
        %s233 = smul.addr %s232, 4
        %s234 = scalar_lea.vmem %s1, %s233
        %p235 = pneg %p83
        %p236 = pneg %p80
        %p237 = pneg %p111
        %p238 = pneg %p108
        %s239 = smul.u32 4, %s18
        %p240 = scmp.lt.s32.totalorder %s239, 3
        %s241 = scalar_select %p240, %s239, 3
        %p242 = scmp.lt.s32.totalorder %s19, 0
        %s243 = scalar_select %p242, %s19, 0
        %s244 = sadd.s32 %s243, %s241
        %s245 = smul.addr %s244, 8
        %s246 = scalar_lea.vmem %s2, %s245
        %s247 = smul.u32 4, %s18
        %s248 = smul.u32 16, %s20
        %p249 = scmp.lt.s32.totalorder %s248, 79
        %s250 = scalar_select %p249, %s248, 79
        %p251 = scmp.lt.s32.totalorder %s19, 0
        %s252 = scalar_select %p251, %s19, 0
        %s253 = sadd.s32 %s252, %s250
        %s254 = smul.addr %s253, 4
        %s255 = scalar_lea.vmem %s1, %s254
        %s256 = smul.u32 16, %s20
        %s257 = smul.u32 4, %s18
        %p258 = scmp.lt.s32.totalorder %s257, 3
        %s259 = scalar_select %p258, %s257, 3
        %p260 = scmp.lt.s32.totalorder %s19, 0
        %s261 = scalar_select %p260, %s19, 0
        %s262 = sadd.s32 %s261, %s259
        %s263 = smul.addr %s262, 8
        %s264 = scalar_lea.vmem %s2, %s263
        %s265 = smul.u32 4, %s18
        %p266 = scmp.eq.s32.totalorder %s20, 0
        // Predicated region
        $region70: #{generator_forward.25} parent=64 // pred_check
          %p267 = pneg %p266
        $region71: #{generator_forward.25} parent=64 // pred_check_branch
          %269 = sbr.rel (%p267) target = $region73
        $region72: #{generator_forward.25} parent=64 // pred_region
          %270 = vst [vmem:[#allocation2] sm:$0xff] 0.0
          %271 = vst [vmem:[#allocation2 + $0x8] sm:$0xff] 0.0
          %272 = vst [vmem:[#allocation2 + $0x10] sm:$0xff] 0.0
          %273 = vst [vmem:[#allocation2 + $0x18] sm:$0xff] 0.0
        $region73: #{generator_forward.25} parent=64 // pred_fallthru
          _
        %v274 = vld [vmem:[#allocation2] sm:$0xff]
        %v275 = vld [vmem:[#allocation2 + $0x8] sm:$0xff]
        %v276 = vld [vmem:[#allocation2 + $0x10] sm:$0xff]
        %v277 = vld [vmem:[#allocation2 + $0x18] sm:$0xff]
        %v278 = vld [vmem:[%s217] sm:$0xf]
        %v279 = vld [vmem:[%s217 + $0x4] sm:$0xf]
        %v280 = vld [vmem:[%s217 + $0x8] sm:$0xf]
        %v281 = vld [vmem:[%s217 + $0xc] sm:$0xf]
        %v282 = vld [vmem:[%s255] sm:$0xf]
        %v283 = vld [vmem:[%s255 + $0x4] sm:$0xf]
        %v284 = vld [vmem:[%s255 + $0x8] sm:$0xf]
        %v285 = vld [vmem:[%s255 + $0xc] sm:$0xf]
        %v286 = vld [vmem:[%s255 + $0x10] sm:$0xf]
        %v287 = vld [vmem:[%s255 + $0x14] sm:$0xf]
        %v288 = vld [vmem:[%s255 + $0x18] sm:$0xf]
        %v289 = vld [vmem:[%s255 + $0x1c] sm:$0xf]
        %v290 = vld [vmem:[%s255 + $0x20] sm:$0xf]
        %v291 = vld [vmem:[%s255 + $0x24] sm:$0xf]
        %v292 = vld [vmem:[%s255 + $0x28] sm:$0xf]
        %v293 = vld [vmem:[%s255 + $0x2c] sm:$0xf]
        %v294 = vld [vmem:[%s255 + $0x30] sm:$0xf]
        %v295 = vld [vmem:[%s255 + $0x34] sm:$0xf]
        %v296 = vld [vmem:[%s255 + $0x38] sm:$0xf]
        %v297 = vld [vmem:[%s255 + $0x3c] sm:$0xf]
        %v302 = vunpack.c.l.b16 %v278
        %v303 = vunpack.c.l.b16 %v279
        %v304 = vunpack.c.l.b16 %v280
        %v305 = vunpack.c.l.b16 %v281
        %v306 = vpack.c.b16 %v303, %v302
        %v307 = vpack.c.b16 %v305, %v304
        %v326 = vunpack.c.l.b16 %v282
        %v327 = vunpack.c.l.b16 %v283
        %v328 = vunpack.c.l.b16 %v284
        %v329 = vunpack.c.l.b16 %v285
        %v330 = vunpack.c.l.b16 %v286
        %v331 = vunpack.c.l.b16 %v287
        %v332 = vunpack.c.l.b16 %v288
        %v333 = vunpack.c.l.b16 %v289
        %v334 = vunpack.c.l.b16 %v290
        %v335 = vunpack.c.l.b16 %v291
        %v336 = vunpack.c.l.b16 %v292
        %v337 = vunpack.c.l.b16 %v293
        %v338 = vunpack.c.l.b16 %v294
        %v339 = vunpack.c.l.b16 %v295
        %v340 = vunpack.c.l.b16 %v296
        %v341 = vunpack.c.l.b16 %v297
        %v342 = vpack.c.b16 %v327, %v326
        %v343 = vpack.c.b16 %v329, %v328
        %v344 = vpack.c.b16 %v331, %v330
        %v345 = vpack.c.b16 %v333, %v332
        %v346 = vpack.c.b16 %v335, %v334
        %v347 = vpack.c.b16 %v337, %v336
        %v348 = vpack.c.b16 %v339, %v338
        %v349 = vpack.c.b16 %v341, %v340
        %358 = vmatpush.bf16.msra.mxu0 %v349
        %359 = vmatpush.bf16.msra.mxu0 %v348
        %360 = vmatpush.bf16.msra.mxu0 %v347
        %361 = vmatpush.bf16.msra.mxu0 %v346
        %362 = vmatpush.bf16.msra.mxu0 %v345
        %363 = vmatpush.bf16.msra.mxu0 %v344
        %364 = vmatpush.bf16.msra.mxu0 %v343
        %365 = vmatpush.bf16.msra.mxu0 %v342
        %366 = vmatmul.bf16.gmra.mxu0 %v306
        %v367 = vpop.f32.mrf.mxu0
        %v368 = vadd.f32 0.0, %v367
        %v369 = vpop.f32.mrf.mxu0
        %v370 = vadd.f32 0.0, %v369
        %371 = vmatmul.bf16.gmra.mxu0 %v307
        %v372 = vpop.f32.mrf.mxu0
        %v373 = vadd.f32 0.0, %v372
        %v374 = vpop.f32.mrf.mxu0
        %v375 = vadd.f32 0.0, %v374
        %376 = vdwg.mxu0
        %v377 = vadd.f32 %v274, %v368
        %v378 = vadd.f32 %v275, %v370
        %v379 = vadd.f32 %v276, %v373
        %v380 = vadd.f32 %v277, %v375
        %381 = vst [vmem:[#allocation2] sm:$0xff] %v377
        %382 = vst [vmem:[#allocation2 + $0x8] sm:$0xff] %v378
        %383 = vst [vmem:[#allocation2 + $0x10] sm:$0xff] %v379
        %384 = vst [vmem:[#allocation2 + $0x18] sm:$0xff] %v380
        %p385 = scmp.eq.s32.totalorder %s20, 4
        // Predicated region
        $region74: #{generator_forward.25} parent=64 // pred_check
          %p386 = pneg %p385
        $region75: #{generator_forward.25} parent=64 // pred_check_branch
          %388 = sbr.rel (%p386) target = $region77
        $region76: #{generator_forward.25} parent=64 // pred_region
          %v389 = vld [vmem:[#allocation2] sm:$0xff]
          %v390 = vld [vmem:[#allocation2 + $0x8] sm:$0xff]
          %v391 = vld [vmem:[#allocation2 + $0x10] sm:$0xff]
          %v392 = vld [vmem:[#allocation2 + $0x18] sm:$0xff]
          %393 = vst [vmem:[%s264] sm:$0xff] %v389
          %394 = vst [vmem:[%s264 + $0x8] sm:$0xff] %v390
          %395 = vst [vmem:[%s264 + $0x10] sm:$0xff] %v391
          %396 = vst [vmem:[%s264 + $0x18] sm:$0xff] %v392
        $region77: #{generator_forward.25} parent=64 // pred_fallthru
          _
        %s397 = smul.u32 4, %s18
        %p398 = scmp.lt.s32.totalorder %s397, 3
        %s399 = scalar_select %p398, %s397, 3
        %p400 = scmp.lt.s32.totalorder %s19, 0
        %s401 = scalar_select %p400, %s19, 0
        %s402 = sadd.s32 %s401, %s399
        %s403 = smul.addr %s402, 8
        %s404 = scalar_lea.vmem %s2, %s403
        // Predicated region
        $region78: #{generator_forward.25} parent=64 // pred_check
          %p405 = pneg %p108
        $region79: #{generator_forward.25} parent=64 // pred_check_branch
          %407 = sbr.rel (%p405) target = $region81
        $region80: #{generator_forward.25} parent=64 // pred_region
          %s408 = smul.u32 4, %s18
        $region81: #{generator_forward.25} parent=64 // pred_fallthru
          _
        // Predicated region
        $region82: #{generator_forward.25} parent=64 // pred_check
          %p409 = pneg %p108
        $region83: #{generator_forward.25} parent=64 // pred_check_branch
          %411 = sbr.rel (%p409) target = $region85
        $region84: #{generator_forward.25} parent=64 // pred_region
          %s412 = smul.u32 4, %s18
          %p413 = scmp.lt.s32.totalorder %s412, 3
          %s414 = scalar_select %p413, %s412, 3
          %p415 = scmp.lt.s32.totalorder %s19, 0
          %s416 = scalar_select %p415, %s19, 0
          %s417 = sadd.s32 %s416, %s414
          %s418 = smul.addr %s417, 8
          %s419 = scalar_lea.vmem %s2, %s418
        $region85: #{generator_forward.25} parent=64 // pred_fallthru
          _
      $region65: #{generator_forward.25} parent=5 // pred_fallthru
        _
      %p420 = scmp.le.s32.totalorder 2, %s8
      // Predicated region
      $region86: #{generator_forward.25} parent=5 // pred_check
        %p421 = pneg %p420
      $region87: #{generator_forward.25} parent=5 // pred_check_branch
        %423 = sbr.rel (%p421) target = $region89
      $region88: #{generator_forward.25} parent=5 // pred_region
        %s424 = ssub.s32 %s8, 2
      $region89: #{generator_forward.25} parent=5 // pred_fallthru
        _
    $region6: #{generator_forward.25} parent=1 // loop_footer
      %s12 = sadd.s32 1, %s8
    $region7: #{generator_forward.25} parent=1 // loop_footer_branch
      %7 = sbr.rel target = $region3
    $region8: #{generator_forward.25} parent=1 // loop_exit
      _

// kernel: generator_forward.28
$region0: #{generator_forward.28}
  #allocation0 [shape = 'u32[]', space=smem, size = 0x4, offset = 0x4, fixed_abs, tag = 'smem constant byte address 0x4 - core index']
  #allocation1 [shape = 'u32[72,128]{1,0:T(1,128)}', space=vmem, size = 0x9000, scoped, tag = 'internal scratch']
  %s0 = inlined_call_operand.vmem [shape: f32[2,16,64], index: 0, kind: input, shape index: {}]
  %s1 = inlined_call_operand.vmem [shape: f32[2,16,64], index: 1, kind: input, shape index: {}]
  %s2 = inlined_call_operand.vmem [shape: f32[1,64], index: 2, kind: input, shape index: {}]
  %s3 = inlined_call_operand.vmem [shape: f32[1,64], index: 3, kind: input, shape index: {}]
  %s4 = inlined_call_operand.vmem [shape: f32[2,16,64], index: 4, kind: output, shape index: {}]
  %s5 = sld [smem:[#allocation0]]
  $region49: #{generator_forward.28} parent=0
    _
  %s7 = ssub.s32 1, %s5
  %s8 = scalar_select 0, %s7, %s5
  loop: start=0, step=1, limit=4
  $region2: #{generator_forward.28} parent=0 // loop_pre_header
    _
  $region3: #{generator_forward.28} parent=0 // loop_header
    %s10 = sphi 0, %s14
    %p11 = scmp.ge.s32.totalorder %s10, 4
    %s17 = sphi 0, %s29
    %s18 = sphi 0, %s25
    %s19 = sphi 0, %s17
    %s20 = sphi 0, %s18
    %s21 = sphi 0, %s19
    %s22 = sphi 0, %s20
    %s34 = sphi 0, %s36
    %s37 = sphi 0, %s34
    %s38 = sphi 0, %s37
    %s54 = sphi 0, %s38
    %s62 = sphi 0, %s64
    %s65 = sphi 0, %s62
    %s66 = sphi 0, %s65
    %s82 = sphi 0, %s66
    %s88 = sphi 0, %s90
    %s91 = sphi 0, %s88
    %s92 = sphi 0, %s91
    %s108 = sphi 0, %s92
    %s114 = sphi 0, %s116
    %s117 = sphi 0, %s114
    %s118 = sphi 0, %s117
    %s134 = sphi 0, %s118
    %s142 = sphi 0, %s144
    %s145 = sphi 0, %s142
    %s146 = sphi 0, %s145
    %s162 = sphi 0, %s146
  $region4: #{generator_forward.28} parent=0 // loop_header_branch
    %13 = sbr.rel (%p11) target = $region8
  $region5: #{generator_forward.28} parent=0 // loop_body
    %s15 = ssub.s32 %s10, 1
    %s16 = ssub.s32 %s10, 2
    %s23 = sadd.s32 1, %s18
    %p24 = scmp.ge.s32.totalorder %s23, 1
    %s25 = scalar_select %p24, 0, %s23
    %s26 = sadd.s32 1, %s17
    %s27 = scalar_select %p24, %s26, %s17
    %p28 = scmp.ge.s32.totalorder %s27, 2
    %s29 = scalar_select %p28, 0, %s27
    %s30 = ssub.s32 %s17, %s29
    %s31 = ssub.s32 %s18, %s25
    %s32 = sor.u32 %s30, %s31
    %p33 = scmp.eq.s32.totalorder %s32, 0
    %s35 = sadd.s32 %s34, 1
    %s36 = scalar_select %p33, %s34, %s35
    %p39 = pneg %p33
    %p40 = scmp.eq.s32.totalorder %s10, 1
    %p41 = por %p39, %p40
    %p42 = scmp.ne.s32.totalorder %s34, %s37
    %p43 = scmp.eq.s32.totalorder %s10, 0
    %p44 = por %p42, %p43
    %p45 = scmp.ne.s32.totalorder %s34, %s37
    %p46 = scmp.eq.s32.totalorder %s15, 1
    %p47 = por %p45, %p46
    %p48 = scmp.ne.s32.totalorder %s37, %s38
    %p49 = scmp.eq.s32.totalorder %s15, 0
    %p50 = por %p48, %p49
    %p51 = scmp.ne.s32.totalorder %s37, %s38
    %p52 = scmp.eq.s32.totalorder %s16, 1
    %p53 = por %p51, %p52
    %p55 = scmp.ne.s32.totalorder %s38, %s54
    %p56 = scmp.eq.s32.totalorder %s16, 0
    %p57 = por %p55, %p56
    %s58 = ssub.s32 %s17, %s29
    %s59 = ssub.s32 %s18, %s25
    %s60 = sor.u32 %s58, %s59
    %p61 = scmp.eq.s32.totalorder %s60, 0
    %s63 = sadd.s32 %s62, 1
    %s64 = scalar_select %p61, %s62, %s63
    %p67 = pneg %p61
    %p68 = scmp.eq.s32.totalorder %s10, 1
    %p69 = por %p67, %p68
    %p70 = scmp.ne.s32.totalorder %s62, %s65
    %p71 = scmp.eq.s32.totalorder %s10, 0
    %p72 = por %p70, %p71
    %p73 = scmp.ne.s32.totalorder %s62, %s65
    %p74 = scmp.eq.s32.totalorder %s15, 1
    %p75 = por %p73, %p74
    %p76 = scmp.ne.s32.totalorder %s65, %s66
    %p77 = scmp.eq.s32.totalorder %s15, 0
    %p78 = por %p76, %p77
    %p79 = scmp.ne.s32.totalorder %s65, %s66
    %p80 = scmp.eq.s32.totalorder %s16, 1
    %p81 = por %p79, %p80
    %p83 = scmp.ne.s32.totalorder %s66, %s82
    %p84 = scmp.eq.s32.totalorder %s16, 0
    %p85 = por %p83, %p84
    %s86 = ssub.s32 %s18, %s25
    %p87 = scmp.eq.s32.totalorder %s86, 0
    %s89 = sadd.s32 %s88, 1
    %s90 = scalar_select %p87, %s88, %s89
    %p93 = pneg %p87
    %p94 = scmp.eq.s32.totalorder %s10, 1
    %p95 = por %p93, %p94
    %p96 = scmp.ne.s32.totalorder %s88, %s91
    %p97 = scmp.eq.s32.totalorder %s10, 0
    %p98 = por %p96, %p97
    %p99 = scmp.ne.s32.totalorder %s88, %s91
    %p100 = scmp.eq.s32.totalorder %s15, 1
    %p101 = por %p99, %p100
    %p102 = scmp.ne.s32.totalorder %s91, %s92
    %p103 = scmp.eq.s32.totalorder %s15, 0
    %p104 = por %p102, %p103
    %p105 = scmp.ne.s32.totalorder %s91, %s92
    %p106 = scmp.eq.s32.totalorder %s16, 1
    %p107 = por %p105, %p106
    %p109 = scmp.ne.s32.totalorder %s92, %s108
    %p110 = scmp.eq.s32.totalorder %s16, 0
    %p111 = por %p109, %p110
    %s112 = ssub.s32 %s18, %s25
    %p113 = scmp.eq.s32.totalorder %s112, 0
    %s115 = sadd.s32 %s114, 1
    %s116 = scalar_select %p113, %s114, %s115
    %p119 = pneg %p113
    %p120 = scmp.eq.s32.totalorder %s10, 1
    %p121 = por %p119, %p120
    %p122 = scmp.ne.s32.totalorder %s114, %s117
    %p123 = scmp.eq.s32.totalorder %s10, 0
    %p124 = por %p122, %p123
    %p125 = scmp.ne.s32.totalorder %s114, %s117
    %p126 = scmp.eq.s32.totalorder %s15, 1
    %p127 = por %p125, %p126
    %p128 = scmp.ne.s32.totalorder %s117, %s118
    %p129 = scmp.eq.s32.totalorder %s15, 0
    %p130 = por %p128, %p129
    %p131 = scmp.ne.s32.totalorder %s117, %s118
    %p132 = scmp.eq.s32.totalorder %s16, 1
    %p133 = por %p131, %p132
    %p135 = scmp.ne.s32.totalorder %s118, %s134
    %p136 = scmp.eq.s32.totalorder %s16, 0
    %p137 = por %p135, %p136
    %s138 = ssub.s32 %s17, %s29
    %s139 = ssub.s32 %s18, %s25
    %s140 = sor.u32 %s138, %s139
    %p141 = scmp.eq.s32.totalorder %s140, 0
    %s143 = sadd.s32 %s142, 1
    %s144 = scalar_select %p141, %s142, %s143
    %p147 = pneg %p141
    %p148 = scmp.eq.s32.totalorder %s10, 1
    %p149 = por %p147, %p148
    %p150 = scmp.ne.s32.totalorder %s142, %s145
    %p151 = scmp.eq.s32.totalorder %s10, 0
    %p152 = por %p150, %p151
    %p153 = scmp.ne.s32.totalorder %s142, %s145
    %p154 = scmp.eq.s32.totalorder %s15, 1
    %p155 = por %p153, %p154
    %p156 = scmp.ne.s32.totalorder %s145, %s146
    %p157 = scmp.eq.s32.totalorder %s15, 0
    %p158 = por %p156, %p157
    %p159 = scmp.ne.s32.totalorder %s145, %s146
    %p160 = scmp.eq.s32.totalorder %s16, 1
    %p161 = por %p159, %p160
    %p163 = scmp.ne.s32.totalorder %s146, %s162
    %p164 = scmp.eq.s32.totalorder %s16, 0
    %p165 = por %p163, %p164
    %p166 = scmp.le.s32.totalorder 1, %s10
    %p167 = scmp.lt.s32.totalorder %s10, 3
    %p168 = pnand %p166, %p167
    %p169 = pneg %p168
    // Predicated region
    $region9: #{generator_forward.28} parent=5 // pred_check
      _
    $region10: #{generator_forward.28} parent=5 // pred_check_branch
      %171 = sbr.rel (%p168) target = $region12
    $region11: #{generator_forward.28} parent=5 // pred_region
      %s172 = ssub.s32 %s10, 1
      // Predicated region
      $region13: #{generator_forward.28} parent=11 // pred_check
        %p173 = pneg %p104
      $region14: #{generator_forward.28} parent=11 // pred_check_branch
        %175 = sbr.rel (%p173) target = $region16
      $region15: #{generator_forward.28} parent=11 // pred_region
        %p176 = scmp.lt.s32.totalorder %s20, 0
        %s177 = scalar_select %p176, %s20, 0
        %s178 = scalar_lea.vmem %s2, %s177
      $region16: #{generator_forward.28} parent=11 // pred_fallthru
        _
      // Predicated region
      $region17: #{generator_forward.28} parent=11 // pred_check
        %p179 = pneg %p130
      $region18: #{generator_forward.28} parent=11 // pred_check_branch
        %181 = sbr.rel (%p179) target = $region20
      $region19: #{generator_forward.28} parent=11 // pred_region
        %p182 = scmp.lt.s32.totalorder %s20, 0
        %s183 = scalar_select %p182, %s20, 0
        %s184 = scalar_lea.vmem %s3, %s183
      $region20: #{generator_forward.28} parent=11 // pred_fallthru
        _
    $region12: #{generator_forward.28} parent=5 // pred_fallthru
      _
    %p185 = scmp.lt.s32.totalorder %s10, 2
    // Predicated region
    $region21: #{generator_forward.28} parent=5 // pred_check
      %p186 = pneg %p185
    $region22: #{generator_forward.28} parent=5 // pred_check_branch
      %188 = sbr.rel (%p186) target = $region24
    $region23: #{generator_forward.28} parent=5 // pred_region
      // Predicated region
      $region25: #{generator_forward.28} parent=23 // pred_check
        %p189 = pneg %p44
      $region26: #{generator_forward.28} parent=23 // pred_check_branch
        %191 = sbr.rel (%p189) target = $region28
      $region27: #{generator_forward.28} parent=23 // pred_region
        %p192 = scmp.lt.s32.totalorder %s17, 1
        %s193 = scalar_select %p192, %s17, 1
        %p194 = scmp.lt.s32.totalorder %s18, 0
        %s195 = scalar_select %p194, %s18, 0
        %s196 = smul.addr %s193, 2
        %s197 = sadd.s32 %s195, %s196
        %s198 = smul.addr %s197, 8
        %s199 = scalar_lea.vmem %s0, %s198
      $region28: #{generator_forward.28} parent=23 // pred_fallthru
        _
      // Predicated region
      $region29: #{generator_forward.28} parent=23 // pred_check
        %p200 = pneg %p72
      $region30: #{generator_forward.28} parent=23 // pred_check_branch
        %202 = sbr.rel (%p200) target = $region32
      $region31: #{generator_forward.28} parent=23 // pred_region
        %p203 = scmp.lt.s32.totalorder %s17, 1
        %s204 = scalar_select %p203, %s17, 1
        %p205 = scmp.lt.s32.totalorder %s18, 0
        %s206 = scalar_select %p205, %s18, 0
        %s207 = smul.addr %s204, 2
        %s208 = sadd.s32 %s206, %s207
        %s209 = smul.addr %s208, 8
        %s210 = scalar_lea.vmem %s1, %s209
      $region32: #{generator_forward.28} parent=23 // pred_fallthru
        _
    $region24: #{generator_forward.28} parent=5 // pred_fallthru
      _
    %p211 = scmp.le.s32.totalorder 1, %s10
    %p212 = scmp.lt.s32.totalorder %s10, 3
    %p213 = pnand %p211, %p212
    %p214 = pneg %p213
    // Predicated region
    $region33: #{generator_forward.28} parent=5 // pred_check
      _
    $region34: #{generator_forward.28} parent=5 // pred_check_branch
      %216 = sbr.rel (%p213) target = $region36
    $region35: #{generator_forward.28} parent=5 // pred_region
      %s217 = ssub.s32 %s10, 1
      %p218 = scmp.lt.s32.totalorder %s19, 1
      %s219 = scalar_select %p218, %s19, 1
      %p220 = scmp.lt.s32.totalorder %s20, 0
      %s221 = scalar_select %p220, %s20, 0
      %s222 = smul.addr %s219, 2
      %s223 = sadd.s32 %s221, %s222
      %s224 = smul.addr %s223, 8
      %s225 = scalar_lea.vmem %s0, %s224
      %p226 = pneg %p50
      %p227 = pneg %p47
      %p228 = scmp.lt.s32.totalorder %s19, 1
      %s229 = scalar_select %p228, %s19, 1
      %p230 = scmp.lt.s32.totalorder %s20, 0
      %s231 = scalar_select %p230, %s20, 0
      %s232 = smul.addr %s229, 2
      %s233 = sadd.s32 %s231, %s232
      %s234 = smul.addr %s233, 8
      %s235 = scalar_lea.vmem %s1, %s234
      %p236 = pneg %p78
      %p237 = pneg %p75
      %p238 = scmp.lt.s32.totalorder %s20, 0
      %s239 = scalar_select %p238, %s20, 0
      %s240 = scalar_lea.vmem %s2, %s239
      %p241 = pneg %p104
      %p242 = pneg %p101
      %p243 = scmp.lt.s32.totalorder %s20, 0
      %s244 = scalar_select %p243, %s20, 0
      %s245 = scalar_lea.vmem %s3, %s244
      %p246 = pneg %p130
      %p247 = pneg %p127
      %p248 = pneg %p158
      %p249 = pneg %p155
      %p250 = scmp.lt.s32.totalorder %s19, 1
      %s251 = scalar_select %p250, %s19, 1
      %p252 = scmp.lt.s32.totalorder %s20, 0
      %s253 = scalar_select %p252, %s20, 0
      %s254 = smul.addr %s251, 2
      %s255 = sadd.s32 %s253, %s254
      %s256 = smul.addr %s255, 8
      %s257 = scalar_lea.vmem %s4, %s256
      %p258 = scmp.lt.s32.totalorder %s19, 1
      %s259 = scalar_select %p258, %s19, 1
      %p260 = scmp.lt.s32.totalorder %s20, 0
      %s261 = scalar_select %p260, %s20, 0
      %s262 = smul.addr %s259, 2
      %s263 = sadd.s32 %s261, %s262
      %s264 = smul.addr %s263, 8
      %s265 = scalar_lea.vmem %s0, %s264
      %p266 = scmp.lt.s32.totalorder %s19, 1
      %s267 = scalar_select %p266, %s19, 1
      %p268 = scmp.lt.s32.totalorder %s20, 0
      %s269 = scalar_select %p268, %s20, 0
      %s270 = smul.addr %s267, 2
      %s271 = sadd.s32 %s269, %s270
      %s272 = smul.addr %s271, 8
      %s273 = scalar_lea.vmem %s1, %s272
      %p274 = scmp.lt.s32.totalorder %s20, 0
      %s275 = scalar_select %p274, %s20, 0
      %s276 = scalar_lea.vmem %s2, %s275
      %p277 = scmp.lt.s32.totalorder %s20, 0
      %s278 = scalar_select %p277, %s20, 0
      %s279 = scalar_lea.vmem %s3, %s278
      %p280 = scmp.lt.s32.totalorder %s19, 1
      %s281 = scalar_select %p280, %s19, 1
      %p282 = scmp.lt.s32.totalorder %s20, 0
      %s283 = scalar_select %p282, %s20, 0
      %s284 = smul.addr %s281, 2
      %s285 = sadd.s32 %s283, %s284
      %s286 = smul.addr %s285, 8
      %s287 = scalar_lea.vmem %s4, %s286
      %v288 = vld [vmem:[%s265] sm:$0xff]
      %v289 = vld [vmem:[%s265 + $0x8] sm:$0xff]
      %vm290 = vcmask 523264
      %v291 = vsel %vm290, %v288, 0.0
      %v292 = vsel %vm290, %v289, 0.0
      %v293 = vadd.f32 %v291, %v292
      %v294 = vrot.slane %v293, 4
      %v295 = vadd.f32 %v293, %v294
      %v296 = vrot.slane %v295, 2
      %v297 = vadd.f32 %v295, %v296
      %v298 = vrot.slane %v297, 1
      %v299 = vadd.f32 %v297, %v298
      %v300 = vmul.f32 %v299, 0.0625
      %v301 = vmul.f32 %v288, %v288
      %v302 = vmul.f32 %v289, %v289
      %v303 = vsel %vm290, %v301, 0.0
      %v304 = vsel %vm290, %v302, 0.0
      %v305 = vadd.f32 %v303, %v304
      %v306 = vrot.slane %v305, 4
      %v307 = vadd.f32 %v305, %v306
      %v308 = vrot.slane %v307, 2
      %v309 = vadd.f32 %v307, %v308
      %v310 = vrot.slane %v309, 1
      %v311 = vadd.f32 %v309, %v310
      %v312 = vmul.f32 %v311, 0.0625
      %v313 = vmul.f32 %v300, %v300
      %v314 = vsub.f32 %v312, %v313
      %v315 = vadd.f32 %v314, 1e-05
      %v316 = vrsqrt.pop %v315
      %v317 = vmul.f32 %v316, %v315
      %v318 = vmul.f32 %v317, %v316
      %v319 = vmul.f32 0.5, %v318
      %v320 = vsub.f32 1.5, %v319
      %v321 = vmul.f32 %v316, %v320
      %vm322 = vweird.f32 %v315
      %vm323 = vweird.f32 %v316
      %vm324 = vmor %vm322, %vm323
      %v325 = vsel %vm324, %v316, %v321
      %v326 = vld [vmem:[%s276] sm:$0x1]
      %v327 = vld [vmem:[%s279] sm:$0x1]
      %v328 = vld [vmem:[%s273] sm:$0xff]
      %v329 = vld [vmem:[%s273 + $0x8] sm:$0xff]
      %v330 = vsub.f32 %v288, %v300
      %v331 = vsub.f32 %v289, %v300
      %v332 = vmul.f32 %v330, %v325
      %v333 = vmul.f32 %v331, %v325
      %v335 = vperm.slane %v326, 0
      %v337 = vmul.f32 %v332, %v335
      %v338 = vmul.f32 %v333, %v335
      %v339 = vadd.f32 %v328, %v337
      %v340 = vadd.f32 %v329, %v338
      %v342 = vperm.slane %v327, 0
      %v344 = vadd.f32 %v339, %v342
      %v345 = vadd.f32 %v340, %v342
      %346 = vst.msk [vmem:[%s287] sm:$0xff] %vm290, %v344
      %347 = vst.msk [vmem:[%s287 + $0x8] sm:$0xff] %vm290, %v345
      %p348 = scmp.lt.s32.totalorder %s19, 1
      %s349 = scalar_select %p348, %s19, 1
      %p350 = scmp.lt.s32.totalorder %s20, 0
      %s351 = scalar_select %p350, %s20, 0
      %s352 = smul.addr %s349, 2
      %s353 = sadd.s32 %s351, %s352
      %s354 = smul.addr %s353, 8
      %s355 = scalar_lea.vmem %s4, %s354
      // Predicated region
      $region37: #{generator_forward.28} parent=35 // pred_check
        %p356 = pneg %p155
      $region38: #{generator_forward.28} parent=35 // pred_check_branch
        %358 = sbr.rel (%p356) target = $region40
      $region39: #{generator_forward.28} parent=35 // pred_region
        _
      $region40: #{generator_forward.28} parent=35 // pred_fallthru
        _
    $region36: #{generator_forward.28} parent=5 // pred_fallthru
      _
    %p359 = scmp.le.s32.totalorder 2, %s10
    // Predicated region
    $region41: #{generator_forward.28} parent=5 // pred_check
      %p360 = pneg %p359
    $region42: #{generator_forward.28} parent=5 // pred_check_branch
      %362 = sbr.rel (%p360) target = $region44
    $region43: #{generator_forward.28} parent=5 // pred_region
      %s363 = ssub.s32 %s10, 2
      // Predicated region
      $region45: #{generator_forward.28} parent=43 // pred_check
        %p364 = pneg %p161
      $region46: #{generator_forward.28} parent=43 // pred_check_branch
        %366 = sbr.rel (%p364) target = $region48
      $region47: #{generator_forward.28} parent=43 // pred_region
        %p367 = scmp.lt.s32.totalorder %s21, 1
        %s368 = scalar_select %p367, %s21, 1
        %p369 = scmp.lt.s32.totalorder %s22, 0
        %s370 = scalar_select %p369, %s22, 0
        %s371 = smul.addr %s368, 2
        %s372 = sadd.s32 %s370, %s371
        %s373 = smul.addr %s372, 8
        %s374 = scalar_lea.vmem %s4, %s373
      $region48: #{generator_forward.28} parent=43 // pred_fallthru
        _
    $region44: #{generator_forward.28} parent=5 // pred_fallthru
      _
  $region6: #{generator_forward.28} parent=0 // loop_footer
    %s14 = sadd.s32 1, %s10
  $region7: #{generator_forward.28} parent=0 // loop_footer_branch
    %9 = sbr.rel target = $region3
  $region8: #{generator_forward.28} parent=0 // loop_exit
    _

// kernel: generator_forward.33
$region0: #{generator_forward.33}
  #allocation0 [shape = 'u32[]', space=smem, size = 0x4, offset = 0x4, fixed_abs, tag = 'smem constant byte address 0x4 - core index']
  #allocation1 [shape = 'u32[72,128]{1,0:T(1,128)}', space=vmem, size = 0x9000, scoped, tag = 'internal scratch']
  #allocation2 [shape = 'f32[64,128]{1,0:T(8,128)}', space=vmem, size = 0x8000, scoped, tag = 'scratch operand']
  %s0 = inlined_call_operand.vmem [shape: bf16[64,256], index: 0, kind: input, shape index: {}]
  %s1 = inlined_call_operand.vmem [shape: bf16[256,128], index: 1, kind: input, shape index: {}]
  %s2 = inlined_call_operand.vmem [shape: f32[64,128], index: 2, kind: output, shape index: {}]
  %s3 = sld [smem:[#allocation0]]
  $region26: #{generator_forward.33} parent=0
    _
  %s5 = ssub.s32 1, %s3
  %s6 = scalar_select 0, %s5, %s3
  // Predicated region
  $region2: #{generator_forward.33} parent=0 // pred_check
    _
  $region3: #{generator_forward.33} parent=0 // pred_check_branch
    %8 = sbr.rel (0) target = $region5
  $region4: #{generator_forward.33} parent=0 // pred_region
    _
  $region5: #{generator_forward.33} parent=0 // pred_fallthru
    _
  // Predicated region
  $region6: #{generator_forward.33} parent=0 // pred_check
    _
  $region7: #{generator_forward.33} parent=0 // pred_check_branch
    %10 = sbr.rel (0) target = $region9
  $region8: #{generator_forward.33} parent=0 // pred_region
    _
  $region9: #{generator_forward.33} parent=0 // pred_fallthru
    _
  %p11 = scmp.eq.s32.totalorder 0, 0
  // Predicated region
  $region10: #{generator_forward.33} parent=0 // pred_check
    %p12 = pneg %p11
  $region11: #{generator_forward.33} parent=0 // pred_check_branch
    %14 = sbr.rel (%p12) target = $region13
  $region12: #{generator_forward.33} parent=0 // pred_region
    %15 = vst [vmem:[#allocation2] sm:$0xff] 0.0
    %16 = vst [vmem:[#allocation2 + $0x8] sm:$0xff] 0.0
    %17 = vst [vmem:[#allocation2 + $0x10] sm:$0xff] 0.0
    %18 = vst [vmem:[#allocation2 + $0x18] sm:$0xff] 0.0
    %19 = vst [vmem:[#allocation2 + $0x20] sm:$0xff] 0.0
    %20 = vst [vmem:[#allocation2 + $0x28] sm:$0xff] 0.0
    %21 = vst [vmem:[#allocation2 + $0x30] sm:$0xff] 0.0
    %22 = vst [vmem:[#allocation2 + $0x38] sm:$0xff] 0.0
  $region13: #{generator_forward.33} parent=0 // pred_fallthru
    _
  %v23 = vld [vmem:[#allocation2] sm:$0xff]
  %v24 = vld [vmem:[#allocation2 + $0x8] sm:$0xff]
  %v25 = vld [vmem:[#allocation2 + $0x10] sm:$0xff]
  %v26 = vld [vmem:[#allocation2 + $0x18] sm:$0xff]
  %v27 = vld [vmem:[#allocation2 + $0x20] sm:$0xff]
  %v28 = vld [vmem:[#allocation2 + $0x28] sm:$0xff]
  %v29 = vld [vmem:[#allocation2 + $0x30] sm:$0xff]
  %v30 = vld [vmem:[#allocation2 + $0x38] sm:$0xff]
  %v31 = vld [vmem:[%s0] sm:$0xff]
  %v32 = vld [vmem:[%s0 + $0x8] sm:$0xff]
  %v33 = vld [vmem:[%s0 + $0x10] sm:$0xff]
  %v34 = vld [vmem:[%s0 + $0x18] sm:$0xff]
  %v35 = vld [vmem:[%s0 + $0x20] sm:$0xff]
  %v36 = vld [vmem:[%s0 + $0x28] sm:$0xff]
  %v37 = vld [vmem:[%s0 + $0x30] sm:$0xff]
  %v38 = vld [vmem:[%s0 + $0x38] sm:$0xff]
  %v39 = vld [vmem:[%s1] sm:$0xf]
  %v40 = vld [vmem:[%s1 + $0x4] sm:$0xf]
  %v41 = vld [vmem:[%s1 + $0x8] sm:$0xf]
  %v42 = vld [vmem:[%s1 + $0xc] sm:$0xf]
  %v43 = vld [vmem:[%s1 + $0x10] sm:$0xf]
  %v44 = vld [vmem:[%s1 + $0x14] sm:$0xf]
  %v45 = vld [vmem:[%s1 + $0x18] sm:$0xf]
  %v46 = vld [vmem:[%s1 + $0x1c] sm:$0xf]
  %v47 = vld [vmem:[%s1 + $0x20] sm:$0xf]
  %v48 = vld [vmem:[%s1 + $0x24] sm:$0xf]
  %v49 = vld [vmem:[%s1 + $0x28] sm:$0xf]
  %v50 = vld [vmem:[%s1 + $0x2c] sm:$0xf]
  %v51 = vld [vmem:[%s1 + $0x30] sm:$0xf]
  %v52 = vld [vmem:[%s1 + $0x34] sm:$0xf]
  %v53 = vld [vmem:[%s1 + $0x38] sm:$0xf]
  %v54 = vld [vmem:[%s1 + $0x3c] sm:$0xf]
  %v55 = vld [vmem:[%s1 + $0x40] sm:$0xf]
  %v56 = vld [vmem:[%s1 + $0x44] sm:$0xf]
  %v57 = vld [vmem:[%s1 + $0x48] sm:$0xf]
  %v58 = vld [vmem:[%s1 + $0x4c] sm:$0xf]
  %v59 = vld [vmem:[%s1 + $0x50] sm:$0xf]
  %v60 = vld [vmem:[%s1 + $0x54] sm:$0xf]
  %v61 = vld [vmem:[%s1 + $0x58] sm:$0xf]
  %v62 = vld [vmem:[%s1 + $0x5c] sm:$0xf]
  %v63 = vld [vmem:[%s1 + $0x60] sm:$0xf]
  %v64 = vld [vmem:[%s1 + $0x64] sm:$0xf]
  %v65 = vld [vmem:[%s1 + $0x68] sm:$0xf]
  %v66 = vld [vmem:[%s1 + $0x6c] sm:$0xf]
  %v67 = vld [vmem:[%s1 + $0x70] sm:$0xf]
  %v68 = vld [vmem:[%s1 + $0x74] sm:$0xf]
  %v69 = vld [vmem:[%s1 + $0x78] sm:$0xf]
  %v70 = vld [vmem:[%s1 + $0x7c] sm:$0xf]
  %v79 = vunpack.c.l.b16 %v31
  %v80 = vunpack.c.h.b16 %v31
  %v81 = vunpack.c.l.b16 %v32
  %v82 = vunpack.c.h.b16 %v32
  %v83 = vunpack.c.l.b16 %v33
  %v84 = vunpack.c.h.b16 %v33
  %v85 = vunpack.c.l.b16 %v34
  %v86 = vunpack.c.h.b16 %v34
  %v87 = vunpack.c.l.b16 %v35
  %v88 = vunpack.c.h.b16 %v35
  %v89 = vunpack.c.l.b16 %v36
  %v90 = vunpack.c.h.b16 %v36
  %v91 = vunpack.c.l.b16 %v37
  %v92 = vunpack.c.h.b16 %v37
  %v93 = vunpack.c.l.b16 %v38
  %v94 = vunpack.c.h.b16 %v38
  %v95 = vpack.c.b16 %v81, %v79
  %v96 = vpack.c.b16 %v82, %v80
  %v97 = vpack.c.b16 %v85, %v83
  %v98 = vpack.c.b16 %v86, %v84
  %v99 = vpack.c.b16 %v89, %v87
  %v100 = vpack.c.b16 %v90, %v88
  %v101 = vpack.c.b16 %v93, %v91
  %v102 = vpack.c.b16 %v94, %v92
  %v143 = vunpack.c.l.b16 %v39
  %v144 = vunpack.c.l.b16 %v40
  %v145 = vunpack.c.l.b16 %v41
  %v146 = vunpack.c.l.b16 %v42
  %v147 = vunpack.c.l.b16 %v43
  %v148 = vunpack.c.l.b16 %v44
  %v149 = vunpack.c.l.b16 %v45
  %v150 = vunpack.c.l.b16 %v46
  %v151 = vunpack.c.l.b16 %v47
  %v152 = vunpack.c.l.b16 %v48
  %v153 = vunpack.c.l.b16 %v49
  %v154 = vunpack.c.l.b16 %v50
  %v155 = vunpack.c.l.b16 %v51
  %v156 = vunpack.c.l.b16 %v52
  %v157 = vunpack.c.l.b16 %v53
  %v158 = vunpack.c.l.b16 %v54
  %v159 = vunpack.c.l.b16 %v55
  %v160 = vunpack.c.l.b16 %v56
  %v161 = vunpack.c.l.b16 %v57
  %v162 = vunpack.c.l.b16 %v58
  %v163 = vunpack.c.l.b16 %v59
  %v164 = vunpack.c.l.b16 %v60
  %v165 = vunpack.c.l.b16 %v61
  %v166 = vunpack.c.l.b16 %v62
  %v167 = vunpack.c.l.b16 %v63
  %v168 = vunpack.c.l.b16 %v64
  %v169 = vunpack.c.l.b16 %v65
  %v170 = vunpack.c.l.b16 %v66
  %v171 = vunpack.c.l.b16 %v67
  %v172 = vunpack.c.l.b16 %v68
  %v173 = vunpack.c.l.b16 %v69
  %v174 = vunpack.c.l.b16 %v70
  %v175 = vpack.c.b16 %v144, %v143
  %v176 = vpack.c.b16 %v146, %v145
  %v177 = vpack.c.b16 %v148, %v147
  %v178 = vpack.c.b16 %v150, %v149
  %v179 = vpack.c.b16 %v152, %v151
  %v180 = vpack.c.b16 %v154, %v153
  %v181 = vpack.c.b16 %v156, %v155
  %v182 = vpack.c.b16 %v158, %v157
  %v183 = vpack.c.b16 %v160, %v159
  %v184 = vpack.c.b16 %v162, %v161
  %v185 = vpack.c.b16 %v164, %v163
  %v186 = vpack.c.b16 %v166, %v165
  %v187 = vpack.c.b16 %v168, %v167
  %v188 = vpack.c.b16 %v170, %v169
  %v189 = vpack.c.b16 %v172, %v171
  %v190 = vpack.c.b16 %v174, %v173
  %207 = vmatpush.bf16.msra.mxu0 %v182
  %208 = vmatpush.bf16.msra.mxu0 %v181
  %209 = vmatpush.bf16.msra.mxu0 %v180
  %210 = vmatpush.bf16.msra.mxu0 %v179
  %211 = vmatpush.bf16.msra.mxu0 %v178
  %212 = vmatpush.bf16.msra.mxu0 %v177
  %213 = vmatpush.bf16.msra.mxu0 %v176
  %214 = vmatpush.bf16.msra.mxu0 %v175
  %215 = vmatmul.bf16.gmra.mxu0 %v95
  %v216 = vpop.f32.mrf.mxu0
  %v217 = vadd.f32 0.0, %v216
  %v218 = vpop.f32.mrf.mxu0
  %v219 = vadd.f32 0.0, %v218
  %220 = vmatmul.bf16.gmra.mxu0 %v97
  %v221 = vpop.f32.mrf.mxu0
  %v222 = vadd.f32 0.0, %v221
  %v223 = vpop.f32.mrf.mxu0
  %v224 = vadd.f32 0.0, %v223
  %225 = vmatmul.bf16.gmra.mxu0 %v99
  %v226 = vpop.f32.mrf.mxu0
  %v227 = vadd.f32 0.0, %v226
  %v228 = vpop.f32.mrf.mxu0
  %v229 = vadd.f32 0.0, %v228
  %230 = vmatmul.bf16.gmra.mxu0 %v101
  %v231 = vpop.f32.mrf.mxu0
  %v232 = vadd.f32 0.0, %v231
  %v233 = vpop.f32.mrf.mxu0
  %v234 = vadd.f32 0.0, %v233
  %235 = vdwg.mxu0
  %236 = vmatpush.bf16.msra.mxu0 %v190
  %237 = vmatpush.bf16.msra.mxu0 %v189
  %238 = vmatpush.bf16.msra.mxu0 %v188
  %239 = vmatpush.bf16.msra.mxu0 %v187
  %240 = vmatpush.bf16.msra.mxu0 %v186
  %241 = vmatpush.bf16.msra.mxu0 %v185
  %242 = vmatpush.bf16.msra.mxu0 %v184
  %243 = vmatpush.bf16.msra.mxu0 %v183
  %244 = vmatmul.bf16.gmra.mxu0 %v96
  %v245 = vpop.f32.mrf.mxu0
  %v246 = vadd.f32 %v217, %v245
  %v247 = vpop.f32.mrf.mxu0
  %v248 = vadd.f32 %v219, %v247
  %249 = vmatmul.bf16.gmra.mxu0 %v98
  %v250 = vpop.f32.mrf.mxu0
  %v251 = vadd.f32 %v222, %v250
  %v252 = vpop.f32.mrf.mxu0
  %v253 = vadd.f32 %v224, %v252
  %254 = vmatmul.bf16.gmra.mxu0 %v100
  %v255 = vpop.f32.mrf.mxu0
  %v256 = vadd.f32 %v227, %v255
  %v257 = vpop.f32.mrf.mxu0
  %v258 = vadd.f32 %v229, %v257
  %259 = vmatmul.bf16.gmra.mxu0 %v102
  %v260 = vpop.f32.mrf.mxu0
  %v261 = vadd.f32 %v232, %v260
  %v262 = vpop.f32.mrf.mxu0
  %v263 = vadd.f32 %v234, %v262
  %264 = vdwg.mxu0
  %v265 = vadd.f32 %v23, %v246
  %v266 = vadd.f32 %v24, %v248
  %v267 = vadd.f32 %v25, %v251
  %v268 = vadd.f32 %v26, %v253
  %v269 = vadd.f32 %v27, %v256
  %v270 = vadd.f32 %v28, %v258
  %v271 = vadd.f32 %v29, %v261
  %v272 = vadd.f32 %v30, %v263
  %273 = vst [vmem:[#allocation2] sm:$0xff] %v265
  %274 = vst [vmem:[#allocation2 + $0x8] sm:$0xff] %v266
  %275 = vst [vmem:[#allocation2 + $0x10] sm:$0xff] %v267
  %276 = vst [vmem:[#allocation2 + $0x18] sm:$0xff] %v268
  %277 = vst [vmem:[#allocation2 + $0x20] sm:$0xff] %v269
  %278 = vst [vmem:[#allocation2 + $0x28] sm:$0xff] %v270
  %279 = vst [vmem:[#allocation2 + $0x30] sm:$0xff] %v271
  %280 = vst [vmem:[#allocation2 + $0x38] sm:$0xff] %v272
  // Predicated region
  $region14: #{generator_forward.33} parent=0 // pred_check
    %p281 = pneg %p11
  $region15: #{generator_forward.33} parent=0 // pred_check_branch
    %283 = sbr.rel (%p281) target = $region17
  $region16: #{generator_forward.33} parent=0 // pred_region
    %v284 = vld [vmem:[#allocation2] sm:$0xff]
    %v285 = vld [vmem:[#allocation2 + $0x8] sm:$0xff]
    %v286 = vld [vmem:[#allocation2 + $0x10] sm:$0xff]
    %v287 = vld [vmem:[#allocation2 + $0x18] sm:$0xff]
    %v288 = vld [vmem:[#allocation2 + $0x20] sm:$0xff]
    %v289 = vld [vmem:[#allocation2 + $0x28] sm:$0xff]
    %v290 = vld [vmem:[#allocation2 + $0x30] sm:$0xff]
    %v291 = vld [vmem:[#allocation2 + $0x38] sm:$0xff]
    %292 = vst [vmem:[%s2] sm:$0xff] %v284
    %293 = vst [vmem:[%s2 + $0x8] sm:$0xff] %v285
    %294 = vst [vmem:[%s2 + $0x10] sm:$0xff] %v286
    %295 = vst [vmem:[%s2 + $0x18] sm:$0xff] %v287
    %296 = vst [vmem:[%s2 + $0x20] sm:$0xff] %v288
    %297 = vst [vmem:[%s2 + $0x28] sm:$0xff] %v289
    %298 = vst [vmem:[%s2 + $0x30] sm:$0xff] %v290
    %299 = vst [vmem:[%s2 + $0x38] sm:$0xff] %v291
  $region17: #{generator_forward.33} parent=0 // pred_fallthru
    _
  // Predicated region
  $region18: #{generator_forward.33} parent=0 // pred_check
    _
  $region19: #{generator_forward.33} parent=0 // pred_check_branch
    %301 = sbr.rel (0) target = $region21
  $region20: #{generator_forward.33} parent=0 // pred_region
    _
  $region21: #{generator_forward.33} parent=0 // pred_fallthru
    _
  // Predicated region
  $region22: #{generator_forward.33} parent=0 // pred_check
    _
  $region23: #{generator_forward.33} parent=0 // pred_check_branch
    %303 = sbr.rel (0) target = $region25
  $region24: #{generator_forward.33} parent=0 // pred_region
    _
  $region25: #{generator_forward.33} parent=0 // pred_fallthru
    _

// kernel: generator_forward.35
$region0: #{generator_forward.35}
  #allocation0 [shape = 'u32[]', space=smem, size = 0x4, offset = 0x4, fixed_abs, tag = 'smem constant byte address 0x4 - core index']
  #allocation1 [shape = 'u32[72,128]{1,0:T(1,128)}', space=vmem, size = 0x9000, scoped, tag = 'internal scratch']
  #allocation2 [shape = 'f32[16,128]{1,0:T(8,128)}', space=vmem, size = 0x2000, scoped, tag = 'scratch operand']
  %s0 = inlined_call_operand.vmem [shape: bf16[176,128], index: 0, kind: input, shape index: {}]
  %s1 = inlined_call_operand.vmem [shape: bf16[128,128], index: 1, kind: input, shape index: {}]
  %s2 = inlined_call_operand.vmem [shape: f32[176,128], index: 2, kind: output, shape index: {}]
  %s3 = sld [smem:[#allocation0]]
  $region49: #{generator_forward.35} parent=0
    _
  %s5 = ssub.s32 1, %s3
  %s6 = scalar_select 0, %s5, %s3
  loop: start=0, step=1, limit=13
  $region2: #{generator_forward.35} parent=0 // loop_pre_header
    _
  $region3: #{generator_forward.35} parent=0 // loop_header
    %s8 = sphi 0, %s12
    %p9 = scmp.ge.s32.totalorder %s8, 13
    %s15 = sphi 0, %s34
    %s16 = sphi 0, %s30
    %s17 = sphi 0, %s26
    %s18 = sphi 0, %s15
    %s19 = sphi 0, %s16
    %s20 = sphi 0, %s17
    %s21 = sphi 0, %s18
    %s22 = sphi 0, %s19
    %s23 = sphi 0, %s20
    %s39 = sphi 0, %s41
    %s42 = sphi 0, %s39
    %s43 = sphi 0, %s42
    %s59 = sphi 0, %s43
    %s67 = sphi 0, %s69
    %s70 = sphi 0, %s67
    %s71 = sphi 0, %s70
    %s87 = sphi 0, %s71
    %s95 = sphi 0, %s97
    %s98 = sphi 0, %s95
    %s99 = sphi 0, %s98
    %s115 = sphi 0, %s99
  $region4: #{generator_forward.35} parent=0 // loop_header_branch
    %11 = sbr.rel (%p9) target = $region8
  $region5: #{generator_forward.35} parent=0 // loop_body
    %s13 = ssub.s32 %s8, 1
    %s14 = ssub.s32 %s8, 2
    %s24 = sadd.s32 1, %s17
    %p25 = scmp.ge.s32.totalorder %s24, 1
    %s26 = scalar_select %p25, 0, %s24
    %s27 = sadd.s32 1, %s16
    %s28 = scalar_select %p25, %s27, %s16
    %p29 = scmp.ge.s32.totalorder %s28, 1
    %s30 = scalar_select %p29, 0, %s28
    %s31 = sadd.s32 1, %s15
    %s32 = scalar_select %p29, %s31, %s15
    %p33 = scmp.ge.s32.totalorder %s32, 11
    %s34 = scalar_select %p33, 0, %s32
    %s35 = ssub.s32 %s15, %s34
    %s36 = ssub.s32 %s17, %s26
    %s37 = sor.u32 %s35, %s36
    %p38 = scmp.eq.s32.totalorder %s37, 0
    %s40 = sadd.s32 %s39, 1
    %s41 = scalar_select %p38, %s39, %s40
    %p44 = pneg %p38
    %p45 = scmp.eq.s32.totalorder %s8, 10
    %p46 = por %p44, %p45
    %p47 = scmp.ne.s32.totalorder %s39, %s42
    %p48 = scmp.eq.s32.totalorder %s8, 0
    %p49 = por %p47, %p48
    %p50 = scmp.ne.s32.totalorder %s39, %s42
    %p51 = scmp.eq.s32.totalorder %s13, 10
    %p52 = por %p50, %p51
    %p53 = scmp.ne.s32.totalorder %s42, %s43
    %p54 = scmp.eq.s32.totalorder %s13, 0
    %p55 = por %p53, %p54
    %p56 = scmp.ne.s32.totalorder %s42, %s43
    %p57 = scmp.eq.s32.totalorder %s14, 10
    %p58 = por %p56, %p57
    %p60 = scmp.ne.s32.totalorder %s43, %s59
    %p61 = scmp.eq.s32.totalorder %s14, 0
    %p62 = por %p60, %p61
    %s63 = ssub.s32 %s17, %s26
    %s64 = ssub.s32 %s16, %s30
    %s65 = sor.u32 %s63, %s64
    %p66 = scmp.eq.s32.totalorder %s65, 0
    %s68 = sadd.s32 %s67, 1
    %s69 = scalar_select %p66, %s67, %s68
    %p72 = pneg %p66
    %p73 = scmp.eq.s32.totalorder %s8, 10
    %p74 = por %p72, %p73
    %p75 = scmp.ne.s32.totalorder %s67, %s70
    %p76 = scmp.eq.s32.totalorder %s8, 0
    %p77 = por %p75, %p76
    %p78 = scmp.ne.s32.totalorder %s67, %s70
    %p79 = scmp.eq.s32.totalorder %s13, 10
    %p80 = por %p78, %p79
    %p81 = scmp.ne.s32.totalorder %s70, %s71
    %p82 = scmp.eq.s32.totalorder %s13, 0
    %p83 = por %p81, %p82
    %p84 = scmp.ne.s32.totalorder %s70, %s71
    %p85 = scmp.eq.s32.totalorder %s14, 10
    %p86 = por %p84, %p85
    %p88 = scmp.ne.s32.totalorder %s71, %s87
    %p89 = scmp.eq.s32.totalorder %s14, 0
    %p90 = por %p88, %p89
    %s91 = ssub.s32 %s15, %s34
    %s92 = ssub.s32 %s16, %s30
    %s93 = sor.u32 %s91, %s92
    %p94 = scmp.eq.s32.totalorder %s93, 0
    %s96 = sadd.s32 %s95, 1
    %s97 = scalar_select %p94, %s95, %s96
    %p100 = pneg %p94
    %p101 = scmp.eq.s32.totalorder %s8, 10
    %p102 = por %p100, %p101
    %p103 = scmp.ne.s32.totalorder %s95, %s98
    %p104 = scmp.eq.s32.totalorder %s8, 0
    %p105 = por %p103, %p104
    %p106 = scmp.ne.s32.totalorder %s95, %s98
    %p107 = scmp.eq.s32.totalorder %s13, 10
    %p108 = por %p106, %p107
    %p109 = scmp.ne.s32.totalorder %s98, %s99
    %p110 = scmp.eq.s32.totalorder %s13, 0
    %p111 = por %p109, %p110
    %p112 = scmp.ne.s32.totalorder %s98, %s99
    %p113 = scmp.eq.s32.totalorder %s14, 10
    %p114 = por %p112, %p113
    %p116 = scmp.ne.s32.totalorder %s99, %s115
    %p117 = scmp.eq.s32.totalorder %s14, 0
    %p118 = por %p116, %p117
    %p119 = scmp.le.s32.totalorder 1, %s8
    %p120 = scmp.lt.s32.totalorder %s8, 12
    %p121 = pnand %p119, %p120
    %p122 = pneg %p121
    // Predicated region
    $region9: #{generator_forward.35} parent=5 // pred_check
      _
    $region10: #{generator_forward.35} parent=5 // pred_check_branch
      %124 = sbr.rel (%p121) target = $region12
    $region11: #{generator_forward.35} parent=5 // pred_region
      %s125 = ssub.s32 %s8, 1
      // Predicated region
      $region13: #{generator_forward.35} parent=11 // pred_check
        %p126 = pneg %p83
      $region14: #{generator_forward.35} parent=11 // pred_check_branch
        %128 = sbr.rel (%p126) target = $region16
      $region15: #{generator_forward.35} parent=11 // pred_region
        %s129 = smul.u32 16, %s20
        %p130 = scmp.lt.s32.totalorder %s129, 15
        %s131 = scalar_select %p130, %s129, 15
        %p132 = scmp.lt.s32.totalorder %s19, 0
        %s133 = scalar_select %p132, %s19, 0
        %s134 = sadd.s32 %s133, %s131
        %s135 = smul.addr %s134, 4
        %s136 = scalar_lea.vmem %s1, %s135
        %s137 = smul.u32 16, %s20
      $region16: #{generator_forward.35} parent=11 // pred_fallthru
        _
    $region12: #{generator_forward.35} parent=5 // pred_fallthru
      _
    %p138 = scmp.lt.s32.totalorder %s8, 11
    // Predicated region
    $region17: #{generator_forward.35} parent=5 // pred_check
      %p139 = pneg %p138
    $region18: #{generator_forward.35} parent=5 // pred_check_branch
      %141 = sbr.rel (%p139) target = $region20
    $region19: #{generator_forward.35} parent=5 // pred_region
      // Predicated region
      $region21: #{generator_forward.35} parent=19 // pred_check
        %p142 = pneg %p49
      $region22: #{generator_forward.35} parent=19 // pred_check_branch
        %144 = sbr.rel (%p142) target = $region24
      $region23: #{generator_forward.35} parent=19 // pred_region
        %s145 = smul.u32 2, %s15
        %p146 = scmp.lt.s32.totalorder %s145, 21
        %s147 = scalar_select %p146, %s145, 21
        %p148 = scmp.lt.s32.totalorder %s17, 0
        %s149 = scalar_select %p148, %s17, 0
        %s150 = sadd.s32 %s149, %s147
        %s151 = smul.addr %s150, 4
        %s152 = scalar_lea.vmem %s0, %s151
        %s153 = smul.u32 2, %s15
      $region24: #{generator_forward.35} parent=19 // pred_fallthru
        _
    $region20: #{generator_forward.35} parent=5 // pred_fallthru
      _
    %p154 = scmp.le.s32.totalorder 1, %s8
    %p155 = scmp.lt.s32.totalorder %s8, 12
    %p156 = pnand %p154, %p155
    %p157 = pneg %p156
    // Predicated region
    $region25: #{generator_forward.35} parent=5 // pred_check
      _
    $region26: #{generator_forward.35} parent=5 // pred_check_branch
      %159 = sbr.rel (%p156) target = $region28
    $region27: #{generator_forward.35} parent=5 // pred_region
      %s160 = ssub.s32 %s8, 1
      %s161 = smul.u32 2, %s18
      %p162 = scmp.lt.s32.totalorder %s161, 21
      %s163 = scalar_select %p162, %s161, 21
      %p164 = scmp.lt.s32.totalorder %s20, 0
      %s165 = scalar_select %p164, %s20, 0
      %s166 = sadd.s32 %s165, %s163
      %s167 = smul.addr %s166, 4
      %s168 = scalar_lea.vmem %s0, %s167
      %p169 = pneg %p55
      %p170 = pneg %p52
      %s171 = smul.u32 16, %s20
      %p172 = scmp.lt.s32.totalorder %s171, 15
      %s173 = scalar_select %p172, %s171, 15
      %p174 = scmp.lt.s32.totalorder %s19, 0
      %s175 = scalar_select %p174, %s19, 0
      %s176 = sadd.s32 %s175, %s173
      %s177 = smul.addr %s176, 4
      %s178 = scalar_lea.vmem %s1, %s177
      %p179 = pneg %p83
      %p180 = pneg %p80
      %p181 = pneg %p111
      %p182 = pneg %p108
      %s183 = smul.u32 2, %s18
      %p184 = scmp.lt.s32.totalorder %s183, 21
      %s185 = scalar_select %p184, %s183, 21
      %p186 = scmp.lt.s32.totalorder %s19, 0
      %s187 = scalar_select %p186, %s19, 0
      %s188 = sadd.s32 %s187, %s185
      %s189 = smul.addr %s188, 8
      %s190 = scalar_lea.vmem %s2, %s189
      %s191 = smul.u32 2, %s18
      %p192 = scmp.lt.s32.totalorder %s191, 21
      %s193 = scalar_select %p192, %s191, 21
      %p194 = scmp.lt.s32.totalorder %s20, 0
      %s195 = scalar_select %p194, %s20, 0
      %s196 = sadd.s32 %s195, %s193
      %s197 = smul.addr %s196, 4
      %s198 = scalar_lea.vmem %s0, %s197
      %s199 = smul.u32 2, %s18
      %s200 = smul.u32 16, %s20
      %p201 = scmp.lt.s32.totalorder %s200, 15
      %s202 = scalar_select %p201, %s200, 15
      %p203 = scmp.lt.s32.totalorder %s19, 0
      %s204 = scalar_select %p203, %s19, 0
      %s205 = sadd.s32 %s204, %s202
      %s206 = smul.addr %s205, 4
      %s207 = scalar_lea.vmem %s1, %s206
      %s208 = smul.u32 16, %s20
      %s209 = smul.u32 2, %s18
      %p210 = scmp.lt.s32.totalorder %s209, 21
      %s211 = scalar_select %p210, %s209, 21
      %p212 = scmp.lt.s32.totalorder %s19, 0
      %s213 = scalar_select %p212, %s19, 0
      %s214 = sadd.s32 %s213, %s211
      %s215 = smul.addr %s214, 8
      %s216 = scalar_lea.vmem %s2, %s215
      %s217 = smul.u32 2, %s18
      %p218 = scmp.eq.s32.totalorder %s20, 0
      // Predicated region
      $region29: #{generator_forward.35} parent=27 // pred_check
        %p219 = pneg %p218
      $region30: #{generator_forward.35} parent=27 // pred_check_branch
        %221 = sbr.rel (%p219) target = $region32
      $region31: #{generator_forward.35} parent=27 // pred_region
        %222 = vst [vmem:[#allocation2] sm:$0xff] 0.0
        %223 = vst [vmem:[#allocation2 + $0x8] sm:$0xff] 0.0
      $region32: #{generator_forward.35} parent=27 // pred_fallthru
        _
      %v224 = vld [vmem:[#allocation2] sm:$0xff]
      %v225 = vld [vmem:[#allocation2 + $0x8] sm:$0xff]
      %v226 = vld [vmem:[%s198] sm:$0xf]
      %v227 = vld [vmem:[%s198 + $0x4] sm:$0xf]
      %v228 = vld [vmem:[%s207] sm:$0xf]
      %v229 = vld [vmem:[%s207 + $0x4] sm:$0xf]
      %v230 = vld [vmem:[%s207 + $0x8] sm:$0xf]
      %v231 = vld [vmem:[%s207 + $0xc] sm:$0xf]
      %v232 = vld [vmem:[%s207 + $0x10] sm:$0xf]
      %v233 = vld [vmem:[%s207 + $0x14] sm:$0xf]
      %v234 = vld [vmem:[%s207 + $0x18] sm:$0xf]
      %v235 = vld [vmem:[%s207 + $0x1c] sm:$0xf]
      %v236 = vld [vmem:[%s207 + $0x20] sm:$0xf]
      %v237 = vld [vmem:[%s207 + $0x24] sm:$0xf]
      %v238 = vld [vmem:[%s207 + $0x28] sm:$0xf]
      %v239 = vld [vmem:[%s207 + $0x2c] sm:$0xf]
      %v240 = vld [vmem:[%s207 + $0x30] sm:$0xf]
      %v241 = vld [vmem:[%s207 + $0x34] sm:$0xf]
      %v242 = vld [vmem:[%s207 + $0x38] sm:$0xf]
      %v243 = vld [vmem:[%s207 + $0x3c] sm:$0xf]
      %v246 = vunpack.c.l.b16 %v226
      %v247 = vunpack.c.l.b16 %v227
      %v248 = vpack.c.b16 %v247, %v246
      %v266 = vunpack.c.l.b16 %v228
      %v267 = vunpack.c.l.b16 %v229
      %v268 = vunpack.c.l.b16 %v230
      %v269 = vunpack.c.l.b16 %v231
      %v270 = vunpack.c.l.b16 %v232
      %v271 = vunpack.c.l.b16 %v233
      %v272 = vunpack.c.l.b16 %v234
      %v273 = vunpack.c.l.b16 %v235
      %v274 = vunpack.c.l.b16 %v236
      %v275 = vunpack.c.l.b16 %v237
      %v276 = vunpack.c.l.b16 %v238
      %v277 = vunpack.c.l.b16 %v239
      %v278 = vunpack.c.l.b16 %v240
      %v279 = vunpack.c.l.b16 %v241
      %v280 = vunpack.c.l.b16 %v242
      %v281 = vunpack.c.l.b16 %v243
      %v282 = vpack.c.b16 %v267, %v266
      %v283 = vpack.c.b16 %v269, %v268
      %v284 = vpack.c.b16 %v271, %v270
      %v285 = vpack.c.b16 %v273, %v272
      %v286 = vpack.c.b16 %v275, %v274
      %v287 = vpack.c.b16 %v277, %v276
      %v288 = vpack.c.b16 %v279, %v278
      %v289 = vpack.c.b16 %v281, %v280
      %298 = vmatpush.bf16.msra.mxu0 %v289
      %299 = vmatpush.bf16.msra.mxu0 %v288
      %300 = vmatpush.bf16.msra.mxu0 %v287
      %301 = vmatpush.bf16.msra.mxu0 %v286
      %302 = vmatpush.bf16.msra.mxu0 %v285
      %303 = vmatpush.bf16.msra.mxu0 %v284
      %304 = vmatpush.bf16.msra.mxu0 %v283
      %305 = vmatpush.bf16.msra.mxu0 %v282
      %306 = vmatmul.bf16.gmra.mxu0 %v248
      %v307 = vpop.f32.mrf.mxu0
      %v308 = vadd.f32 0.0, %v307
      %v309 = vpop.f32.mrf.mxu0
      %v310 = vadd.f32 0.0, %v309
      %311 = vdwg.mxu0
      %v312 = vadd.f32 %v224, %v308
      %v313 = vadd.f32 %v225, %v310
      %314 = vst [vmem:[#allocation2] sm:$0xff] %v312
      %315 = vst [vmem:[#allocation2 + $0x8] sm:$0xff] %v313
      // Predicated region
      $region33: #{generator_forward.35} parent=27 // pred_check
        %p316 = pneg %p218
      $region34: #{generator_forward.35} parent=27 // pred_check_branch
        %318 = sbr.rel (%p316) target = $region36
      $region35: #{generator_forward.35} parent=27 // pred_region
        %v319 = vld [vmem:[#allocation2] sm:$0xff]
        %v320 = vld [vmem:[#allocation2 + $0x8] sm:$0xff]
        %321 = vst [vmem:[%s216] sm:$0xff] %v319
        %322 = vst [vmem:[%s216 + $0x8] sm:$0xff] %v320
      $region36: #{generator_forward.35} parent=27 // pred_fallthru
        _
      %s323 = smul.u32 2, %s18
      %p324 = scmp.lt.s32.totalorder %s323, 21
      %s325 = scalar_select %p324, %s323, 21
      %p326 = scmp.lt.s32.totalorder %s19, 0
      %s327 = scalar_select %p326, %s19, 0
      %s328 = sadd.s32 %s327, %s325
      %s329 = smul.addr %s328, 8
      %s330 = scalar_lea.vmem %s2, %s329
      // Predicated region
      $region37: #{generator_forward.35} parent=27 // pred_check
        %p331 = pneg %p108
      $region38: #{generator_forward.35} parent=27 // pred_check_branch
        %333 = sbr.rel (%p331) target = $region40
      $region39: #{generator_forward.35} parent=27 // pred_region
        %s334 = smul.u32 2, %s18
      $region40: #{generator_forward.35} parent=27 // pred_fallthru
        _
    $region28: #{generator_forward.35} parent=5 // pred_fallthru
      _
    %p335 = scmp.le.s32.totalorder 2, %s8
    // Predicated region
    $region41: #{generator_forward.35} parent=5 // pred_check
      %p336 = pneg %p335
    $region42: #{generator_forward.35} parent=5 // pred_check_branch
      %338 = sbr.rel (%p336) target = $region44
    $region43: #{generator_forward.35} parent=5 // pred_region
      %s339 = ssub.s32 %s8, 2
      // Predicated region
      $region45: #{generator_forward.35} parent=43 // pred_check
        %p340 = pneg %p114
      $region46: #{generator_forward.35} parent=43 // pred_check_branch
        %342 = sbr.rel (%p340) target = $region48
      $region47: #{generator_forward.35} parent=43 // pred_region
        %s343 = smul.u32 2, %s21
        %p344 = scmp.lt.s32.totalorder %s343, 21
        %s345 = scalar_select %p344, %s343, 21
        %p346 = scmp.lt.s32.totalorder %s22, 0
        %s347 = scalar_select %p346, %s22, 0
        %s348 = sadd.s32 %s347, %s345
        %s349 = smul.addr %s348, 8
        %s350 = scalar_lea.vmem %s2, %s349
      $region48: #{generator_forward.35} parent=43 // pred_fallthru
        _
    $region44: #{generator_forward.35} parent=5 // pred_fallthru
      _
  $region6: #{generator_forward.35} parent=0 // loop_footer
    %s12 = sadd.s32 1, %s8
  $region7: #{generator_forward.35} parent=0 // loop_footer_branch
    %7 = sbr.rel target = $region3
  $region8: #{generator_forward.35} parent=0 // loop_exit
    _

// kernel: generator_forward.37
$region0: #{generator_forward.37}
  #allocation0 [shape = 'u32[]', space=smem, size = 0x4, offset = 0x4, fixed_abs, tag = 'smem constant byte address 0x4 - core index']
  #allocation1 [shape = 'u32[72,128]{1,0:T(1,128)}', space=vmem, size = 0x9000, scoped, tag = 'internal scratch']
  #allocation2 [shape = 'f32[512,128]{1,0:T(8,128)}', space=vmem, size = 0x40000, scoped, tag = 'scratch operand']
  %s0 = inlined_call_operand.vmem [shape: bf16[512,896], index: 0, kind: input, shape index: {}]
  %s1 = inlined_call_operand.vmem [shape: bf16[896,128], index: 1, kind: input, shape index: {}]
  %s2 = inlined_call_operand.vmem [shape: f32[512,128], index: 2, kind: output, shape index: {}]
  %s3 = sld [smem:[#allocation0]]
  $region90: #{generator_forward.37} parent=0
    _
  %s5 = ssub.s32 1, %s3
  %s6 = scalar_select 0, %s5, %s3
  $region1: #{generator_forward.37} parent=0
    #allocation3 [shape = 'u8[262144]{0}', space=vmem, size = 0x40000, scoped, tag = 'input window, operand 0']
    loop: start=0, step=1, limit=9
    $region2: #{generator_forward.37} parent=1 // loop_pre_header
      _
    $region3: #{generator_forward.37} parent=1 // loop_header
      %s8 = sphi 0, %s12
      %p9 = scmp.ge.s32.totalorder %s8, 9
      %s15 = sphi 0, %s34
      %s16 = sphi 0, %s30
      %s17 = sphi 0, %s26
      %s18 = sphi 0, %s15
      %s19 = sphi 0, %s16
      %s20 = sphi 0, %s17
      %s21 = sphi 0, %s18
      %s22 = sphi 0, %s19
      %s23 = sphi 0, %s20
      %s39 = sphi 0, %s41
      %s42 = sphi 0, %s39
      %s43 = sphi 0, %s42
      %s59 = sphi 0, %s43
      %s67 = sphi 0, %s69
      %s70 = sphi 0, %s67
      %s71 = sphi 0, %s70
      %s87 = sphi 0, %s71
      %s95 = sphi 0, %s97
      %s98 = sphi 0, %s95
      %s99 = sphi 0, %s98
      %s115 = sphi 0, %s99
    $region4: #{generator_forward.37} parent=1 // loop_header_branch
      %11 = sbr.rel (%p9) target = $region8
    $region5: #{generator_forward.37} parent=1 // loop_body
      %s13 = ssub.s32 %s8, 1
      %s14 = ssub.s32 %s8, 2
      %s24 = sadd.s32 1, %s17
      %p25 = scmp.ge.s32.totalorder %s24, 7
      %s26 = scalar_select %p25, 0, %s24
      %s27 = sadd.s32 1, %s16
      %s28 = scalar_select %p25, %s27, %s16
      %p29 = scmp.ge.s32.totalorder %s28, 1
      %s30 = scalar_select %p29, 0, %s28
      %s31 = sadd.s32 1, %s15
      %s32 = scalar_select %p29, %s31, %s15
      %p33 = scmp.ge.s32.totalorder %s32, 1
      %s34 = scalar_select %p33, 0, %s32
      %s35 = ssub.s32 %s15, %s34
      %s36 = ssub.s32 %s17, %s26
      %s37 = sor.u32 %s35, %s36
      %p38 = scmp.eq.s32.totalorder %s37, 0
      %s40 = sadd.s32 %s39, 1
      %s41 = scalar_select %p38, %s39, %s40
      %p44 = pneg %p38
      %p45 = scmp.eq.s32.totalorder %s8, 6
      %p46 = por %p44, %p45
      %p47 = scmp.ne.s32.totalorder %s39, %s42
      %p48 = scmp.eq.s32.totalorder %s8, 0
      %p49 = por %p47, %p48
      %p50 = scmp.ne.s32.totalorder %s39, %s42
      %p51 = scmp.eq.s32.totalorder %s13, 6
      %p52 = por %p50, %p51
      %p53 = scmp.ne.s32.totalorder %s42, %s43
      %p54 = scmp.eq.s32.totalorder %s13, 0
      %p55 = por %p53, %p54
      %p56 = scmp.ne.s32.totalorder %s42, %s43
      %p57 = scmp.eq.s32.totalorder %s14, 6
      %p58 = por %p56, %p57
      %p60 = scmp.ne.s32.totalorder %s43, %s59
      %p61 = scmp.eq.s32.totalorder %s14, 0
      %p62 = por %p60, %p61
      %s63 = ssub.s32 %s17, %s26
      %s64 = ssub.s32 %s16, %s30
      %s65 = sor.u32 %s63, %s64
      %p66 = scmp.eq.s32.totalorder %s65, 0
      %s68 = sadd.s32 %s67, 1
      %s69 = scalar_select %p66, %s67, %s68
      %p72 = pneg %p66
      %p73 = scmp.eq.s32.totalorder %s8, 6
      %p74 = por %p72, %p73
      %p75 = scmp.ne.s32.totalorder %s67, %s70
      %p76 = scmp.eq.s32.totalorder %s8, 0
      %p77 = por %p75, %p76
      %p78 = scmp.ne.s32.totalorder %s67, %s70
      %p79 = scmp.eq.s32.totalorder %s13, 6
      %p80 = por %p78, %p79
      %p81 = scmp.ne.s32.totalorder %s70, %s71
      %p82 = scmp.eq.s32.totalorder %s13, 0
      %p83 = por %p81, %p82
      %p84 = scmp.ne.s32.totalorder %s70, %s71
      %p85 = scmp.eq.s32.totalorder %s14, 6
      %p86 = por %p84, %p85
      %p88 = scmp.ne.s32.totalorder %s71, %s87
      %p89 = scmp.eq.s32.totalorder %s14, 0
      %p90 = por %p88, %p89
      %s91 = ssub.s32 %s15, %s34
      %s92 = ssub.s32 %s16, %s30
      %s93 = sor.u32 %s91, %s92
      %p94 = scmp.eq.s32.totalorder %s93, 0
      %s96 = sadd.s32 %s95, 1
      %s97 = scalar_select %p94, %s95, %s96
      %p100 = pneg %p94
      %p101 = scmp.eq.s32.totalorder %s8, 6
      %p102 = por %p100, %p101
      %p103 = scmp.ne.s32.totalorder %s95, %s98
      %p104 = scmp.eq.s32.totalorder %s8, 0
      %p105 = por %p103, %p104
      %p106 = scmp.ne.s32.totalorder %s95, %s98
      %p107 = scmp.eq.s32.totalorder %s13, 6
      %p108 = por %p106, %p107
      %p109 = scmp.ne.s32.totalorder %s98, %s99
      %p110 = scmp.eq.s32.totalorder %s13, 0
      %p111 = por %p109, %p110
      %p112 = scmp.ne.s32.totalorder %s98, %s99
      %p113 = scmp.eq.s32.totalorder %s14, 6
      %p114 = por %p112, %p113
      %p116 = scmp.ne.s32.totalorder %s99, %s115
      %p117 = scmp.eq.s32.totalorder %s14, 0
      %p118 = por %p116, %p117
      %p119 = scmp.le.s32.totalorder 1, %s8
      %p120 = scmp.lt.s32.totalorder %s8, 8
      %p121 = pnand %p119, %p120
      %p122 = pneg %p121
      // Predicated region
      $region9: #{generator_forward.37} parent=5 // pred_check
        _
      $region10: #{generator_forward.37} parent=5 // pred_check_branch
        %124 = sbr.rel (%p121) target = $region12
      $region11: #{generator_forward.37} parent=5 // pred_region
        %s125 = ssub.s32 %s8, 1
      $region12: #{generator_forward.37} parent=5 // pred_fallthru
        _
      %p126 = scmp.lt.s32.totalorder %s8, 7
      // Predicated region
      $region13: #{generator_forward.37} parent=5 // pred_check
        %p127 = pneg %p126
      $region14: #{generator_forward.37} parent=5 // pred_check_branch
        %129 = sbr.rel (%p127) target = $region16
      $region15: #{generator_forward.37} parent=5 // pred_region
        // Predicated region
        $region17: #{generator_forward.37} parent=15 // pred_check
          %p130 = pneg %p49
        $region18: #{generator_forward.37} parent=15 // pred_check_branch
          %132 = sbr.rel (%p130) target = $region20
        $region19: #{generator_forward.37} parent=15 // pred_region
          %s133 = sand.u32 %s39, 1
          %s134 = sand.u32 %s39, 1
          %s135 = smul.addr %s134, 256
          %s136 = scalar_lea.vmem [#allocation3], %s135
          %s137 = smul.u32 64, %s15
          %s138 = smul.addr %s137, 7
          %s139 = sadd.s32 %s17, %s138
          %s140 = smul.addr %s139, 4
          %s141 = scalar_lea.vmem %s0, %s140
          // Predicated region
          $region21: #{generator_forward.37} parent=19 // pred_check
            _
          $region22: #{generator_forward.37} parent=19 // pred_check_branch
            %143 = sbr.rel (0) target = $region24
          $region23: #{generator_forward.37} parent=19 // pred_region
            // Predicated region
            $region25: #{generator_forward.37} parent=23 // pred_check
              _
            $region26: #{generator_forward.37} parent=23 // pred_check_branch
              %145 = sbr.rel target = $region28
            $region27: #{generator_forward.37} parent=23 // pred_region
              // Predicated region
              $region40: #{generator_forward.37} parent=27 // pred_check
                _
              $region41: #{generator_forward.37} parent=27 // pred_check_branch
                %287 = sbr.rel (0) target = $region43
              $region42: #{generator_forward.37} parent=27 // pred_region
                loop: start=0, step=1, limit=1
                $region44: #{generator_forward.37} parent=42 // loop_pre_header
                  _
                $region45: #{generator_forward.37} parent=42 // loop_header
                  %s289 = sphi 0, %s293
                  %p290 = scmp.ge.s32.totalorder %s289, 1
                  %s294 = sphi %s141, %s141
                  %s295 = sphi %s136, %s136
                $region46: #{generator_forward.37} parent=42 // loop_header_branch
                  %292 = sbr.rel (%p290) target = $region50
                $region47: #{generator_forward.37} parent=42 // loop_body
                  _
                $region48: #{generator_forward.37} parent=42 // loop_footer
                  %s293 = sadd.s32 1, %s289
                $region49: #{generator_forward.37} parent=42 // loop_footer_branch
                  %288 = sbr.rel target = $region45
                $region50: #{generator_forward.37} parent=42 // loop_exit
                  _
                %s297 = ssub.s32 16, 1
                loop: start=0, step=1, limit=1
                $region51: #{generator_forward.37} parent=42 // loop_pre_header
                  _
                $region52: #{generator_forward.37} parent=42 // loop_header
                  %s299 = sphi 0, %s303
                  %p300 = scmp.ge.s32.totalorder %s299, 1
                  %s304 = sphi %s141, %s141
                  %s305 = sphi %s136, %s136
                $region53: #{generator_forward.37} parent=42 // loop_header_branch
                  %302 = sbr.rel (%p300) target = $region57
                $region54: #{generator_forward.37} parent=42 // loop_body
                  %v306 = vld [vmem:[%s304] sm:%s297]
                  %307 = vst [vmem:[%s305] sm:%s297] %v306
                  %v308 = vld [vmem:[%s304 + $0x1c] sm:%s297]
                  %309 = vst [vmem:[%s305 + $0x4] sm:%s297] %v308
                  %v310 = vld [vmem:[%s304 + $0x38] sm:%s297]
                  %311 = vst [vmem:[%s305 + $0x8] sm:%s297] %v310
                  %v312 = vld [vmem:[%s304 + $0x54] sm:%s297]
                  %313 = vst [vmem:[%s305 + $0xc] sm:%s297] %v312
                  %v314 = vld [vmem:[%s304 + $0x70] sm:%s297]
                  %315 = vst [vmem:[%s305 + $0x10] sm:%s297] %v314
                  %v316 = vld [vmem:[%s304 + $0x8c] sm:%s297]
                  %317 = vst [vmem:[%s305 + $0x14] sm:%s297] %v316
                  %v318 = vld [vmem:[%s304 + $0xa8] sm:%s297]
                  %319 = vst [vmem:[%s305 + $0x18] sm:%s297] %v318
                  %v320 = vld [vmem:[%s304 + $0xc4] sm:%s297]
                  %321 = vst [vmem:[%s305 + $0x1c] sm:%s297] %v320
                  %v322 = vld [vmem:[%s304 + $0xe0] sm:%s297]
                  %323 = vst [vmem:[%s305 + $0x20] sm:%s297] %v322
                  %v324 = vld [vmem:[%s304 + $0xfc] sm:%s297]
                  %325 = vst [vmem:[%s305 + $0x24] sm:%s297] %v324
                  %v326 = vld [vmem:[%s304 + $0x118] sm:%s297]
                  %327 = vst [vmem:[%s305 + $0x28] sm:%s297] %v326
                  %v328 = vld [vmem:[%s304 + $0x134] sm:%s297]
                  %329 = vst [vmem:[%s305 + $0x2c] sm:%s297] %v328
                  %v330 = vld [vmem:[%s304 + $0x150] sm:%s297]
                  %331 = vst [vmem:[%s305 + $0x30] sm:%s297] %v330
                  %v332 = vld [vmem:[%s304 + $0x16c] sm:%s297]
                  %333 = vst [vmem:[%s305 + $0x34] sm:%s297] %v332
                  %v334 = vld [vmem:[%s304 + $0x188] sm:%s297]
                  %335 = vst [vmem:[%s305 + $0x38] sm:%s297] %v334
                  %v336 = vld [vmem:[%s304 + $0x1a4] sm:%s297]
                  %337 = vst [vmem:[%s305 + $0x3c] sm:%s297] %v336
                  %v338 = vld [vmem:[%s304 + $0x1c0] sm:%s297]
                  %339 = vst [vmem:[%s305 + $0x40] sm:%s297] %v338
                  %v340 = vld [vmem:[%s304 + $0x1dc] sm:%s297]
                  %341 = vst [vmem:[%s305 + $0x44] sm:%s297] %v340
                  %v342 = vld [vmem:[%s304 + $0x1f8] sm:%s297]
                  %343 = vst [vmem:[%s305 + $0x48] sm:%s297] %v342
                  %v344 = vld [vmem:[%s304 + $0x214] sm:%s297]
                  %345 = vst [vmem:[%s305 + $0x4c] sm:%s297] %v344
                  %v346 = vld [vmem:[%s304 + $0x230] sm:%s297]
                  %347 = vst [vmem:[%s305 + $0x50] sm:%s297] %v346
                  %v348 = vld [vmem:[%s304 + $0x24c] sm:%s297]
                  %349 = vst [vmem:[%s305 + $0x54] sm:%s297] %v348
                  %v350 = vld [vmem:[%s304 + $0x268] sm:%s297]
                  %351 = vst [vmem:[%s305 + $0x58] sm:%s297] %v350
                  %v352 = vld [vmem:[%s304 + $0x284] sm:%s297]
                  %353 = vst [vmem:[%s305 + $0x5c] sm:%s297] %v352
                  %v354 = vld [vmem:[%s304 + $0x2a0] sm:%s297]
                  %355 = vst [vmem:[%s305 + $0x60] sm:%s297] %v354
                  %v356 = vld [vmem:[%s304 + $0x2bc] sm:%s297]
                  %357 = vst [vmem:[%s305 + $0x64] sm:%s297] %v356
                  %v358 = vld [vmem:[%s304 + $0x2d8] sm:%s297]
                  %359 = vst [vmem:[%s305 + $0x68] sm:%s297] %v358
                  %v360 = vld [vmem:[%s304 + $0x2f4] sm:%s297]
                  %361 = vst [vmem:[%s305 + $0x6c] sm:%s297] %v360
                  %v362 = vld [vmem:[%s304 + $0x310] sm:%s297]
                  %363 = vst [vmem:[%s305 + $0x70] sm:%s297] %v362
                  %v364 = vld [vmem:[%s304 + $0x32c] sm:%s297]
                  %365 = vst [vmem:[%s305 + $0x74] sm:%s297] %v364
                  %v366 = vld [vmem:[%s304 + $0x348] sm:%s297]
                  %367 = vst [vmem:[%s305 + $0x78] sm:%s297] %v366
                  %v368 = vld [vmem:[%s304 + $0x364] sm:%s297]
                  %369 = vst [vmem:[%s305 + $0x7c] sm:%s297] %v368
                  %v370 = vld [vmem:[%s304 + $0x380] sm:%s297]
                  %371 = vst [vmem:[%s305 + $0x80] sm:%s297] %v370
                  %v372 = vld [vmem:[%s304 + $0x39c] sm:%s297]
                  %373 = vst [vmem:[%s305 + $0x84] sm:%s297] %v372
                  %v374 = vld [vmem:[%s304 + $0x3b8] sm:%s297]
                  %375 = vst [vmem:[%s305 + $0x88] sm:%s297] %v374
                  %v376 = vld [vmem:[%s304 + $0x3d4] sm:%s297]
                  %377 = vst [vmem:[%s305 + $0x8c] sm:%s297] %v376
                  %v378 = vld [vmem:[%s304 + $0x3f0] sm:%s297]
                  %379 = vst [vmem:[%s305 + $0x90] sm:%s297] %v378
                  %v380 = vld [vmem:[%s304 + $0x40c] sm:%s297]
                  %381 = vst [vmem:[%s305 + $0x94] sm:%s297] %v380
                  %v382 = vld [vmem:[%s304 + $0x428] sm:%s297]
                  %383 = vst [vmem:[%s305 + $0x98] sm:%s297] %v382
                  %v384 = vld [vmem:[%s304 + $0x444] sm:%s297]
                  %385 = vst [vmem:[%s305 + $0x9c] sm:%s297] %v384
                  %v386 = vld [vmem:[%s304 + $0x460] sm:%s297]
                  %387 = vst [vmem:[%s305 + $0xa0] sm:%s297] %v386
                  %v388 = vld [vmem:[%s304 + $0x47c] sm:%s297]
                  %389 = vst [vmem:[%s305 + $0xa4] sm:%s297] %v388
                  %v390 = vld [vmem:[%s304 + $0x498] sm:%s297]
                  %391 = vst [vmem:[%s305 + $0xa8] sm:%s297] %v390
                  %v392 = vld [vmem:[%s304 + $0x4b4] sm:%s297]
                  %393 = vst [vmem:[%s305 + $0xac] sm:%s297] %v392
                  %v394 = vld [vmem:[%s304 + $0x4d0] sm:%s297]
                  %395 = vst [vmem:[%s305 + $0xb0] sm:%s297] %v394
                  %v396 = vld [vmem:[%s304 + $0x4ec] sm:%s297]
                  %397 = vst [vmem:[%s305 + $0xb4] sm:%s297] %v396
                  %v398 = vld [vmem:[%s304 + $0x508] sm:%s297]
                  %399 = vst [vmem:[%s305 + $0xb8] sm:%s297] %v398
                  %v400 = vld [vmem:[%s304 + $0x524] sm:%s297]
                  %401 = vst [vmem:[%s305 + $0xbc] sm:%s297] %v400
                  %v402 = vld [vmem:[%s304 + $0x540] sm:%s297]
                  %403 = vst [vmem:[%s305 + $0xc0] sm:%s297] %v402
                  %v404 = vld [vmem:[%s304 + $0x55c] sm:%s297]
                  %405 = vst [vmem:[%s305 + $0xc4] sm:%s297] %v404
                  %v406 = vld [vmem:[%s304 + $0x578] sm:%s297]
                  %407 = vst [vmem:[%s305 + $0xc8] sm:%s297] %v406
                  %v408 = vld [vmem:[%s304 + $0x594] sm:%s297]
                  %409 = vst [vmem:[%s305 + $0xcc] sm:%s297] %v408
                  %v410 = vld [vmem:[%s304 + $0x5b0] sm:%s297]
                  %411 = vst [vmem:[%s305 + $0xd0] sm:%s297] %v410
                  %v412 = vld [vmem:[%s304 + $0x5cc] sm:%s297]
                  %413 = vst [vmem:[%s305 + $0xd4] sm:%s297] %v412
                  %v414 = vld [vmem:[%s304 + $0x5e8] sm:%s297]
                  %415 = vst [vmem:[%s305 + $0xd8] sm:%s297] %v414
                  %v416 = vld [vmem:[%s304 + $0x604] sm:%s297]
                  %417 = vst [vmem:[%s305 + $0xdc] sm:%s297] %v416
                  %v418 = vld [vmem:[%s304 + $0x620] sm:%s297]
                  %419 = vst [vmem:[%s305 + $0xe0] sm:%s297] %v418
                  %v420 = vld [vmem:[%s304 + $0x63c] sm:%s297]
                  %421 = vst [vmem:[%s305 + $0xe4] sm:%s297] %v420
                  %v422 = vld [vmem:[%s304 + $0x658] sm:%s297]
                  %423 = vst [vmem:[%s305 + $0xe8] sm:%s297] %v422
                  %v424 = vld [vmem:[%s304 + $0x674] sm:%s297]
                  %425 = vst [vmem:[%s305 + $0xec] sm:%s297] %v424
                  %v426 = vld [vmem:[%s304 + $0x690] sm:%s297]
                  %427 = vst [vmem:[%s305 + $0xf0] sm:%s297] %v426
                  %v428 = vld [vmem:[%s304 + $0x6ac] sm:%s297]
                  %429 = vst [vmem:[%s305 + $0xf4] sm:%s297] %v428
                  %v430 = vld [vmem:[%s304 + $0x6c8] sm:%s297]
                  %431 = vst [vmem:[%s305 + $0xf8] sm:%s297] %v430
                  %v432 = vld [vmem:[%s304 + $0x6e4] sm:%s297]
                  %433 = vst [vmem:[%s305 + $0xfc] sm:%s297] %v432
                $region55: #{generator_forward.37} parent=42 // loop_footer
                  %s303 = sadd.s32 1, %s299
                $region56: #{generator_forward.37} parent=42 // loop_footer_branch
                  %298 = sbr.rel target = $region52
                $region57: #{generator_forward.37} parent=42 // loop_exit
                  _
              $region43: #{generator_forward.37} parent=27 // pred_fallthru
                _
            $region28: #{generator_forward.37} parent=23 // pred_fallthru
              _
            // Predicated region
            $region29: #{generator_forward.37} parent=23 // pred_check
              _
            $region30: #{generator_forward.37} parent=23 // pred_check_branch
              %147 = sbr.rel (0) target = $region32
            $region31: #{generator_forward.37} parent=23 // pred_region
              %s149 = ssub.s32 16, 1
              loop: start=0, step=1, limit=1
              $region33: #{generator_forward.37} parent=31 // loop_pre_header
                _
              $region34: #{generator_forward.37} parent=31 // loop_header
                %s151 = sphi 0, %s155
                %p152 = scmp.ge.s32.totalorder %s151, 1
                %s156 = sphi %s141, %s141
                %s157 = sphi %s136, %s136
              $region35: #{generator_forward.37} parent=31 // loop_header_branch
                %154 = sbr.rel (%p152) target = $region39
              $region36: #{generator_forward.37} parent=31 // loop_body
                %v158 = vld [vmem:[%s156] sm:%s149]
                %159 = vst [vmem:[%s157] sm:%s149] %v158
                %v160 = vld [vmem:[%s156 + $0x1c] sm:%s149]
                %161 = vst [vmem:[%s157 + $0x4] sm:%s149] %v160
                %v162 = vld [vmem:[%s156 + $0x38] sm:%s149]
                %163 = vst [vmem:[%s157 + $0x8] sm:%s149] %v162
                %v164 = vld [vmem:[%s156 + $0x54] sm:%s149]
                %165 = vst [vmem:[%s157 + $0xc] sm:%s149] %v164
                %v166 = vld [vmem:[%s156 + $0x70] sm:%s149]
                %167 = vst [vmem:[%s157 + $0x10] sm:%s149] %v166
                %v168 = vld [vmem:[%s156 + $0x8c] sm:%s149]
                %169 = vst [vmem:[%s157 + $0x14] sm:%s149] %v168
                %v170 = vld [vmem:[%s156 + $0xa8] sm:%s149]
                %171 = vst [vmem:[%s157 + $0x18] sm:%s149] %v170
                %v172 = vld [vmem:[%s156 + $0xc4] sm:%s149]
                %173 = vst [vmem:[%s157 + $0x1c] sm:%s149] %v172
                %v174 = vld [vmem:[%s156 + $0xe0] sm:%s149]
                %175 = vst [vmem:[%s157 + $0x20] sm:%s149] %v174
                %v176 = vld [vmem:[%s156 + $0xfc] sm:%s149]
                %177 = vst [vmem:[%s157 + $0x24] sm:%s149] %v176
                %v178 = vld [vmem:[%s156 + $0x118] sm:%s149]
                %179 = vst [vmem:[%s157 + $0x28] sm:%s149] %v178
                %v180 = vld [vmem:[%s156 + $0x134] sm:%s149]
                %181 = vst [vmem:[%s157 + $0x2c] sm:%s149] %v180
                %v182 = vld [vmem:[%s156 + $0x150] sm:%s149]
                %183 = vst [vmem:[%s157 + $0x30] sm:%s149] %v182
                %v184 = vld [vmem:[%s156 + $0x16c] sm:%s149]
                %185 = vst [vmem:[%s157 + $0x34] sm:%s149] %v184
                %v186 = vld [vmem:[%s156 + $0x188] sm:%s149]
                %187 = vst [vmem:[%s157 + $0x38] sm:%s149] %v186
                %v188 = vld [vmem:[%s156 + $0x1a4] sm:%s149]
                %189 = vst [vmem:[%s157 + $0x3c] sm:%s149] %v188
                %v190 = vld [vmem:[%s156 + $0x1c0] sm:%s149]
                %191 = vst [vmem:[%s157 + $0x40] sm:%s149] %v190
                %v192 = vld [vmem:[%s156 + $0x1dc] sm:%s149]
                %193 = vst [vmem:[%s157 + $0x44] sm:%s149] %v192
                %v194 = vld [vmem:[%s156 + $0x1f8] sm:%s149]
                %195 = vst [vmem:[%s157 + $0x48] sm:%s149] %v194
                %v196 = vld [vmem:[%s156 + $0x214] sm:%s149]
                %197 = vst [vmem:[%s157 + $0x4c] sm:%s149] %v196
                %v198 = vld [vmem:[%s156 + $0x230] sm:%s149]
                %199 = vst [vmem:[%s157 + $0x50] sm:%s149] %v198
                %v200 = vld [vmem:[%s156 + $0x24c] sm:%s149]
                %201 = vst [vmem:[%s157 + $0x54] sm:%s149] %v200
                %v202 = vld [vmem:[%s156 + $0x268] sm:%s149]
                %203 = vst [vmem:[%s157 + $0x58] sm:%s149] %v202
                %v204 = vld [vmem:[%s156 + $0x284] sm:%s149]
                %205 = vst [vmem:[%s157 + $0x5c] sm:%s149] %v204
                %v206 = vld [vmem:[%s156 + $0x2a0] sm:%s149]
                %207 = vst [vmem:[%s157 + $0x60] sm:%s149] %v206
                %v208 = vld [vmem:[%s156 + $0x2bc] sm:%s149]
                %209 = vst [vmem:[%s157 + $0x64] sm:%s149] %v208
                %v210 = vld [vmem:[%s156 + $0x2d8] sm:%s149]
                %211 = vst [vmem:[%s157 + $0x68] sm:%s149] %v210
                %v212 = vld [vmem:[%s156 + $0x2f4] sm:%s149]
                %213 = vst [vmem:[%s157 + $0x6c] sm:%s149] %v212
                %v214 = vld [vmem:[%s156 + $0x310] sm:%s149]
                %215 = vst [vmem:[%s157 + $0x70] sm:%s149] %v214
                %v216 = vld [vmem:[%s156 + $0x32c] sm:%s149]
                %217 = vst [vmem:[%s157 + $0x74] sm:%s149] %v216
                %v218 = vld [vmem:[%s156 + $0x348] sm:%s149]
                %219 = vst [vmem:[%s157 + $0x78] sm:%s149] %v218
                %v220 = vld [vmem:[%s156 + $0x364] sm:%s149]
                %221 = vst [vmem:[%s157 + $0x7c] sm:%s149] %v220
                %v222 = vld [vmem:[%s156 + $0x380] sm:%s149]
                %223 = vst [vmem:[%s157 + $0x80] sm:%s149] %v222
                %v224 = vld [vmem:[%s156 + $0x39c] sm:%s149]
                %225 = vst [vmem:[%s157 + $0x84] sm:%s149] %v224
                %v226 = vld [vmem:[%s156 + $0x3b8] sm:%s149]
                %227 = vst [vmem:[%s157 + $0x88] sm:%s149] %v226
                %v228 = vld [vmem:[%s156 + $0x3d4] sm:%s149]
                %229 = vst [vmem:[%s157 + $0x8c] sm:%s149] %v228
                %v230 = vld [vmem:[%s156 + $0x3f0] sm:%s149]
                %231 = vst [vmem:[%s157 + $0x90] sm:%s149] %v230
                %v232 = vld [vmem:[%s156 + $0x40c] sm:%s149]
                %233 = vst [vmem:[%s157 + $0x94] sm:%s149] %v232
                %v234 = vld [vmem:[%s156 + $0x428] sm:%s149]
                %235 = vst [vmem:[%s157 + $0x98] sm:%s149] %v234
                %v236 = vld [vmem:[%s156 + $0x444] sm:%s149]
                %237 = vst [vmem:[%s157 + $0x9c] sm:%s149] %v236
                %v238 = vld [vmem:[%s156 + $0x460] sm:%s149]
                %239 = vst [vmem:[%s157 + $0xa0] sm:%s149] %v238
                %v240 = vld [vmem:[%s156 + $0x47c] sm:%s149]
                %241 = vst [vmem:[%s157 + $0xa4] sm:%s149] %v240
                %v242 = vld [vmem:[%s156 + $0x498] sm:%s149]
                %243 = vst [vmem:[%s157 + $0xa8] sm:%s149] %v242
                %v244 = vld [vmem:[%s156 + $0x4b4] sm:%s149]
                %245 = vst [vmem:[%s157 + $0xac] sm:%s149] %v244
                %v246 = vld [vmem:[%s156 + $0x4d0] sm:%s149]
                %247 = vst [vmem:[%s157 + $0xb0] sm:%s149] %v246
                %v248 = vld [vmem:[%s156 + $0x4ec] sm:%s149]
                %249 = vst [vmem:[%s157 + $0xb4] sm:%s149] %v248
                %v250 = vld [vmem:[%s156 + $0x508] sm:%s149]
                %251 = vst [vmem:[%s157 + $0xb8] sm:%s149] %v250
                %v252 = vld [vmem:[%s156 + $0x524] sm:%s149]
                %253 = vst [vmem:[%s157 + $0xbc] sm:%s149] %v252
                %v254 = vld [vmem:[%s156 + $0x540] sm:%s149]
                %255 = vst [vmem:[%s157 + $0xc0] sm:%s149] %v254
                %v256 = vld [vmem:[%s156 + $0x55c] sm:%s149]
                %257 = vst [vmem:[%s157 + $0xc4] sm:%s149] %v256
                %v258 = vld [vmem:[%s156 + $0x578] sm:%s149]
                %259 = vst [vmem:[%s157 + $0xc8] sm:%s149] %v258
                %v260 = vld [vmem:[%s156 + $0x594] sm:%s149]
                %261 = vst [vmem:[%s157 + $0xcc] sm:%s149] %v260
                %v262 = vld [vmem:[%s156 + $0x5b0] sm:%s149]
                %263 = vst [vmem:[%s157 + $0xd0] sm:%s149] %v262
                %v264 = vld [vmem:[%s156 + $0x5cc] sm:%s149]
                %265 = vst [vmem:[%s157 + $0xd4] sm:%s149] %v264
                %v266 = vld [vmem:[%s156 + $0x5e8] sm:%s149]
                %267 = vst [vmem:[%s157 + $0xd8] sm:%s149] %v266
                %v268 = vld [vmem:[%s156 + $0x604] sm:%s149]
                %269 = vst [vmem:[%s157 + $0xdc] sm:%s149] %v268
                %v270 = vld [vmem:[%s156 + $0x620] sm:%s149]
                %271 = vst [vmem:[%s157 + $0xe0] sm:%s149] %v270
                %v272 = vld [vmem:[%s156 + $0x63c] sm:%s149]
                %273 = vst [vmem:[%s157 + $0xe4] sm:%s149] %v272
                %v274 = vld [vmem:[%s156 + $0x658] sm:%s149]
                %275 = vst [vmem:[%s157 + $0xe8] sm:%s149] %v274
                %v276 = vld [vmem:[%s156 + $0x674] sm:%s149]
                %277 = vst [vmem:[%s157 + $0xec] sm:%s149] %v276
                %v278 = vld [vmem:[%s156 + $0x690] sm:%s149]
                %279 = vst [vmem:[%s157 + $0xf0] sm:%s149] %v278
                %v280 = vld [vmem:[%s156 + $0x6ac] sm:%s149]
                %281 = vst [vmem:[%s157 + $0xf4] sm:%s149] %v280
                %v282 = vld [vmem:[%s156 + $0x6c8] sm:%s149]
                %283 = vst [vmem:[%s157 + $0xf8] sm:%s149] %v282
                %v284 = vld [vmem:[%s156 + $0x6e4] sm:%s149]
                %285 = vst [vmem:[%s157 + $0xfc] sm:%s149] %v284
              $region37: #{generator_forward.37} parent=31 // loop_footer
                %s155 = sadd.s32 1, %s151
              $region38: #{generator_forward.37} parent=31 // loop_footer_branch
                %150 = sbr.rel target = $region34
              $region39: #{generator_forward.37} parent=31 // loop_exit
                _
            $region32: #{generator_forward.37} parent=23 // pred_fallthru
              _
          $region24: #{generator_forward.37} parent=19 // pred_fallthru
            _
          %434 = vnop
        $region20: #{generator_forward.37} parent=15 // pred_fallthru
          _
        // Predicated region
        $region58: #{generator_forward.37} parent=15 // pred_check
          %p435 = pneg %p77
        $region59: #{generator_forward.37} parent=15 // pred_check_branch
          %437 = sbr.rel (%p435) target = $region61
        $region60: #{generator_forward.37} parent=15 // pred_region
          %s438 = smul.u32 16, %s17
          %p439 = scmp.lt.s32.totalorder %s438, 111
          %s440 = scalar_select %p439, %s438, 111
          %p441 = scmp.lt.s32.totalorder %s16, 0
          %s442 = scalar_select %p441, %s16, 0
          %s443 = sadd.s32 %s442, %s440
          %s444 = smul.addr %s443, 4
          %s445 = scalar_lea.vmem %s1, %s444
          %s446 = smul.u32 16, %s17
        $region61: #{generator_forward.37} parent=15 // pred_fallthru
          _
      $region16: #{generator_forward.37} parent=5 // pred_fallthru
        _
      %p447 = scmp.le.s32.totalorder 1, %s8
      %p448 = scmp.lt.s32.totalorder %s8, 8
      %p449 = pnand %p447, %p448
      %p450 = pneg %p449
      // Predicated region
      $region62: #{generator_forward.37} parent=5 // pred_check
        _
      $region63: #{generator_forward.37} parent=5 // pred_check_branch
        %452 = sbr.rel (%p449) target = $region65
      $region64: #{generator_forward.37} parent=5 // pred_region
        %s453 = ssub.s32 %s8, 1
        %s454 = sand.u32 %s42, 1
        %s455 = sand.u32 %s42, 1
        %s456 = smul.addr %s455, 256
        %s457 = scalar_lea.vmem [#allocation3], %s456
        // Predicated region
        $region66: #{generator_forward.37} parent=64 // pred_check
          %p458 = pneg %p55
        $region67: #{generator_forward.37} parent=64 // pred_check_branch
          %460 = sbr.rel (%p458) target = $region69
        $region68: #{generator_forward.37} parent=64 // pred_region
          _
        $region69: #{generator_forward.37} parent=64 // pred_fallthru
          _
        %s461 = sand.u32 %s42, 1
        %s462 = sand.u32 %s42, 1
        %s463 = smul.addr %s462, 256
        %s464 = scalar_lea.vmem [#allocation3], %s463
        %p465 = pneg %p55
        %p466 = pneg %p52
        %s467 = smul.u32 16, %s20
        %p468 = scmp.lt.s32.totalorder %s467, 111
        %s469 = scalar_select %p468, %s467, 111
        %p470 = scmp.lt.s32.totalorder %s19, 0
        %s471 = scalar_select %p470, %s19, 0
        %s472 = sadd.s32 %s471, %s469
        %s473 = smul.addr %s472, 4
        %s474 = scalar_lea.vmem %s1, %s473
        %p475 = pneg %p83
        %p476 = pneg %p80
        %p477 = pneg %p111
        %p478 = pneg %p108
        %s479 = smul.u32 64, %s18
        %p480 = scmp.lt.s32.totalorder %s479, 63
        %s481 = scalar_select %p480, %s479, 63
        %p482 = scmp.lt.s32.totalorder %s19, 0
        %s483 = scalar_select %p482, %s19, 0
        %s484 = sadd.s32 %s483, %s481
        %s485 = smul.addr %s484, 8
        %s486 = scalar_lea.vmem %s2, %s485
        %s487 = smul.u32 64, %s18
        %s488 = smul.u32 16, %s20
        %p489 = scmp.lt.s32.totalorder %s488, 111
        %s490 = scalar_select %p489, %s488, 111
        %p491 = scmp.lt.s32.totalorder %s19, 0
        %s492 = scalar_select %p491, %s19, 0
        %s493 = sadd.s32 %s492, %s490
        %s494 = smul.addr %s493, 4
        %s495 = scalar_lea.vmem %s1, %s494
        %s496 = smul.u32 16, %s20
        %s497 = smul.u32 64, %s18
        %p498 = scmp.lt.s32.totalorder %s497, 63
        %s499 = scalar_select %p498, %s497, 63
        %p500 = scmp.lt.s32.totalorder %s19, 0
        %s501 = scalar_select %p500, %s19, 0
        %s502 = sadd.s32 %s501, %s499
        %s503 = smul.addr %s502, 8
        %s504 = scalar_lea.vmem %s2, %s503
        %s505 = smul.u32 64, %s18
        %p506 = scmp.eq.s32.totalorder %s20, 0
        // Predicated region
        $region70: #{generator_forward.37} parent=64 // pred_check
          %p507 = pneg %p506
        $region71: #{generator_forward.37} parent=64 // pred_check_branch
          %509 = sbr.rel (%p507) target = $region73
        $region72: #{generator_forward.37} parent=64 // pred_region
          %510 = vst [vmem:[#allocation2] sm:$0xff] 0.0
          %511 = vst [vmem:[#allocation2 + $0x8] sm:$0xff] 0.0
          %512 = vst [vmem:[#allocation2 + $0x10] sm:$0xff] 0.0
          %513 = vst [vmem:[#allocation2 + $0x18] sm:$0xff] 0.0
          %514 = vst [vmem:[#allocation2 + $0x20] sm:$0xff] 0.0
          %515 = vst [vmem:[#allocation2 + $0x28] sm:$0xff] 0.0
          %516 = vst [vmem:[#allocation2 + $0x30] sm:$0xff] 0.0
          %517 = vst [vmem:[#allocation2 + $0x38] sm:$0xff] 0.0
          %518 = vst [vmem:[#allocation2 + $0x40] sm:$0xff] 0.0
          %519 = vst [vmem:[#allocation2 + $0x48] sm:$0xff] 0.0
          %520 = vst [vmem:[#allocation2 + $0x50] sm:$0xff] 0.0
          %521 = vst [vmem:[#allocation2 + $0x58] sm:$0xff] 0.0
          %522 = vst [vmem:[#allocation2 + $0x60] sm:$0xff] 0.0
          %523 = vst [vmem:[#allocation2 + $0x68] sm:$0xff] 0.0
          %524 = vst [vmem:[#allocation2 + $0x70] sm:$0xff] 0.0
          %525 = vst [vmem:[#allocation2 + $0x78] sm:$0xff] 0.0
          %526 = vst [vmem:[#allocation2 + $0x80] sm:$0xff] 0.0
          %527 = vst [vmem:[#allocation2 + $0x88] sm:$0xff] 0.0
          %528 = vst [vmem:[#allocation2 + $0x90] sm:$0xff] 0.0
          %529 = vst [vmem:[#allocation2 + $0x98] sm:$0xff] 0.0
          %530 = vst [vmem:[#allocation2 + $0xa0] sm:$0xff] 0.0
          %531 = vst [vmem:[#allocation2 + $0xa8] sm:$0xff] 0.0
          %532 = vst [vmem:[#allocation2 + $0xb0] sm:$0xff] 0.0
          %533 = vst [vmem:[#allocation2 + $0xb8] sm:$0xff] 0.0
          %534 = vst [vmem:[#allocation2 + $0xc0] sm:$0xff] 0.0
          %535 = vst [vmem:[#allocation2 + $0xc8] sm:$0xff] 0.0
          %536 = vst [vmem:[#allocation2 + $0xd0] sm:$0xff] 0.0
          %537 = vst [vmem:[#allocation2 + $0xd8] sm:$0xff] 0.0
          %538 = vst [vmem:[#allocation2 + $0xe0] sm:$0xff] 0.0
          %539 = vst [vmem:[#allocation2 + $0xe8] sm:$0xff] 0.0
          %540 = vst [vmem:[#allocation2 + $0xf0] sm:$0xff] 0.0
          %541 = vst [vmem:[#allocation2 + $0xf8] sm:$0xff] 0.0
          %542 = vst [vmem:[#allocation2 + $0x100] sm:$0xff] 0.0
          %543 = vst [vmem:[#allocation2 + $0x108] sm:$0xff] 0.0
          %544 = vst [vmem:[#allocation2 + $0x110] sm:$0xff] 0.0
          %545 = vst [vmem:[#allocation2 + $0x118] sm:$0xff] 0.0
          %546 = vst [vmem:[#allocation2 + $0x120] sm:$0xff] 0.0
          %547 = vst [vmem:[#allocation2 + $0x128] sm:$0xff] 0.0
          %548 = vst [vmem:[#allocation2 + $0x130] sm:$0xff] 0.0
          %549 = vst [vmem:[#allocation2 + $0x138] sm:$0xff] 0.0
          %550 = vst [vmem:[#allocation2 + $0x140] sm:$0xff] 0.0
          %551 = vst [vmem:[#allocation2 + $0x148] sm:$0xff] 0.0
          %552 = vst [vmem:[#allocation2 + $0x150] sm:$0xff] 0.0
          %553 = vst [vmem:[#allocation2 + $0x158] sm:$0xff] 0.0
          %554 = vst [vmem:[#allocation2 + $0x160] sm:$0xff] 0.0
          %555 = vst [vmem:[#allocation2 + $0x168] sm:$0xff] 0.0
          %556 = vst [vmem:[#allocation2 + $0x170] sm:$0xff] 0.0
          %557 = vst [vmem:[#allocation2 + $0x178] sm:$0xff] 0.0
          %558 = vst [vmem:[#allocation2 + $0x180] sm:$0xff] 0.0
          %559 = vst [vmem:[#allocation2 + $0x188] sm:$0xff] 0.0
          %560 = vst [vmem:[#allocation2 + $0x190] sm:$0xff] 0.0
          %561 = vst [vmem:[#allocation2 + $0x198] sm:$0xff] 0.0
          %562 = vst [vmem:[#allocation2 + $0x1a0] sm:$0xff] 0.0
          %563 = vst [vmem:[#allocation2 + $0x1a8] sm:$0xff] 0.0
          %564 = vst [vmem:[#allocation2 + $0x1b0] sm:$0xff] 0.0
          %565 = vst [vmem:[#allocation2 + $0x1b8] sm:$0xff] 0.0
          %566 = vst [vmem:[#allocation2 + $0x1c0] sm:$0xff] 0.0
          %567 = vst [vmem:[#allocation2 + $0x1c8] sm:$0xff] 0.0
          %568 = vst [vmem:[#allocation2 + $0x1d0] sm:$0xff] 0.0
          %569 = vst [vmem:[#allocation2 + $0x1d8] sm:$0xff] 0.0
          %570 = vst [vmem:[#allocation2 + $0x1e0] sm:$0xff] 0.0
          %571 = vst [vmem:[#allocation2 + $0x1e8] sm:$0xff] 0.0
          %572 = vst [vmem:[#allocation2 + $0x1f0] sm:$0xff] 0.0
          %573 = vst [vmem:[#allocation2 + $0x1f8] sm:$0xff] 0.0
        $region73: #{generator_forward.37} parent=64 // pred_fallthru
          _
        %v574 = vld [vmem:[#allocation2] sm:$0xff]
        %v575 = vld [vmem:[#allocation2 + $0x8] sm:$0xff]
        %v576 = vld [vmem:[#allocation2 + $0x10] sm:$0xff]
        %v577 = vld [vmem:[#allocation2 + $0x18] sm:$0xff]
        %v578 = vld [vmem:[#allocation2 + $0x20] sm:$0xff]
        %v579 = vld [vmem:[#allocation2 + $0x28] sm:$0xff]
        %v580 = vld [vmem:[#allocation2 + $0x30] sm:$0xff]
        %v581 = vld [vmem:[#allocation2 + $0x38] sm:$0xff]
        %v582 = vld [vmem:[#allocation2 + $0x40] sm:$0xff]
        %v583 = vld [vmem:[#allocation2 + $0x48] sm:$0xff]
        %v584 = vld [vmem:[#allocation2 + $0x50] sm:$0xff]
        %v585 = vld [vmem:[#allocation2 + $0x58] sm:$0xff]
        %v586 = vld [vmem:[#allocation2 + $0x60] sm:$0xff]
        %v587 = vld [vmem:[#allocation2 + $0x68] sm:$0xff]
        %v588 = vld [vmem:[#allocation2 + $0x70] sm:$0xff]
        %v589 = vld [vmem:[#allocation2 + $0x78] sm:$0xff]
        %v590 = vld [vmem:[#allocation2 + $0x80] sm:$0xff]
        %v591 = vld [vmem:[#allocation2 + $0x88] sm:$0xff]
        %v592 = vld [vmem:[#allocation2 + $0x90] sm:$0xff]
        %v593 = vld [vmem:[#allocation2 + $0x98] sm:$0xff]
        %v594 = vld [vmem:[#allocation2 + $0xa0] sm:$0xff]
        %v595 = vld [vmem:[#allocation2 + $0xa8] sm:$0xff]
        %v596 = vld [vmem:[#allocation2 + $0xb0] sm:$0xff]
        %v597 = vld [vmem:[#allocation2 + $0xb8] sm:$0xff]
        %v598 = vld [vmem:[#allocation2 + $0xc0] sm:$0xff]
        %v599 = vld [vmem:[#allocation2 + $0xc8] sm:$0xff]
        %v600 = vld [vmem:[#allocation2 + $0xd0] sm:$0xff]
        %v601 = vld [vmem:[#allocation2 + $0xd8] sm:$0xff]
        %v602 = vld [vmem:[#allocation2 + $0xe0] sm:$0xff]
        %v603 = vld [vmem:[#allocation2 + $0xe8] sm:$0xff]
        %v604 = vld [vmem:[#allocation2 + $0xf0] sm:$0xff]
        %v605 = vld [vmem:[#allocation2 + $0xf8] sm:$0xff]
        %v606 = vld [vmem:[#allocation2 + $0x100] sm:$0xff]
        %v607 = vld [vmem:[#allocation2 + $0x108] sm:$0xff]
        %v608 = vld [vmem:[#allocation2 + $0x110] sm:$0xff]
        %v609 = vld [vmem:[#allocation2 + $0x118] sm:$0xff]
        %v610 = vld [vmem:[#allocation2 + $0x120] sm:$0xff]
        %v611 = vld [vmem:[#allocation2 + $0x128] sm:$0xff]
        %v612 = vld [vmem:[#allocation2 + $0x130] sm:$0xff]
        %v613 = vld [vmem:[#allocation2 + $0x138] sm:$0xff]
        %v614 = vld [vmem:[#allocation2 + $0x140] sm:$0xff]
        %v615 = vld [vmem:[#allocation2 + $0x148] sm:$0xff]
        %v616 = vld [vmem:[#allocation2 + $0x150] sm:$0xff]
        %v617 = vld [vmem:[#allocation2 + $0x158] sm:$0xff]
        %v618 = vld [vmem:[#allocation2 + $0x160] sm:$0xff]
        %v619 = vld [vmem:[#allocation2 + $0x168] sm:$0xff]
        %v620 = vld [vmem:[#allocation2 + $0x170] sm:$0xff]
        %v621 = vld [vmem:[#allocation2 + $0x178] sm:$0xff]
        %v622 = vld [vmem:[#allocation2 + $0x180] sm:$0xff]
        %v623 = vld [vmem:[#allocation2 + $0x188] sm:$0xff]
        %v624 = vld [vmem:[#allocation2 + $0x190] sm:$0xff]
        %v625 = vld [vmem:[#allocation2 + $0x198] sm:$0xff]
        %v626 = vld [vmem:[#allocation2 + $0x1a0] sm:$0xff]
        %v627 = vld [vmem:[#allocation2 + $0x1a8] sm:$0xff]
        %v628 = vld [vmem:[#allocation2 + $0x1b0] sm:$0xff]
        %v629 = vld [vmem:[#allocation2 + $0x1b8] sm:$0xff]
        %v630 = vld [vmem:[#allocation2 + $0x1c0] sm:$0xff]
        %v631 = vld [vmem:[#allocation2 + $0x1c8] sm:$0xff]
        %v632 = vld [vmem:[#allocation2 + $0x1d0] sm:$0xff]
        %v633 = vld [vmem:[#allocation2 + $0x1d8] sm:$0xff]
        %v634 = vld [vmem:[#allocation2 + $0x1e0] sm:$0xff]
        %v635 = vld [vmem:[#allocation2 + $0x1e8] sm:$0xff]
        %v636 = vld [vmem:[#allocation2 + $0x1f0] sm:$0xff]
        %v637 = vld [vmem:[#allocation2 + $0x1f8] sm:$0xff]
        %v638 = vld [vmem:[%s457] sm:$0xf]
        %v639 = vld [vmem:[%s457 + $0x4] sm:$0xf]
        %v640 = vld [vmem:[%s457 + $0x8] sm:$0xf]
        %v641 = vld [vmem:[%s457 + $0xc] sm:$0xf]
        %v642 = vld [vmem:[%s457 + $0x10] sm:$0xf]
        %v643 = vld [vmem:[%s457 + $0x14] sm:$0xf]
        %v644 = vld [vmem:[%s457 + $0x18] sm:$0xf]
        %v645 = vld [vmem:[%s457 + $0x1c] sm:$0xf]
        %v646 = vld [vmem:[%s457 + $0x20] sm:$0xf]
        %v647 = vld [vmem:[%s457 + $0x24] sm:$0xf]
        %v648 = vld [vmem:[%s457 + $0x28] sm:$0xf]
        %v649 = vld [vmem:[%s457 + $0x2c] sm:$0xf]
        %v650 = vld [vmem:[%s457 + $0x30] sm:$0xf]
        %v651 = vld [vmem:[%s457 + $0x34] sm:$0xf]
        %v652 = vld [vmem:[%s457 + $0x38] sm:$0xf]
        %v653 = vld [vmem:[%s457 + $0x3c] sm:$0xf]
        %v654 = vld [vmem:[%s457 + $0x40] sm:$0xf]
        %v655 = vld [vmem:[%s457 + $0x44] sm:$0xf]
        %v656 = vld [vmem:[%s457 + $0x48] sm:$0xf]
        %v657 = vld [vmem:[%s457 + $0x4c] sm:$0xf]
        %v658 = vld [vmem:[%s457 + $0x50] sm:$0xf]
        %v659 = vld [vmem:[%s457 + $0x54] sm:$0xf]
        %v660 = vld [vmem:[%s457 + $0x58] sm:$0xf]
        %v661 = vld [vmem:[%s457 + $0x5c] sm:$0xf]
        %v662 = vld [vmem:[%s457 + $0x60] sm:$0xf]
        %v663 = vld [vmem:[%s457 + $0x64] sm:$0xf]
        %v664 = vld [vmem:[%s457 + $0x68] sm:$0xf]
        %v665 = vld [vmem:[%s457 + $0x6c] sm:$0xf]
        %v666 = vld [vmem:[%s457 + $0x70] sm:$0xf]
        %v667 = vld [vmem:[%s457 + $0x74] sm:$0xf]
        %v668 = vld [vmem:[%s457 + $0x78] sm:$0xf]
        %v669 = vld [vmem:[%s457 + $0x7c] sm:$0xf]
        %v670 = vld [vmem:[%s457 + $0x80] sm:$0xf]
        %v671 = vld [vmem:[%s457 + $0x84] sm:$0xf]
        %v672 = vld [vmem:[%s457 + $0x88] sm:$0xf]
        %v673 = vld [vmem:[%s457 + $0x8c] sm:$0xf]
        %v674 = vld [vmem:[%s457 + $0x90] sm:$0xf]
        %v675 = vld [vmem:[%s457 + $0x94] sm:$0xf]
        %v676 = vld [vmem:[%s457 + $0x98] sm:$0xf]
        %v677 = vld [vmem:[%s457 + $0x9c] sm:$0xf]
        %v678 = vld [vmem:[%s457 + $0xa0] sm:$0xf]
        %v679 = vld [vmem:[%s457 + $0xa4] sm:$0xf]
        %v680 = vld [vmem:[%s457 + $0xa8] sm:$0xf]
        %v681 = vld [vmem:[%s457 + $0xac] sm:$0xf]
        %v682 = vld [vmem:[%s457 + $0xb0] sm:$0xf]
        %v683 = vld [vmem:[%s457 + $0xb4] sm:$0xf]
        %v684 = vld [vmem:[%s457 + $0xb8] sm:$0xf]
        %v685 = vld [vmem:[%s457 + $0xbc] sm:$0xf]
        %v686 = vld [vmem:[%s457 + $0xc0] sm:$0xf]
        %v687 = vld [vmem:[%s457 + $0xc4] sm:$0xf]
        %v688 = vld [vmem:[%s457 + $0xc8] sm:$0xf]
        %v689 = vld [vmem:[%s457 + $0xcc] sm:$0xf]
        %v690 = vld [vmem:[%s457 + $0xd0] sm:$0xf]
        %v691 = vld [vmem:[%s457 + $0xd4] sm:$0xf]
        %v692 = vld [vmem:[%s457 + $0xd8] sm:$0xf]
        %v693 = vld [vmem:[%s457 + $0xdc] sm:$0xf]
        %v694 = vld [vmem:[%s457 + $0xe0] sm:$0xf]
        %v695 = vld [vmem:[%s457 + $0xe4] sm:$0xf]
        %v696 = vld [vmem:[%s457 + $0xe8] sm:$0xf]
        %v697 = vld [vmem:[%s457 + $0xec] sm:$0xf]
        %v698 = vld [vmem:[%s457 + $0xf0] sm:$0xf]
        %v699 = vld [vmem:[%s457 + $0xf4] sm:$0xf]
        %v700 = vld [vmem:[%s457 + $0xf8] sm:$0xf]
        %v701 = vld [vmem:[%s457 + $0xfc] sm:$0xf]
        %v702 = vld [vmem:[%s495] sm:$0xf]
        %v703 = vld [vmem:[%s495 + $0x4] sm:$0xf]
        %v704 = vld [vmem:[%s495 + $0x8] sm:$0xf]
        %v705 = vld [vmem:[%s495 + $0xc] sm:$0xf]
        %v706 = vld [vmem:[%s495 + $0x10] sm:$0xf]
        %v707 = vld [vmem:[%s495 + $0x14] sm:$0xf]
        %v708 = vld [vmem:[%s495 + $0x18] sm:$0xf]
        %v709 = vld [vmem:[%s495 + $0x1c] sm:$0xf]
        %v710 = vld [vmem:[%s495 + $0x20] sm:$0xf]
        %v711 = vld [vmem:[%s495 + $0x24] sm:$0xf]
        %v712 = vld [vmem:[%s495 + $0x28] sm:$0xf]
        %v713 = vld [vmem:[%s495 + $0x2c] sm:$0xf]
        %v714 = vld [vmem:[%s495 + $0x30] sm:$0xf]
        %v715 = vld [vmem:[%s495 + $0x34] sm:$0xf]
        %v716 = vld [vmem:[%s495 + $0x38] sm:$0xf]
        %v717 = vld [vmem:[%s495 + $0x3c] sm:$0xf]
        %v782 = vunpack.c.l.b16 %v638
        %v783 = vunpack.c.l.b16 %v639
        %v784 = vunpack.c.l.b16 %v640
        %v785 = vunpack.c.l.b16 %v641
        %v786 = vunpack.c.l.b16 %v642
        %v787 = vunpack.c.l.b16 %v643
        %v788 = vunpack.c.l.b16 %v644
        %v789 = vunpack.c.l.b16 %v645
        %v790 = vunpack.c.l.b16 %v646
        %v791 = vunpack.c.l.b16 %v647
        %v792 = vunpack.c.l.b16 %v648
        %v793 = vunpack.c.l.b16 %v649
        %v794 = vunpack.c.l.b16 %v650
        %v795 = vunpack.c.l.b16 %v651
        %v796 = vunpack.c.l.b16 %v652
        %v797 = vunpack.c.l.b16 %v653
        %v798 = vunpack.c.l.b16 %v654
        %v799 = vunpack.c.l.b16 %v655
        %v800 = vunpack.c.l.b16 %v656
        %v801 = vunpack.c.l.b16 %v657
        %v802 = vunpack.c.l.b16 %v658
        %v803 = vunpack.c.l.b16 %v659
        %v804 = vunpack.c.l.b16 %v660
        %v805 = vunpack.c.l.b16 %v661
        %v806 = vunpack.c.l.b16 %v662
        %v807 = vunpack.c.l.b16 %v663
        %v808 = vunpack.c.l.b16 %v664
        %v809 = vunpack.c.l.b16 %v665
        %v810 = vunpack.c.l.b16 %v666
        %v811 = vunpack.c.l.b16 %v667
        %v812 = vunpack.c.l.b16 %v668
        %v813 = vunpack.c.l.b16 %v669
        %v814 = vunpack.c.l.b16 %v670
        %v815 = vunpack.c.l.b16 %v671
        %v816 = vunpack.c.l.b16 %v672
        %v817 = vunpack.c.l.b16 %v673
        %v818 = vunpack.c.l.b16 %v674
        %v819 = vunpack.c.l.b16 %v675
        %v820 = vunpack.c.l.b16 %v676
        %v821 = vunpack.c.l.b16 %v677
        %v822 = vunpack.c.l.b16 %v678
        %v823 = vunpack.c.l.b16 %v679
        %v824 = vunpack.c.l.b16 %v680
        %v825 = vunpack.c.l.b16 %v681
        %v826 = vunpack.c.l.b16 %v682
        %v827 = vunpack.c.l.b16 %v683
        %v828 = vunpack.c.l.b16 %v684
        %v829 = vunpack.c.l.b16 %v685
        %v830 = vunpack.c.l.b16 %v686
        %v831 = vunpack.c.l.b16 %v687
        %v832 = vunpack.c.l.b16 %v688
        %v833 = vunpack.c.l.b16 %v689
        %v834 = vunpack.c.l.b16 %v690
        %v835 = vunpack.c.l.b16 %v691
        %v836 = vunpack.c.l.b16 %v692
        %v837 = vunpack.c.l.b16 %v693
        %v838 = vunpack.c.l.b16 %v694
        %v839 = vunpack.c.l.b16 %v695
        %v840 = vunpack.c.l.b16 %v696
        %v841 = vunpack.c.l.b16 %v697
        %v842 = vunpack.c.l.b16 %v698
        %v843 = vunpack.c.l.b16 %v699
        %v844 = vunpack.c.l.b16 %v700
        %v845 = vunpack.c.l.b16 %v701
        %v846 = vpack.c.b16 %v783, %v782
        %v847 = vpack.c.b16 %v785, %v784
        %v848 = vpack.c.b16 %v787, %v786
        %v849 = vpack.c.b16 %v789, %v788
        %v850 = vpack.c.b16 %v791, %v790
        %v851 = vpack.c.b16 %v793, %v792
        %v852 = vpack.c.b16 %v795, %v794
        %v853 = vpack.c.b16 %v797, %v796
        %v854 = vpack.c.b16 %v799, %v798
        %v855 = vpack.c.b16 %v801, %v800
        %v856 = vpack.c.b16 %v803, %v802
        %v857 = vpack.c.b16 %v805, %v804
        %v858 = vpack.c.b16 %v807, %v806
        %v859 = vpack.c.b16 %v809, %v808
        %v860 = vpack.c.b16 %v811, %v810
        %v861 = vpack.c.b16 %v813, %v812
        %v862 = vpack.c.b16 %v815, %v814
        %v863 = vpack.c.b16 %v817, %v816
        %v864 = vpack.c.b16 %v819, %v818
        %v865 = vpack.c.b16 %v821, %v820
        %v866 = vpack.c.b16 %v823, %v822
        %v867 = vpack.c.b16 %v825, %v824
        %v868 = vpack.c.b16 %v827, %v826
        %v869 = vpack.c.b16 %v829, %v828
        %v870 = vpack.c.b16 %v831, %v830
        %v871 = vpack.c.b16 %v833, %v832
        %v872 = vpack.c.b16 %v835, %v834
        %v873 = vpack.c.b16 %v837, %v836
        %v874 = vpack.c.b16 %v839, %v838
        %v875 = vpack.c.b16 %v841, %v840
        %v876 = vpack.c.b16 %v843, %v842
        %v877 = vpack.c.b16 %v845, %v844
        %v926 = vunpack.c.l.b16 %v702
        %v927 = vunpack.c.l.b16 %v703
        %v928 = vunpack.c.l.b16 %v704
        %v929 = vunpack.c.l.b16 %v705
        %v930 = vunpack.c.l.b16 %v706
        %v931 = vunpack.c.l.b16 %v707
        %v932 = vunpack.c.l.b16 %v708
        %v933 = vunpack.c.l.b16 %v709
        %v934 = vunpack.c.l.b16 %v710
        %v935 = vunpack.c.l.b16 %v711
        %v936 = vunpack.c.l.b16 %v712
        %v937 = vunpack.c.l.b16 %v713
        %v938 = vunpack.c.l.b16 %v714
        %v939 = vunpack.c.l.b16 %v715
        %v940 = vunpack.c.l.b16 %v716
        %v941 = vunpack.c.l.b16 %v717
        %v942 = vpack.c.b16 %v927, %v926
        %v943 = vpack.c.b16 %v929, %v928
        %v944 = vpack.c.b16 %v931, %v930
        %v945 = vpack.c.b16 %v933, %v932
        %v946 = vpack.c.b16 %v935, %v934
        %v947 = vpack.c.b16 %v937, %v936
        %v948 = vpack.c.b16 %v939, %v938
        %v949 = vpack.c.b16 %v941, %v940
        %958 = vmatpush.bf16.msra.mxu0 %v949
        %959 = vmatpush.bf16.msra.mxu0 %v948
        %960 = vmatpush.bf16.msra.mxu0 %v947
        %961 = vmatpush.bf16.msra.mxu0 %v946
        %962 = vmatpush.bf16.msra.mxu0 %v945
        %963 = vmatpush.bf16.msra.mxu0 %v944
        %964 = vmatpush.bf16.msra.mxu0 %v943
        %965 = vmatpush.bf16.msra.mxu0 %v942
        %966 = vmatmul.bf16.gmra.mxu0 %v846
        %v967 = vpop.f32.mrf.mxu0
        %v968 = vadd.f32 0.0, %v967
        %v969 = vpop.f32.mrf.mxu0
        %v970 = vadd.f32 0.0, %v969
        %971 = vmatmul.bf16.gmra.mxu0 %v847
        %v972 = vpop.f32.mrf.mxu0
        %v973 = vadd.f32 0.0, %v972
        %v974 = vpop.f32.mrf.mxu0
        %v975 = vadd.f32 0.0, %v974
        %976 = vmatmul.bf16.gmra.mxu0 %v848
        %v977 = vpop.f32.mrf.mxu0
        %v978 = vadd.f32 0.0, %v977
        %v979 = vpop.f32.mrf.mxu0
        %v980 = vadd.f32 0.0, %v979
        %981 = vmatmul.bf16.gmra.mxu0 %v849
        %v982 = vpop.f32.mrf.mxu0
        %v983 = vadd.f32 0.0, %v982
        %v984 = vpop.f32.mrf.mxu0
        %v985 = vadd.f32 0.0, %v984
        %986 = vmatmul.bf16.gmra.mxu0 %v850
        %v987 = vpop.f32.mrf.mxu0
        %v988 = vadd.f32 0.0, %v987
        %v989 = vpop.f32.mrf.mxu0
        %v990 = vadd.f32 0.0, %v989
        %991 = vmatmul.bf16.gmra.mxu0 %v851
        %v992 = vpop.f32.mrf.mxu0
        %v993 = vadd.f32 0.0, %v992
        %v994 = vpop.f32.mrf.mxu0
        %v995 = vadd.f32 0.0, %v994
        %996 = vmatmul.bf16.gmra.mxu0 %v852
        %v997 = vpop.f32.mrf.mxu0
        %v998 = vadd.f32 0.0, %v997
        %v999 = vpop.f32.mrf.mxu0
        %v1000 = vadd.f32 0.0, %v999
        %1001 = vmatmul.bf16.gmra.mxu0 %v853
        %v1002 = vpop.f32.mrf.mxu0
        %v1003 = vadd.f32 0.0, %v1002
        %v1004 = vpop.f32.mrf.mxu0
        %v1005 = vadd.f32 0.0, %v1004
        %1006 = vmatmul.bf16.gmra.mxu0 %v854
        %v1007 = vpop.f32.mrf.mxu0
        %v1008 = vadd.f32 0.0, %v1007
        %v1009 = vpop.f32.mrf.mxu0
        %v1010 = vadd.f32 0.0, %v1009
        %1011 = vmatmul.bf16.gmra.mxu0 %v855
        %v1012 = vpop.f32.mrf.mxu0
        %v1013 = vadd.f32 0.0, %v1012
        %v1014 = vpop.f32.mrf.mxu0
        %v1015 = vadd.f32 0.0, %v1014
        %1016 = vmatmul.bf16.gmra.mxu0 %v856
        %v1017 = vpop.f32.mrf.mxu0
        %v1018 = vadd.f32 0.0, %v1017
        %v1019 = vpop.f32.mrf.mxu0
        %v1020 = vadd.f32 0.0, %v1019
        %1021 = vmatmul.bf16.gmra.mxu0 %v857
        %v1022 = vpop.f32.mrf.mxu0
        %v1023 = vadd.f32 0.0, %v1022
        %v1024 = vpop.f32.mrf.mxu0
        %v1025 = vadd.f32 0.0, %v1024
        %1026 = vmatmul.bf16.gmra.mxu0 %v858
        %v1027 = vpop.f32.mrf.mxu0
        %v1028 = vadd.f32 0.0, %v1027
        %v1029 = vpop.f32.mrf.mxu0
        %v1030 = vadd.f32 0.0, %v1029
        %1031 = vmatmul.bf16.gmra.mxu0 %v859
        %v1032 = vpop.f32.mrf.mxu0
        %v1033 = vadd.f32 0.0, %v1032
        %v1034 = vpop.f32.mrf.mxu0
        %v1035 = vadd.f32 0.0, %v1034
        %1036 = vmatmul.bf16.gmra.mxu0 %v860
        %v1037 = vpop.f32.mrf.mxu0
        %v1038 = vadd.f32 0.0, %v1037
        %v1039 = vpop.f32.mrf.mxu0
        %v1040 = vadd.f32 0.0, %v1039
        %1041 = vmatmul.bf16.gmra.mxu0 %v861
        %v1042 = vpop.f32.mrf.mxu0
        %v1043 = vadd.f32 0.0, %v1042
        %v1044 = vpop.f32.mrf.mxu0
        %v1045 = vadd.f32 0.0, %v1044
        %1046 = vmatmul.bf16.gmra.mxu0 %v862
        %v1047 = vpop.f32.mrf.mxu0
        %v1048 = vadd.f32 0.0, %v1047
        %v1049 = vpop.f32.mrf.mxu0
        %v1050 = vadd.f32 0.0, %v1049
        %1051 = vmatmul.bf16.gmra.mxu0 %v863
        %v1052 = vpop.f32.mrf.mxu0
        %v1053 = vadd.f32 0.0, %v1052
        %v1054 = vpop.f32.mrf.mxu0
        %v1055 = vadd.f32 0.0, %v1054
        %1056 = vmatmul.bf16.gmra.mxu0 %v864
        %v1057 = vpop.f32.mrf.mxu0
        %v1058 = vadd.f32 0.0, %v1057
        %v1059 = vpop.f32.mrf.mxu0
        %v1060 = vadd.f32 0.0, %v1059
        %1061 = vmatmul.bf16.gmra.mxu0 %v865
        %v1062 = vpop.f32.mrf.mxu0
        %v1063 = vadd.f32 0.0, %v1062
        %v1064 = vpop.f32.mrf.mxu0
        %v1065 = vadd.f32 0.0, %v1064
        %1066 = vmatmul.bf16.gmra.mxu0 %v866
        %v1067 = vpop.f32.mrf.mxu0
        %v1068 = vadd.f32 0.0, %v1067
        %v1069 = vpop.f32.mrf.mxu0
        %v1070 = vadd.f32 0.0, %v1069
        %1071 = vmatmul.bf16.gmra.mxu0 %v867
        %v1072 = vpop.f32.mrf.mxu0
        %v1073 = vadd.f32 0.0, %v1072
        %v1074 = vpop.f32.mrf.mxu0
        %v1075 = vadd.f32 0.0, %v1074
        %1076 = vmatmul.bf16.gmra.mxu0 %v868
        %v1077 = vpop.f32.mrf.mxu0
        %v1078 = vadd.f32 0.0, %v1077
        %v1079 = vpop.f32.mrf.mxu0
        %v1080 = vadd.f32 0.0, %v1079
        %1081 = vmatmul.bf16.gmra.mxu0 %v869
        %v1082 = vpop.f32.mrf.mxu0
        %v1083 = vadd.f32 0.0, %v1082
        %v1084 = vpop.f32.mrf.mxu0
        %v1085 = vadd.f32 0.0, %v1084
        %1086 = vmatmul.bf16.gmra.mxu0 %v870
        %v1087 = vpop.f32.mrf.mxu0
        %v1088 = vadd.f32 0.0, %v1087
        %v1089 = vpop.f32.mrf.mxu0
        %v1090 = vadd.f32 0.0, %v1089
        %1091 = vmatmul.bf16.gmra.mxu0 %v871
        %v1092 = vpop.f32.mrf.mxu0
        %v1093 = vadd.f32 0.0, %v1092
        %v1094 = vpop.f32.mrf.mxu0
        %v1095 = vadd.f32 0.0, %v1094
        %1096 = vmatmul.bf16.gmra.mxu0 %v872
        %v1097 = vpop.f32.mrf.mxu0
        %v1098 = vadd.f32 0.0, %v1097
        %v1099 = vpop.f32.mrf.mxu0
        %v1100 = vadd.f32 0.0, %v1099
        %1101 = vmatmul.bf16.gmra.mxu0 %v873
        %v1102 = vpop.f32.mrf.mxu0
        %v1103 = vadd.f32 0.0, %v1102
        %v1104 = vpop.f32.mrf.mxu0
        %v1105 = vadd.f32 0.0, %v1104
        %1106 = vmatmul.bf16.gmra.mxu0 %v874
        %v1107 = vpop.f32.mrf.mxu0
        %v1108 = vadd.f32 0.0, %v1107
        %v1109 = vpop.f32.mrf.mxu0
        %v1110 = vadd.f32 0.0, %v1109
        %1111 = vmatmul.bf16.gmra.mxu0 %v875
        %v1112 = vpop.f32.mrf.mxu0
        %v1113 = vadd.f32 0.0, %v1112
        %v1114 = vpop.f32.mrf.mxu0
        %v1115 = vadd.f32 0.0, %v1114
        %1116 = vmatmul.bf16.gmra.mxu0 %v876
        %v1117 = vpop.f32.mrf.mxu0
        %v1118 = vadd.f32 0.0, %v1117
        %v1119 = vpop.f32.mrf.mxu0
        %v1120 = vadd.f32 0.0, %v1119
        %1121 = vmatmul.bf16.gmra.mxu0 %v877
        %v1122 = vpop.f32.mrf.mxu0
        %v1123 = vadd.f32 0.0, %v1122
        %v1124 = vpop.f32.mrf.mxu0
        %v1125 = vadd.f32 0.0, %v1124
        %1126 = vdwg.mxu0
        %v1127 = vadd.f32 %v574, %v968
        %v1128 = vadd.f32 %v575, %v970
        %v1129 = vadd.f32 %v576, %v973
        %v1130 = vadd.f32 %v577, %v975
        %v1131 = vadd.f32 %v578, %v978
        %v1132 = vadd.f32 %v579, %v980
        %v1133 = vadd.f32 %v580, %v983
        %v1134 = vadd.f32 %v581, %v985
        %v1135 = vadd.f32 %v582, %v988
        %v1136 = vadd.f32 %v583, %v990
        %v1137 = vadd.f32 %v584, %v993
        %v1138 = vadd.f32 %v585, %v995
        %v1139 = vadd.f32 %v586, %v998
        %v1140 = vadd.f32 %v587, %v1000
        %v1141 = vadd.f32 %v588, %v1003
        %v1142 = vadd.f32 %v589, %v1005
        %v1143 = vadd.f32 %v590, %v1008
        %v1144 = vadd.f32 %v591, %v1010
        %v1145 = vadd.f32 %v592, %v1013
        %v1146 = vadd.f32 %v593, %v1015
        %v1147 = vadd.f32 %v594, %v1018
        %v1148 = vadd.f32 %v595, %v1020
        %v1149 = vadd.f32 %v596, %v1023
        %v1150 = vadd.f32 %v597, %v1025
        %v1151 = vadd.f32 %v598, %v1028
        %v1152 = vadd.f32 %v599, %v1030
        %v1153 = vadd.f32 %v600, %v1033
        %v1154 = vadd.f32 %v601, %v1035
        %v1155 = vadd.f32 %v602, %v1038
        %v1156 = vadd.f32 %v603, %v1040
        %v1157 = vadd.f32 %v604, %v1043
        %v1158 = vadd.f32 %v605, %v1045
        %v1159 = vadd.f32 %v606, %v1048
        %v1160 = vadd.f32 %v607, %v1050
        %v1161 = vadd.f32 %v608, %v1053
        %v1162 = vadd.f32 %v609, %v1055
        %v1163 = vadd.f32 %v610, %v1058
        %v1164 = vadd.f32 %v611, %v1060
        %v1165 = vadd.f32 %v612, %v1063
        %v1166 = vadd.f32 %v613, %v1065
        %v1167 = vadd.f32 %v614, %v1068
        %v1168 = vadd.f32 %v615, %v1070
        %v1169 = vadd.f32 %v616, %v1073
        %v1170 = vadd.f32 %v617, %v1075
        %v1171 = vadd.f32 %v618, %v1078
        %v1172 = vadd.f32 %v619, %v1080
        %v1173 = vadd.f32 %v620, %v1083
        %v1174 = vadd.f32 %v621, %v1085
        %v1175 = vadd.f32 %v622, %v1088
        %v1176 = vadd.f32 %v623, %v1090
        %v1177 = vadd.f32 %v624, %v1093
        %v1178 = vadd.f32 %v625, %v1095
        %v1179 = vadd.f32 %v626, %v1098
        %v1180 = vadd.f32 %v627, %v1100
        %v1181 = vadd.f32 %v628, %v1103
        %v1182 = vadd.f32 %v629, %v1105
        %v1183 = vadd.f32 %v630, %v1108
        %v1184 = vadd.f32 %v631, %v1110
        %v1185 = vadd.f32 %v632, %v1113
        %v1186 = vadd.f32 %v633, %v1115
        %v1187 = vadd.f32 %v634, %v1118
        %v1188 = vadd.f32 %v635, %v1120
        %v1189 = vadd.f32 %v636, %v1123
        %v1190 = vadd.f32 %v637, %v1125
        %1191 = vst [vmem:[#allocation2] sm:$0xff] %v1127
        %1192 = vst [vmem:[#allocation2 + $0x8] sm:$0xff] %v1128
        %1193 = vst [vmem:[#allocation2 + $0x10] sm:$0xff] %v1129
        %1194 = vst [vmem:[#allocation2 + $0x18] sm:$0xff] %v1130
        %1195 = vst [vmem:[#allocation2 + $0x20] sm:$0xff] %v1131
        %1196 = vst [vmem:[#allocation2 + $0x28] sm:$0xff] %v1132
        %1197 = vst [vmem:[#allocation2 + $0x30] sm:$0xff] %v1133
        %1198 = vst [vmem:[#allocation2 + $0x38] sm:$0xff] %v1134
        %1199 = vst [vmem:[#allocation2 + $0x40] sm:$0xff] %v1135
        %1200 = vst [vmem:[#allocation2 + $0x48] sm:$0xff] %v1136
        %1201 = vst [vmem:[#allocation2 + $0x50] sm:$0xff] %v1137
        %1202 = vst [vmem:[#allocation2 + $0x58] sm:$0xff] %v1138
        %1203 = vst [vmem:[#allocation2 + $0x60] sm:$0xff] %v1139
        %1204 = vst [vmem:[#allocation2 + $0x68] sm:$0xff] %v1140
        %1205 = vst [vmem:[#allocation2 + $0x70] sm:$0xff] %v1141
        %1206 = vst [vmem:[#allocation2 + $0x78] sm:$0xff] %v1142
        %1207 = vst [vmem:[#allocation2 + $0x80] sm:$0xff] %v1143
        %1208 = vst [vmem:[#allocation2 + $0x88] sm:$0xff] %v1144
        %1209 = vst [vmem:[#allocation2 + $0x90] sm:$0xff] %v1145
        %1210 = vst [vmem:[#allocation2 + $0x98] sm:$0xff] %v1146
        %1211 = vst [vmem:[#allocation2 + $0xa0] sm:$0xff] %v1147
        %1212 = vst [vmem:[#allocation2 + $0xa8] sm:$0xff] %v1148
        %1213 = vst [vmem:[#allocation2 + $0xb0] sm:$0xff] %v1149
        %1214 = vst [vmem:[#allocation2 + $0xb8] sm:$0xff] %v1150
        %1215 = vst [vmem:[#allocation2 + $0xc0] sm:$0xff] %v1151
        %1216 = vst [vmem:[#allocation2 + $0xc8] sm:$0xff] %v1152
        %1217 = vst [vmem:[#allocation2 + $0xd0] sm:$0xff] %v1153
        %1218 = vst [vmem:[#allocation2 + $0xd8] sm:$0xff] %v1154
        %1219 = vst [vmem:[#allocation2 + $0xe0] sm:$0xff] %v1155
        %1220 = vst [vmem:[#allocation2 + $0xe8] sm:$0xff] %v1156
        %1221 = vst [vmem:[#allocation2 + $0xf0] sm:$0xff] %v1157
        %1222 = vst [vmem:[#allocation2 + $0xf8] sm:$0xff] %v1158
        %1223 = vst [vmem:[#allocation2 + $0x100] sm:$0xff] %v1159
        %1224 = vst [vmem:[#allocation2 + $0x108] sm:$0xff] %v1160
        %1225 = vst [vmem:[#allocation2 + $0x110] sm:$0xff] %v1161
        %1226 = vst [vmem:[#allocation2 + $0x118] sm:$0xff] %v1162
        %1227 = vst [vmem:[#allocation2 + $0x120] sm:$0xff] %v1163
        %1228 = vst [vmem:[#allocation2 + $0x128] sm:$0xff] %v1164
        %1229 = vst [vmem:[#allocation2 + $0x130] sm:$0xff] %v1165
        %1230 = vst [vmem:[#allocation2 + $0x138] sm:$0xff] %v1166
        %1231 = vst [vmem:[#allocation2 + $0x140] sm:$0xff] %v1167
        %1232 = vst [vmem:[#allocation2 + $0x148] sm:$0xff] %v1168
        %1233 = vst [vmem:[#allocation2 + $0x150] sm:$0xff] %v1169
        %1234 = vst [vmem:[#allocation2 + $0x158] sm:$0xff] %v1170
        %1235 = vst [vmem:[#allocation2 + $0x160] sm:$0xff] %v1171
        %1236 = vst [vmem:[#allocation2 + $0x168] sm:$0xff] %v1172
        %1237 = vst [vmem:[#allocation2 + $0x170] sm:$0xff] %v1173
        %1238 = vst [vmem:[#allocation2 + $0x178] sm:$0xff] %v1174
        %1239 = vst [vmem:[#allocation2 + $0x180] sm:$0xff] %v1175
        %1240 = vst [vmem:[#allocation2 + $0x188] sm:$0xff] %v1176
        %1241 = vst [vmem:[#allocation2 + $0x190] sm:$0xff] %v1177
        %1242 = vst [vmem:[#allocation2 + $0x198] sm:$0xff] %v1178
        %1243 = vst [vmem:[#allocation2 + $0x1a0] sm:$0xff] %v1179
        %1244 = vst [vmem:[#allocation2 + $0x1a8] sm:$0xff] %v1180
        %1245 = vst [vmem:[#allocation2 + $0x1b0] sm:$0xff] %v1181
        %1246 = vst [vmem:[#allocation2 + $0x1b8] sm:$0xff] %v1182
        %1247 = vst [vmem:[#allocation2 + $0x1c0] sm:$0xff] %v1183
        %1248 = vst [vmem:[#allocation2 + $0x1c8] sm:$0xff] %v1184
        %1249 = vst [vmem:[#allocation2 + $0x1d0] sm:$0xff] %v1185
        %1250 = vst [vmem:[#allocation2 + $0x1d8] sm:$0xff] %v1186
        %1251 = vst [vmem:[#allocation2 + $0x1e0] sm:$0xff] %v1187
        %1252 = vst [vmem:[#allocation2 + $0x1e8] sm:$0xff] %v1188
        %1253 = vst [vmem:[#allocation2 + $0x1f0] sm:$0xff] %v1189
        %1254 = vst [vmem:[#allocation2 + $0x1f8] sm:$0xff] %v1190
        %p1255 = scmp.eq.s32.totalorder %s20, 6
        // Predicated region
        $region74: #{generator_forward.37} parent=64 // pred_check
          %p1256 = pneg %p1255
        $region75: #{generator_forward.37} parent=64 // pred_check_branch
          %1258 = sbr.rel (%p1256) target = $region77
        $region76: #{generator_forward.37} parent=64 // pred_region
          %v1259 = vld [vmem:[#allocation2] sm:$0xff]
          %v1260 = vld [vmem:[#allocation2 + $0x8] sm:$0xff]
          %v1261 = vld [vmem:[#allocation2 + $0x10] sm:$0xff]
          %v1262 = vld [vmem:[#allocation2 + $0x18] sm:$0xff]
          %v1263 = vld [vmem:[#allocation2 + $0x20] sm:$0xff]
          %v1264 = vld [vmem:[#allocation2 + $0x28] sm:$0xff]
          %v1265 = vld [vmem:[#allocation2 + $0x30] sm:$0xff]
          %v1266 = vld [vmem:[#allocation2 + $0x38] sm:$0xff]
          %v1267 = vld [vmem:[#allocation2 + $0x40] sm:$0xff]
          %v1268 = vld [vmem:[#allocation2 + $0x48] sm:$0xff]
          %v1269 = vld [vmem:[#allocation2 + $0x50] sm:$0xff]
          %v1270 = vld [vmem:[#allocation2 + $0x58] sm:$0xff]
          %v1271 = vld [vmem:[#allocation2 + $0x60] sm:$0xff]
          %v1272 = vld [vmem:[#allocation2 + $0x68] sm:$0xff]
          %v1273 = vld [vmem:[#allocation2 + $0x70] sm:$0xff]
          %v1274 = vld [vmem:[#allocation2 + $0x78] sm:$0xff]
          %v1275 = vld [vmem:[#allocation2 + $0x80] sm:$0xff]
          %v1276 = vld [vmem:[#allocation2 + $0x88] sm:$0xff]
          %v1277 = vld [vmem:[#allocation2 + $0x90] sm:$0xff]
          %v1278 = vld [vmem:[#allocation2 + $0x98] sm:$0xff]
          %v1279 = vld [vmem:[#allocation2 + $0xa0] sm:$0xff]
          %v1280 = vld [vmem:[#allocation2 + $0xa8] sm:$0xff]
          %v1281 = vld [vmem:[#allocation2 + $0xb0] sm:$0xff]
          %v1282 = vld [vmem:[#allocation2 + $0xb8] sm:$0xff]
          %v1283 = vld [vmem:[#allocation2 + $0xc0] sm:$0xff]
          %v1284 = vld [vmem:[#allocation2 + $0xc8] sm:$0xff]
          %v1285 = vld [vmem:[#allocation2 + $0xd0] sm:$0xff]
          %v1286 = vld [vmem:[#allocation2 + $0xd8] sm:$0xff]
          %v1287 = vld [vmem:[#allocation2 + $0xe0] sm:$0xff]
          %v1288 = vld [vmem:[#allocation2 + $0xe8] sm:$0xff]
          %v1289 = vld [vmem:[#allocation2 + $0xf0] sm:$0xff]
          %v1290 = vld [vmem:[#allocation2 + $0xf8] sm:$0xff]
          %v1291 = vld [vmem:[#allocation2 + $0x100] sm:$0xff]
          %v1292 = vld [vmem:[#allocation2 + $0x108] sm:$0xff]
          %v1293 = vld [vmem:[#allocation2 + $0x110] sm:$0xff]
          %v1294 = vld [vmem:[#allocation2 + $0x118] sm:$0xff]
          %v1295 = vld [vmem:[#allocation2 + $0x120] sm:$0xff]
          %v1296 = vld [vmem:[#allocation2 + $0x128] sm:$0xff]
          %v1297 = vld [vmem:[#allocation2 + $0x130] sm:$0xff]
          %v1298 = vld [vmem:[#allocation2 + $0x138] sm:$0xff]
          %v1299 = vld [vmem:[#allocation2 + $0x140] sm:$0xff]
          %v1300 = vld [vmem:[#allocation2 + $0x148] sm:$0xff]
          %v1301 = vld [vmem:[#allocation2 + $0x150] sm:$0xff]
          %v1302 = vld [vmem:[#allocation2 + $0x158] sm:$0xff]
          %v1303 = vld [vmem:[#allocation2 + $0x160] sm:$0xff]
          %v1304 = vld [vmem:[#allocation2 + $0x168] sm:$0xff]
          %v1305 = vld [vmem:[#allocation2 + $0x170] sm:$0xff]
          %v1306 = vld [vmem:[#allocation2 + $0x178] sm:$0xff]
          %v1307 = vld [vmem:[#allocation2 + $0x180] sm:$0xff]
          %v1308 = vld [vmem:[#allocation2 + $0x188] sm:$0xff]
          %v1309 = vld [vmem:[#allocation2 + $0x190] sm:$0xff]
          %v1310 = vld [vmem:[#allocation2 + $0x198] sm:$0xff]
          %v1311 = vld [vmem:[#allocation2 + $0x1a0] sm:$0xff]
          %v1312 = vld [vmem:[#allocation2 + $0x1a8] sm:$0xff]
          %v1313 = vld [vmem:[#allocation2 + $0x1b0] sm:$0xff]
          %v1314 = vld [vmem:[#allocation2 + $0x1b8] sm:$0xff]
          %v1315 = vld [vmem:[#allocation2 + $0x1c0] sm:$0xff]
          %v1316 = vld [vmem:[#allocation2 + $0x1c8] sm:$0xff]
          %v1317 = vld [vmem:[#allocation2 + $0x1d0] sm:$0xff]
          %v1318 = vld [vmem:[#allocation2 + $0x1d8] sm:$0xff]
          %v1319 = vld [vmem:[#allocation2 + $0x1e0] sm:$0xff]
          %v1320 = vld [vmem:[#allocation2 + $0x1e8] sm:$0xff]
          %v1321 = vld [vmem:[#allocation2 + $0x1f0] sm:$0xff]
          %v1322 = vld [vmem:[#allocation2 + $0x1f8] sm:$0xff]
          %v1323 = vtanh.pop %v1259
          %v1324 = vtanh.pop %v1260
          %v1325 = vtanh.pop %v1261
          %v1326 = vtanh.pop %v1262
          %v1327 = vtanh.pop %v1263
          %v1328 = vtanh.pop %v1264
          %v1329 = vtanh.pop %v1265
          %v1330 = vtanh.pop %v1266
          %v1331 = vtanh.pop %v1267
          %v1332 = vtanh.pop %v1268
          %v1333 = vtanh.pop %v1269
          %v1334 = vtanh.pop %v1270
          %v1335 = vtanh.pop %v1271
          %v1336 = vtanh.pop %v1272
          %v1337 = vtanh.pop %v1273
          %v1338 = vtanh.pop %v1274
          %v1339 = vtanh.pop %v1275
          %v1340 = vtanh.pop %v1276
          %v1341 = vtanh.pop %v1277
          %v1342 = vtanh.pop %v1278
          %v1343 = vtanh.pop %v1279
          %v1344 = vtanh.pop %v1280
          %v1345 = vtanh.pop %v1281
          %v1346 = vtanh.pop %v1282
          %v1347 = vtanh.pop %v1283
          %v1348 = vtanh.pop %v1284
          %v1349 = vtanh.pop %v1285
          %v1350 = vtanh.pop %v1286
          %v1351 = vtanh.pop %v1287
          %v1352 = vtanh.pop %v1288
          %v1353 = vtanh.pop %v1289
          %v1354 = vtanh.pop %v1290
          %v1355 = vtanh.pop %v1291
          %v1356 = vtanh.pop %v1292
          %v1357 = vtanh.pop %v1293
          %v1358 = vtanh.pop %v1294
          %v1359 = vtanh.pop %v1295
          %v1360 = vtanh.pop %v1296
          %v1361 = vtanh.pop %v1297
          %v1362 = vtanh.pop %v1298
          %v1363 = vtanh.pop %v1299
          %v1364 = vtanh.pop %v1300
          %v1365 = vtanh.pop %v1301
          %v1366 = vtanh.pop %v1302
          %v1367 = vtanh.pop %v1303
          %v1368 = vtanh.pop %v1304
          %v1369 = vtanh.pop %v1305
          %v1370 = vtanh.pop %v1306
          %v1371 = vtanh.pop %v1307
          %v1372 = vtanh.pop %v1308
          %v1373 = vtanh.pop %v1309
          %v1374 = vtanh.pop %v1310
          %v1375 = vtanh.pop %v1311
          %v1376 = vtanh.pop %v1312
          %v1377 = vtanh.pop %v1313
          %v1378 = vtanh.pop %v1314
          %v1379 = vtanh.pop %v1315
          %v1380 = vtanh.pop %v1316
          %v1381 = vtanh.pop %v1317
          %v1382 = vtanh.pop %v1318
          %v1383 = vtanh.pop %v1319
          %v1384 = vtanh.pop %v1320
          %v1385 = vtanh.pop %v1321
          %v1386 = vtanh.pop %v1322
          %1387 = vst [vmem:[%s504] sm:$0xff] %v1323
          %1388 = vst [vmem:[%s504 + $0x8] sm:$0xff] %v1324
          %1389 = vst [vmem:[%s504 + $0x10] sm:$0xff] %v1325
          %1390 = vst [vmem:[%s504 + $0x18] sm:$0xff] %v1326
          %1391 = vst [vmem:[%s504 + $0x20] sm:$0xff] %v1327
          %1392 = vst [vmem:[%s504 + $0x28] sm:$0xff] %v1328
          %1393 = vst [vmem:[%s504 + $0x30] sm:$0xff] %v1329
          %1394 = vst [vmem:[%s504 + $0x38] sm:$0xff] %v1330
          %1395 = vst [vmem:[%s504 + $0x40] sm:$0xff] %v1331
          %1396 = vst [vmem:[%s504 + $0x48] sm:$0xff] %v1332
          %1397 = vst [vmem:[%s504 + $0x50] sm:$0xff] %v1333
          %1398 = vst [vmem:[%s504 + $0x58] sm:$0xff] %v1334
          %1399 = vst [vmem:[%s504 + $0x60] sm:$0xff] %v1335
          %1400 = vst [vmem:[%s504 + $0x68] sm:$0xff] %v1336
          %1401 = vst [vmem:[%s504 + $0x70] sm:$0xff] %v1337
          %1402 = vst [vmem:[%s504 + $0x78] sm:$0xff] %v1338
          %1403 = vst [vmem:[%s504 + $0x80] sm:$0xff] %v1339
          %1404 = vst [vmem:[%s504 + $0x88] sm:$0xff] %v1340
          %1405 = vst [vmem:[%s504 + $0x90] sm:$0xff] %v1341
          %1406 = vst [vmem:[%s504 + $0x98] sm:$0xff] %v1342
          %1407 = vst [vmem:[%s504 + $0xa0] sm:$0xff] %v1343
          %1408 = vst [vmem:[%s504 + $0xa8] sm:$0xff] %v1344
          %1409 = vst [vmem:[%s504 + $0xb0] sm:$0xff] %v1345
          %1410 = vst [vmem:[%s504 + $0xb8] sm:$0xff] %v1346
          %1411 = vst [vmem:[%s504 + $0xc0] sm:$0xff] %v1347
          %1412 = vst [vmem:[%s504 + $0xc8] sm:$0xff] %v1348
          %1413 = vst [vmem:[%s504 + $0xd0] sm:$0xff] %v1349
          %1414 = vst [vmem:[%s504 + $0xd8] sm:$0xff] %v1350
          %1415 = vst [vmem:[%s504 + $0xe0] sm:$0xff] %v1351
          %1416 = vst [vmem:[%s504 + $0xe8] sm:$0xff] %v1352
          %1417 = vst [vmem:[%s504 + $0xf0] sm:$0xff] %v1353
          %1418 = vst [vmem:[%s504 + $0xf8] sm:$0xff] %v1354
          %1419 = vst [vmem:[%s504 + $0x100] sm:$0xff] %v1355
          %1420 = vst [vmem:[%s504 + $0x108] sm:$0xff] %v1356
          %1421 = vst [vmem:[%s504 + $0x110] sm:$0xff] %v1357
          %1422 = vst [vmem:[%s504 + $0x118] sm:$0xff] %v1358
          %1423 = vst [vmem:[%s504 + $0x120] sm:$0xff] %v1359
          %1424 = vst [vmem:[%s504 + $0x128] sm:$0xff] %v1360
          %1425 = vst [vmem:[%s504 + $0x130] sm:$0xff] %v1361
          %1426 = vst [vmem:[%s504 + $0x138] sm:$0xff] %v1362
          %1427 = vst [vmem:[%s504 + $0x140] sm:$0xff] %v1363
          %1428 = vst [vmem:[%s504 + $0x148] sm:$0xff] %v1364
          %1429 = vst [vmem:[%s504 + $0x150] sm:$0xff] %v1365
          %1430 = vst [vmem:[%s504 + $0x158] sm:$0xff] %v1366
          %1431 = vst [vmem:[%s504 + $0x160] sm:$0xff] %v1367
          %1432 = vst [vmem:[%s504 + $0x168] sm:$0xff] %v1368
          %1433 = vst [vmem:[%s504 + $0x170] sm:$0xff] %v1369
          %1434 = vst [vmem:[%s504 + $0x178] sm:$0xff] %v1370
          %1435 = vst [vmem:[%s504 + $0x180] sm:$0xff] %v1371
          %1436 = vst [vmem:[%s504 + $0x188] sm:$0xff] %v1372
          %1437 = vst [vmem:[%s504 + $0x190] sm:$0xff] %v1373
          %1438 = vst [vmem:[%s504 + $0x198] sm:$0xff] %v1374
          %1439 = vst [vmem:[%s504 + $0x1a0] sm:$0xff] %v1375
          %1440 = vst [vmem:[%s504 + $0x1a8] sm:$0xff] %v1376
          %1441 = vst [vmem:[%s504 + $0x1b0] sm:$0xff] %v1377
          %1442 = vst [vmem:[%s504 + $0x1b8] sm:$0xff] %v1378
          %1443 = vst [vmem:[%s504 + $0x1c0] sm:$0xff] %v1379
          %1444 = vst [vmem:[%s504 + $0x1c8] sm:$0xff] %v1380
          %1445 = vst [vmem:[%s504 + $0x1d0] sm:$0xff] %v1381
          %1446 = vst [vmem:[%s504 + $0x1d8] sm:$0xff] %v1382
          %1447 = vst [vmem:[%s504 + $0x1e0] sm:$0xff] %v1383
          %1448 = vst [vmem:[%s504 + $0x1e8] sm:$0xff] %v1384
          %1449 = vst [vmem:[%s504 + $0x1f0] sm:$0xff] %v1385
          %1450 = vst [vmem:[%s504 + $0x1f8] sm:$0xff] %v1386
        $region77: #{generator_forward.37} parent=64 // pred_fallthru
          _
        %s1451 = smul.u32 64, %s18
        %p1452 = scmp.lt.s32.totalorder %s1451, 63
        %s1453 = scalar_select %p1452, %s1451, 63
        %p1454 = scmp.lt.s32.totalorder %s19, 0
        %s1455 = scalar_select %p1454, %s19, 0
        %s1456 = sadd.s32 %s1455, %s1453
        %s1457 = smul.addr %s1456, 8
        %s1458 = scalar_lea.vmem %s2, %s1457
        // Predicated region
        $region78: #{generator_forward.37} parent=64 // pred_check
          %p1459 = pneg %p108
        $region79: #{generator_forward.37} parent=64 // pred_check_branch
          %1461 = sbr.rel (%p1459) target = $region81
        $region80: #{generator_forward.37} parent=64 // pred_region
          %s1462 = smul.u32 64, %s18
        $region81: #{generator_forward.37} parent=64 // pred_fallthru
          _
        // Predicated region
        $region82: #{generator_forward.37} parent=64 // pred_check
          %p1463 = pneg %p108
        $region83: #{generator_forward.37} parent=64 // pred_check_branch
          %1465 = sbr.rel (%p1463) target = $region85
        $region84: #{generator_forward.37} parent=64 // pred_region
          %s1466 = smul.u32 64, %s18
          %p1467 = scmp.lt.s32.totalorder %s1466, 63
          %s1468 = scalar_select %p1467, %s1466, 63
          %p1469 = scmp.lt.s32.totalorder %s19, 0
          %s1470 = scalar_select %p1469, %s19, 0
          %s1471 = sadd.s32 %s1470, %s1468
          %s1472 = smul.addr %s1471, 8
          %s1473 = scalar_lea.vmem %s2, %s1472
        $region85: #{generator_forward.37} parent=64 // pred_fallthru
          _
      $region65: #{generator_forward.37} parent=5 // pred_fallthru
        _
      %p1474 = scmp.le.s32.totalorder 2, %s8
      // Predicated region
      $region86: #{generator_forward.37} parent=5 // pred_check
        %p1475 = pneg %p1474
      $region87: #{generator_forward.37} parent=5 // pred_check_branch
        %1477 = sbr.rel (%p1475) target = $region89
      $region88: #{generator_forward.37} parent=5 // pred_region
        %s1478 = ssub.s32 %s8, 2
      $region89: #{generator_forward.37} parent=5 // pred_fallthru
        _
    $region6: #{generator_forward.37} parent=1 // loop_footer
      %s12 = sadd.s32 1, %s8
    $region7: #{generator_forward.37} parent=1 // loop_footer_branch
      %7 = sbr.rel target = $region3
    $region8: #{generator_forward.37} parent=1 // loop_exit
      _

</llo_original>
